<compile_context>
chip_gen: v6e
topology: v6e:2x2x1
jax: 0.10.0
libtpu: 0.0.40
codegen_flags: <defaults>
</compile_context>

<pallas_src>
import jax
import jax.numpy as jnp
from jax.experimental import pallas as pl
from jax.experimental.pallas import tpu as pltpu

EPS = 1e-5
SLOPE = 1e-5  # LeakyReLU negative slope


def _make_stage_kernel(D, H, W, C, *, residual, stats):
    """BN(affine, batch-stats folded) -> LeakyReLU -> 3x3x3 conv (pad 1) [+res]."""
    KC = 3 * C

    def kernel(*refs):
        xm_ref, x0_ref, xp_ref, scale_ref, shift_ref, w_ref, b_ref = refs[:7]
        i = 7
        if residual:
            res_ref = refs[i]; i += 1
        out_ref = refs[i]; i += 1
        if stats:
            psum_ref = refs[i]; psq_ref = refs[i + 1]; i += 2
        pad_ref, acc_ref = refs[i], refs[i + 1]

        d = pl.program_id(1)
        x_refs = (xm_ref, x0_ref, xp_ref)

        # Zero the small (H+2, W+2, C) halo scratch.  Only the 1-wide border must
        # stay zero (the interior is overwritten for every kd tap), but this is a
        # single depth slice so the cost is negligible and every grid step stays
        # fully independent (safe under megacore "parallel" scheduling).
        pad_ref[...] = jnp.zeros(pad_ref.shape, pad_ref.dtype)

        scale = scale_ref[...]     # (1, C)  gamma / sqrt(var + eps)
        shift = shift_ref[...]     # (1, C)  beta - mean * scale

        for kd in range(3):                              # depth taps
            a = x_refs[kd][...] * scale + shift          # BN (batch stats folded)
            a = jnp.where(a >= 0, a, SLOPE * a)          # LeakyReLU(1e-5)
            # zero contribution of out-of-range depth taps (post-activation pad)
            if kd == 0:
                a = jnp.where(d > 0, a, 0.0)
            elif kd == 2:
                a = jnp.where(d < D - 1, a, 0.0)
            # MXU operands in bf16; BN/activation math stayed in f32.
            pad_ref[1:H + 1, 1:W + 1, :] = a.astype(pad_ref.dtype)

            part = None
            for kh in range(3):                          # height taps
                # K-pack the three kw taps along the contraction dim: K = 3*C.
                cols = [pad_ref[kh:kh + H, kw:kw + W, :] for kw in range(3)]
                patch = jnp.concatenate(cols, axis=-1).reshape(H * W, KC)
                contrib = jnp.dot(patch, w_ref[kd * 3 + kh],
                                  preferred_element_type=jnp.float32)
                part = contrib if part is None else part + contrib
            # Small per-step accumulator lives in VMEM scratch, not the vreg file.
            if kd == 0:
                acc_ref[...] = part
            else:
                acc_ref[...] += part

        y = acc_ref[...] + b_ref[...]                    # (H*W, 64) f32
        if stats:
            # partial sums for the next stage's BatchNorm batch statistics
            psum_ref[...] = jnp.sum(y, axis=0, keepdims=True)
            psq_ref[...] = jnp.sum(y * y, axis=0, keepdims=True)
        y = y.reshape(H, W, 64)
        if residual:
            y = y + res_ref[...]
        out_ref[...] = y.astype(out_ref.dtype)

    return kernel


def _pack_conv_weight(w):
    """(O=64, I, kD, kH, kW) -> (kD*kH, kW*I, O) bf16, matching the K-packed patch."""
    o, i = w.shape[0], w.shape[1]
    wp = jnp.transpose(w, (2, 3, 4, 1, 0)).reshape(9, 3 * i, o)
    return wp.astype(jnp.bfloat16)


def _stage_specs(N, D, H, W, C, KC):
    del N
    slab = lambda f: pl.BlockSpec((None, None, H, W, C), f)
    # three depth-shifted views of the same (N, D, H, W, C) array
    x_specs = [
        slab(lambda n, d: (n, jnp.maximum(d - 1, 0), 0, 0, 0)),
        slab(lambda n, d: (n, d, 0, 0, 0)),
        slab(lambda n, d: (n, jnp.minimum(d + 1, D - 1), 0, 0, 0)),
    ]
    # params / weights: constant index_map -> resident in VMEM across grid steps
    vec_c = pl.BlockSpec((1, C), lambda n, d: (0, 0))
    vec64 = pl.BlockSpec((1, 64), lambda n, d: (0, 0))
    w_spec = pl.BlockSpec((9, KC, 64), lambda n, d: (0, 0, 0))
    out_spec = pl.BlockSpec((None, None, H, W, 64), lambda n, d: (n, d, 0, 0, 0))
    stat_spec = pl.BlockSpec((None, None, 1, 64), lambda n, d: (n, d, 0, 0))
    res_spec = pl.BlockSpec((None, None, H, W, C), lambda n, d: (n, d, 0, 0, 0))
    return x_specs, vec_c, vec64, w_spec, out_spec, stat_spec, res_spec


def voxres_forward_ndhwc(x, params):
    """VoxRes forward, channels-last NDHWC layout (lane dim = channels)."""
    N, D, H, W, C = x.shape
    assert C == 64, "residual add (x += img) requires in_dims == 64"
    x = x.astype(jnp.float32)
    M = N * D * H * W

    # ---- BN1 batch statistics (hoisted, exact training-mode stats) ---------
    mean1 = jnp.mean(x, axis=(0, 1, 2, 3))
    var1 = jnp.var(x, axis=(0, 1, 2, 3))                 # biased, as in PyTorch
    rstd1 = jax.lax.rsqrt(var1 + EPS)
    scale1 = (params["g1"] * rstd1).reshape(1, C).astype(jnp.float32)
    shift1 = (params["be1"] - params["g1"] * mean1 * rstd1).reshape(1, C).astype(jnp.float32)

    w1p = _pack_conv_weight(params["conv1_w"])           # (9, 3*C, 64) bf16
    w2p = _pack_conv_weight(params["conv2_w"])           # (9, 192, 64) bf16
    b1 = params["conv1_b"].reshape(1, 64).astype(jnp.float32)
    b2 = params["conv2_b"].reshape(1, 64).astype(jnp.float32)

    x_specs, vec_c, vec64, w_spec, out_spec, stat_spec, res_spec = \
        _stage_specs(N, D, H, W, C, 3 * C)

    cparams = pltpu.CompilerParams(
        dimension_semantics=("parallel", "parallel"),     # megacore-shardable
        vmem_limit_bytes=32 * 1024 * 1024,
    )
    scratch = [pltpu.VMEM((H + 2, W + 2, C), jnp.bfloat16),   # halo'd activation slice
               pltpu.VMEM((H * W, 64), jnp.float32)]          # per-step conv accumulator

    # ---- stage 1: BN1 -> LeakyReLU -> conv1  (+ BN2 partial stats) ----------
    y1, psum, psq = pl.pallas_call(
        _make_stage_kernel(D, H, W, C, residual=False, stats=True),
        grid=(N, D),
        in_specs=x_specs + [vec_c, vec_c, w_spec, vec64],
        out_specs=(out_spec, stat_spec, stat_spec),
        out_shape=(jax.ShapeDtypeStruct((N, D, H, W, 64), jnp.float32),
                   jax.ShapeDtypeStruct((N, D, 1, 64), jnp.float32),
                   jax.ShapeDtypeStruct((N, D, 1, 64), jnp.float32)),
        scratch_shapes=scratch,
        compiler_params=cparams,
    )(x, x, x, scale1, shift1, w1p, b1)

    # ---- BN2 batch statistics from the in-kernel grid reduction -------------
    s1 = jnp.sum(psum, axis=(0, 1, 2))
    s2 = jnp.sum(psq, axis=(0, 1, 2))
    mean2 = s1 / M
    var2 = jnp.maximum(s2 / M - mean2 * mean2, 0.0)
    rstd2 = jax.lax.rsqrt(var2 + EPS)
    scale2 = (params["g2"] * rstd2).reshape(1, 64).astype(jnp.float32)
    shift2 = (params["be2"] - params["g2"] * mean2 * rstd2).reshape(1, 64).astype(jnp.float32)

    # ---- stage 2: BN2 -> LeakyReLU -> conv2 -> + residual -------------------
    out = pl.pallas_call(
        _make_stage_kernel(D, H, W, 64, residual=True, stats=False),
        grid=(N, D),
        in_specs=x_specs + [vec64, vec64, w_spec, vec64, res_spec],
        out_specs=out_spec,
        out_shape=jax.ShapeDtypeStruct((N, D, H, W, 64), jnp.float32),
        scratch_shapes=scratch,
        compiler_params=cparams,
    )(y1, y1, y1, scale2, shift2, w2p, b2, x)

    return out


def voxres_reference(img, params):
    """Pure-JAX reference of the PyTorch forward (NCDHW)."""
    def bn(x, g, b):
        mean = jnp.mean(x, axis=(0, 2, 3, 4), keepdims=True)
        var = jnp.var(x, axis=(0, 2, 3, 4), keepdims=True)      # biased
        g = g.reshape(1, -1, 1, 1, 1)
        b = b.reshape(1, -1, 1, 1, 1)
        return (x - mean) / jnp.sqrt(var + EPS) * g + b

    def lrelu(x):
        return jnp.where(x >= 0, x, SLOPE * x)

    def conv(x, w, b):
        y = jax.lax.conv_general_dilated(
            x, w, window_strides=(1, 1, 1), padding=[(1, 1)] * 3,
            dimension_numbers=("NCDHW", "OIDHW", "NCDHW"))
        return y + b.reshape(1, -1, 1, 1, 1)

    x = conv(lrelu(bn(img, params["g1"], params["be1"])),
             params["conv1_w"], params["conv1_b"])
    x = conv(lrelu(bn(x, params["g2"], params["be2"])),
             params["conv2_w"], params["conv2_b"])
    return x + img


def init_params(key, in_dims):
    """Deterministic synthetic init mirroring VoxRes.__init__ / reset_params."""
    k1, k2, k3, k4 = jax.random.split(key, 4)
    fan_in1 = in_dims * 27
    fan_in2 = 64 * 27
    return {
        "conv1_w": jax.random.normal(k1, (64, in_dims, 3, 3, 3), jnp.float32)
                   * jnp.sqrt(2.0 / fan_in1),
        "conv1_b": jax.random.uniform(k2, (64,), jnp.float32, -1.0, 1.0)
                   / jnp.sqrt(fan_in1),
        "conv2_w": jax.random.normal(k3, (64, 64, 3, 3, 3), jnp.float32)
                   * jnp.sqrt(2.0 / fan_in2),
        "conv2_b": jax.random.uniform(k4, (64,), jnp.float32, -1.0, 1.0)
                   / jnp.sqrt(fan_in2),
        "g1": jnp.ones((in_dims,), jnp.float32),
        "be1": jnp.zeros((in_dims,), jnp.float32),
        "g2": jnp.ones((64,), jnp.float32),
        "be2": jnp.zeros((64,), jnp.float32),
    }


if __name__ == "__main__":
    key = jax.random.PRNGKey(0)
    kp, kx = jax.random.split(key)

    in_dims = 64                      # residual add requires in_dims == 64
    N, D, H, W = 2, 8, 8, 8
    params = init_params(kp, in_dims)
    img = jax.random.normal(kx, (N, in_dims, D, H, W), jnp.float32)   # NCDHW

    # single layout conversion at the boundary (kernel API is NDHWC natively)
    x_ndhwc = jnp.transpose(img, (0, 2, 3, 4, 1))
    fwd = jax.jit(voxres_forward_ndhwc)
    out_ndhwc = jax.block_until_ready(fwd(x_ndhwc, params))
    out = jnp.transpose(out_ndhwc, (0, 4, 1, 2, 3))                   # back to NCDHW

    ref = jax.block_until_ready(voxres_reference(img, params))

    assert out.shape == (N, 64, D, H, W)
    err = jnp.max(jnp.abs(out - ref))
    assert jnp.allclose(out, ref, rtol=5e-2, atol=5e-2), f"max abs err {err:.3e}"
    print("KERNEL_OK")
</pallas_src>

<mosaic_0001>
module attributes {stable_mosaic.version = 11 : i64} {
  func.func @kernel(%arg0: i32, %arg1: i32, %arg2: memref<1x1x8x8x64xf32, #tpu.memory_space<vmem>>, %arg3: memref<1x1x8x8x64xf32, #tpu.memory_space<vmem>>, %arg4: memref<1x1x8x8x64xf32, #tpu.memory_space<vmem>>, %arg5: memref<1x64xf32, #tpu.memory_space<vmem>>, %arg6: memref<1x64xf32, #tpu.memory_space<vmem>>, %arg7: memref<9x192x64xbf16, #tpu.memory_space<vmem>>, %arg8: memref<1x64xf32, #tpu.memory_space<vmem>>, %arg9: memref<1x1x8x8x64xf32, #tpu.memory_space<vmem>>, %arg10: memref<1x1x1x64xf32, #tpu.memory_space<vmem>>, %arg11: memref<1x1x1x64xf32, #tpu.memory_space<vmem>>, %arg12: memref<10x10x64xbf16, #tpu.memory_space<vmem>>, %arg13: memref<64x64xf32, #tpu.memory_space<vmem>>) attributes {dimension_semantics = [#tpu.dimension_semantics<parallel>, #tpu.dimension_semantics<parallel>], iteration_bounds = array<i64: 2, 8>, scalar_prefetch = 0 : i64, scratch_operands = 2 : i64, tpu.core_type = #tpu.core_type<tc>, window_params = [{transform_indices = @transform_0, window_bounds = array<i64: 1, 1, 8, 8, 64>}, {transform_indices = @transform_1, window_bounds = array<i64: 1, 1, 8, 8, 64>}, {transform_indices = @transform_2, window_bounds = array<i64: 1, 1, 8, 8, 64>}, {pipeline_mode = #tpu.pipeline_mode<synchronous>, transform_indices = @transform_3, window_bounds = array<i64: 1, 64>}, {pipeline_mode = #tpu.pipeline_mode<synchronous>, transform_indices = @transform_4, window_bounds = array<i64: 1, 64>}, {pipeline_mode = #tpu.pipeline_mode<synchronous>, transform_indices = @transform_5, window_bounds = array<i64: 9, 192, 64>}, {pipeline_mode = #tpu.pipeline_mode<synchronous>, transform_indices = @transform_6, window_bounds = array<i64: 1, 64>}, {transform_indices = @transform_7, window_bounds = array<i64: 1, 1, 8, 8, 64>}, {transform_indices = @transform_8, window_bounds = array<i64: 1, 1, 1, 64>}, {transform_indices = @transform_9, window_bounds = array<i64: 1, 1, 1, 64>}]} {
    %cst = arith.constant 0.000000e+00 : bf16
    %0 = vector.broadcast %cst : bf16 to vector<10x10x64xbf16>
    %c0 = arith.constant 0 : index
    %c0_0 = arith.constant 0 : index
    %c0_1 = arith.constant 0 : index
    %1 = vector.load %arg12[%c0, %c0_0, %c0_1] : memref<10x10x64xbf16, #tpu.memory_space<vmem>>, vector<10x10x64xbf16>
    tpu.vector_store %arg12[%c0, %c0_0, %c0_1], %0 {strides = array<i32>} : memref<10x10x64xbf16, #tpu.memory_space<vmem>>, vector<10x10x64xbf16>,
    %c0_2 = arith.constant 0 : index
    %c0_3 = arith.constant 0 : index
    %2 = vector.load %arg5[%c0_2, %c0_3] : memref<1x64xf32, #tpu.memory_space<vmem>>, vector<1x64xf32>
    %c0_4 = arith.constant 0 : index
    %c0_5 = arith.constant 0 : index
    %3 = vector.load %arg6[%c0_4, %c0_5] : memref<1x64xf32, #tpu.memory_space<vmem>>, vector<1x64xf32>
    %c0_6 = arith.constant 0 : index
    %c0_7 = arith.constant 0 : index
    %c0_8 = arith.constant 0 : index
    %c0_9 = arith.constant 0 : index
    %c0_10 = arith.constant 0 : index
    %4 = vector.load %arg2[%c0_6, %c0_7, %c0_8, %c0_9, %c0_10] : memref<1x1x8x8x64xf32, #tpu.memory_space<vmem>>, vector<1x1x8x8x64xf32>
    %5 = vector.shape_cast %4 : vector<1x1x8x8x64xf32> to vector<8x8x64xf32>
    %6 = vector.shape_cast %2 : vector<1x64xf32> to vector<1x1x64xf32>
    %7 = vector.broadcast %6 : vector<1x1x64xf32> to vector<8x8x64xf32>
    %8 = arith.mulf %5, %7 : vector<8x8x64xf32>
    %9 = vector.shape_cast %3 : vector<1x64xf32> to vector<1x1x64xf32>
    %10 = vector.broadcast %9 : vector<1x1x64xf32> to vector<8x8x64xf32>
    %11 = arith.addf %8, %10 : vector<8x8x64xf32>
    %cst_11 = arith.constant 0.000000e+00 : f32
    %12 = vector.broadcast %cst_11 : f32 to vector<8x8x64xf32>
    %13 = arith.cmpf oge, %11, %12 : vector<8x8x64xf32>
    %cst_12 = arith.constant 9.99999974E-6 : f32
    %14 = vector.broadcast %cst_12 : f32 to vector<8x8x64xf32>
    %15 = arith.mulf %14, %11 : vector<8x8x64xf32>
    %16 = arith.select %13, %11, %15 : vector<8x8x64xi1>, vector<8x8x64xf32>
    %c0_i32 = arith.constant 0 : i32
    %17 = arith.cmpi sgt, %arg1, %c0_i32 : i32
    %cst_13 = arith.constant 0.000000e+00 : f32
    %18 = vector.broadcast %cst_13 : f32 to vector<8x8x64xf32>
    %19 = arith.select %17, %16, %18 : vector<8x8x64xf32>
    %20 = arith.truncf %19 : vector<8x8x64xf32> to vector<8x8x64xbf16>
    %c1 = arith.constant 1 : index
    %c1_14 = arith.constant 1 : index
    %c0_15 = arith.constant 0 : index
    %21 = vector.load %arg12[%c1, %c1_14, %c0_15] : memref<10x10x64xbf16, #tpu.memory_space<vmem>>, vector<8x8x64xbf16>
    tpu.vector_store %arg12[%c1, %c1_14, %c0_15], %20 {strides = array<i32>} : memref<10x10x64xbf16, #tpu.memory_space<vmem>>, vector<8x8x64xbf16>,
    %c0_16 = arith.constant 0 : index
    %c0_17 = arith.constant 0 : index
    %c0_18 = arith.constant 0 : index
    %22 = vector.load %arg12[%c0_16, %c0_17, %c0_18] : memref<10x10x64xbf16, #tpu.memory_space<vmem>>, vector<8x8x64xbf16>
    %c0_19 = arith.constant 0 : index
    %c1_20 = arith.constant 1 : index
    %c0_21 = arith.constant 0 : index
    %23 = vector.load %arg12[%c0_19, %c1_20, %c0_21] : memref<10x10x64xbf16, #tpu.memory_space<vmem>>, vector<8x8x64xbf16>
    %c0_22 = arith.constant 0 : index
    %c2 = arith.constant 2 : index
    %c0_23 = arith.constant 0 : index
    %24 = vector.load %arg12[%c0_22, %c2, %c0_23] : memref<10x10x64xbf16, #tpu.memory_space<vmem>>, vector<8x8x64xbf16>
    %25 = tpu.concatenate %22, %23, %24 in 2 : vector<8x8x64xbf16>, vector<8x8x64xbf16>, vector<8x8x64xbf16> -> vector<8x8x192xbf16>
    %26 = vector.shape_cast %25 : vector<8x8x192xbf16> to vector<64x192xbf16>
    %c0_24 = arith.constant 0 : index
    %c0_25 = arith.constant 0 : index
    %c0_26 = arith.constant 0 : index
    %27 = vector.load %arg7[%c0_24, %c0_25, %c0_26] : memref<9x192x64xbf16, #tpu.memory_space<vmem>>, vector<1x192x64xbf16>
    %28 = vector.shape_cast %27 : vector<1x192x64xbf16> to vector<192x64xbf16>
    %cst_27 = arith.constant dense<0.000000e+00> : vector<64x64xf32>
    %29 = tpu.matmul %26, %28, %cst_27 {dimension_numbers = #tpu.dot_dimension_numbers<[1], [0], [0], [1], [0, 0, 1, 1], [], []>} : vector<64x192xbf16>, vector<192x64xbf16>, vector<64x64xf32> -> vector<64x64xf32>
    %c1_28 = arith.constant 1 : index
    %c0_29 = arith.constant 0 : index
    %c0_30 = arith.constant 0 : index
    %30 = vector.load %arg12[%c1_28, %c0_29, %c0_30] : memref<10x10x64xbf16, #tpu.memory_space<vmem>>, vector<8x8x64xbf16>
    %c1_31 = arith.constant 1 : index
    %c1_32 = arith.constant 1 : index
    %c0_33 = arith.constant 0 : index
    %31 = vector.load %arg12[%c1_31, %c1_32, %c0_33] : memref<10x10x64xbf16, #tpu.memory_space<vmem>>, vector<8x8x64xbf16>
    %c1_34 = arith.constant 1 : index
    %c2_35 = arith.constant 2 : index
    %c0_36 = arith.constant 0 : index
    %32 = vector.load %arg12[%c1_34, %c2_35, %c0_36] : memref<10x10x64xbf16, #tpu.memory_space<vmem>>, vector<8x8x64xbf16>
    %33 = tpu.concatenate %30, %31, %32 in 2 : vector<8x8x64xbf16>, vector<8x8x64xbf16>, vector<8x8x64xbf16> -> vector<8x8x192xbf16>
    %34 = vector.shape_cast %33 : vector<8x8x192xbf16> to vector<64x192xbf16>
    %c1_37 = arith.constant 1 : index
    %c0_38 = arith.constant 0 : index
    %c0_39 = arith.constant 0 : index
    %35 = vector.load %arg7[%c1_37, %c0_38, %c0_39] : memref<9x192x64xbf16, #tpu.memory_space<vmem>>, vector<1x192x64xbf16>
    %36 = vector.shape_cast %35 : vector<1x192x64xbf16> to vector<192x64xbf16>
    %cst_40 = arith.constant dense<0.000000e+00> : vector<64x64xf32>
    %37 = tpu.matmul %34, %36, %cst_40 {dimension_numbers = #tpu.dot_dimension_numbers<[1], [0], [0], [1], [0, 0, 1, 1], [], []>} : vector<64x192xbf16>, vector<192x64xbf16>, vector<64x64xf32> -> vector<64x64xf32>
    %38 = arith.addf %29, %37 : vector<64x64xf32>
    %c2_41 = arith.constant 2 : index
    %c0_42 = arith.constant 0 : index
    %c0_43 = arith.constant 0 : index
    %39 = vector.load %arg12[%c2_41, %c0_42, %c0_43] : memref<10x10x64xbf16, #tpu.memory_space<vmem>>, vector<8x8x64xbf16>
    %c2_44 = arith.constant 2 : index
    %c1_45 = arith.constant 1 : index
    %c0_46 = arith.constant 0 : index
    %40 = vector.load %arg12[%c2_44, %c1_45, %c0_46] : memref<10x10x64xbf16, #tpu.memory_space<vmem>>, vector<8x8x64xbf16>
    %c2_47 = arith.constant 2 : index
    %c2_48 = arith.constant 2 : index
    %c0_49 = arith.constant 0 : index
    %41 = vector.load %arg12[%c2_47, %c2_48, %c0_49] : memref<10x10x64xbf16, #tpu.memory_space<vmem>>, vector<8x8x64xbf16>
    %42 = tpu.concatenate %39, %40, %41 in 2 : vector<8x8x64xbf16>, vector<8x8x64xbf16>, vector<8x8x64xbf16> -> vector<8x8x192xbf16>
    %43 = vector.shape_cast %42 : vector<8x8x192xbf16> to vector<64x192xbf16>
    %c2_50 = arith.constant 2 : index
    %c0_51 = arith.constant 0 : index
    %c0_52 = arith.constant 0 : index
    %44 = vector.load %arg7[%c2_50, %c0_51, %c0_52] : memref<9x192x64xbf16, #tpu.memory_space<vmem>>, vector<1x192x64xbf16>
    %45 = vector.shape_cast %44 : vector<1x192x64xbf16> to vector<192x64xbf16>
    %cst_53 = arith.constant dense<0.000000e+00> : vector<64x64xf32>
    %46 = tpu.matmul %43, %45, %cst_53 {dimension_numbers = #tpu.dot_dimension_numbers<[1], [0], [0], [1], [0, 0, 1, 1], [], []>} : vector<64x192xbf16>, vector<192x64xbf16>, vector<64x64xf32> -> vector<64x64xf32>
    %47 = arith.addf %38, %46 : vector<64x64xf32>
    %c0_54 = arith.constant 0 : index
    %c0_55 = arith.constant 0 : index
    %48 = vector.load %arg13[%c0_54, %c0_55] : memref<64x64xf32, #tpu.memory_space<vmem>>, vector<64x64xf32>
    tpu.vector_store %arg13[%c0_54, %c0_55], %47 {strides = array<i32>} : memref<64x64xf32, #tpu.memory_space<vmem>>, vector<64x64xf32>,
    %c0_56 = arith.constant 0 : index
    %c0_57 = arith.constant 0 : index
    %c0_58 = arith.constant 0 : index
    %c0_59 = arith.constant 0 : index
    %c0_60 = arith.constant 0 : index
    %49 = vector.load %arg3[%c0_56, %c0_57, %c0_58, %c0_59, %c0_60] : memref<1x1x8x8x64xf32, #tpu.memory_space<vmem>>, vector<1x1x8x8x64xf32>
    %50 = vector.shape_cast %49 : vector<1x1x8x8x64xf32> to vector<8x8x64xf32>
    %51 = vector.shape_cast %2 : vector<1x64xf32> to vector<1x1x64xf32>
    %52 = vector.broadcast %51 : vector<1x1x64xf32> to vector<8x8x64xf32>
    %53 = arith.mulf %50, %52 : vector<8x8x64xf32>
    %54 = vector.shape_cast %3 : vector<1x64xf32> to vector<1x1x64xf32>
    %55 = vector.broadcast %54 : vector<1x1x64xf32> to vector<8x8x64xf32>
    %56 = arith.addf %53, %55 : vector<8x8x64xf32>
    %cst_61 = arith.constant 0.000000e+00 : f32
    %57 = vector.broadcast %cst_61 : f32 to vector<8x8x64xf32>
    %58 = arith.cmpf oge, %56, %57 : vector<8x8x64xf32>
    %cst_62 = arith.constant 9.99999974E-6 : f32
    %59 = vector.broadcast %cst_62 : f32 to vector<8x8x64xf32>
    %60 = arith.mulf %59, %56 : vector<8x8x64xf32>
    %61 = arith.select %58, %56, %60 : vector<8x8x64xi1>, vector<8x8x64xf32>
    %62 = arith.truncf %61 : vector<8x8x64xf32> to vector<8x8x64xbf16>
    %c1_63 = arith.constant 1 : index
    %c1_64 = arith.constant 1 : index
    %c0_65 = arith.constant 0 : index
    %63 = vector.load %arg12[%c1_63, %c1_64, %c0_65] : memref<10x10x64xbf16, #tpu.memory_space<vmem>>, vector<8x8x64xbf16>
    tpu.vector_store %arg12[%c1_63, %c1_64, %c0_65], %62 {strides = array<i32>} : memref<10x10x64xbf16, #tpu.memory_space<vmem>>, vector<8x8x64xbf16>,
    %c0_66 = arith.constant 0 : index
    %c0_67 = arith.constant 0 : index
    %c0_68 = arith.constant 0 : index
    %64 = vector.load %arg12[%c0_66, %c0_67, %c0_68] : memref<10x10x64xbf16, #tpu.memory_space<vmem>>, vector<8x8x64xbf16>
    %c0_69 = arith.constant 0 : index
    %c1_70 = arith.constant 1 : index
    %c0_71 = arith.constant 0 : index
    %65 = vector.load %arg12[%c0_69, %c1_70, %c0_71] : memref<10x10x64xbf16, #tpu.memory_space<vmem>>, vector<8x8x64xbf16>
    %c0_72 = arith.constant 0 : index
    %c2_73 = arith.constant 2 : index
    %c0_74 = arith.constant 0 : index
    %66 = vector.load %arg12[%c0_72, %c2_73, %c0_74] : memref<10x10x64xbf16, #tpu.memory_space<vmem>>, vector<8x8x64xbf16>
    %67 = tpu.concatenate %64, %65, %66 in 2 : vector<8x8x64xbf16>, vector<8x8x64xbf16>, vector<8x8x64xbf16> -> vector<8x8x192xbf16>
    %68 = vector.shape_cast %67 : vector<8x8x192xbf16> to vector<64x192xbf16>
    %c3 = arith.constant 3 : index
    %c0_75 = arith.constant 0 : index
    %c0_76 = arith.constant 0 : index
    %69 = vector.load %arg7[%c3, %c0_75, %c0_76] : memref<9x192x64xbf16, #tpu.memory_space<vmem>>, vector<1x192x64xbf16>
    %70 = vector.shape_cast %69 : vector<1x192x64xbf16> to vector<192x64xbf16>
    %cst_77 = arith.constant dense<0.000000e+00> : vector<64x64xf32>
    %71 = tpu.matmul %68, %70, %cst_77 {dimension_numbers = #tpu.dot_dimension_numbers<[1], [0], [0], [1], [0, 0, 1, 1], [], []>} : vector<64x192xbf16>, vector<192x64xbf16>, vector<64x64xf32> -> vector<64x64xf32>
    %c1_78 = arith.constant 1 : index
    %c0_79 = arith.constant 0 : index
    %c0_80 = arith.constant 0 : index
    %72 = vector.load %arg12[%c1_78, %c0_79, %c0_80] : memref<10x10x64xbf16, #tpu.memory_space<vmem>>, vector<8x8x64xbf16>
    %c1_81 = arith.constant 1 : index
    %c1_82 = arith.constant 1 : index
    %c0_83 = arith.constant 0 : index
    %73 = vector.load %arg12[%c1_81, %c1_82, %c0_83] : memref<10x10x64xbf16, #tpu.memory_space<vmem>>, vector<8x8x64xbf16>
    %c1_84 = arith.constant 1 : index
    %c2_85 = arith.constant 2 : index
    %c0_86 = arith.constant 0 : index
    %74 = vector.load %arg12[%c1_84, %c2_85, %c0_86] : memref<10x10x64xbf16, #tpu.memory_space<vmem>>, vector<8x8x64xbf16>
    %75 = tpu.concatenate %72, %73, %74 in 2 : vector<8x8x64xbf16>, vector<8x8x64xbf16>, vector<8x8x64xbf16> -> vector<8x8x192xbf16>
    %76 = vector.shape_cast %75 : vector<8x8x192xbf16> to vector<64x192xbf16>
    %c4 = arith.constant 4 : index
    %c0_87 = arith.constant 0 : index
    %c0_88 = arith.constant 0 : index
    %77 = vector.load %arg7[%c4, %c0_87, %c0_88] : memref<9x192x64xbf16, #tpu.memory_space<vmem>>, vector<1x192x64xbf16>
    %78 = vector.shape_cast %77 : vector<1x192x64xbf16> to vector<192x64xbf16>
    %cst_89 = arith.constant dense<0.000000e+00> : vector<64x64xf32>
    %79 = tpu.matmul %76, %78, %cst_89 {dimension_numbers = #tpu.dot_dimension_numbers<[1], [0], [0], [1], [0, 0, 1, 1], [], []>} : vector<64x192xbf16>, vector<192x64xbf16>, vector<64x64xf32> -> vector<64x64xf32>
    %80 = arith.addf %71, %79 : vector<64x64xf32>
    %c2_90 = arith.constant 2 : index
    %c0_91 = arith.constant 0 : index
    %c0_92 = arith.constant 0 : index
    %81 = vector.load %arg12[%c2_90, %c0_91, %c0_92] : memref<10x10x64xbf16, #tpu.memory_space<vmem>>, vector<8x8x64xbf16>
    %c2_93 = arith.constant 2 : index
    %c1_94 = arith.constant 1 : index
    %c0_95 = arith.constant 0 : index
    %82 = vector.load %arg12[%c2_93, %c1_94, %c0_95] : memref<10x10x64xbf16, #tpu.memory_space<vmem>>, vector<8x8x64xbf16>
    %c2_96 = arith.constant 2 : index
    %c2_97 = arith.constant 2 : index
    %c0_98 = arith.constant 0 : index
    %83 = vector.load %arg12[%c2_96, %c2_97, %c0_98] : memref<10x10x64xbf16, #tpu.memory_space<vmem>>, vector<8x8x64xbf16>
    %84 = tpu.concatenate %81, %82, %83 in 2 : vector<8x8x64xbf16>, vector<8x8x64xbf16>, vector<8x8x64xbf16> -> vector<8x8x192xbf16>
    %85 = vector.shape_cast %84 : vector<8x8x192xbf16> to vector<64x192xbf16>
    %c5 = arith.constant 5 : index
    %c0_99 = arith.constant 0 : index
    %c0_100 = arith.constant 0 : index
    %86 = vector.load %arg7[%c5, %c0_99, %c0_100] : memref<9x192x64xbf16, #tpu.memory_space<vmem>>, vector<1x192x64xbf16>
    %87 = vector.shape_cast %86 : vector<1x192x64xbf16> to vector<192x64xbf16>
    %cst_101 = arith.constant dense<0.000000e+00> : vector<64x64xf32>
    %88 = tpu.matmul %85, %87, %cst_101 {dimension_numbers = #tpu.dot_dimension_numbers<[1], [0], [0], [1], [0, 0, 1, 1], [], []>} : vector<64x192xbf16>, vector<192x64xbf16>, vector<64x64xf32> -> vector<64x64xf32>
    %89 = arith.addf %80, %88 : vector<64x64xf32>
    %c0_102 = arith.constant 0 : index
    %c0_103 = arith.constant 0 : index
    %90 = vector.load %arg13[%c0_102, %c0_103] : memref<64x64xf32, #tpu.memory_space<vmem>>, vector<64x64xf32>
    %91 = arith.addf %90, %89 : vector<64x64xf32>
    %c0_104 = arith.constant 0 : index
    %c0_105 = arith.constant 0 : index
    %92 = vector.load %arg13[%c0_104, %c0_105] : memref<64x64xf32, #tpu.memory_space<vmem>>, vector<64x64xf32>
    tpu.vector_store %arg13[%c0_104, %c0_105], %91 {strides = array<i32>} : memref<64x64xf32, #tpu.memory_space<vmem>>, vector<64x64xf32>,
    %c0_106 = arith.constant 0 : index
    %c0_107 = arith.constant 0 : index
    %c0_108 = arith.constant 0 : index
    %c0_109 = arith.constant 0 : index
    %c0_110 = arith.constant 0 : index
    %93 = vector.load %arg4[%c0_106, %c0_107, %c0_108, %c0_109, %c0_110] : memref<1x1x8x8x64xf32, #tpu.memory_space<vmem>>, vector<1x1x8x8x64xf32>
    %94 = vector.shape_cast %93 : vector<1x1x8x8x64xf32> to vector<8x8x64xf32>
    %95 = vector.shape_cast %2 : vector<1x64xf32> to vector<1x1x64xf32>
    %96 = vector.broadcast %95 : vector<1x1x64xf32> to vector<8x8x64xf32>
    %97 = arith.mulf %94, %96 : vector<8x8x64xf32>
    %98 = vector.shape_cast %3 : vector<1x64xf32> to vector<1x1x64xf32>
    %99 = vector.broadcast %98 : vector<1x1x64xf32> to vector<8x8x64xf32>
    %100 = arith.addf %97, %99 : vector<8x8x64xf32>
    %cst_111 = arith.constant 0.000000e+00 : f32
    %101 = vector.broadcast %cst_111 : f32 to vector<8x8x64xf32>
    %102 = arith.cmpf oge, %100, %101 : vector<8x8x64xf32>
    %cst_112 = arith.constant 9.99999974E-6 : f32
    %103 = vector.broadcast %cst_112 : f32 to vector<8x8x64xf32>
    %104 = arith.mulf %103, %100 : vector<8x8x64xf32>
    %105 = arith.select %102, %100, %104 : vector<8x8x64xi1>, vector<8x8x64xf32>
    %c7_i32 = arith.constant 7 : i32
    %106 = arith.cmpi slt, %arg1, %c7_i32 : i32
    %cst_113 = arith.constant 0.000000e+00 : f32
    %107 = vector.broadcast %cst_113 : f32 to vector<8x8x64xf32>
    %108 = arith.select %106, %105, %107 : vector<8x8x64xf32>
    %109 = arith.truncf %108 : vector<8x8x64xf32> to vector<8x8x64xbf16>
    %c1_114 = arith.constant 1 : index
    %c1_115 = arith.constant 1 : index
    %c0_116 = arith.constant 0 : index
    %110 = vector.load %arg12[%c1_114, %c1_115, %c0_116] : memref<10x10x64xbf16, #tpu.memory_space<vmem>>, vector<8x8x64xbf16>
    tpu.vector_store %arg12[%c1_114, %c1_115, %c0_116], %109 {strides = array<i32>} : memref<10x10x64xbf16, #tpu.memory_space<vmem>>, vector<8x8x64xbf16>,
    %c0_117 = arith.constant 0 : index
    %c0_118 = arith.constant 0 : index
    %c0_119 = arith.constant 0 : index
    %111 = vector.load %arg12[%c0_117, %c0_118, %c0_119] : memref<10x10x64xbf16, #tpu.memory_space<vmem>>, vector<8x8x64xbf16>
    %c0_120 = arith.constant 0 : index
    %c1_121 = arith.constant 1 : index
    %c0_122 = arith.constant 0 : index
    %112 = vector.load %arg12[%c0_120, %c1_121, %c0_122] : memref<10x10x64xbf16, #tpu.memory_space<vmem>>, vector<8x8x64xbf16>
    %c0_123 = arith.constant 0 : index
    %c2_124 = arith.constant 2 : index
    %c0_125 = arith.constant 0 : index
    %113 = vector.load %arg12[%c0_123, %c2_124, %c0_125] : memref<10x10x64xbf16, #tpu.memory_space<vmem>>, vector<8x8x64xbf16>
    %114 = tpu.concatenate %111, %112, %113 in 2 : vector<8x8x64xbf16>, vector<8x8x64xbf16>, vector<8x8x64xbf16> -> vector<8x8x192xbf16>
    %115 = vector.shape_cast %114 : vector<8x8x192xbf16> to vector<64x192xbf16>
    %c6 = arith.constant 6 : index
    %c0_126 = arith.constant 0 : index
    %c0_127 = arith.constant 0 : index
    %116 = vector.load %arg7[%c6, %c0_126, %c0_127] : memref<9x192x64xbf16, #tpu.memory_space<vmem>>, vector<1x192x64xbf16>
    %117 = vector.shape_cast %116 : vector<1x192x64xbf16> to vector<192x64xbf16>
    %cst_128 = arith.constant dense<0.000000e+00> : vector<64x64xf32>
    %118 = tpu.matmul %115, %117, %cst_128 {dimension_numbers = #tpu.dot_dimension_numbers<[1], [0], [0], [1], [0, 0, 1, 1], [], []>} : vector<64x192xbf16>, vector<192x64xbf16>, vector<64x64xf32> -> vector<64x64xf32>
    %c1_129 = arith.constant 1 : index
    %c0_130 = arith.constant 0 : index
    %c0_131 = arith.constant 0 : index
    %119 = vector.load %arg12[%c1_129, %c0_130, %c0_131] : memref<10x10x64xbf16, #tpu.memory_space<vmem>>, vector<8x8x64xbf16>
    %c1_132 = arith.constant 1 : index
    %c1_133 = arith.constant 1 : index
    %c0_134 = arith.constant 0 : index
    %120 = vector.load %arg12[%c1_132, %c1_133, %c0_134] : memref<10x10x64xbf16, #tpu.memory_space<vmem>>, vector<8x8x64xbf16>
    %c1_135 = arith.constant 1 : index
    %c2_136 = arith.constant 2 : index
    %c0_137 = arith.constant 0 : index
    %121 = vector.load %arg12[%c1_135, %c2_136, %c0_137] : memref<10x10x64xbf16, #tpu.memory_space<vmem>>, vector<8x8x64xbf16>
    %122 = tpu.concatenate %119, %120, %121 in 2 : vector<8x8x64xbf16>, vector<8x8x64xbf16>, vector<8x8x64xbf16> -> vector<8x8x192xbf16>
    %123 = vector.shape_cast %122 : vector<8x8x192xbf16> to vector<64x192xbf16>
    %c7 = arith.constant 7 : index
    %c0_138 = arith.constant 0 : index
    %c0_139 = arith.constant 0 : index
    %124 = vector.load %arg7[%c7, %c0_138, %c0_139] : memref<9x192x64xbf16, #tpu.memory_space<vmem>>, vector<1x192x64xbf16>
    %125 = vector.shape_cast %124 : vector<1x192x64xbf16> to vector<192x64xbf16>
    %cst_140 = arith.constant dense<0.000000e+00> : vector<64x64xf32>
    %126 = tpu.matmul %123, %125, %cst_140 {dimension_numbers = #tpu.dot_dimension_numbers<[1], [0], [0], [1], [0, 0, 1, 1], [], []>} : vector<64x192xbf16>, vector<192x64xbf16>, vector<64x64xf32> -> vector<64x64xf32>
    %127 = arith.addf %118, %126 : vector<64x64xf32>
    %c2_141 = arith.constant 2 : index
    %c0_142 = arith.constant 0 : index
    %c0_143 = arith.constant 0 : index
    %128 = vector.load %arg12[%c2_141, %c0_142, %c0_143] : memref<10x10x64xbf16, #tpu.memory_space<vmem>>, vector<8x8x64xbf16>
    %c2_144 = arith.constant 2 : index
    %c1_145 = arith.constant 1 : index
    %c0_146 = arith.constant 0 : index
    %129 = vector.load %arg12[%c2_144, %c1_145, %c0_146] : memref<10x10x64xbf16, #tpu.memory_space<vmem>>, vector<8x8x64xbf16>
    %c2_147 = arith.constant 2 : index
    %c2_148 = arith.constant 2 : index
    %c0_149 = arith.constant 0 : index
    %130 = vector.load %arg12[%c2_147, %c2_148, %c0_149] : memref<10x10x64xbf16, #tpu.memory_space<vmem>>, vector<8x8x64xbf16>
    %131 = tpu.concatenate %128, %129, %130 in 2 : vector<8x8x64xbf16>, vector<8x8x64xbf16>, vector<8x8x64xbf16> -> vector<8x8x192xbf16>
    %132 = vector.shape_cast %131 : vector<8x8x192xbf16> to vector<64x192xbf16>
    %c8 = arith.constant 8 : index
    %c0_150 = arith.constant 0 : index
    %c0_151 = arith.constant 0 : index
    %133 = vector.load %arg7[%c8, %c0_150, %c0_151] : memref<9x192x64xbf16, #tpu.memory_space<vmem>>, vector<1x192x64xbf16>
    %134 = vector.shape_cast %133 : vector<1x192x64xbf16> to vector<192x64xbf16>
    %cst_152 = arith.constant dense<0.000000e+00> : vector<64x64xf32>
    %135 = tpu.matmul %132, %134, %cst_152 {dimension_numbers = #tpu.dot_dimension_numbers<[1], [0], [0], [1], [0, 0, 1, 1], [], []>} : vector<64x192xbf16>, vector<192x64xbf16>, vector<64x64xf32> -> vector<64x64xf32>
    %136 = arith.addf %127, %135 : vector<64x64xf32>
    %c0_153 = arith.constant 0 : index
    %c0_154 = arith.constant 0 : index
    %137 = vector.load %arg13[%c0_153, %c0_154] : memref<64x64xf32, #tpu.memory_space<vmem>>, vector<64x64xf32>
    %138 = arith.addf %137, %136 : vector<64x64xf32>
    %c0_155 = arith.constant 0 : index
    %c0_156 = arith.constant 0 : index
    %139 = vector.load %arg13[%c0_155, %c0_156] : memref<64x64xf32, #tpu.memory_space<vmem>>, vector<64x64xf32>
    tpu.vector_store %arg13[%c0_155, %c0_156], %138 {strides = array<i32>} : memref<64x64xf32, #tpu.memory_space<vmem>>, vector<64x64xf32>,
    %c0_157 = arith.constant 0 : index
    %c0_158 = arith.constant 0 : index
    %140 = vector.load %arg13[%c0_157, %c0_158] : memref<64x64xf32, #tpu.memory_space<vmem>>, vector<64x64xf32>
    %c0_159 = arith.constant 0 : index
    %c0_160 = arith.constant 0 : index
    %141 = vector.load %arg8[%c0_159, %c0_160] : memref<1x64xf32, #tpu.memory_space<vmem>>, vector<1x64xf32>
    %142 = vector.broadcast %141 : vector<1x64xf32> to vector<64x64xf32>
    %143 = arith.addf %140, %142 : vector<64x64xf32>
    %cst_161 = arith.constant dense<0.000000e+00> : vector<64xf32>
    %144 = vector.multi_reduction <add>, %143, %cst_161 [0] : vector<64x64xf32> to vector<64xf32>
    %145 = vector.shape_cast %144 : vector<64xf32> to vector<1x64xf32>
    %c0_162 = arith.constant 0 : index
    %c0_163 = arith.constant 0 : index
    %c0_164 = arith.constant 0 : index
    %c0_165 = arith.constant 0 : index
    %146 = vector.load %arg10[%c0_162, %c0_163, %c0_164, %c0_165] : memref<1x1x1x64xf32, #tpu.memory_space<vmem>>, vector<1x1x1x64xf32>
    %147 = vector.shape_cast %146 : vector<1x1x1x64xf32> to vector<1x64xf32>
    %148 = vector.shape_cast %145 : vector<1x64xf32> to vector<1x1x1x64xf32>
    tpu.vector_store %arg10[%c0_162, %c0_163, %c0_164, %c0_165], %148 {strides = array<i32>} : memref<1x1x1x64xf32, #tpu.memory_space<vmem>>, vector<1x1x1x64xf32>,
    %149 = arith.mulf %143, %143 : vector<64x64xf32>
    %cst_166 = arith.constant dense<0.000000e+00> : vector<64xf32>
    %150 = vector.multi_reduction <add>, %149, %cst_166 [0] : vector<64x64xf32> to vector<64xf32>
    %151 = vector.shape_cast %150 : vector<64xf32> to vector<1x64xf32>
    %c0_167 = arith.constant 0 : index
    %c0_168 = arith.constant 0 : index
    %c0_169 = arith.constant 0 : index
    %c0_170 = arith.constant 0 : index
    %152 = vector.load %arg11[%c0_167, %c0_168, %c0_169, %c0_170] : memref<1x1x1x64xf32, #tpu.memory_space<vmem>>, vector<1x1x1x64xf32>
    %153 = vector.shape_cast %152 : vector<1x1x1x64xf32> to vector<1x64xf32>
    %154 = vector.shape_cast %151 : vector<1x64xf32> to vector<1x1x1x64xf32>
    tpu.vector_store %arg11[%c0_167, %c0_168, %c0_169, %c0_170], %154 {strides = array<i32>} : memref<1x1x1x64xf32, #tpu.memory_space<vmem>>, vector<1x1x1x64xf32>,
    %155 = vector.shape_cast %143 : vector<64x64xf32> to vector<8x8x64xf32>
    %c0_171 = arith.constant 0 : index
    %c0_172 = arith.constant 0 : index
    %c0_173 = arith.constant 0 : index
    %c0_174 = arith.constant 0 : index
    %c0_175 = arith.constant 0 : index
    %156 = vector.load %arg9[%c0_171, %c0_172, %c0_173, %c0_174, %c0_175] : memref<1x1x8x8x64xf32, #tpu.memory_space<vmem>>, vector<1x1x8x8x64xf32>
    %157 = vector.shape_cast %156 : vector<1x1x8x8x64xf32> to vector<8x8x64xf32>
    %158 = vector.shape_cast %155 : vector<8x8x64xf32> to vector<1x1x8x8x64xf32>
    tpu.vector_store %arg9[%c0_171, %c0_172, %c0_173, %c0_174, %c0_175], %158 {strides = array<i32>} : memref<1x1x8x8x64xf32, #tpu.memory_space<vmem>>, vector<1x1x8x8x64xf32>,
    return
  }
  func.func @transform_0(%arg0: i32, %arg1: i32) -> (i32, i32, i32, i32, i32) {
    %c1_i32 = arith.constant 1 : i32
    %0 = arith.subi %arg1, %c1_i32 : i32
    %c0_i32 = arith.constant 0 : i32
    %1 = arith.maxsi %0, %c0_i32 : i32
    %c0_i32_0 = arith.constant 0 : i32
    %c0_i32_1 = arith.constant 0 : i32
    %c0_i32_2 = arith.constant 0 : i32
    %c0_i32_3 = arith.constant 0 : i32
    return %arg0, %1, %c0_i32_0, %c0_i32_1, %c0_i32_2 : i32, i32, i32, i32, i32
  }
  func.func @transform_1(%arg0: i32, %arg1: i32) -> (i32, i32, i32, i32, i32) {
    %c0_i32 = arith.constant 0 : i32
    %c0_i32_0 = arith.constant 0 : i32
    %c0_i32_1 = arith.constant 0 : i32
    %c0_i32_2 = arith.constant 0 : i32
    return %arg0, %arg1, %c0_i32, %c0_i32_0, %c0_i32_1 : i32, i32, i32, i32, i32
  }
  func.func @transform_2(%arg0: i32, %arg1: i32) -> (i32, i32, i32, i32, i32) {
    %c1_i32 = arith.constant 1 : i32
    %0 = arith.addi %arg1, %c1_i32 : i32
    %c7_i32 = arith.constant 7 : i32
    %1 = arith.minsi %0, %c7_i32 : i32
    %c0_i32 = arith.constant 0 : i32
    %c0_i32_0 = arith.constant 0 : i32
    %c0_i32_1 = arith.constant 0 : i32
    %c0_i32_2 = arith.constant 0 : i32
    return %arg0, %1, %c0_i32, %c0_i32_0, %c0_i32_1 : i32, i32, i32, i32, i32
  }
  func.func @transform_3(%arg0: i32, %arg1: i32) -> (i32, i32) {
    %c0_i32 = arith.constant 0 : i32
    %c0_i32_0 = arith.constant 0 : i32
    %c0_i32_1 = arith.constant 0 : i32
    return %c0_i32, %c0_i32_0 : i32, i32
  }
  func.func @transform_4(%arg0: i32, %arg1: i32) -> (i32, i32) {
    %c0_i32 = arith.constant 0 : i32
    %c0_i32_0 = arith.constant 0 : i32
    %c0_i32_1 = arith.constant 0 : i32
    return %c0_i32, %c0_i32_0 : i32, i32
  }
  func.func @transform_5(%arg0: i32, %arg1: i32) -> (i32, i32, i32) {
    %c0_i32 = arith.constant 0 : i32
    %c0_i32_0 = arith.constant 0 : i32
    %c0_i32_1 = arith.constant 0 : i32
    %c0_i32_2 = arith.constant 0 : i32
    return %c0_i32, %c0_i32_0, %c0_i32_1 : i32, i32, i32
  }
  func.func @transform_6(%arg0: i32, %arg1: i32) -> (i32, i32) {
    %c0_i32 = arith.constant 0 : i32
    %c0_i32_0 = arith.constant 0 : i32
    %c0_i32_1 = arith.constant 0 : i32
    return %c0_i32, %c0_i32_0 : i32, i32
  }
  func.func @transform_7(%arg0: i32, %arg1: i32) -> (i32, i32, i32, i32, i32) {
    %c0_i32 = arith.constant 0 : i32
    %c0_i32_0 = arith.constant 0 : i32
    %c0_i32_1 = arith.constant 0 : i32
    %c0_i32_2 = arith.constant 0 : i32
    return %arg0, %arg1, %c0_i32, %c0_i32_0, %c0_i32_1 : i32, i32, i32, i32, i32
  }
  func.func @transform_8(%arg0: i32, %arg1: i32) -> (i32, i32, i32, i32) {
    %c0_i32 = arith.constant 0 : i32
    %c0_i32_0 = arith.constant 0 : i32
    %c0_i32_1 = arith.constant 0 : i32
    return %arg0, %arg1, %c0_i32, %c0_i32_0 : i32, i32, i32, i32
  }
  func.func @transform_9(%arg0: i32, %arg1: i32) -> (i32, i32, i32, i32) {
    %c0_i32 = arith.constant 0 : i32
    %c0_i32_0 = arith.constant 0 : i32
    %c0_i32_1 = arith.constant 0 : i32
    return %arg0, %arg1, %c0_i32, %c0_i32_0 : i32, i32, i32, i32
  }
}

module attributes {stable_mosaic.version = 11 : i64} {
  func.func @kernel(%arg0: i32, %arg1: i32, %arg2: memref<1x1x8x8x64xf32, #tpu.memory_space<vmem>>, %arg3: memref<1x1x8x8x64xf32, #tpu.memory_space<vmem>>, %arg4: memref<1x1x8x8x64xf32, #tpu.memory_space<vmem>>, %arg5: memref<1x64xf32, #tpu.memory_space<vmem>>, %arg6: memref<1x64xf32, #tpu.memory_space<vmem>>, %arg7: memref<9x192x64xbf16, #tpu.memory_space<vmem>>, %arg8: memref<1x64xf32, #tpu.memory_space<vmem>>, %arg9: memref<1x1x8x8x64xf32, #tpu.memory_space<vmem>>, %arg10: memref<1x1x8x8x64xf32, #tpu.memory_space<vmem>>, %arg11: memref<10x10x64xbf16, #tpu.memory_space<vmem>>, %arg12: memref<64x64xf32, #tpu.memory_space<vmem>>) attributes {dimension_semantics = [#tpu.dimension_semantics<parallel>, #tpu.dimension_semantics<parallel>], iteration_bounds = array<i64: 2, 8>, scalar_prefetch = 0 : i64, scratch_operands = 2 : i64, tpu.core_type = #tpu.core_type<tc>, window_params = [{transform_indices = @transform_0, window_bounds = array<i64: 1, 1, 8, 8, 64>}, {transform_indices = @transform_1, window_bounds = array<i64: 1, 1, 8, 8, 64>}, {transform_indices = @transform_2, window_bounds = array<i64: 1, 1, 8, 8, 64>}, {pipeline_mode = #tpu.pipeline_mode<synchronous>, transform_indices = @transform_3, window_bounds = array<i64: 1, 64>}, {pipeline_mode = #tpu.pipeline_mode<synchronous>, transform_indices = @transform_4, window_bounds = array<i64: 1, 64>}, {pipeline_mode = #tpu.pipeline_mode<synchronous>, transform_indices = @transform_5, window_bounds = array<i64: 9, 192, 64>}, {pipeline_mode = #tpu.pipeline_mode<synchronous>, transform_indices = @transform_6, window_bounds = array<i64: 1, 64>}, {transform_indices = @transform_7, window_bounds = array<i64: 1, 1, 8, 8, 64>}, {transform_indices = @transform_8, window_bounds = array<i64: 1, 1, 8, 8, 64>}]} {
    %cst = arith.constant 0.000000e+00 : bf16
    %0 = vector.broadcast %cst : bf16 to vector<10x10x64xbf16>
    %c0 = arith.constant 0 : index
    %c0_0 = arith.constant 0 : index
    %c0_1 = arith.constant 0 : index
    %1 = vector.load %arg11[%c0, %c0_0, %c0_1] : memref<10x10x64xbf16, #tpu.memory_space<vmem>>, vector<10x10x64xbf16>
    tpu.vector_store %arg11[%c0, %c0_0, %c0_1], %0 {strides = array<i32>} : memref<10x10x64xbf16, #tpu.memory_space<vmem>>, vector<10x10x64xbf16>,
    %c0_2 = arith.constant 0 : index
    %c0_3 = arith.constant 0 : index
    %2 = vector.load %arg5[%c0_2, %c0_3] : memref<1x64xf32, #tpu.memory_space<vmem>>, vector<1x64xf32>
    %c0_4 = arith.constant 0 : index
    %c0_5 = arith.constant 0 : index
    %3 = vector.load %arg6[%c0_4, %c0_5] : memref<1x64xf32, #tpu.memory_space<vmem>>, vector<1x64xf32>
    %c0_6 = arith.constant 0 : index
    %c0_7 = arith.constant 0 : index
    %c0_8 = arith.constant 0 : index
    %c0_9 = arith.constant 0 : index
    %c0_10 = arith.constant 0 : index
    %4 = vector.load %arg2[%c0_6, %c0_7, %c0_8, %c0_9, %c0_10] : memref<1x1x8x8x64xf32, #tpu.memory_space<vmem>>, vector<1x1x8x8x64xf32>
    %5 = vector.shape_cast %4 : vector<1x1x8x8x64xf32> to vector<8x8x64xf32>
    %6 = vector.shape_cast %2 : vector<1x64xf32> to vector<1x1x64xf32>
    %7 = vector.broadcast %6 : vector<1x1x64xf32> to vector<8x8x64xf32>
    %8 = arith.mulf %5, %7 : vector<8x8x64xf32>
    %9 = vector.shape_cast %3 : vector<1x64xf32> to vector<1x1x64xf32>
    %10 = vector.broadcast %9 : vector<1x1x64xf32> to vector<8x8x64xf32>
    %11 = arith.addf %8, %10 : vector<8x8x64xf32>
    %cst_11 = arith.constant 0.000000e+00 : f32
    %12 = vector.broadcast %cst_11 : f32 to vector<8x8x64xf32>
    %13 = arith.cmpf oge, %11, %12 : vector<8x8x64xf32>
    %cst_12 = arith.constant 9.99999974E-6 : f32
    %14 = vector.broadcast %cst_12 : f32 to vector<8x8x64xf32>
    %15 = arith.mulf %14, %11 : vector<8x8x64xf32>
    %16 = arith.select %13, %11, %15 : vector<8x8x64xi1>, vector<8x8x64xf32>
    %c0_i32 = arith.constant 0 : i32
    %17 = arith.cmpi sgt, %arg1, %c0_i32 : i32
    %cst_13 = arith.constant 0.000000e+00 : f32
    %18 = vector.broadcast %cst_13 : f32 to vector<8x8x64xf32>
    %19 = arith.select %17, %16, %18 : vector<8x8x64xf32>
    %20 = arith.truncf %19 : vector<8x8x64xf32> to vector<8x8x64xbf16>
    %c1 = arith.constant 1 : index
    %c1_14 = arith.constant 1 : index
    %c0_15 = arith.constant 0 : index
    %21 = vector.load %arg11[%c1, %c1_14, %c0_15] : memref<10x10x64xbf16, #tpu.memory_space<vmem>>, vector<8x8x64xbf16>
    tpu.vector_store %arg11[%c1, %c1_14, %c0_15], %20 {strides = array<i32>} : memref<10x10x64xbf16, #tpu.memory_space<vmem>>, vector<8x8x64xbf16>,
    %c0_16 = arith.constant 0 : index
    %c0_17 = arith.constant 0 : index
    %c0_18 = arith.constant 0 : index
    %22 = vector.load %arg11[%c0_16, %c0_17, %c0_18] : memref<10x10x64xbf16, #tpu.memory_space<vmem>>, vector<8x8x64xbf16>
    %c0_19 = arith.constant 0 : index
    %c1_20 = arith.constant 1 : index
    %c0_21 = arith.constant 0 : index
    %23 = vector.load %arg11[%c0_19, %c1_20, %c0_21] : memref<10x10x64xbf16, #tpu.memory_space<vmem>>, vector<8x8x64xbf16>
    %c0_22 = arith.constant 0 : index
    %c2 = arith.constant 2 : index
    %c0_23 = arith.constant 0 : index
    %24 = vector.load %arg11[%c0_22, %c2, %c0_23] : memref<10x10x64xbf16, #tpu.memory_space<vmem>>, vector<8x8x64xbf16>
    %25 = tpu.concatenate %22, %23, %24 in 2 : vector<8x8x64xbf16>, vector<8x8x64xbf16>, vector<8x8x64xbf16> -> vector<8x8x192xbf16>
    %26 = vector.shape_cast %25 : vector<8x8x192xbf16> to vector<64x192xbf16>
    %c0_24 = arith.constant 0 : index
    %c0_25 = arith.constant 0 : index
    %c0_26 = arith.constant 0 : index
    %27 = vector.load %arg7[%c0_24, %c0_25, %c0_26] : memref<9x192x64xbf16, #tpu.memory_space<vmem>>, vector<1x192x64xbf16>
    %28 = vector.shape_cast %27 : vector<1x192x64xbf16> to vector<192x64xbf16>
    %cst_27 = arith.constant dense<0.000000e+00> : vector<64x64xf32>
    %29 = tpu.matmul %26, %28, %cst_27 {dimension_numbers = #tpu.dot_dimension_numbers<[1], [0], [0], [1], [0, 0, 1, 1], [], []>} : vector<64x192xbf16>, vector<192x64xbf16>, vector<64x64xf32> -> vector<64x64xf32>
    %c1_28 = arith.constant 1 : index
    %c0_29 = arith.constant 0 : index
    %c0_30 = arith.constant 0 : index
    %30 = vector.load %arg11[%c1_28, %c0_29, %c0_30] : memref<10x10x64xbf16, #tpu.memory_space<vmem>>, vector<8x8x64xbf16>
    %c1_31 = arith.constant 1 : index
    %c1_32 = arith.constant 1 : index
    %c0_33 = arith.constant 0 : index
    %31 = vector.load %arg11[%c1_31, %c1_32, %c0_33] : memref<10x10x64xbf16, #tpu.memory_space<vmem>>, vector<8x8x64xbf16>
    %c1_34 = arith.constant 1 : index
    %c2_35 = arith.constant 2 : index
    %c0_36 = arith.constant 0 : index
    %32 = vector.load %arg11[%c1_34, %c2_35, %c0_36] : memref<10x10x64xbf16, #tpu.memory_space<vmem>>, vector<8x8x64xbf16>
    %33 = tpu.concatenate %30, %31, %32 in 2 : vector<8x8x64xbf16>, vector<8x8x64xbf16>, vector<8x8x64xbf16> -> vector<8x8x192xbf16>
    %34 = vector.shape_cast %33 : vector<8x8x192xbf16> to vector<64x192xbf16>
    %c1_37 = arith.constant 1 : index
    %c0_38 = arith.constant 0 : index
    %c0_39 = arith.constant 0 : index
    %35 = vector.load %arg7[%c1_37, %c0_38, %c0_39] : memref<9x192x64xbf16, #tpu.memory_space<vmem>>, vector<1x192x64xbf16>
    %36 = vector.shape_cast %35 : vector<1x192x64xbf16> to vector<192x64xbf16>
    %cst_40 = arith.constant dense<0.000000e+00> : vector<64x64xf32>
    %37 = tpu.matmul %34, %36, %cst_40 {dimension_numbers = #tpu.dot_dimension_numbers<[1], [0], [0], [1], [0, 0, 1, 1], [], []>} : vector<64x192xbf16>, vector<192x64xbf16>, vector<64x64xf32> -> vector<64x64xf32>
    %38 = arith.addf %29, %37 : vector<64x64xf32>
    %c2_41 = arith.constant 2 : index
    %c0_42 = arith.constant 0 : index
    %c0_43 = arith.constant 0 : index
    %39 = vector.load %arg11[%c2_41, %c0_42, %c0_43] : memref<10x10x64xbf16, #tpu.memory_space<vmem>>, vector<8x8x64xbf16>
    %c2_44 = arith.constant 2 : index
    %c1_45 = arith.constant 1 : index
    %c0_46 = arith.constant 0 : index
    %40 = vector.load %arg11[%c2_44, %c1_45, %c0_46] : memref<10x10x64xbf16, #tpu.memory_space<vmem>>, vector<8x8x64xbf16>
    %c2_47 = arith.constant 2 : index
    %c2_48 = arith.constant 2 : index
    %c0_49 = arith.constant 0 : index
    %41 = vector.load %arg11[%c2_47, %c2_48, %c0_49] : memref<10x10x64xbf16, #tpu.memory_space<vmem>>, vector<8x8x64xbf16>
    %42 = tpu.concatenate %39, %40, %41 in 2 : vector<8x8x64xbf16>, vector<8x8x64xbf16>, vector<8x8x64xbf16> -> vector<8x8x192xbf16>
    %43 = vector.shape_cast %42 : vector<8x8x192xbf16> to vector<64x192xbf16>
    %c2_50 = arith.constant 2 : index
    %c0_51 = arith.constant 0 : index
    %c0_52 = arith.constant 0 : index
    %44 = vector.load %arg7[%c2_50, %c0_51, %c0_52] : memref<9x192x64xbf16, #tpu.memory_space<vmem>>, vector<1x192x64xbf16>
    %45 = vector.shape_cast %44 : vector<1x192x64xbf16> to vector<192x64xbf16>
    %cst_53 = arith.constant dense<0.000000e+00> : vector<64x64xf32>
    %46 = tpu.matmul %43, %45, %cst_53 {dimension_numbers = #tpu.dot_dimension_numbers<[1], [0], [0], [1], [0, 0, 1, 1], [], []>} : vector<64x192xbf16>, vector<192x64xbf16>, vector<64x64xf32> -> vector<64x64xf32>
    %47 = arith.addf %38, %46 : vector<64x64xf32>
    %c0_54 = arith.constant 0 : index
    %c0_55 = arith.constant 0 : index
    %48 = vector.load %arg12[%c0_54, %c0_55] : memref<64x64xf32, #tpu.memory_space<vmem>>, vector<64x64xf32>
    tpu.vector_store %arg12[%c0_54, %c0_55], %47 {strides = array<i32>} : memref<64x64xf32, #tpu.memory_space<vmem>>, vector<64x64xf32>,
    %c0_56 = arith.constant 0 : index
    %c0_57 = arith.constant 0 : index
    %c0_58 = arith.constant 0 : index
    %c0_59 = arith.constant 0 : index
    %c0_60 = arith.constant 0 : index
    %49 = vector.load %arg3[%c0_56, %c0_57, %c0_58, %c0_59, %c0_60] : memref<1x1x8x8x64xf32, #tpu.memory_space<vmem>>, vector<1x1x8x8x64xf32>
    %50 = vector.shape_cast %49 : vector<1x1x8x8x64xf32> to vector<8x8x64xf32>
    %51 = vector.shape_cast %2 : vector<1x64xf32> to vector<1x1x64xf32>
    %52 = vector.broadcast %51 : vector<1x1x64xf32> to vector<8x8x64xf32>
    %53 = arith.mulf %50, %52 : vector<8x8x64xf32>
    %54 = vector.shape_cast %3 : vector<1x64xf32> to vector<1x1x64xf32>
    %55 = vector.broadcast %54 : vector<1x1x64xf32> to vector<8x8x64xf32>
    %56 = arith.addf %53, %55 : vector<8x8x64xf32>
    %cst_61 = arith.constant 0.000000e+00 : f32
    %57 = vector.broadcast %cst_61 : f32 to vector<8x8x64xf32>
    %58 = arith.cmpf oge, %56, %57 : vector<8x8x64xf32>
    %cst_62 = arith.constant 9.99999974E-6 : f32
    %59 = vector.broadcast %cst_62 : f32 to vector<8x8x64xf32>
    %60 = arith.mulf %59, %56 : vector<8x8x64xf32>
    %61 = arith.select %58, %56, %60 : vector<8x8x64xi1>, vector<8x8x64xf32>
    %62 = arith.truncf %61 : vector<8x8x64xf32> to vector<8x8x64xbf16>
    %c1_63 = arith.constant 1 : index
    %c1_64 = arith.constant 1 : index
    %c0_65 = arith.constant 0 : index
    %63 = vector.load %arg11[%c1_63, %c1_64, %c0_65] : memref<10x10x64xbf16, #tpu.memory_space<vmem>>, vector<8x8x64xbf16>
    tpu.vector_store %arg11[%c1_63, %c1_64, %c0_65], %62 {strides = array<i32>} : memref<10x10x64xbf16, #tpu.memory_space<vmem>>, vector<8x8x64xbf16>,
    %c0_66 = arith.constant 0 : index
    %c0_67 = arith.constant 0 : index
    %c0_68 = arith.constant 0 : index
    %64 = vector.load %arg11[%c0_66, %c0_67, %c0_68] : memref<10x10x64xbf16, #tpu.memory_space<vmem>>, vector<8x8x64xbf16>
    %c0_69 = arith.constant 0 : index
    %c1_70 = arith.constant 1 : index
    %c0_71 = arith.constant 0 : index
    %65 = vector.load %arg11[%c0_69, %c1_70, %c0_71] : memref<10x10x64xbf16, #tpu.memory_space<vmem>>, vector<8x8x64xbf16>
    %c0_72 = arith.constant 0 : index
    %c2_73 = arith.constant 2 : index
    %c0_74 = arith.constant 0 : index
    %66 = vector.load %arg11[%c0_72, %c2_73, %c0_74] : memref<10x10x64xbf16, #tpu.memory_space<vmem>>, vector<8x8x64xbf16>
    %67 = tpu.concatenate %64, %65, %66 in 2 : vector<8x8x64xbf16>, vector<8x8x64xbf16>, vector<8x8x64xbf16> -> vector<8x8x192xbf16>
    %68 = vector.shape_cast %67 : vector<8x8x192xbf16> to vector<64x192xbf16>
    %c3 = arith.constant 3 : index
    %c0_75 = arith.constant 0 : index
    %c0_76 = arith.constant 0 : index
    %69 = vector.load %arg7[%c3, %c0_75, %c0_76] : memref<9x192x64xbf16, #tpu.memory_space<vmem>>, vector<1x192x64xbf16>
    %70 = vector.shape_cast %69 : vector<1x192x64xbf16> to vector<192x64xbf16>
    %cst_77 = arith.constant dense<0.000000e+00> : vector<64x64xf32>
    %71 = tpu.matmul %68, %70, %cst_77 {dimension_numbers = #tpu.dot_dimension_numbers<[1], [0], [0], [1], [0, 0, 1, 1], [], []>} : vector<64x192xbf16>, vector<192x64xbf16>, vector<64x64xf32> -> vector<64x64xf32>
    %c1_78 = arith.constant 1 : index
    %c0_79 = arith.constant 0 : index
    %c0_80 = arith.constant 0 : index
    %72 = vector.load %arg11[%c1_78, %c0_79, %c0_80] : memref<10x10x64xbf16, #tpu.memory_space<vmem>>, vector<8x8x64xbf16>
    %c1_81 = arith.constant 1 : index
    %c1_82 = arith.constant 1 : index
    %c0_83 = arith.constant 0 : index
    %73 = vector.load %arg11[%c1_81, %c1_82, %c0_83] : memref<10x10x64xbf16, #tpu.memory_space<vmem>>, vector<8x8x64xbf16>
    %c1_84 = arith.constant 1 : index
    %c2_85 = arith.constant 2 : index
    %c0_86 = arith.constant 0 : index
    %74 = vector.load %arg11[%c1_84, %c2_85, %c0_86] : memref<10x10x64xbf16, #tpu.memory_space<vmem>>, vector<8x8x64xbf16>
    %75 = tpu.concatenate %72, %73, %74 in 2 : vector<8x8x64xbf16>, vector<8x8x64xbf16>, vector<8x8x64xbf16> -> vector<8x8x192xbf16>
    %76 = vector.shape_cast %75 : vector<8x8x192xbf16> to vector<64x192xbf16>
    %c4 = arith.constant 4 : index
    %c0_87 = arith.constant 0 : index
    %c0_88 = arith.constant 0 : index
    %77 = vector.load %arg7[%c4, %c0_87, %c0_88] : memref<9x192x64xbf16, #tpu.memory_space<vmem>>, vector<1x192x64xbf16>
    %78 = vector.shape_cast %77 : vector<1x192x64xbf16> to vector<192x64xbf16>
    %cst_89 = arith.constant dense<0.000000e+00> : vector<64x64xf32>
    %79 = tpu.matmul %76, %78, %cst_89 {dimension_numbers = #tpu.dot_dimension_numbers<[1], [0], [0], [1], [0, 0, 1, 1], [], []>} : vector<64x192xbf16>, vector<192x64xbf16>, vector<64x64xf32> -> vector<64x64xf32>
    %80 = arith.addf %71, %79 : vector<64x64xf32>
    %c2_90 = arith.constant 2 : index
    %c0_91 = arith.constant 0 : index
    %c0_92 = arith.constant 0 : index
    %81 = vector.load %arg11[%c2_90, %c0_91, %c0_92] : memref<10x10x64xbf16, #tpu.memory_space<vmem>>, vector<8x8x64xbf16>
    %c2_93 = arith.constant 2 : index
    %c1_94 = arith.constant 1 : index
    %c0_95 = arith.constant 0 : index
    %82 = vector.load %arg11[%c2_93, %c1_94, %c0_95] : memref<10x10x64xbf16, #tpu.memory_space<vmem>>, vector<8x8x64xbf16>
    %c2_96 = arith.constant 2 : index
    %c2_97 = arith.constant 2 : index
    %c0_98 = arith.constant 0 : index
    %83 = vector.load %arg11[%c2_96, %c2_97, %c0_98] : memref<10x10x64xbf16, #tpu.memory_space<vmem>>, vector<8x8x64xbf16>
    %84 = tpu.concatenate %81, %82, %83 in 2 : vector<8x8x64xbf16>, vector<8x8x64xbf16>, vector<8x8x64xbf16> -> vector<8x8x192xbf16>
    %85 = vector.shape_cast %84 : vector<8x8x192xbf16> to vector<64x192xbf16>
    %c5 = arith.constant 5 : index
    %c0_99 = arith.constant 0 : index
    %c0_100 = arith.constant 0 : index
    %86 = vector.load %arg7[%c5, %c0_99, %c0_100] : memref<9x192x64xbf16, #tpu.memory_space<vmem>>, vector<1x192x64xbf16>
    %87 = vector.shape_cast %86 : vector<1x192x64xbf16> to vector<192x64xbf16>
    %cst_101 = arith.constant dense<0.000000e+00> : vector<64x64xf32>
    %88 = tpu.matmul %85, %87, %cst_101 {dimension_numbers = #tpu.dot_dimension_numbers<[1], [0], [0], [1], [0, 0, 1, 1], [], []>} : vector<64x192xbf16>, vector<192x64xbf16>, vector<64x64xf32> -> vector<64x64xf32>
    %89 = arith.addf %80, %88 : vector<64x64xf32>
    %c0_102 = arith.constant 0 : index
    %c0_103 = arith.constant 0 : index
    %90 = vector.load %arg12[%c0_102, %c0_103] : memref<64x64xf32, #tpu.memory_space<vmem>>, vector<64x64xf32>
    %91 = arith.addf %90, %89 : vector<64x64xf32>
    %c0_104 = arith.constant 0 : index
    %c0_105 = arith.constant 0 : index
    %92 = vector.load %arg12[%c0_104, %c0_105] : memref<64x64xf32, #tpu.memory_space<vmem>>, vector<64x64xf32>
    tpu.vector_store %arg12[%c0_104, %c0_105], %91 {strides = array<i32>} : memref<64x64xf32, #tpu.memory_space<vmem>>, vector<64x64xf32>,
    %c0_106 = arith.constant 0 : index
    %c0_107 = arith.constant 0 : index
    %c0_108 = arith.constant 0 : index
    %c0_109 = arith.constant 0 : index
    %c0_110 = arith.constant 0 : index
    %93 = vector.load %arg4[%c0_106, %c0_107, %c0_108, %c0_109, %c0_110] : memref<1x1x8x8x64xf32, #tpu.memory_space<vmem>>, vector<1x1x8x8x64xf32>
    %94 = vector.shape_cast %93 : vector<1x1x8x8x64xf32> to vector<8x8x64xf32>
    %95 = vector.shape_cast %2 : vector<1x64xf32> to vector<1x1x64xf32>
    %96 = vector.broadcast %95 : vector<1x1x64xf32> to vector<8x8x64xf32>
    %97 = arith.mulf %94, %96 : vector<8x8x64xf32>
    %98 = vector.shape_cast %3 : vector<1x64xf32> to vector<1x1x64xf32>
    %99 = vector.broadcast %98 : vector<1x1x64xf32> to vector<8x8x64xf32>
    %100 = arith.addf %97, %99 : vector<8x8x64xf32>
    %cst_111 = arith.constant 0.000000e+00 : f32
    %101 = vector.broadcast %cst_111 : f32 to vector<8x8x64xf32>
    %102 = arith.cmpf oge, %100, %101 : vector<8x8x64xf32>
    %cst_112 = arith.constant 9.99999974E-6 : f32
    %103 = vector.broadcast %cst_112 : f32 to vector<8x8x64xf32>
    %104 = arith.mulf %103, %100 : vector<8x8x64xf32>
    %105 = arith.select %102, %100, %104 : vector<8x8x64xi1>, vector<8x8x64xf32>
    %c7_i32 = arith.constant 7 : i32
    %106 = arith.cmpi slt, %arg1, %c7_i32 : i32
    %cst_113 = arith.constant 0.000000e+00 : f32
    %107 = vector.broadcast %cst_113 : f32 to vector<8x8x64xf32>
    %108 = arith.select %106, %105, %107 : vector<8x8x64xf32>
    %109 = arith.truncf %108 : vector<8x8x64xf32> to vector<8x8x64xbf16>
    %c1_114 = arith.constant 1 : index
    %c1_115 = arith.constant 1 : index
    %c0_116 = arith.constant 0 : index
    %110 = vector.load %arg11[%c1_114, %c1_115, %c0_116] : memref<10x10x64xbf16, #tpu.memory_space<vmem>>, vector<8x8x64xbf16>
    tpu.vector_store %arg11[%c1_114, %c1_115, %c0_116], %109 {strides = array<i32>} : memref<10x10x64xbf16, #tpu.memory_space<vmem>>, vector<8x8x64xbf16>,
    %c0_117 = arith.constant 0 : index
    %c0_118 = arith.constant 0 : index
    %c0_119 = arith.constant 0 : index
    %111 = vector.load %arg11[%c0_117, %c0_118, %c0_119] : memref<10x10x64xbf16, #tpu.memory_space<vmem>>, vector<8x8x64xbf16>
    %c0_120 = arith.constant 0 : index
    %c1_121 = arith.constant 1 : index
    %c0_122 = arith.constant 0 : index
    %112 = vector.load %arg11[%c0_120, %c1_121, %c0_122] : memref<10x10x64xbf16, #tpu.memory_space<vmem>>, vector<8x8x64xbf16>
    %c0_123 = arith.constant 0 : index
    %c2_124 = arith.constant 2 : index
    %c0_125 = arith.constant 0 : index
    %113 = vector.load %arg11[%c0_123, %c2_124, %c0_125] : memref<10x10x64xbf16, #tpu.memory_space<vmem>>, vector<8x8x64xbf16>
    %114 = tpu.concatenate %111, %112, %113 in 2 : vector<8x8x64xbf16>, vector<8x8x64xbf16>, vector<8x8x64xbf16> -> vector<8x8x192xbf16>
    %115 = vector.shape_cast %114 : vector<8x8x192xbf16> to vector<64x192xbf16>
    %c6 = arith.constant 6 : index
    %c0_126 = arith.constant 0 : index
    %c0_127 = arith.constant 0 : index
    %116 = vector.load %arg7[%c6, %c0_126, %c0_127] : memref<9x192x64xbf16, #tpu.memory_space<vmem>>, vector<1x192x64xbf16>
    %117 = vector.shape_cast %116 : vector<1x192x64xbf16> to vector<192x64xbf16>
    %cst_128 = arith.constant dense<0.000000e+00> : vector<64x64xf32>
    %118 = tpu.matmul %115, %117, %cst_128 {dimension_numbers = #tpu.dot_dimension_numbers<[1], [0], [0], [1], [0, 0, 1, 1], [], []>} : vector<64x192xbf16>, vector<192x64xbf16>, vector<64x64xf32> -> vector<64x64xf32>
    %c1_129 = arith.constant 1 : index
    %c0_130 = arith.constant 0 : index
    %c0_131 = arith.constant 0 : index
    %119 = vector.load %arg11[%c1_129, %c0_130, %c0_131] : memref<10x10x64xbf16, #tpu.memory_space<vmem>>, vector<8x8x64xbf16>
    %c1_132 = arith.constant 1 : index
    %c1_133 = arith.constant 1 : index
    %c0_134 = arith.constant 0 : index
    %120 = vector.load %arg11[%c1_132, %c1_133, %c0_134] : memref<10x10x64xbf16, #tpu.memory_space<vmem>>, vector<8x8x64xbf16>
    %c1_135 = arith.constant 1 : index
    %c2_136 = arith.constant 2 : index
    %c0_137 = arith.constant 0 : index
    %121 = vector.load %arg11[%c1_135, %c2_136, %c0_137] : memref<10x10x64xbf16, #tpu.memory_space<vmem>>, vector<8x8x64xbf16>
    %122 = tpu.concatenate %119, %120, %121 in 2 : vector<8x8x64xbf16>, vector<8x8x64xbf16>, vector<8x8x64xbf16> -> vector<8x8x192xbf16>
    %123 = vector.shape_cast %122 : vector<8x8x192xbf16> to vector<64x192xbf16>
    %c7 = arith.constant 7 : index
    %c0_138 = arith.constant 0 : index
    %c0_139 = arith.constant 0 : index
    %124 = vector.load %arg7[%c7, %c0_138, %c0_139] : memref<9x192x64xbf16, #tpu.memory_space<vmem>>, vector<1x192x64xbf16>
    %125 = vector.shape_cast %124 : vector<1x192x64xbf16> to vector<192x64xbf16>
    %cst_140 = arith.constant dense<0.000000e+00> : vector<64x64xf32>
    %126 = tpu.matmul %123, %125, %cst_140 {dimension_numbers = #tpu.dot_dimension_numbers<[1], [0], [0], [1], [0, 0, 1, 1], [], []>} : vector<64x192xbf16>, vector<192x64xbf16>, vector<64x64xf32> -> vector<64x64xf32>
    %127 = arith.addf %118, %126 : vector<64x64xf32>
    %c2_141 = arith.constant 2 : index
    %c0_142 = arith.constant 0 : index
    %c0_143 = arith.constant 0 : index
    %128 = vector.load %arg11[%c2_141, %c0_142, %c0_143] : memref<10x10x64xbf16, #tpu.memory_space<vmem>>, vector<8x8x64xbf16>
    %c2_144 = arith.constant 2 : index
    %c1_145 = arith.constant 1 : index
    %c0_146 = arith.constant 0 : index
    %129 = vector.load %arg11[%c2_144, %c1_145, %c0_146] : memref<10x10x64xbf16, #tpu.memory_space<vmem>>, vector<8x8x64xbf16>
    %c2_147 = arith.constant 2 : index
    %c2_148 = arith.constant 2 : index
    %c0_149 = arith.constant 0 : index
    %130 = vector.load %arg11[%c2_147, %c2_148, %c0_149] : memref<10x10x64xbf16, #tpu.memory_space<vmem>>, vector<8x8x64xbf16>
    %131 = tpu.concatenate %128, %129, %130 in 2 : vector<8x8x64xbf16>, vector<8x8x64xbf16>, vector<8x8x64xbf16> -> vector<8x8x192xbf16>
    %132 = vector.shape_cast %131 : vector<8x8x192xbf16> to vector<64x192xbf16>
    %c8 = arith.constant 8 : index
    %c0_150 = arith.constant 0 : index
    %c0_151 = arith.constant 0 : index
    %133 = vector.load %arg7[%c8, %c0_150, %c0_151] : memref<9x192x64xbf16, #tpu.memory_space<vmem>>, vector<1x192x64xbf16>
    %134 = vector.shape_cast %133 : vector<1x192x64xbf16> to vector<192x64xbf16>
    %cst_152 = arith.constant dense<0.000000e+00> : vector<64x64xf32>
    %135 = tpu.matmul %132, %134, %cst_152 {dimension_numbers = #tpu.dot_dimension_numbers<[1], [0], [0], [1], [0, 0, 1, 1], [], []>} : vector<64x192xbf16>, vector<192x64xbf16>, vector<64x64xf32> -> vector<64x64xf32>
    %136 = arith.addf %127, %135 : vector<64x64xf32>
    %c0_153 = arith.constant 0 : index
    %c0_154 = arith.constant 0 : index
    %137 = vector.load %arg12[%c0_153, %c0_154] : memref<64x64xf32, #tpu.memory_space<vmem>>, vector<64x64xf32>
    %138 = arith.addf %137, %136 : vector<64x64xf32>
    %c0_155 = arith.constant 0 : index
    %c0_156 = arith.constant 0 : index
    %139 = vector.load %arg12[%c0_155, %c0_156] : memref<64x64xf32, #tpu.memory_space<vmem>>, vector<64x64xf32>
    tpu.vector_store %arg12[%c0_155, %c0_156], %138 {strides = array<i32>} : memref<64x64xf32, #tpu.memory_space<vmem>>, vector<64x64xf32>,
    %c0_157 = arith.constant 0 : index
    %c0_158 = arith.constant 0 : index
    %140 = vector.load %arg12[%c0_157, %c0_158] : memref<64x64xf32, #tpu.memory_space<vmem>>, vector<64x64xf32>
    %c0_159 = arith.constant 0 : index
    %c0_160 = arith.constant 0 : index
    %141 = vector.load %arg8[%c0_159, %c0_160] : memref<1x64xf32, #tpu.memory_space<vmem>>, vector<1x64xf32>
    %142 = vector.broadcast %141 : vector<1x64xf32> to vector<64x64xf32>
    %143 = arith.addf %140, %142 : vector<64x64xf32>
    %144 = vector.shape_cast %143 : vector<64x64xf32> to vector<8x8x64xf32>
    %c0_161 = arith.constant 0 : index
    %c0_162 = arith.constant 0 : index
    %c0_163 = arith.constant 0 : index
    %c0_164 = arith.constant 0 : index
    %c0_165 = arith.constant 0 : index
    %145 = vector.load %arg9[%c0_161, %c0_162, %c0_163, %c0_164, %c0_165] : memref<1x1x8x8x64xf32, #tpu.memory_space<vmem>>, vector<1x1x8x8x64xf32>
    %146 = vector.shape_cast %145 : vector<1x1x8x8x64xf32> to vector<8x8x64xf32>
    %147 = arith.addf %144, %146 : vector<8x8x64xf32>
    %c0_166 = arith.constant 0 : index
    %c0_167 = arith.constant 0 : index
    %c0_168 = arith.constant 0 : index
    %c0_169 = arith.constant 0 : index
    %c0_170 = arith.constant 0 : index
    %148 = vector.load %arg10[%c0_166, %c0_167, %c0_168, %c0_169, %c0_170] : memref<1x1x8x8x64xf32, #tpu.memory_space<vmem>>, vector<1x1x8x8x64xf32>
    %149 = vector.shape_cast %148 : vector<1x1x8x8x64xf32> to vector<8x8x64xf32>
    %150 = vector.shape_cast %147 : vector<8x8x64xf32> to vector<1x1x8x8x64xf32>
    tpu.vector_store %arg10[%c0_166, %c0_167, %c0_168, %c0_169, %c0_170], %150 {strides = array<i32>} : memref<1x1x8x8x64xf32, #tpu.memory_space<vmem>>, vector<1x1x8x8x64xf32>,
    return
  }
  func.func @transform_0(%arg0: i32, %arg1: i32) -> (i32, i32, i32, i32, i32) {
    %c1_i32 = arith.constant 1 : i32
    %0 = arith.subi %arg1, %c1_i32 : i32
    %c0_i32 = arith.constant 0 : i32
    %1 = arith.maxsi %0, %c0_i32 : i32
    %c0_i32_0 = arith.constant 0 : i32
    %c0_i32_1 = arith.constant 0 : i32
    %c0_i32_2 = arith.constant 0 : i32
    %c0_i32_3 = arith.constant 0 : i32
    return %arg0, %1, %c0_i32_0, %c0_i32_1, %c0_i32_2 : i32, i32, i32, i32, i32
  }
  func.func @transform_1(%arg0: i32, %arg1: i32) -> (i32, i32, i32, i32, i32) {
    %c0_i32 = arith.constant 0 : i32
    %c0_i32_0 = arith.constant 0 : i32
    %c0_i32_1 = arith.constant 0 : i32
    %c0_i32_2 = arith.constant 0 : i32
    return %arg0, %arg1, %c0_i32, %c0_i32_0, %c0_i32_1 : i32, i32, i32, i32, i32
  }
  func.func @transform_2(%arg0: i32, %arg1: i32) -> (i32, i32, i32, i32, i32) {
    %c1_i32 = arith.constant 1 : i32
    %0 = arith.addi %arg1, %c1_i32 : i32
    %c7_i32 = arith.constant 7 : i32
    %1 = arith.minsi %0, %c7_i32 : i32
    %c0_i32 = arith.constant 0 : i32
    %c0_i32_0 = arith.constant 0 : i32
    %c0_i32_1 = arith.constant 0 : i32
    %c0_i32_2 = arith.constant 0 : i32
    return %arg0, %1, %c0_i32, %c0_i32_0, %c0_i32_1 : i32, i32, i32, i32, i32
  }
  func.func @transform_3(%arg0: i32, %arg1: i32) -> (i32, i32) {
    %c0_i32 = arith.constant 0 : i32
    %c0_i32_0 = arith.constant 0 : i32
    %c0_i32_1 = arith.constant 0 : i32
    return %c0_i32, %c0_i32_0 : i32, i32
  }
  func.func @transform_4(%arg0: i32, %arg1: i32) -> (i32, i32) {
    %c0_i32 = arith.constant 0 : i32
    %c0_i32_0 = arith.constant 0 : i32
    %c0_i32_1 = arith.constant 0 : i32
    return %c0_i32, %c0_i32_0 : i32, i32
  }
  func.func @transform_5(%arg0: i32, %arg1: i32) -> (i32, i32, i32) {
    %c0_i32 = arith.constant 0 : i32
    %c0_i32_0 = arith.constant 0 : i32
    %c0_i32_1 = arith.constant 0 : i32
    %c0_i32_2 = arith.constant 0 : i32
    return %c0_i32, %c0_i32_0, %c0_i32_1 : i32, i32, i32
  }
  func.func @transform_6(%arg0: i32, %arg1: i32) -> (i32, i32) {
    %c0_i32 = arith.constant 0 : i32
    %c0_i32_0 = arith.constant 0 : i32
    %c0_i32_1 = arith.constant 0 : i32
    return %c0_i32, %c0_i32_0 : i32, i32
  }
  func.func @transform_7(%arg0: i32, %arg1: i32) -> (i32, i32, i32, i32, i32) {
    %c0_i32 = arith.constant 0 : i32
    %c0_i32_0 = arith.constant 0 : i32
    %c0_i32_1 = arith.constant 0 : i32
    %c0_i32_2 = arith.constant 0 : i32
    return %arg0, %arg1, %c0_i32, %c0_i32_0, %c0_i32_1 : i32, i32, i32, i32, i32
  }
  func.func @transform_8(%arg0: i32, %arg1: i32) -> (i32, i32, i32, i32, i32) {
    %c0_i32 = arith.constant 0 : i32
    %c0_i32_0 = arith.constant 0 : i32
    %c0_i32_1 = arith.constant 0 : i32
    %c0_i32_2 = arith.constant 0 : i32
    return %arg0, %arg1, %c0_i32, %c0_i32_0, %c0_i32_1 : i32, i32, i32, i32, i32
  }
}

</mosaic_0001>

<llo_original>
// kernel: voxres_forward_ndhwc.3
$region0: #{voxres_forward_ndhwc.3}
  #allocation0 [shape = 'u32[]', space=smem, size = 0x4, offset = 0x4, fixed_abs, tag = 'smem constant byte address 0x4 - core index']
  #allocation1 [shape = 'u32[144,128]{1,0:T(1,128)}', space=vmem, size = 0x12000, scoped, tag = 'internal scratch']
  #allocation2 [shape = 'bf16[10,10,64]{2,1,0:T(8,128)(2,1)}', space=vmem, size = 0xa000, scoped, tag = 'scratch operand']
  #allocation3 [shape = 'f32[64,64]{1,0:T(8,128)}', space=vmem, size = 0x8000, scoped, tag = 'scratch operand']
  %s0 = inlined_call_operand.vmem [shape: f32[2,8,8,8,64], index: 0, kind: input, shape index: {}, may-alias: {0,1,2}]
  %s1 = inlined_call_operand.vmem [shape: f32[2,8,8,8,64], index: 1, kind: input, shape index: {}, may-alias: {0,1,2}]
  %s2 = inlined_call_operand.vmem [shape: f32[2,8,8,8,64], index: 2, kind: input, shape index: {}, may-alias: {0,1,2}]
  %s3 = inlined_call_operand.vmem [shape: f32[1,64], index: 3, kind: input, shape index: {}]
  %s4 = inlined_call_operand.vmem [shape: f32[1,64], index: 4, kind: input, shape index: {}]
  %s5 = inlined_call_operand.vmem [shape: bf16[9,192,64], index: 5, kind: input, shape index: {}]
  %s6 = inlined_call_operand.vmem [shape: f32[1,64], index: 6, kind: input, shape index: {}]
  %s7 = inlined_call_operand.vmem [shape: f32[2,8,8,8,64], index: 7, kind: input, shape index: {}]
  %s8 = inlined_call_operand.hbm [shape: f32[2,8,8,8,64], index: 8, kind: output, shape index: {}]
  %s9 = sld [smem:[#allocation0]]
  $region65: #{voxres_forward_ndhwc.3} parent=0
    _
  %s11 = ssub.s32 1, %s9
  %s12 = scalar_select 0, %s11, %s9
  $region1: #{voxres_forward_ndhwc.3} parent=0
    #allocation4 [shape = 'u8[65536]{0}', space=vmem, size = 0x10000, scoped, tag = 'output window, operand 0']
    #allocation5 [shape = 's32[2]{0}', space=sflag, size = 0x8, scoped, tag = 'scoped memory for voxres_forward_ndhwc.3']
    %13 = vsyncpa [#allocation5], 0
    %s14 = scalar_lea.sflag [#allocation5], 1
    %15 = vsyncpa %s14, 0
    loop: start=0, step=1, limit=18
    $region2: #{voxres_forward_ndhwc.3} parent=1 // loop_pre_header
      _
    $region3: #{voxres_forward_ndhwc.3} parent=1 // loop_header
      %s17 = sphi 0, %s21
      %p18 = scmp.ge.s32.totalorder %s17, 18
      %s24 = sphi 0, %s36
      %s25 = sphi 0, %s32
      %s26 = sphi 0, %s24
      %s27 = sphi 0, %s25
      %s28 = sphi 0, %s26
      %s29 = sphi 0, %s27
      %s47 = sphi 0, %s49
      %s50 = sphi 0, %s47
      %s51 = sphi 0, %s50
      %s67 = sphi 0, %s51
      %s75 = sphi 0, %s77
      %s78 = sphi 0, %s75
      %s79 = sphi 0, %s78
      %s95 = sphi 0, %s79
      %s109 = sphi 0, %s111
      %s112 = sphi 0, %s109
      %s113 = sphi 0, %s112
      %s129 = sphi 0, %s113
      %s133 = sphi 0, %s133
      %s135 = sphi 0, %s133
      %s136 = sphi 0, %s135
      %s150 = sphi 0, %s136
      %s154 = sphi 0, %s154
      %s156 = sphi 0, %s154
      %s157 = sphi 0, %s156
      %s171 = sphi 0, %s157
      %s175 = sphi 0, %s175
      %s177 = sphi 0, %s175
      %s178 = sphi 0, %s177
      %s192 = sphi 0, %s178
      %s196 = sphi 0, %s196
      %s198 = sphi 0, %s196
      %s199 = sphi 0, %s198
      %s213 = sphi 0, %s199
      %s221 = sphi 0, %s223
      %s224 = sphi 0, %s221
      %s225 = sphi 0, %s224
      %s241 = sphi 0, %s225
      %s249 = sphi 0, %s251
      %s252 = sphi 0, %s249
      %s253 = sphi 0, %s252
      %s269 = sphi 0, %s253
    $region4: #{voxres_forward_ndhwc.3} parent=1 // loop_header_branch
      %20 = sbr.rel (%p18) target = $region8
    $region5: #{voxres_forward_ndhwc.3} parent=1 // loop_body
      %s22 = ssub.s32 %s17, 1
      %s23 = ssub.s32 %s17, 2
      %s30 = sadd.s32 1, %s25
      %p31 = scmp.ge.s32.totalorder %s30, 8
      %s32 = scalar_select %p31, 0, %s30
      %s33 = sadd.s32 1, %s24
      %s34 = scalar_select %p31, %s33, %s24
      %p35 = scmp.ge.s32.totalorder %s34, 2
      %s36 = scalar_select %p35, 0, %s34
      %s37 = ssub.s32 %s25, 1
      %p38 = scmp.gt.s32.totalorder %s37, 0
      %s39 = scalar_select %p38, %s37, 0
      %s40 = ssub.s32 %s32, 1
      %p41 = scmp.gt.s32.totalorder %s40, 0
      %s42 = scalar_select %p41, %s40, 0
      %s43 = ssub.s32 %s24, %s36
      %s44 = ssub.s32 %s39, %s42
      %s45 = sor.u32 %s43, %s44
      %p46 = scmp.eq.s32.totalorder %s45, 0
      %s48 = sadd.s32 %s47, 1
      %s49 = scalar_select %p46, %s47, %s48
      %p52 = pneg %p46
      %p53 = scmp.eq.s32.totalorder %s17, 15
      %p54 = por %p52, %p53
      %p55 = scmp.ne.s32.totalorder %s47, %s50
      %p56 = scmp.eq.s32.totalorder %s17, 0
      %p57 = por %p55, %p56
      %p58 = scmp.ne.s32.totalorder %s47, %s50
      %p59 = scmp.eq.s32.totalorder %s22, 15
      %p60 = por %p58, %p59
      %p61 = scmp.ne.s32.totalorder %s50, %s51
      %p62 = scmp.eq.s32.totalorder %s22, 0
      %p63 = por %p61, %p62
      %p64 = scmp.ne.s32.totalorder %s50, %s51
      %p65 = scmp.eq.s32.totalorder %s23, 15
      %p66 = por %p64, %p65
      %p68 = scmp.ne.s32.totalorder %s51, %s67
      %p69 = scmp.eq.s32.totalorder %s23, 0
      %p70 = por %p68, %p69
      %s71 = ssub.s32 %s24, %s36
      %s72 = ssub.s32 %s25, %s32
      %s73 = sor.u32 %s71, %s72
      %p74 = scmp.eq.s32.totalorder %s73, 0
      %s76 = sadd.s32 %s75, 1
      %s77 = scalar_select %p74, %s75, %s76
      %p80 = pneg %p74
      %p81 = scmp.eq.s32.totalorder %s17, 15
      %p82 = por %p80, %p81
      %p83 = scmp.ne.s32.totalorder %s75, %s78
      %p84 = scmp.eq.s32.totalorder %s17, 0
      %p85 = por %p83, %p84
      %p86 = scmp.ne.s32.totalorder %s75, %s78
      %p87 = scmp.eq.s32.totalorder %s22, 15
      %p88 = por %p86, %p87
      %p89 = scmp.ne.s32.totalorder %s78, %s79
      %p90 = scmp.eq.s32.totalorder %s22, 0
      %p91 = por %p89, %p90
      %p92 = scmp.ne.s32.totalorder %s78, %s79
      %p93 = scmp.eq.s32.totalorder %s23, 15
      %p94 = por %p92, %p93
      %p96 = scmp.ne.s32.totalorder %s79, %s95
      %p97 = scmp.eq.s32.totalorder %s23, 0
      %p98 = por %p96, %p97
      %s99 = sadd.s32 %s25, 1
      %p100 = scmp.lt.s32.totalorder %s99, 7
      %s101 = scalar_select %p100, %s99, 7
      %s102 = sadd.s32 %s32, 1
      %p103 = scmp.lt.s32.totalorder %s102, 7
      %s104 = scalar_select %p103, %s102, 7
      %s105 = ssub.s32 %s24, %s36
      %s106 = ssub.s32 %s101, %s104
      %s107 = sor.u32 %s105, %s106
      %p108 = scmp.eq.s32.totalorder %s107, 0
      %s110 = sadd.s32 %s109, 1
      %s111 = scalar_select %p108, %s109, %s110
      %p114 = pneg %p108
      %p115 = scmp.eq.s32.totalorder %s17, 15
      %p116 = por %p114, %p115
      %p117 = scmp.ne.s32.totalorder %s109, %s112
      %p118 = scmp.eq.s32.totalorder %s17, 0
      %p119 = por %p117, %p118
      %p120 = scmp.ne.s32.totalorder %s109, %s112
      %p121 = scmp.eq.s32.totalorder %s22, 15
      %p122 = por %p120, %p121
      %p123 = scmp.ne.s32.totalorder %s112, %s113
      %p124 = scmp.eq.s32.totalorder %s22, 0
      %p125 = por %p123, %p124
      %p126 = scmp.ne.s32.totalorder %s112, %s113
      %p127 = scmp.eq.s32.totalorder %s23, 15
      %p128 = por %p126, %p127
      %p130 = scmp.ne.s32.totalorder %s113, %s129
      %p131 = scmp.eq.s32.totalorder %s23, 0
      %p132 = por %p130, %p131
      %s134 = sadd.s32 %s133, 1
      %p137 = scmp.eq.s32.totalorder %s17, 15
      %p138 = scmp.ne.s32.totalorder %s133, %s135
      %p139 = scmp.eq.s32.totalorder %s17, 0
      %p140 = por %p138, %p139
      %p141 = scmp.ne.s32.totalorder %s133, %s135
      %p142 = scmp.eq.s32.totalorder %s22, 15
      %p143 = por %p141, %p142
      %p144 = scmp.ne.s32.totalorder %s135, %s136
      %p145 = scmp.eq.s32.totalorder %s22, 0
      %p146 = por %p144, %p145
      %p147 = scmp.ne.s32.totalorder %s135, %s136
      %p148 = scmp.eq.s32.totalorder %s23, 15
      %p149 = por %p147, %p148
      %p151 = scmp.ne.s32.totalorder %s136, %s150
      %p152 = scmp.eq.s32.totalorder %s23, 0
      %p153 = por %p151, %p152
      %s155 = sadd.s32 %s154, 1
      %p158 = scmp.eq.s32.totalorder %s17, 15
      %p159 = scmp.ne.s32.totalorder %s154, %s156
      %p160 = scmp.eq.s32.totalorder %s17, 0
      %p161 = por %p159, %p160
      %p162 = scmp.ne.s32.totalorder %s154, %s156
      %p163 = scmp.eq.s32.totalorder %s22, 15
      %p164 = por %p162, %p163
      %p165 = scmp.ne.s32.totalorder %s156, %s157
      %p166 = scmp.eq.s32.totalorder %s22, 0
      %p167 = por %p165, %p166
      %p168 = scmp.ne.s32.totalorder %s156, %s157
      %p169 = scmp.eq.s32.totalorder %s23, 15
      %p170 = por %p168, %p169
      %p172 = scmp.ne.s32.totalorder %s157, %s171
      %p173 = scmp.eq.s32.totalorder %s23, 0
      %p174 = por %p172, %p173
      %s176 = sadd.s32 %s175, 1
      %p179 = scmp.eq.s32.totalorder %s17, 15
      %p180 = scmp.ne.s32.totalorder %s175, %s177
      %p181 = scmp.eq.s32.totalorder %s17, 0
      %p182 = por %p180, %p181
      %p183 = scmp.ne.s32.totalorder %s175, %s177
      %p184 = scmp.eq.s32.totalorder %s22, 15
      %p185 = por %p183, %p184
      %p186 = scmp.ne.s32.totalorder %s177, %s178
      %p187 = scmp.eq.s32.totalorder %s22, 0
      %p188 = por %p186, %p187
      %p189 = scmp.ne.s32.totalorder %s177, %s178
      %p190 = scmp.eq.s32.totalorder %s23, 15
      %p191 = por %p189, %p190
      %p193 = scmp.ne.s32.totalorder %s178, %s192
      %p194 = scmp.eq.s32.totalorder %s23, 0
      %p195 = por %p193, %p194
      %s197 = sadd.s32 %s196, 1
      %p200 = scmp.eq.s32.totalorder %s17, 15
      %p201 = scmp.ne.s32.totalorder %s196, %s198
      %p202 = scmp.eq.s32.totalorder %s17, 0
      %p203 = por %p201, %p202
      %p204 = scmp.ne.s32.totalorder %s196, %s198
      %p205 = scmp.eq.s32.totalorder %s22, 15
      %p206 = por %p204, %p205
      %p207 = scmp.ne.s32.totalorder %s198, %s199
      %p208 = scmp.eq.s32.totalorder %s22, 0
      %p209 = por %p207, %p208
      %p210 = scmp.ne.s32.totalorder %s198, %s199
      %p211 = scmp.eq.s32.totalorder %s23, 15
      %p212 = por %p210, %p211
      %p214 = scmp.ne.s32.totalorder %s199, %s213
      %p215 = scmp.eq.s32.totalorder %s23, 0
      %p216 = por %p214, %p215
      %s217 = ssub.s32 %s24, %s36
      %s218 = ssub.s32 %s25, %s32
      %s219 = sor.u32 %s217, %s218
      %p220 = scmp.eq.s32.totalorder %s219, 0
      %s222 = sadd.s32 %s221, 1
      %s223 = scalar_select %p220, %s221, %s222
      %p226 = pneg %p220
      %p227 = scmp.eq.s32.totalorder %s17, 15
      %p228 = por %p226, %p227
      %p229 = scmp.ne.s32.totalorder %s221, %s224
      %p230 = scmp.eq.s32.totalorder %s17, 0
      %p231 = por %p229, %p230
      %p232 = scmp.ne.s32.totalorder %s221, %s224
      %p233 = scmp.eq.s32.totalorder %s22, 15
      %p234 = por %p232, %p233
      %p235 = scmp.ne.s32.totalorder %s224, %s225
      %p236 = scmp.eq.s32.totalorder %s22, 0
      %p237 = por %p235, %p236
      %p238 = scmp.ne.s32.totalorder %s224, %s225
      %p239 = scmp.eq.s32.totalorder %s23, 15
      %p240 = por %p238, %p239
      %p242 = scmp.ne.s32.totalorder %s225, %s241
      %p243 = scmp.eq.s32.totalorder %s23, 0
      %p244 = por %p242, %p243
      %s245 = ssub.s32 %s24, %s36
      %s246 = ssub.s32 %s25, %s32
      %s247 = sor.u32 %s245, %s246
      %p248 = scmp.eq.s32.totalorder %s247, 0
      %s250 = sadd.s32 %s249, 1
      %s251 = scalar_select %p248, %s249, %s250
      %p254 = pneg %p248
      %p255 = scmp.eq.s32.totalorder %s17, 15
      %p256 = por %p254, %p255
      %p257 = scmp.ne.s32.totalorder %s249, %s252
      %p258 = scmp.eq.s32.totalorder %s17, 0
      %p259 = por %p257, %p258
      %p260 = scmp.ne.s32.totalorder %s249, %s252
      %p261 = scmp.eq.s32.totalorder %s22, 15
      %p262 = por %p260, %p261
      %p263 = scmp.ne.s32.totalorder %s252, %s253
      %p264 = scmp.eq.s32.totalorder %s22, 0
      %p265 = por %p263, %p264
      %p266 = scmp.ne.s32.totalorder %s252, %s253
      %p267 = scmp.eq.s32.totalorder %s23, 15
      %p268 = por %p266, %p267
      %p270 = scmp.ne.s32.totalorder %s253, %s269
      %p271 = scmp.eq.s32.totalorder %s23, 0
      %p272 = por %p270, %p271
      %p273 = scmp.le.s32.totalorder 1, %s17
      %p274 = scmp.lt.s32.totalorder %s17, 17
      %p275 = pnand %p273, %p274
      %p276 = pneg %p275
      // Predicated region
      $region9: #{voxres_forward_ndhwc.3} parent=5 // pred_check
        _
      $region10: #{voxres_forward_ndhwc.3} parent=5 // pred_check_branch
        %278 = sbr.rel (%p275) target = $region12
      $region11: #{voxres_forward_ndhwc.3} parent=5 // pred_region
        %s279 = ssub.s32 %s17, 1
        // Predicated region
        $region13: #{voxres_forward_ndhwc.3} parent=11 // pred_check
          %p280 = pneg %p146
        $region14: #{voxres_forward_ndhwc.3} parent=11 // pred_check_branch
          %282 = sbr.rel (%p280) target = $region16
        $region15: #{voxres_forward_ndhwc.3} parent=11 // pred_region
          _
        $region16: #{voxres_forward_ndhwc.3} parent=11 // pred_fallthru
          _
        // Predicated region
        $region17: #{voxres_forward_ndhwc.3} parent=11 // pred_check
          %p283 = pneg %p167
        $region18: #{voxres_forward_ndhwc.3} parent=11 // pred_check_branch
          %285 = sbr.rel (%p283) target = $region20
        $region19: #{voxres_forward_ndhwc.3} parent=11 // pred_region
          _
        $region20: #{voxres_forward_ndhwc.3} parent=11 // pred_fallthru
          _
        // Predicated region
        $region21: #{voxres_forward_ndhwc.3} parent=11 // pred_check
          %p286 = pneg %p188
        $region22: #{voxres_forward_ndhwc.3} parent=11 // pred_check_branch
          %288 = sbr.rel (%p286) target = $region24
        $region23: #{voxres_forward_ndhwc.3} parent=11 // pred_region
          _
        $region24: #{voxres_forward_ndhwc.3} parent=11 // pred_fallthru
          _
        // Predicated region
        $region25: #{voxres_forward_ndhwc.3} parent=11 // pred_check
          %p289 = pneg %p209
        $region26: #{voxres_forward_ndhwc.3} parent=11 // pred_check_branch
          %291 = sbr.rel (%p289) target = $region28
        $region27: #{voxres_forward_ndhwc.3} parent=11 // pred_region
          _
        $region28: #{voxres_forward_ndhwc.3} parent=11 // pred_fallthru
          _
      $region12: #{voxres_forward_ndhwc.3} parent=5 // pred_fallthru
        _
      %p292 = scmp.lt.s32.totalorder %s17, 16
      // Predicated region
      $region29: #{voxres_forward_ndhwc.3} parent=5 // pred_check
        %p293 = pneg %p292
      $region30: #{voxres_forward_ndhwc.3} parent=5 // pred_check_branch
        %295 = sbr.rel (%p293) target = $region32
      $region31: #{voxres_forward_ndhwc.3} parent=5 // pred_region
        // Predicated region
        $region33: #{voxres_forward_ndhwc.3} parent=31 // pred_check
          %p296 = pneg %p57
        $region34: #{voxres_forward_ndhwc.3} parent=31 // pred_check_branch
          %298 = sbr.rel (%p296) target = $region36
        $region35: #{voxres_forward_ndhwc.3} parent=31 // pred_region
          %s299 = ssub.s32 %s25, 1
          %p300 = scmp.gt.s32.totalorder %s299, 0
          %s301 = scalar_select %p300, %s299, 0
          %p302 = scmp.lt.s32.totalorder %s24, 1
          %s303 = scalar_select %p302, %s24, 1
          %p304 = scmp.lt.s32.totalorder %s301, 7
          %s305 = scalar_select %p304, %s301, 7
          %s306 = smul.addr %s305, 8
          %s307 = smul.addr %s303, 64
          %s308 = sadd.s32 %s306, %s307
          %s309 = smul.addr %s308, 8
          %s310 = scalar_lea.vmem %s0, %s309
          %s311 = ssub.s32 %s25, 1
          %p312 = scmp.gt.s32.totalorder %s311, 0
          %s313 = scalar_select %p312, %s311, 0
        $region36: #{voxres_forward_ndhwc.3} parent=31 // pred_fallthru
          _
        // Predicated region
        $region37: #{voxres_forward_ndhwc.3} parent=31 // pred_check
          %p314 = pneg %p85
        $region38: #{voxres_forward_ndhwc.3} parent=31 // pred_check_branch
          %316 = sbr.rel (%p314) target = $region40
        $region39: #{voxres_forward_ndhwc.3} parent=31 // pred_region
          %p317 = scmp.lt.s32.totalorder %s24, 1
          %s318 = scalar_select %p317, %s24, 1
          %p319 = scmp.lt.s32.totalorder %s25, 7
          %s320 = scalar_select %p319, %s25, 7
          %s321 = smul.addr %s320, 8
          %s322 = smul.addr %s318, 64
          %s323 = sadd.s32 %s321, %s322
          %s324 = smul.addr %s323, 8
          %s325 = scalar_lea.vmem %s1, %s324
        $region40: #{voxres_forward_ndhwc.3} parent=31 // pred_fallthru
          _
        // Predicated region
        $region41: #{voxres_forward_ndhwc.3} parent=31 // pred_check
          %p326 = pneg %p119
        $region42: #{voxres_forward_ndhwc.3} parent=31 // pred_check_branch
          %328 = sbr.rel (%p326) target = $region44
        $region43: #{voxres_forward_ndhwc.3} parent=31 // pred_region
          %s329 = sadd.s32 %s25, 1
          %p330 = scmp.lt.s32.totalorder %s329, 7
          %s331 = scalar_select %p330, %s329, 7
          %p332 = scmp.lt.s32.totalorder %s24, 1
          %s333 = scalar_select %p332, %s24, 1
          %p334 = scmp.lt.s32.totalorder %s331, 7
          %s335 = scalar_select %p334, %s331, 7
          %s336 = smul.addr %s335, 8
          %s337 = smul.addr %s333, 64
          %s338 = sadd.s32 %s336, %s337
          %s339 = smul.addr %s338, 8
          %s340 = scalar_lea.vmem %s2, %s339
          %s341 = sadd.s32 %s25, 1
          %p342 = scmp.lt.s32.totalorder %s341, 7
          %s343 = scalar_select %p342, %s341, 7
        $region44: #{voxres_forward_ndhwc.3} parent=31 // pred_fallthru
          _
        // Predicated region
        $region45: #{voxres_forward_ndhwc.3} parent=31 // pred_check
          %p344 = pneg %p231
        $region46: #{voxres_forward_ndhwc.3} parent=31 // pred_check_branch
          %346 = sbr.rel (%p344) target = $region48
        $region47: #{voxres_forward_ndhwc.3} parent=31 // pred_region
          %p347 = scmp.lt.s32.totalorder %s24, 1
          %s348 = scalar_select %p347, %s24, 1
          %p349 = scmp.lt.s32.totalorder %s25, 7
          %s350 = scalar_select %p349, %s25, 7
          %s351 = smul.addr %s350, 8
          %s352 = smul.addr %s348, 64
          %s353 = sadd.s32 %s351, %s352
          %s354 = smul.addr %s353, 8
          %s355 = scalar_lea.vmem %s7, %s354
        $region48: #{voxres_forward_ndhwc.3} parent=31 // pred_fallthru
          _
      $region32: #{voxres_forward_ndhwc.3} parent=5 // pred_fallthru
        _
      %p356 = scmp.le.s32.totalorder 1, %s17
      %p357 = scmp.lt.s32.totalorder %s17, 17
      %p358 = pnand %p356, %p357
      %p359 = pneg %p358
      // Predicated region
      $region49: #{voxres_forward_ndhwc.3} parent=5 // pred_check
        _
      $region50: #{voxres_forward_ndhwc.3} parent=5 // pred_check_branch
        %361 = sbr.rel (%p358) target = $region52
      $region51: #{voxres_forward_ndhwc.3} parent=5 // pred_region
        %s362 = ssub.s32 %s17, 1
        %s363 = ssub.s32 %s27, 1
        %p364 = scmp.gt.s32.totalorder %s363, 0
        %s365 = scalar_select %p364, %s363, 0
        %p366 = scmp.lt.s32.totalorder %s26, 1
        %s367 = scalar_select %p366, %s26, 1
        %p368 = scmp.lt.s32.totalorder %s365, 7
        %s369 = scalar_select %p368, %s365, 7
        %s370 = smul.addr %s369, 8
        %s371 = smul.addr %s367, 64
        %s372 = sadd.s32 %s370, %s371
        %s373 = smul.addr %s372, 8
        %s374 = scalar_lea.vmem %s0, %s373
        %p375 = pneg %p63
        %p376 = pneg %p60
        %p377 = scmp.lt.s32.totalorder %s26, 1
        %s378 = scalar_select %p377, %s26, 1
        %p379 = scmp.lt.s32.totalorder %s27, 7
        %s380 = scalar_select %p379, %s27, 7
        %s381 = smul.addr %s380, 8
        %s382 = smul.addr %s378, 64
        %s383 = sadd.s32 %s381, %s382
        %s384 = smul.addr %s383, 8
        %s385 = scalar_lea.vmem %s1, %s384
        %p386 = pneg %p91
        %p387 = pneg %p88
        %s388 = sadd.s32 %s27, 1
        %p389 = scmp.lt.s32.totalorder %s388, 7
        %s390 = scalar_select %p389, %s388, 7
        %p391 = scmp.lt.s32.totalorder %s26, 1
        %s392 = scalar_select %p391, %s26, 1
        %p393 = scmp.lt.s32.totalorder %s390, 7
        %s394 = scalar_select %p393, %s390, 7
        %s395 = smul.addr %s394, 8
        %s396 = smul.addr %s392, 64
        %s397 = sadd.s32 %s395, %s396
        %s398 = smul.addr %s397, 8
        %s399 = scalar_lea.vmem %s2, %s398
        %p400 = pneg %p125
        %p401 = pneg %p122
        %p402 = pneg %p146
        %p403 = pneg %p143
        %p404 = pneg %p167
        %p405 = pneg %p164
        %p406 = pneg %p188
        %p407 = pneg %p185
        %p408 = pneg %p209
        %p409 = pneg %p206
        %p410 = scmp.lt.s32.totalorder %s26, 1
        %s411 = scalar_select %p410, %s26, 1
        %p412 = scmp.lt.s32.totalorder %s27, 7
        %s413 = scalar_select %p412, %s27, 7
        %s414 = smul.addr %s413, 8
        %s415 = smul.addr %s411, 64
        %s416 = sadd.s32 %s414, %s415
        %s417 = smul.addr %s416, 8
        %s418 = scalar_lea.vmem %s7, %s417
        %p419 = pneg %p237
        %p420 = pneg %p234
        %p421 = pneg %p265
        %p422 = pneg %p262
        %s423 = sand.u32 %s252, 1
        %s424 = scalar_lea.sflag [#allocation5], %s423
        %s425 = sand.u32 %s252, 1
        %s426 = smul.addr %s425, 64
        %s427 = scalar_lea.vmem [#allocation4], %s426
        %s428 = ssub.s32 %s27, 1
        %p429 = scmp.gt.s32.totalorder %s428, 0
        %s430 = scalar_select %p429, %s428, 0
        %p431 = scmp.lt.s32.totalorder %s26, 1
        %s432 = scalar_select %p431, %s26, 1
        %p433 = scmp.lt.s32.totalorder %s430, 7
        %s434 = scalar_select %p433, %s430, 7
        %s435 = smul.addr %s434, 8
        %s436 = smul.addr %s432, 64
        %s437 = sadd.s32 %s435, %s436
        %s438 = smul.addr %s437, 8
        %s439 = scalar_lea.vmem %s0, %s438
        %s440 = ssub.s32 %s27, 1
        %p441 = scmp.gt.s32.totalorder %s440, 0
        %s442 = scalar_select %p441, %s440, 0
        %p443 = scmp.lt.s32.totalorder %s26, 1
        %s444 = scalar_select %p443, %s26, 1
        %p445 = scmp.lt.s32.totalorder %s27, 7
        %s446 = scalar_select %p445, %s27, 7
        %s447 = smul.addr %s446, 8
        %s448 = smul.addr %s444, 64
        %s449 = sadd.s32 %s447, %s448
        %s450 = smul.addr %s449, 8
        %s451 = scalar_lea.vmem %s1, %s450
        %s452 = sadd.s32 %s27, 1
        %p453 = scmp.lt.s32.totalorder %s452, 7
        %s454 = scalar_select %p453, %s452, 7
        %p455 = scmp.lt.s32.totalorder %s26, 1
        %s456 = scalar_select %p455, %s26, 1
        %p457 = scmp.lt.s32.totalorder %s454, 7
        %s458 = scalar_select %p457, %s454, 7
        %s459 = smul.addr %s458, 8
        %s460 = smul.addr %s456, 64
        %s461 = sadd.s32 %s459, %s460
        %s462 = smul.addr %s461, 8
        %s463 = scalar_lea.vmem %s2, %s462
        %s464 = sadd.s32 %s27, 1
        %p465 = scmp.lt.s32.totalorder %s464, 7
        %s466 = scalar_select %p465, %s464, 7
        %p467 = scmp.lt.s32.totalorder %s26, 1
        %s468 = scalar_select %p467, %s26, 1
        %p469 = scmp.lt.s32.totalorder %s27, 7
        %s470 = scalar_select %p469, %s27, 7
        %s471 = smul.addr %s470, 8
        %s472 = smul.addr %s468, 64
        %s473 = sadd.s32 %s471, %s472
        %s474 = smul.addr %s473, 8
        %s475 = scalar_lea.vmem %s7, %s474
        %vm477 = vcmask 519168
        %478 = vst.msk [vmem:[#allocation2] sm:$0xf] %vm477, 0
        %vm479 = vcmask 516096
        %480 = vst.msk [vmem:[#allocation2 + $0x4] sm:$0x1] %vm479, 0
        %481 = vst.msk [vmem:[#allocation2 + $0x8] sm:$0xf] %vm477, 0
        %482 = vst.msk [vmem:[#allocation2 + $0xc] sm:$0x1] %vm479, 0
        %483 = vst.msk [vmem:[#allocation2 + $0x10] sm:$0xf] %vm477, 0
        %484 = vst.msk [vmem:[#allocation2 + $0x14] sm:$0x1] %vm479, 0
        %485 = vst.msk [vmem:[#allocation2 + $0x18] sm:$0xf] %vm477, 0
        %486 = vst.msk [vmem:[#allocation2 + $0x1c] sm:$0x1] %vm479, 0
        %487 = vst.msk [vmem:[#allocation2 + $0x20] sm:$0xf] %vm477, 0
        %488 = vst.msk [vmem:[#allocation2 + $0x24] sm:$0x1] %vm479, 0
        %489 = vst.msk [vmem:[#allocation2 + $0x28] sm:$0xf] %vm477, 0
        %490 = vst.msk [vmem:[#allocation2 + $0x2c] sm:$0x1] %vm479, 0
        %491 = vst.msk [vmem:[#allocation2 + $0x30] sm:$0xf] %vm477, 0
        %492 = vst.msk [vmem:[#allocation2 + $0x34] sm:$0x1] %vm479, 0
        %493 = vst.msk [vmem:[#allocation2 + $0x38] sm:$0xf] %vm477, 0
        %494 = vst.msk [vmem:[#allocation2 + $0x3c] sm:$0x1] %vm479, 0
        %495 = vst.msk [vmem:[#allocation2 + $0x40] sm:$0xf] %vm477, 0
        %496 = vst.msk [vmem:[#allocation2 + $0x44] sm:$0x1] %vm479, 0
        %497 = vst.msk [vmem:[#allocation2 + $0x48] sm:$0xf] %vm477, 0
        %498 = vst.msk [vmem:[#allocation2 + $0x4c] sm:$0x1] %vm479, 0
        %v499 = vld [vmem:[%s3] sm:$0x1]
        %v500 = vld [vmem:[%s4] sm:$0x1]
        %v501 = vld [vmem:[%s439] sm:$0xff]
        %v502 = vld [vmem:[%s439 + $0x8] sm:$0xff]
        %v503 = vld [vmem:[%s439 + $0x10] sm:$0xff]
        %v504 = vld [vmem:[%s439 + $0x18] sm:$0xff]
        %v505 = vld [vmem:[%s439 + $0x20] sm:$0xff]
        %v506 = vld [vmem:[%s439 + $0x28] sm:$0xff]
        %v507 = vld [vmem:[%s439 + $0x30] sm:$0xff]
        %v508 = vld [vmem:[%s439 + $0x38] sm:$0xff]
        %v510 = vlaneseq
        %v511 = vshrl.u32 %v510, 7
        %v512 = vsub.s32 0, %v511
        %v513 = vrot.slane %v499, %v512
        %v515 = vmul.f32 %v501, %v513
        %v516 = vmul.f32 %v502, %v513
        %v517 = vmul.f32 %v503, %v513
        %v518 = vmul.f32 %v504, %v513
        %v519 = vmul.f32 %v505, %v513
        %v520 = vmul.f32 %v506, %v513
        %v521 = vmul.f32 %v507, %v513
        %v522 = vmul.f32 %v508, %v513
        %v524 = vlaneseq
        %v525 = vshrl.u32 %v524, 7
        %v526 = vsub.s32 0, %v525
        %v527 = vrot.slane %v500, %v526
        %v529 = vadd.f32 %v515, %v527
        %v530 = vadd.f32 %v516, %v527
        %v531 = vadd.f32 %v517, %v527
        %v532 = vadd.f32 %v518, %v527
        %v533 = vadd.f32 %v519, %v527
        %v534 = vadd.f32 %v520, %v527
        %v535 = vadd.f32 %v521, %v527
        %v536 = vadd.f32 %v522, %v527
        %vm537 = vcmp.ge.f32.partialorder %v529, 0.0
        %vm538 = vcmp.ge.f32.partialorder %v530, 0.0
        %vm539 = vcmp.ge.f32.partialorder %v531, 0.0
        %vm540 = vcmp.ge.f32.partialorder %v532, 0.0
        %vm541 = vcmp.ge.f32.partialorder %v533, 0.0
        %vm542 = vcmp.ge.f32.partialorder %v534, 0.0
        %vm543 = vcmp.ge.f32.partialorder %v535, 0.0
        %vm544 = vcmp.ge.f32.partialorder %v536, 0.0
        %v545 = vmul.f32 %v529, 1e-05
        %v546 = vmul.f32 %v530, 1e-05
        %v547 = vmul.f32 %v531, 1e-05
        %v548 = vmul.f32 %v532, 1e-05
        %v549 = vmul.f32 %v533, 1e-05
        %v550 = vmul.f32 %v534, 1e-05
        %v551 = vmul.f32 %v535, 1e-05
        %v552 = vmul.f32 %v536, 1e-05
        %v553 = vsel %vm537, %v529, %v545
        %v554 = vsel %vm538, %v530, %v546
        %v555 = vsel %vm539, %v531, %v547
        %v556 = vsel %vm540, %v532, %v548
        %v557 = vsel %vm541, %v533, %v549
        %v558 = vsel %vm542, %v534, %v550
        %v559 = vsel %vm543, %v535, %v551
        %v560 = vsel %vm544, %v536, %v552
        %p561 = scmp.gt.s32.totalorder %s27, 0
        %s562 = scalar_select %p561, 1, 0
        %v563 = vstv %s562
        %vm564 = vcmp.eq.s32.totalorder %v563, 1
        %v565 = vsel %vm564, %v553, 0.0
        %v566 = vsel %vm564, %v554, 0.0
        %v567 = vsel %vm564, %v555, 0.0
        %v568 = vsel %vm564, %v556, 0.0
        %v569 = vsel %vm564, %v557, 0.0
        %v570 = vsel %vm564, %v558, 0.0
        %v571 = vsel %vm564, %v559, 0.0
        %v572 = vsel %vm564, %v560, 0.0
        %v573 = vpack.c.bf16 %v565, %v565
        %v574 = vpack.c.bf16 %v566, %v566
        %v575 = vpack.c.bf16 %v567, %v567
        %v576 = vpack.c.bf16 %v568, %v568
        %v577 = vpack.c.bf16 %v569, %v569
        %v578 = vpack.c.bf16 %v570, %v570
        %v579 = vpack.c.bf16 %v571, %v571
        %v580 = vpack.c.bf16 %v572, %v572
        %v589 = vunpack.c.l.b16 %v573
        %v590 = vunpack.c.l.b16 %v574
        %v591 = vunpack.c.l.b16 %v575
        %v592 = vunpack.c.l.b16 %v576
        %v593 = vunpack.c.l.b16 %v577
        %v594 = vunpack.c.l.b16 %v578
        %v595 = vunpack.c.l.b16 %v579
        %v596 = vunpack.c.l.b16 %v580
        %v597 = vpack.c.b16 %v589, %v589
        %v598 = vpack.c.b16 %v590, %v590
        %v599 = vpack.c.b16 %v591, %v591
        %v600 = vpack.c.b16 %v592, %v592
        %v601 = vpack.c.b16 %v593, %v593
        %v602 = vpack.c.b16 %v594, %v594
        %v603 = vpack.c.b16 %v595, %v595
        %v604 = vpack.c.b16 %v596, %v596
        %v606 = vshrl.u32 %v597, 16
        %v608 = vrot.slane %v606, 7
        %v609 = vshll.u32 %v597, 16
        %v611 = vor.u32 %v608, %v609
        %v612 = vrot.slane %v608, 4
        %v614 = vshrl.u32 %v598, 16
        %v616 = vrot.slane %v614, 7
        %v617 = vshll.u32 %v598, 16
        %v619 = vor.u32 %v616, %v617
        %v620 = vrot.slane %v616, 4
        %v622 = vshrl.u32 %v599, 16
        %v624 = vrot.slane %v622, 7
        %v625 = vshll.u32 %v599, 16
        %v627 = vor.u32 %v624, %v625
        %v628 = vrot.slane %v624, 4
        %v630 = vshrl.u32 %v600, 16
        %v632 = vrot.slane %v630, 7
        %v633 = vshll.u32 %v600, 16
        %v635 = vor.u32 %v632, %v633
        %v636 = vrot.slane %v632, 4
        %v638 = vshrl.u32 %v601, 16
        %v640 = vrot.slane %v638, 7
        %v641 = vshll.u32 %v601, 16
        %v643 = vor.u32 %v640, %v641
        %v644 = vrot.slane %v640, 4
        %v646 = vshrl.u32 %v602, 16
        %v648 = vrot.slane %v646, 7
        %v649 = vshll.u32 %v602, 16
        %v651 = vor.u32 %v648, %v649
        %v652 = vrot.slane %v648, 4
        %v654 = vshrl.u32 %v603, 16
        %v656 = vrot.slane %v654, 7
        %v657 = vshll.u32 %v603, 16
        %v659 = vor.u32 %v656, %v657
        %v660 = vrot.slane %v656, 4
        %v662 = vshrl.u32 %v604, 16
        %v664 = vrot.slane %v662, 7
        %v665 = vshll.u32 %v604, 16
        %v667 = vor.u32 %v664, %v665
        %v668 = vrot.slane %v664, 4
        %s685 = scalar_lea.vmem [#allocation2], 8
        %vm686 = vcmask 519168
        %vm687 = vsmask.f32 7938
        %vm688 = vmand %vm686, %vm687
        %v689 = vld [vmem:[%s685] sm:$0xf]
        %v690 = vsel %vm688, %v611, %v689
        %691 = vst [vmem:[%s685] sm:$0xf] %v690
        %vm692 = vcmask 516096
        %vm693 = vsmask.f32 256
        %vm694 = vmand %vm692, %vm693
        %v695 = vld [vmem:[%s685 + $0x4] sm:$0x1]
        %v696 = vsel %vm694, %v612, %v695
        %697 = vst [vmem:[%s685 + $0x4] sm:$0x1] %v696
        %v698 = vld [vmem:[%s685 + $0x8] sm:$0xf]
        %v699 = vsel %vm688, %v619, %v698
        %700 = vst [vmem:[%s685 + $0x8] sm:$0xf] %v699
        %v701 = vld [vmem:[%s685 + $0xc] sm:$0x1]
        %v702 = vsel %vm694, %v620, %v701
        %703 = vst [vmem:[%s685 + $0xc] sm:$0x1] %v702
        %v704 = vld [vmem:[%s685 + $0x10] sm:$0xf]
        %v705 = vsel %vm688, %v627, %v704
        %706 = vst [vmem:[%s685 + $0x10] sm:$0xf] %v705
        %v707 = vld [vmem:[%s685 + $0x14] sm:$0x1]
        %v708 = vsel %vm694, %v628, %v707
        %709 = vst [vmem:[%s685 + $0x14] sm:$0x1] %v708
        %v710 = vld [vmem:[%s685 + $0x18] sm:$0xf]
        %v711 = vsel %vm688, %v635, %v710
        %712 = vst [vmem:[%s685 + $0x18] sm:$0xf] %v711
        %v713 = vld [vmem:[%s685 + $0x1c] sm:$0x1]
        %v714 = vsel %vm694, %v636, %v713
        %715 = vst [vmem:[%s685 + $0x1c] sm:$0x1] %v714
        %v716 = vld [vmem:[%s685 + $0x20] sm:$0xf]
        %v717 = vsel %vm688, %v643, %v716
        %718 = vst [vmem:[%s685 + $0x20] sm:$0xf] %v717
        %v719 = vld [vmem:[%s685 + $0x24] sm:$0x1]
        %v720 = vsel %vm694, %v644, %v719
        %721 = vst [vmem:[%s685 + $0x24] sm:$0x1] %v720
        %v722 = vld [vmem:[%s685 + $0x28] sm:$0xf]
        %v723 = vsel %vm688, %v651, %v722
        %724 = vst [vmem:[%s685 + $0x28] sm:$0xf] %v723
        %v725 = vld [vmem:[%s685 + $0x2c] sm:$0x1]
        %v726 = vsel %vm694, %v652, %v725
        %727 = vst [vmem:[%s685 + $0x2c] sm:$0x1] %v726
        %v728 = vld [vmem:[%s685 + $0x30] sm:$0xf]
        %v729 = vsel %vm688, %v659, %v728
        %730 = vst [vmem:[%s685 + $0x30] sm:$0xf] %v729
        %v731 = vld [vmem:[%s685 + $0x34] sm:$0x1]
        %v732 = vsel %vm694, %v660, %v731
        %733 = vst [vmem:[%s685 + $0x34] sm:$0x1] %v732
        %v734 = vld [vmem:[%s685 + $0x38] sm:$0xf]
        %v735 = vsel %vm688, %v667, %v734
        %736 = vst [vmem:[%s685 + $0x38] sm:$0xf] %v735
        %v737 = vld [vmem:[%s685 + $0x3c] sm:$0x1]
        %v738 = vsel %vm694, %v668, %v737
        %739 = vst [vmem:[%s685 + $0x3c] sm:$0x1] %v738
        %v740 = vld [vmem:[#allocation2] sm:$0xf]
        %v741 = vld [vmem:[#allocation2 + $0x8] sm:$0xf]
        %v742 = vld [vmem:[#allocation2 + $0x10] sm:$0xf]
        %v743 = vld [vmem:[#allocation2 + $0x18] sm:$0xf]
        %v744 = vld [vmem:[#allocation2 + $0x20] sm:$0xf]
        %v745 = vld [vmem:[#allocation2 + $0x28] sm:$0xf]
        %v746 = vld [vmem:[#allocation2 + $0x30] sm:$0xf]
        %v747 = vld [vmem:[#allocation2 + $0x38] sm:$0xf]
        %v748 = vld [vmem:[#allocation2 + $0x4] sm:$0x1]
        %v749 = vld [vmem:[#allocation2 + $0xc] sm:$0x1]
        %v750 = vld [vmem:[#allocation2 + $0x14] sm:$0x1]
        %v751 = vld [vmem:[#allocation2 + $0x1c] sm:$0x1]
        %v752 = vld [vmem:[#allocation2 + $0x24] sm:$0x1]
        %v753 = vld [vmem:[#allocation2 + $0x2c] sm:$0x1]
        %v754 = vld [vmem:[#allocation2 + $0x34] sm:$0x1]
        %v755 = vld [vmem:[#allocation2 + $0x3c] sm:$0x1]
        %v756 = vld [vmem:[#allocation2] sm:$0xe]
        %v757 = vld [vmem:[#allocation2 + $0x8] sm:$0xe]
        %v758 = vld [vmem:[#allocation2 + $0x10] sm:$0xe]
        %v759 = vld [vmem:[#allocation2 + $0x18] sm:$0xe]
        %v760 = vld [vmem:[#allocation2 + $0x20] sm:$0xe]
        %v761 = vld [vmem:[#allocation2 + $0x28] sm:$0xe]
        %v762 = vld [vmem:[#allocation2 + $0x30] sm:$0xe]
        %v763 = vld [vmem:[#allocation2 + $0x38] sm:$0xe]
        %v780 = vunpack.c.l.b16 %v740
        %v781 = vunpack.c.l.b16 %v748
        %v782 = vunpack.c.l.b16 %v741
        %v783 = vunpack.c.l.b16 %v749
        %v784 = vunpack.c.l.b16 %v742
        %v785 = vunpack.c.l.b16 %v750
        %v786 = vunpack.c.l.b16 %v743
        %v787 = vunpack.c.l.b16 %v751
        %v788 = vunpack.c.l.b16 %v744
        %v789 = vunpack.c.l.b16 %v752
        %v790 = vunpack.c.l.b16 %v745
        %v791 = vunpack.c.l.b16 %v753
        %v792 = vunpack.c.l.b16 %v746
        %v793 = vunpack.c.l.b16 %v754
        %v794 = vunpack.c.l.b16 %v747
        %v795 = vunpack.c.l.b16 %v755
        %v796 = vpack.c.b16 %v781, %v780
        %v797 = vpack.c.b16 %v783, %v782
        %v798 = vpack.c.b16 %v785, %v784
        %v799 = vpack.c.b16 %v787, %v786
        %v800 = vpack.c.b16 %v789, %v788
        %v801 = vpack.c.b16 %v791, %v790
        %v802 = vpack.c.b16 %v793, %v792
        %v803 = vpack.c.b16 %v795, %v794
        %v805 = vshrl.u32 %v796, 16
        %v807 = vshll.u32 %v796, 16
        %v809 = vrot.slane %v807, 1
        %v810 = vor.u32 %v805, %v809
        %v812 = vshrl.u32 %v797, 16
        %v814 = vshll.u32 %v797, 16
        %v816 = vrot.slane %v814, 1
        %v817 = vor.u32 %v812, %v816
        %v819 = vshrl.u32 %v798, 16
        %v821 = vshll.u32 %v798, 16
        %v823 = vrot.slane %v821, 1
        %v824 = vor.u32 %v819, %v823
        %v826 = vshrl.u32 %v799, 16
        %v828 = vshll.u32 %v799, 16
        %v830 = vrot.slane %v828, 1
        %v831 = vor.u32 %v826, %v830
        %v833 = vshrl.u32 %v800, 16
        %v835 = vshll.u32 %v800, 16
        %v837 = vrot.slane %v835, 1
        %v838 = vor.u32 %v833, %v837
        %v840 = vshrl.u32 %v801, 16
        %v842 = vshll.u32 %v801, 16
        %v844 = vrot.slane %v842, 1
        %v845 = vor.u32 %v840, %v844
        %v847 = vshrl.u32 %v802, 16
        %v849 = vshll.u32 %v802, 16
        %v851 = vrot.slane %v849, 1
        %v852 = vor.u32 %v847, %v851
        %v854 = vshrl.u32 %v803, 16
        %v856 = vshll.u32 %v803, 16
        %v858 = vrot.slane %v856, 1
        %v859 = vor.u32 %v854, %v858
        %860 = vrot.lane.b32.xlu0 %v810, 64
        %v861 = vpop.permute.xlu0 %860
        %862 = vrot.lane.b32.xlu0 %v817, 64
        %v863 = vpop.permute.xlu0 %862
        %864 = vrot.lane.b32.xlu0 %v824, 64
        %v865 = vpop.permute.xlu0 %864
        %866 = vrot.lane.b32.xlu0 %v831, 64
        %v867 = vpop.permute.xlu0 %866
        %868 = vrot.lane.b32.xlu0 %v838, 64
        %v869 = vpop.permute.xlu0 %868
        %870 = vrot.lane.b32.xlu0 %v845, 64
        %v871 = vpop.permute.xlu0 %870
        %872 = vrot.lane.b32.xlu0 %v852, 64
        %v873 = vpop.permute.xlu0 %872
        %874 = vrot.lane.b32.xlu0 %v859, 64
        %v875 = vpop.permute.xlu0 %874
        %v884 = vunpack.c.l.b16 %v756
        %v885 = vunpack.c.l.b16 %v757
        %v886 = vunpack.c.l.b16 %v758
        %v887 = vunpack.c.l.b16 %v759
        %v888 = vunpack.c.l.b16 %v760
        %v889 = vunpack.c.l.b16 %v761
        %v890 = vunpack.c.l.b16 %v762
        %v891 = vunpack.c.l.b16 %v763
        %v892 = vpack.c.b16 %v781, %v884
        %v893 = vpack.c.b16 %v783, %v885
        %v894 = vpack.c.b16 %v785, %v886
        %v895 = vpack.c.b16 %v787, %v887
        %v896 = vpack.c.b16 %v789, %v888
        %v897 = vpack.c.b16 %v791, %v889
        %v898 = vpack.c.b16 %v793, %v890
        %v899 = vpack.c.b16 %v795, %v891
        %v900 = vrot.slane %v892, 1
        %v901 = vrot.slane %v893, 1
        %v902 = vrot.slane %v894, 1
        %v903 = vrot.slane %v895, 1
        %v904 = vrot.slane %v896, 1
        %v905 = vrot.slane %v897, 1
        %v906 = vrot.slane %v898, 1
        %v907 = vrot.slane %v899, 1
        %vm908 = vcmask 523264
        %v911 = vsel %vm908, %v740, %v861
        %v914 = vsel %vm908, %v741, %v863
        %v917 = vsel %vm908, %v742, %v865
        %v920 = vsel %vm908, %v743, %v867
        %v923 = vsel %vm908, %v744, %v869
        %v926 = vsel %vm908, %v745, %v871
        %v929 = vsel %vm908, %v746, %v873
        %v932 = vsel %vm908, %v747, %v875
        %v941 = vunpack.c.l.b16 %v911
        %v942 = vunpack.c.l.b16 %v900
        %v943 = vunpack.c.l.b16 %v914
        %v944 = vunpack.c.l.b16 %v901
        %v945 = vunpack.c.l.b16 %v917
        %v946 = vunpack.c.l.b16 %v902
        %v947 = vunpack.c.l.b16 %v920
        %v948 = vunpack.c.l.b16 %v903
        %v949 = vunpack.c.l.b16 %v923
        %v950 = vunpack.c.l.b16 %v904
        %v951 = vunpack.c.l.b16 %v926
        %v952 = vunpack.c.l.b16 %v905
        %v953 = vunpack.c.l.b16 %v929
        %v954 = vunpack.c.l.b16 %v906
        %v955 = vunpack.c.l.b16 %v932
        %v956 = vunpack.c.l.b16 %v907
        %v957 = vld [vmem:[%s5] sm:$0xf]
        %v958 = vld [vmem:[%s5 + $0x4] sm:$0xf]
        %v959 = vld [vmem:[%s5 + $0x8] sm:$0xf]
        %v960 = vld [vmem:[%s5 + $0xc] sm:$0xf]
        %v961 = vld [vmem:[%s5 + $0x10] sm:$0xf]
        %v962 = vld [vmem:[%s5 + $0x14] sm:$0xf]
        %v963 = vld [vmem:[%s5 + $0x18] sm:$0xf]
        %v964 = vld [vmem:[%s5 + $0x1c] sm:$0xf]
        %v965 = vld [vmem:[%s5 + $0x20] sm:$0xf]
        %v966 = vld [vmem:[%s5 + $0x24] sm:$0xf]
        %v967 = vld [vmem:[%s5 + $0x28] sm:$0xf]
        %v968 = vld [vmem:[%s5 + $0x2c] sm:$0xf]
        %v969 = vld [vmem:[%s5 + $0x30] sm:$0xf]
        %v970 = vld [vmem:[%s5 + $0x34] sm:$0xf]
        %v971 = vld [vmem:[%s5 + $0x38] sm:$0xf]
        %v972 = vld [vmem:[%s5 + $0x3c] sm:$0xf]
        %v973 = vld [vmem:[%s5 + $0x40] sm:$0xf]
        %v974 = vld [vmem:[%s5 + $0x44] sm:$0xf]
        %v975 = vld [vmem:[%s5 + $0x48] sm:$0xf]
        %v976 = vld [vmem:[%s5 + $0x4c] sm:$0xf]
        %v977 = vld [vmem:[%s5 + $0x50] sm:$0xf]
        %v978 = vld [vmem:[%s5 + $0x54] sm:$0xf]
        %v979 = vld [vmem:[%s5 + $0x58] sm:$0xf]
        %v980 = vld [vmem:[%s5 + $0x5c] sm:$0xf]
        %v981 = vld [vmem:[%s685] sm:$0xf]
        %v982 = vld [vmem:[%s685 + $0x8] sm:$0xf]
        %v983 = vld [vmem:[%s685 + $0x10] sm:$0xf]
        %v984 = vld [vmem:[%s685 + $0x18] sm:$0xf]
        %v985 = vld [vmem:[%s685 + $0x20] sm:$0xf]
        %v986 = vld [vmem:[%s685 + $0x28] sm:$0xf]
        %v987 = vld [vmem:[%s685 + $0x30] sm:$0xf]
        %v988 = vld [vmem:[%s685 + $0x38] sm:$0xf]
        %v989 = vld [vmem:[%s685 + $0x4] sm:$0x1]
        %v990 = vld [vmem:[%s685 + $0xc] sm:$0x1]
        %v991 = vld [vmem:[%s685 + $0x14] sm:$0x1]
        %v992 = vld [vmem:[%s685 + $0x1c] sm:$0x1]
        %v993 = vld [vmem:[%s685 + $0x24] sm:$0x1]
        %v994 = vld [vmem:[%s685 + $0x2c] sm:$0x1]
        %v995 = vld [vmem:[%s685 + $0x34] sm:$0x1]
        %v996 = vld [vmem:[%s685 + $0x3c] sm:$0x1]
        %v997 = vld [vmem:[%s685] sm:$0xe]
        %v998 = vld [vmem:[%s685 + $0x8] sm:$0xe]
        %v999 = vld [vmem:[%s685 + $0x10] sm:$0xe]
        %v1000 = vld [vmem:[%s685 + $0x18] sm:$0xe]
        %v1001 = vld [vmem:[%s685 + $0x20] sm:$0xe]
        %v1002 = vld [vmem:[%s685 + $0x28] sm:$0xe]
        %v1003 = vld [vmem:[%s685 + $0x30] sm:$0xe]
        %v1004 = vld [vmem:[%s685 + $0x38] sm:$0xe]
        %v1021 = vunpack.c.l.b16 %v981
        %v1022 = vunpack.c.l.b16 %v989
        %v1023 = vunpack.c.l.b16 %v982
        %v1024 = vunpack.c.l.b16 %v990
        %v1025 = vunpack.c.l.b16 %v983
        %v1026 = vunpack.c.l.b16 %v991
        %v1027 = vunpack.c.l.b16 %v984
        %v1028 = vunpack.c.l.b16 %v992
        %v1029 = vunpack.c.l.b16 %v985
        %v1030 = vunpack.c.l.b16 %v993
        %v1031 = vunpack.c.l.b16 %v986
        %v1032 = vunpack.c.l.b16 %v994
        %v1033 = vunpack.c.l.b16 %v987
        %v1034 = vunpack.c.l.b16 %v995
        %v1035 = vunpack.c.l.b16 %v988
        %v1036 = vunpack.c.l.b16 %v996
        %v1037 = vpack.c.b16 %v1022, %v1021
        %v1038 = vpack.c.b16 %v1024, %v1023
        %v1039 = vpack.c.b16 %v1026, %v1025
        %v1040 = vpack.c.b16 %v1028, %v1027
        %v1041 = vpack.c.b16 %v1030, %v1029
        %v1042 = vpack.c.b16 %v1032, %v1031
        %v1043 = vpack.c.b16 %v1034, %v1033
        %v1044 = vpack.c.b16 %v1036, %v1035
        %v1046 = vshrl.u32 %v1037, 16
        %v1048 = vshll.u32 %v1037, 16
        %v1050 = vrot.slane %v1048, 1
        %v1051 = vor.u32 %v1046, %v1050
        %v1053 = vshrl.u32 %v1038, 16
        %v1055 = vshll.u32 %v1038, 16
        %v1057 = vrot.slane %v1055, 1
        %v1058 = vor.u32 %v1053, %v1057
        %v1060 = vshrl.u32 %v1039, 16
        %v1062 = vshll.u32 %v1039, 16
        %v1064 = vrot.slane %v1062, 1
        %v1065 = vor.u32 %v1060, %v1064
        %v1067 = vshrl.u32 %v1040, 16
        %v1069 = vshll.u32 %v1040, 16
        %v1071 = vrot.slane %v1069, 1
        %v1072 = vor.u32 %v1067, %v1071
        %v1074 = vshrl.u32 %v1041, 16
        %v1076 = vshll.u32 %v1041, 16
        %v1078 = vrot.slane %v1076, 1
        %v1079 = vor.u32 %v1074, %v1078
        %v1081 = vshrl.u32 %v1042, 16
        %v1083 = vshll.u32 %v1042, 16
        %v1085 = vrot.slane %v1083, 1
        %v1086 = vor.u32 %v1081, %v1085
        %v1088 = vshrl.u32 %v1043, 16
        %v1090 = vshll.u32 %v1043, 16
        %v1092 = vrot.slane %v1090, 1
        %v1093 = vor.u32 %v1088, %v1092
        %v1095 = vshrl.u32 %v1044, 16
        %v1097 = vshll.u32 %v1044, 16
        %v1099 = vrot.slane %v1097, 1
        %v1100 = vor.u32 %v1095, %v1099
        %1101 = vrot.lane.b32.xlu0 %v1051, 64
        %v1102 = vpop.permute.xlu0 %1101
        %1103 = vrot.lane.b32.xlu0 %v1058, 64
        %v1104 = vpop.permute.xlu0 %1103
        %1105 = vrot.lane.b32.xlu0 %v1065, 64
        %v1106 = vpop.permute.xlu0 %1105
        %1107 = vrot.lane.b32.xlu0 %v1072, 64
        %v1108 = vpop.permute.xlu0 %1107
        %1109 = vrot.lane.b32.xlu0 %v1079, 64
        %v1110 = vpop.permute.xlu0 %1109
        %1111 = vrot.lane.b32.xlu0 %v1086, 64
        %v1112 = vpop.permute.xlu0 %1111
        %1113 = vrot.lane.b32.xlu0 %v1093, 64
        %v1114 = vpop.permute.xlu0 %1113
        %1115 = vrot.lane.b32.xlu0 %v1100, 64
        %v1116 = vpop.permute.xlu0 %1115
        %v1125 = vunpack.c.l.b16 %v997
        %v1126 = vunpack.c.l.b16 %v998
        %v1127 = vunpack.c.l.b16 %v999
        %v1128 = vunpack.c.l.b16 %v1000
        %v1129 = vunpack.c.l.b16 %v1001
        %v1130 = vunpack.c.l.b16 %v1002
        %v1131 = vunpack.c.l.b16 %v1003
        %v1132 = vunpack.c.l.b16 %v1004
        %v1133 = vpack.c.b16 %v1022, %v1125
        %v1134 = vpack.c.b16 %v1024, %v1126
        %v1135 = vpack.c.b16 %v1026, %v1127
        %v1136 = vpack.c.b16 %v1028, %v1128
        %v1137 = vpack.c.b16 %v1030, %v1129
        %v1138 = vpack.c.b16 %v1032, %v1130
        %v1139 = vpack.c.b16 %v1034, %v1131
        %v1140 = vpack.c.b16 %v1036, %v1132
        %v1141 = vrot.slane %v1133, 1
        %v1142 = vrot.slane %v1134, 1
        %v1143 = vrot.slane %v1135, 1
        %v1144 = vrot.slane %v1136, 1
        %v1145 = vrot.slane %v1137, 1
        %v1146 = vrot.slane %v1138, 1
        %v1147 = vrot.slane %v1139, 1
        %v1148 = vrot.slane %v1140, 1
        %v1151 = vsel %vm908, %v981, %v1102
        %v1154 = vsel %vm908, %v982, %v1104
        %v1157 = vsel %vm908, %v983, %v1106
        %v1160 = vsel %vm908, %v984, %v1108
        %v1163 = vsel %vm908, %v985, %v1110
        %v1166 = vsel %vm908, %v986, %v1112
        %v1169 = vsel %vm908, %v987, %v1114
        %v1172 = vsel %vm908, %v988, %v1116
        %v1181 = vunpack.c.l.b16 %v1151
        %v1182 = vunpack.c.l.b16 %v1141
        %v1183 = vunpack.c.l.b16 %v1154
        %v1184 = vunpack.c.l.b16 %v1142
        %v1185 = vunpack.c.l.b16 %v1157
        %v1186 = vunpack.c.l.b16 %v1143
        %v1187 = vunpack.c.l.b16 %v1160
        %v1188 = vunpack.c.l.b16 %v1144
        %v1189 = vunpack.c.l.b16 %v1163
        %v1190 = vunpack.c.l.b16 %v1145
        %v1191 = vunpack.c.l.b16 %v1166
        %v1192 = vunpack.c.l.b16 %v1146
        %v1193 = vunpack.c.l.b16 %v1169
        %v1194 = vunpack.c.l.b16 %v1147
        %v1195 = vunpack.c.l.b16 %v1172
        %v1196 = vunpack.c.l.b16 %v1148
        %s1197 = scalar_lea.vmem %s5, 96
        %v1198 = vld [vmem:[%s1197] sm:$0xf]
        %v1199 = vld [vmem:[%s1197 + $0x4] sm:$0xf]
        %v1200 = vld [vmem:[%s1197 + $0x8] sm:$0xf]
        %v1201 = vld [vmem:[%s1197 + $0xc] sm:$0xf]
        %v1202 = vld [vmem:[%s1197 + $0x10] sm:$0xf]
        %v1203 = vld [vmem:[%s1197 + $0x14] sm:$0xf]
        %v1204 = vld [vmem:[%s1197 + $0x18] sm:$0xf]
        %v1205 = vld [vmem:[%s1197 + $0x1c] sm:$0xf]
        %v1206 = vld [vmem:[%s1197 + $0x20] sm:$0xf]
        %v1207 = vld [vmem:[%s1197 + $0x24] sm:$0xf]
        %v1208 = vld [vmem:[%s1197 + $0x28] sm:$0xf]
        %v1209 = vld [vmem:[%s1197 + $0x2c] sm:$0xf]
        %v1210 = vld [vmem:[%s1197 + $0x30] sm:$0xf]
        %v1211 = vld [vmem:[%s1197 + $0x34] sm:$0xf]
        %v1212 = vld [vmem:[%s1197 + $0x38] sm:$0xf]
        %v1213 = vld [vmem:[%s1197 + $0x3c] sm:$0xf]
        %v1214 = vld [vmem:[%s1197 + $0x40] sm:$0xf]
        %v1215 = vld [vmem:[%s1197 + $0x44] sm:$0xf]
        %v1216 = vld [vmem:[%s1197 + $0x48] sm:$0xf]
        %v1217 = vld [vmem:[%s1197 + $0x4c] sm:$0xf]
        %v1218 = vld [vmem:[%s1197 + $0x50] sm:$0xf]
        %v1219 = vld [vmem:[%s1197 + $0x54] sm:$0xf]
        %v1220 = vld [vmem:[%s1197 + $0x58] sm:$0xf]
        %v1221 = vld [vmem:[%s1197 + $0x5c] sm:$0xf]
        %v1222 = vpack.c.b16 %v1183, %v1181
        %v1223 = vpack.c.b16 %v1184, %v1182
        %v1224 = vpack.c.b16 %v1187, %v1185
        %v1225 = vpack.c.b16 %v1188, %v1186
        %v1226 = vpack.c.b16 %v1191, %v1189
        %v1227 = vpack.c.b16 %v1192, %v1190
        %v1228 = vpack.c.b16 %v1195, %v1193
        %v1229 = vpack.c.b16 %v1196, %v1194
        %v1258 = vunpack.c.l.b16 %v1198
        %v1259 = vunpack.c.l.b16 %v1199
        %v1260 = vunpack.c.l.b16 %v1200
        %v1261 = vunpack.c.l.b16 %v1201
        %v1262 = vunpack.c.l.b16 %v1202
        %v1263 = vunpack.c.l.b16 %v1203
        %v1264 = vunpack.c.l.b16 %v1204
        %v1265 = vunpack.c.l.b16 %v1205
        %v1266 = vunpack.c.l.b16 %v1206
        %v1267 = vunpack.c.l.b16 %v1207
        %v1268 = vunpack.c.l.b16 %v1208
        %v1269 = vunpack.c.l.b16 %v1209
        %v1270 = vunpack.c.l.b16 %v1210
        %v1271 = vunpack.c.l.b16 %v1211
        %v1272 = vunpack.c.l.b16 %v1212
        %v1273 = vunpack.c.l.b16 %v1213
        %v1274 = vunpack.c.l.b16 %v1214
        %v1275 = vunpack.c.l.b16 %v1215
        %v1276 = vunpack.c.l.b16 %v1216
        %v1277 = vunpack.c.l.b16 %v1217
        %v1278 = vunpack.c.l.b16 %v1218
        %v1279 = vunpack.c.l.b16 %v1219
        %v1280 = vunpack.c.l.b16 %v1220
        %v1281 = vunpack.c.l.b16 %v1221
        %v1282 = vpack.c.b16 %v1259, %v1258
        %v1283 = vpack.c.b16 %v1261, %v1260
        %v1284 = vpack.c.b16 %v1263, %v1262
        %v1285 = vpack.c.b16 %v1265, %v1264
        %v1286 = vpack.c.b16 %v1267, %v1266
        %v1287 = vpack.c.b16 %v1269, %v1268
        %v1288 = vpack.c.b16 %v1271, %v1270
        %v1289 = vpack.c.b16 %v1273, %v1272
        %v1290 = vpack.c.b16 %v1275, %v1274
        %v1291 = vpack.c.b16 %v1277, %v1276
        %v1292 = vpack.c.b16 %v1279, %v1278
        %v1293 = vpack.c.b16 %v1281, %v1280
        %v1307 = vsel %vm908, %v1223, 0
        %v1310 = vsel %vm908, %v1225, 0
        %v1313 = vsel %vm908, %v1227, 0
        %v1316 = vsel %vm908, %v1229, 0
        %1318 = vmatprep.subr.bf16.mxu0 0
        %1319 = vmatpush1.bf16.msra.mxu0 %v1289
        %1320 = vmatprep.subr.bf16.mxu0 0
        %1321 = vmatpush1.bf16.msra.mxu0 %v1288
        %1322 = vmatprep.subr.bf16.mxu0 0
        %1323 = vmatpush1.bf16.msra.mxu0 %v1287
        %1324 = vmatprep.subr.bf16.mxu0 0
        %1325 = vmatpush1.bf16.msra.mxu0 %v1286
        %1326 = vmatprep.subr.bf16.mxu0 0
        %1327 = vmatpush1.bf16.msra.mxu0 %v1285
        %1328 = vmatprep.subr.bf16.mxu0 0
        %1329 = vmatpush1.bf16.msra.mxu0 %v1284
        %1330 = vmatprep.subr.bf16.mxu0 0
        %1331 = vmatpush1.bf16.msra.mxu0 %v1283
        %1332 = vmatprep.subr.bf16.mxu0 0
        %1333 = vmatpush1.bf16.msra.mxu0 %v1282
        %1334 = vmatprep.subr.bf16.mxu0 0
        %1335 = vmatpush2.bf16.msra.mxu0 0
        %1336 = vmatprep.subr.bf16.mxu0 0
        %1337 = vmatpush2.bf16.msra.mxu0 0
        %1338 = vmatprep.subr.bf16.mxu0 0
        %1339 = vmatpush2.bf16.msra.mxu0 0
        %1340 = vmatprep.subr.bf16.mxu0 0
        %1341 = vmatpush2.bf16.msra.mxu0 0
        %1342 = vmatprep.subr.bf16.mxu0 0
        %1343 = vmatpush2.bf16.msra.mxu0 %v1293
        %1344 = vmatprep.subr.bf16.mxu0 0
        %1345 = vmatpush2.bf16.msra.mxu0 %v1292
        %1346 = vmatprep.subr.bf16.mxu0 0
        %1347 = vmatpush2.bf16.msra.mxu0 %v1291
        %1348 = vmatprep.subr.bf16.mxu0 0
        %1349 = vmatpush2.bf16.msra.mxu0 %v1290
        %1350 = vmatprep.mubr.bf16.mxu0 %v1307
        %1351 = vmatmul.mubr.bf16.gmra.mxu0 %v1222
        %v1352 = vpop.f32.mrf.mxu0
        %v1353 = vadd.f32 0.0, %v1352
        %v1354 = vpop.f32.mrf.mxu0
        %v1355 = vpop.f32.mrf.mxu0
        %v1356 = vadd.f32 0.0, %v1355
        %v1357 = vpop.f32.mrf.mxu0
        %1358 = vmatprep.mubr.bf16.mxu0 %v1310
        %1359 = vmatmul.mubr.bf16.gmra.mxu0 %v1224
        %v1360 = vpop.f32.mrf.mxu0
        %v1361 = vadd.f32 0.0, %v1360
        %v1362 = vpop.f32.mrf.mxu0
        %v1363 = vpop.f32.mrf.mxu0
        %v1364 = vadd.f32 0.0, %v1363
        %v1365 = vpop.f32.mrf.mxu0
        %1366 = vmatprep.mubr.bf16.mxu0 %v1313
        %1367 = vmatmul.mubr.bf16.gmra.mxu0 %v1226
        %v1368 = vpop.f32.mrf.mxu0
        %v1369 = vadd.f32 0.0, %v1368
        %v1370 = vpop.f32.mrf.mxu0
        %v1371 = vpop.f32.mrf.mxu0
        %v1372 = vadd.f32 0.0, %v1371
        %v1373 = vpop.f32.mrf.mxu0
        %1374 = vmatprep.mubr.bf16.mxu0 %v1316
        %1375 = vmatmul.mubr.bf16.gmra.mxu0 %v1228
        %v1376 = vpop.f32.mrf.mxu0
        %v1377 = vadd.f32 0.0, %v1376
        %v1378 = vpop.f32.mrf.mxu0
        %v1379 = vpop.f32.mrf.mxu0
        %v1380 = vadd.f32 0.0, %v1379
        %v1381 = vpop.f32.mrf.mxu0
        %1382 = vdwg.mxu0
        %v1383 = vpack.c.b16 %v943, %v941
        %v1384 = vpack.c.b16 %v944, %v942
        %v1385 = vpack.c.b16 %v947, %v945
        %v1386 = vpack.c.b16 %v948, %v946
        %v1387 = vpack.c.b16 %v951, %v949
        %v1388 = vpack.c.b16 %v952, %v950
        %v1389 = vpack.c.b16 %v955, %v953
        %v1390 = vpack.c.b16 %v956, %v954
        %v1419 = vunpack.c.l.b16 %v957
        %v1420 = vunpack.c.l.b16 %v958
        %v1421 = vunpack.c.l.b16 %v959
        %v1422 = vunpack.c.l.b16 %v960
        %v1423 = vunpack.c.l.b16 %v961
        %v1424 = vunpack.c.l.b16 %v962
        %v1425 = vunpack.c.l.b16 %v963
        %v1426 = vunpack.c.l.b16 %v964
        %v1427 = vunpack.c.l.b16 %v965
        %v1428 = vunpack.c.l.b16 %v966
        %v1429 = vunpack.c.l.b16 %v967
        %v1430 = vunpack.c.l.b16 %v968
        %v1431 = vunpack.c.l.b16 %v969
        %v1432 = vunpack.c.l.b16 %v970
        %v1433 = vunpack.c.l.b16 %v971
        %v1434 = vunpack.c.l.b16 %v972
        %v1435 = vunpack.c.l.b16 %v973
        %v1436 = vunpack.c.l.b16 %v974
        %v1437 = vunpack.c.l.b16 %v975
        %v1438 = vunpack.c.l.b16 %v976
        %v1439 = vunpack.c.l.b16 %v977
        %v1440 = vunpack.c.l.b16 %v978
        %v1441 = vunpack.c.l.b16 %v979
        %v1442 = vunpack.c.l.b16 %v980
        %v1443 = vpack.c.b16 %v1420, %v1419
        %v1444 = vpack.c.b16 %v1422, %v1421
        %v1445 = vpack.c.b16 %v1424, %v1423
        %v1446 = vpack.c.b16 %v1426, %v1425
        %v1447 = vpack.c.b16 %v1428, %v1427
        %v1448 = vpack.c.b16 %v1430, %v1429
        %v1449 = vpack.c.b16 %v1432, %v1431
        %v1450 = vpack.c.b16 %v1434, %v1433
        %v1451 = vpack.c.b16 %v1436, %v1435
        %v1452 = vpack.c.b16 %v1438, %v1437
        %v1453 = vpack.c.b16 %v1440, %v1439
        %v1454 = vpack.c.b16 %v1442, %v1441
        %v1468 = vsel %vm908, %v1384, 0
        %v1471 = vsel %vm908, %v1386, 0
        %v1474 = vsel %vm908, %v1388, 0
        %v1477 = vsel %vm908, %v1390, 0
        %1479 = vmatprep.subr.bf16.mxu0 0
        %1480 = vmatpush1.bf16.msra.mxu0 %v1450
        %1481 = vmatprep.subr.bf16.mxu0 0
        %1482 = vmatpush1.bf16.msra.mxu0 %v1449
        %1483 = vmatprep.subr.bf16.mxu0 0
        %1484 = vmatpush1.bf16.msra.mxu0 %v1448
        %1485 = vmatprep.subr.bf16.mxu0 0
        %1486 = vmatpush1.bf16.msra.mxu0 %v1447
        %1487 = vmatprep.subr.bf16.mxu0 0
        %1488 = vmatpush1.bf16.msra.mxu0 %v1446
        %1489 = vmatprep.subr.bf16.mxu0 0
        %1490 = vmatpush1.bf16.msra.mxu0 %v1445
        %1491 = vmatprep.subr.bf16.mxu0 0
        %1492 = vmatpush1.bf16.msra.mxu0 %v1444
        %1493 = vmatprep.subr.bf16.mxu0 0
        %1494 = vmatpush1.bf16.msra.mxu0 %v1443
        %1495 = vmatprep.subr.bf16.mxu0 0
        %1496 = vmatpush2.bf16.msra.mxu0 0
        %1497 = vmatprep.subr.bf16.mxu0 0
        %1498 = vmatpush2.bf16.msra.mxu0 0
        %1499 = vmatprep.subr.bf16.mxu0 0
        %1500 = vmatpush2.bf16.msra.mxu0 0
        %1501 = vmatprep.subr.bf16.mxu0 0
        %1502 = vmatpush2.bf16.msra.mxu0 0
        %1503 = vmatprep.subr.bf16.mxu0 0
        %1504 = vmatpush2.bf16.msra.mxu0 %v1454
        %1505 = vmatprep.subr.bf16.mxu0 0
        %1506 = vmatpush2.bf16.msra.mxu0 %v1453
        %1507 = vmatprep.subr.bf16.mxu0 0
        %1508 = vmatpush2.bf16.msra.mxu0 %v1452
        %1509 = vmatprep.subr.bf16.mxu0 0
        %1510 = vmatpush2.bf16.msra.mxu0 %v1451
        %1511 = vmatprep.mubr.bf16.mxu0 %v1468
        %1512 = vmatmul.mubr.bf16.gmra.mxu0 %v1383
        %v1513 = vpop.f32.mrf.mxu0
        %v1514 = vadd.f32 %v1353, %v1513
        %v1515 = vpop.f32.mrf.mxu0
        %v1516 = vpop.f32.mrf.mxu0
        %v1517 = vadd.f32 %v1356, %v1516
        %v1518 = vpop.f32.mrf.mxu0
        %1519 = vmatprep.mubr.bf16.mxu0 %v1471
        %1520 = vmatmul.mubr.bf16.gmra.mxu0 %v1385
        %v1521 = vpop.f32.mrf.mxu0
        %v1522 = vadd.f32 %v1361, %v1521
        %v1523 = vpop.f32.mrf.mxu0
        %v1524 = vpop.f32.mrf.mxu0
        %v1525 = vadd.f32 %v1364, %v1524
        %v1526 = vpop.f32.mrf.mxu0
        %1527 = vmatprep.mubr.bf16.mxu0 %v1474
        %1528 = vmatmul.mubr.bf16.gmra.mxu0 %v1387
        %v1529 = vpop.f32.mrf.mxu0
        %v1530 = vadd.f32 %v1369, %v1529
        %v1531 = vpop.f32.mrf.mxu0
        %v1532 = vpop.f32.mrf.mxu0
        %v1533 = vadd.f32 %v1372, %v1532
        %v1534 = vpop.f32.mrf.mxu0
        %1535 = vmatprep.mubr.bf16.mxu0 %v1477
        %1536 = vmatmul.mubr.bf16.gmra.mxu0 %v1389
        %v1537 = vpop.f32.mrf.mxu0
        %v1538 = vadd.f32 %v1377, %v1537
        %v1539 = vpop.f32.mrf.mxu0
        %v1540 = vpop.f32.mrf.mxu0
        %v1541 = vadd.f32 %v1380, %v1540
        %v1542 = vpop.f32.mrf.mxu0
        %1543 = vdwg.mxu0
        %s1544 = scalar_lea.vmem [#allocation2], 16
        %v1545 = vld [vmem:[%s1544] sm:$0xf]
        %v1546 = vld [vmem:[%s1544 + $0x8] sm:$0xf]
        %v1547 = vld [vmem:[%s1544 + $0x10] sm:$0xf]
        %v1548 = vld [vmem:[%s1544 + $0x18] sm:$0xf]
        %v1549 = vld [vmem:[%s1544 + $0x20] sm:$0xf]
        %v1550 = vld [vmem:[%s1544 + $0x28] sm:$0xf]
        %v1551 = vld [vmem:[%s1544 + $0x30] sm:$0xf]
        %v1552 = vld [vmem:[%s1544 + $0x38] sm:$0xf]
        %v1553 = vld [vmem:[%s1544 + $0x4] sm:$0x1]
        %v1554 = vld [vmem:[%s1544 + $0xc] sm:$0x1]
        %v1555 = vld [vmem:[%s1544 + $0x14] sm:$0x1]
        %v1556 = vld [vmem:[%s1544 + $0x1c] sm:$0x1]
        %v1557 = vld [vmem:[%s1544 + $0x24] sm:$0x1]
        %v1558 = vld [vmem:[%s1544 + $0x2c] sm:$0x1]
        %v1559 = vld [vmem:[%s1544 + $0x34] sm:$0x1]
        %v1560 = vld [vmem:[%s1544 + $0x3c] sm:$0x1]
        %v1561 = vld [vmem:[%s1544] sm:$0xe]
        %v1562 = vld [vmem:[%s1544 + $0x8] sm:$0xe]
        %v1563 = vld [vmem:[%s1544 + $0x10] sm:$0xe]
        %v1564 = vld [vmem:[%s1544 + $0x18] sm:$0xe]
        %v1565 = vld [vmem:[%s1544 + $0x20] sm:$0xe]
        %v1566 = vld [vmem:[%s1544 + $0x28] sm:$0xe]
        %v1567 = vld [vmem:[%s1544 + $0x30] sm:$0xe]
        %v1568 = vld [vmem:[%s1544 + $0x38] sm:$0xe]
        %v1585 = vunpack.c.l.b16 %v1545
        %v1586 = vunpack.c.l.b16 %v1553
        %v1587 = vunpack.c.l.b16 %v1546
        %v1588 = vunpack.c.l.b16 %v1554
        %v1589 = vunpack.c.l.b16 %v1547
        %v1590 = vunpack.c.l.b16 %v1555
        %v1591 = vunpack.c.l.b16 %v1548
        %v1592 = vunpack.c.l.b16 %v1556
        %v1593 = vunpack.c.l.b16 %v1549
        %v1594 = vunpack.c.l.b16 %v1557
        %v1595 = vunpack.c.l.b16 %v1550
        %v1596 = vunpack.c.l.b16 %v1558
        %v1597 = vunpack.c.l.b16 %v1551
        %v1598 = vunpack.c.l.b16 %v1559
        %v1599 = vunpack.c.l.b16 %v1552
        %v1600 = vunpack.c.l.b16 %v1560
        %v1601 = vpack.c.b16 %v1586, %v1585
        %v1602 = vpack.c.b16 %v1588, %v1587
        %v1603 = vpack.c.b16 %v1590, %v1589
        %v1604 = vpack.c.b16 %v1592, %v1591
        %v1605 = vpack.c.b16 %v1594, %v1593
        %v1606 = vpack.c.b16 %v1596, %v1595
        %v1607 = vpack.c.b16 %v1598, %v1597
        %v1608 = vpack.c.b16 %v1600, %v1599
        %v1610 = vshrl.u32 %v1601, 16
        %v1612 = vshll.u32 %v1601, 16
        %v1614 = vrot.slane %v1612, 1
        %v1615 = vor.u32 %v1610, %v1614
        %v1617 = vshrl.u32 %v1602, 16
        %v1619 = vshll.u32 %v1602, 16
        %v1621 = vrot.slane %v1619, 1
        %v1622 = vor.u32 %v1617, %v1621
        %v1624 = vshrl.u32 %v1603, 16
        %v1626 = vshll.u32 %v1603, 16
        %v1628 = vrot.slane %v1626, 1
        %v1629 = vor.u32 %v1624, %v1628
        %v1631 = vshrl.u32 %v1604, 16
        %v1633 = vshll.u32 %v1604, 16
        %v1635 = vrot.slane %v1633, 1
        %v1636 = vor.u32 %v1631, %v1635
        %v1638 = vshrl.u32 %v1605, 16
        %v1640 = vshll.u32 %v1605, 16
        %v1642 = vrot.slane %v1640, 1
        %v1643 = vor.u32 %v1638, %v1642
        %v1645 = vshrl.u32 %v1606, 16
        %v1647 = vshll.u32 %v1606, 16
        %v1649 = vrot.slane %v1647, 1
        %v1650 = vor.u32 %v1645, %v1649
        %v1652 = vshrl.u32 %v1607, 16
        %v1654 = vshll.u32 %v1607, 16
        %v1656 = vrot.slane %v1654, 1
        %v1657 = vor.u32 %v1652, %v1656
        %v1659 = vshrl.u32 %v1608, 16
        %v1661 = vshll.u32 %v1608, 16
        %v1663 = vrot.slane %v1661, 1
        %v1664 = vor.u32 %v1659, %v1663
        %1665 = vrot.lane.b32.xlu0 %v1615, 64
        %v1666 = vpop.permute.xlu0 %1665
        %1667 = vrot.lane.b32.xlu0 %v1622, 64
        %v1668 = vpop.permute.xlu0 %1667
        %1669 = vrot.lane.b32.xlu0 %v1629, 64
        %v1670 = vpop.permute.xlu0 %1669
        %1671 = vrot.lane.b32.xlu0 %v1636, 64
        %v1672 = vpop.permute.xlu0 %1671
        %1673 = vrot.lane.b32.xlu0 %v1643, 64
        %v1674 = vpop.permute.xlu0 %1673
        %1675 = vrot.lane.b32.xlu0 %v1650, 64
        %v1676 = vpop.permute.xlu0 %1675
        %1677 = vrot.lane.b32.xlu0 %v1657, 64
        %v1678 = vpop.permute.xlu0 %1677
        %1679 = vrot.lane.b32.xlu0 %v1664, 64
        %v1680 = vpop.permute.xlu0 %1679
        %v1689 = vunpack.c.l.b16 %v1561
        %v1690 = vunpack.c.l.b16 %v1562
        %v1691 = vunpack.c.l.b16 %v1563
        %v1692 = vunpack.c.l.b16 %v1564
        %v1693 = vunpack.c.l.b16 %v1565
        %v1694 = vunpack.c.l.b16 %v1566
        %v1695 = vunpack.c.l.b16 %v1567
        %v1696 = vunpack.c.l.b16 %v1568
        %v1697 = vpack.c.b16 %v1586, %v1689
        %v1698 = vpack.c.b16 %v1588, %v1690
        %v1699 = vpack.c.b16 %v1590, %v1691
        %v1700 = vpack.c.b16 %v1592, %v1692
        %v1701 = vpack.c.b16 %v1594, %v1693
        %v1702 = vpack.c.b16 %v1596, %v1694
        %v1703 = vpack.c.b16 %v1598, %v1695
        %v1704 = vpack.c.b16 %v1600, %v1696
        %v1705 = vrot.slane %v1697, 1
        %v1706 = vrot.slane %v1698, 1
        %v1707 = vrot.slane %v1699, 1
        %v1708 = vrot.slane %v1700, 1
        %v1709 = vrot.slane %v1701, 1
        %v1710 = vrot.slane %v1702, 1
        %v1711 = vrot.slane %v1703, 1
        %v1712 = vrot.slane %v1704, 1
        %v1715 = vsel %vm908, %v1545, %v1666
        %v1718 = vsel %vm908, %v1546, %v1668
        %v1721 = vsel %vm908, %v1547, %v1670
        %v1724 = vsel %vm908, %v1548, %v1672
        %v1727 = vsel %vm908, %v1549, %v1674
        %v1730 = vsel %vm908, %v1550, %v1676
        %v1733 = vsel %vm908, %v1551, %v1678
        %v1736 = vsel %vm908, %v1552, %v1680
        %v1745 = vunpack.c.l.b16 %v1715
        %v1746 = vunpack.c.l.b16 %v1705
        %v1747 = vunpack.c.l.b16 %v1718
        %v1748 = vunpack.c.l.b16 %v1706
        %v1749 = vunpack.c.l.b16 %v1721
        %v1750 = vunpack.c.l.b16 %v1707
        %v1751 = vunpack.c.l.b16 %v1724
        %v1752 = vunpack.c.l.b16 %v1708
        %v1753 = vunpack.c.l.b16 %v1727
        %v1754 = vunpack.c.l.b16 %v1709
        %v1755 = vunpack.c.l.b16 %v1730
        %v1756 = vunpack.c.l.b16 %v1710
        %v1757 = vunpack.c.l.b16 %v1733
        %v1758 = vunpack.c.l.b16 %v1711
        %v1759 = vunpack.c.l.b16 %v1736
        %v1760 = vunpack.c.l.b16 %v1712
        %s1761 = scalar_lea.vmem %s5, 192
        %v1762 = vld [vmem:[%s1761] sm:$0xf]
        %v1763 = vld [vmem:[%s1761 + $0x4] sm:$0xf]
        %v1764 = vld [vmem:[%s1761 + $0x8] sm:$0xf]
        %v1765 = vld [vmem:[%s1761 + $0xc] sm:$0xf]
        %v1766 = vld [vmem:[%s1761 + $0x10] sm:$0xf]
        %v1767 = vld [vmem:[%s1761 + $0x14] sm:$0xf]
        %v1768 = vld [vmem:[%s1761 + $0x18] sm:$0xf]
        %v1769 = vld [vmem:[%s1761 + $0x1c] sm:$0xf]
        %v1770 = vld [vmem:[%s1761 + $0x20] sm:$0xf]
        %v1771 = vld [vmem:[%s1761 + $0x24] sm:$0xf]
        %v1772 = vld [vmem:[%s1761 + $0x28] sm:$0xf]
        %v1773 = vld [vmem:[%s1761 + $0x2c] sm:$0xf]
        %v1774 = vld [vmem:[%s1761 + $0x30] sm:$0xf]
        %v1775 = vld [vmem:[%s1761 + $0x34] sm:$0xf]
        %v1776 = vld [vmem:[%s1761 + $0x38] sm:$0xf]
        %v1777 = vld [vmem:[%s1761 + $0x3c] sm:$0xf]
        %v1778 = vld [vmem:[%s1761 + $0x40] sm:$0xf]
        %v1779 = vld [vmem:[%s1761 + $0x44] sm:$0xf]
        %v1780 = vld [vmem:[%s1761 + $0x48] sm:$0xf]
        %v1781 = vld [vmem:[%s1761 + $0x4c] sm:$0xf]
        %v1782 = vld [vmem:[%s1761 + $0x50] sm:$0xf]
        %v1783 = vld [vmem:[%s1761 + $0x54] sm:$0xf]
        %v1784 = vld [vmem:[%s1761 + $0x58] sm:$0xf]
        %v1785 = vld [vmem:[%s1761 + $0x5c] sm:$0xf]
        %v1786 = vpack.c.b16 %v1747, %v1745
        %v1787 = vpack.c.b16 %v1748, %v1746
        %v1788 = vpack.c.b16 %v1751, %v1749
        %v1789 = vpack.c.b16 %v1752, %v1750
        %v1790 = vpack.c.b16 %v1755, %v1753
        %v1791 = vpack.c.b16 %v1756, %v1754
        %v1792 = vpack.c.b16 %v1759, %v1757
        %v1793 = vpack.c.b16 %v1760, %v1758
        %v1822 = vunpack.c.l.b16 %v1762
        %v1823 = vunpack.c.l.b16 %v1763
        %v1824 = vunpack.c.l.b16 %v1764
        %v1825 = vunpack.c.l.b16 %v1765
        %v1826 = vunpack.c.l.b16 %v1766
        %v1827 = vunpack.c.l.b16 %v1767
        %v1828 = vunpack.c.l.b16 %v1768
        %v1829 = vunpack.c.l.b16 %v1769
        %v1830 = vunpack.c.l.b16 %v1770
        %v1831 = vunpack.c.l.b16 %v1771
        %v1832 = vunpack.c.l.b16 %v1772
        %v1833 = vunpack.c.l.b16 %v1773
        %v1834 = vunpack.c.l.b16 %v1774
        %v1835 = vunpack.c.l.b16 %v1775
        %v1836 = vunpack.c.l.b16 %v1776
        %v1837 = vunpack.c.l.b16 %v1777
        %v1838 = vunpack.c.l.b16 %v1778
        %v1839 = vunpack.c.l.b16 %v1779
        %v1840 = vunpack.c.l.b16 %v1780
        %v1841 = vunpack.c.l.b16 %v1781
        %v1842 = vunpack.c.l.b16 %v1782
        %v1843 = vunpack.c.l.b16 %v1783
        %v1844 = vunpack.c.l.b16 %v1784
        %v1845 = vunpack.c.l.b16 %v1785
        %v1846 = vpack.c.b16 %v1823, %v1822
        %v1847 = vpack.c.b16 %v1825, %v1824
        %v1848 = vpack.c.b16 %v1827, %v1826
        %v1849 = vpack.c.b16 %v1829, %v1828
        %v1850 = vpack.c.b16 %v1831, %v1830
        %v1851 = vpack.c.b16 %v1833, %v1832
        %v1852 = vpack.c.b16 %v1835, %v1834
        %v1853 = vpack.c.b16 %v1837, %v1836
        %v1854 = vpack.c.b16 %v1839, %v1838
        %v1855 = vpack.c.b16 %v1841, %v1840
        %v1856 = vpack.c.b16 %v1843, %v1842
        %v1857 = vpack.c.b16 %v1845, %v1844
        %v1871 = vsel %vm908, %v1787, 0
        %v1874 = vsel %vm908, %v1789, 0
        %v1877 = vsel %vm908, %v1791, 0
        %v1880 = vsel %vm908, %v1793, 0
        %1882 = vmatprep.subr.bf16.mxu0 0
        %1883 = vmatpush1.bf16.msra.mxu0 %v1853
        %1884 = vmatprep.subr.bf16.mxu0 0
        %1885 = vmatpush1.bf16.msra.mxu0 %v1852
        %1886 = vmatprep.subr.bf16.mxu0 0
        %1887 = vmatpush1.bf16.msra.mxu0 %v1851
        %1888 = vmatprep.subr.bf16.mxu0 0
        %1889 = vmatpush1.bf16.msra.mxu0 %v1850
        %1890 = vmatprep.subr.bf16.mxu0 0
        %1891 = vmatpush1.bf16.msra.mxu0 %v1849
        %1892 = vmatprep.subr.bf16.mxu0 0
        %1893 = vmatpush1.bf16.msra.mxu0 %v1848
        %1894 = vmatprep.subr.bf16.mxu0 0
        %1895 = vmatpush1.bf16.msra.mxu0 %v1847
        %1896 = vmatprep.subr.bf16.mxu0 0
        %1897 = vmatpush1.bf16.msra.mxu0 %v1846
        %1898 = vmatprep.subr.bf16.mxu0 0
        %1899 = vmatpush2.bf16.msra.mxu0 0
        %1900 = vmatprep.subr.bf16.mxu0 0
        %1901 = vmatpush2.bf16.msra.mxu0 0
        %1902 = vmatprep.subr.bf16.mxu0 0
        %1903 = vmatpush2.bf16.msra.mxu0 0
        %1904 = vmatprep.subr.bf16.mxu0 0
        %1905 = vmatpush2.bf16.msra.mxu0 0
        %1906 = vmatprep.subr.bf16.mxu0 0
        %1907 = vmatpush2.bf16.msra.mxu0 %v1857
        %1908 = vmatprep.subr.bf16.mxu0 0
        %1909 = vmatpush2.bf16.msra.mxu0 %v1856
        %1910 = vmatprep.subr.bf16.mxu0 0
        %1911 = vmatpush2.bf16.msra.mxu0 %v1855
        %1912 = vmatprep.subr.bf16.mxu0 0
        %1913 = vmatpush2.bf16.msra.mxu0 %v1854
        %1914 = vmatprep.mubr.bf16.mxu0 %v1871
        %1915 = vmatmul.mubr.bf16.gmra.mxu0 %v1786
        %v1916 = vpop.f32.mrf.mxu0
        %v1917 = vadd.f32 0.0, %v1916
        %v1918 = vpop.f32.mrf.mxu0
        %v1919 = vpop.f32.mrf.mxu0
        %v1920 = vadd.f32 0.0, %v1919
        %v1921 = vpop.f32.mrf.mxu0
        %1922 = vmatprep.mubr.bf16.mxu0 %v1874
        %1923 = vmatmul.mubr.bf16.gmra.mxu0 %v1788
        %v1924 = vpop.f32.mrf.mxu0
        %v1925 = vadd.f32 0.0, %v1924
        %v1926 = vpop.f32.mrf.mxu0
        %v1927 = vpop.f32.mrf.mxu0
        %v1928 = vadd.f32 0.0, %v1927
        %v1929 = vpop.f32.mrf.mxu0
        %1930 = vmatprep.mubr.bf16.mxu0 %v1877
        %1931 = vmatmul.mubr.bf16.gmra.mxu0 %v1790
        %v1932 = vpop.f32.mrf.mxu0
        %v1933 = vadd.f32 0.0, %v1932
        %v1934 = vpop.f32.mrf.mxu0
        %v1935 = vpop.f32.mrf.mxu0
        %v1936 = vadd.f32 0.0, %v1935
        %v1937 = vpop.f32.mrf.mxu0
        %1938 = vmatprep.mubr.bf16.mxu0 %v1880
        %1939 = vmatmul.mubr.bf16.gmra.mxu0 %v1792
        %v1940 = vpop.f32.mrf.mxu0
        %v1941 = vadd.f32 0.0, %v1940
        %v1942 = vpop.f32.mrf.mxu0
        %v1943 = vpop.f32.mrf.mxu0
        %v1944 = vadd.f32 0.0, %v1943
        %v1945 = vpop.f32.mrf.mxu0
        %1946 = vdwg.mxu0
        %v1947 = vadd.f32 %v1514, %v1917
        %v1948 = vadd.f32 %v1517, %v1920
        %v1949 = vadd.f32 %v1522, %v1925
        %v1950 = vadd.f32 %v1525, %v1928
        %v1951 = vadd.f32 %v1530, %v1933
        %v1952 = vadd.f32 %v1533, %v1936
        %v1953 = vadd.f32 %v1538, %v1941
        %v1954 = vadd.f32 %v1541, %v1944
        %1955 = vst.msk [vmem:[#allocation3] sm:$0xff] %vm908, %v1947
        %1956 = vst.msk [vmem:[#allocation3 + $0x8] sm:$0xff] %vm908, %v1948
        %1957 = vst.msk [vmem:[#allocation3 + $0x10] sm:$0xff] %vm908, %v1949
        %1958 = vst.msk [vmem:[#allocation3 + $0x18] sm:$0xff] %vm908, %v1950
        %1959 = vst.msk [vmem:[#allocation3 + $0x20] sm:$0xff] %vm908, %v1951
        %1960 = vst.msk [vmem:[#allocation3 + $0x28] sm:$0xff] %vm908, %v1952
        %1961 = vst.msk [vmem:[#allocation3 + $0x30] sm:$0xff] %vm908, %v1953
        %1962 = vst.msk [vmem:[#allocation3 + $0x38] sm:$0xff] %vm908, %v1954
        %v1963 = vld [vmem:[%s451] sm:$0xff]
        %v1964 = vld [vmem:[%s451 + $0x8] sm:$0xff]
        %v1965 = vld [vmem:[%s451 + $0x10] sm:$0xff]
        %v1966 = vld [vmem:[%s451 + $0x18] sm:$0xff]
        %v1967 = vld [vmem:[%s451 + $0x20] sm:$0xff]
        %v1968 = vld [vmem:[%s451 + $0x28] sm:$0xff]
        %v1969 = vld [vmem:[%s451 + $0x30] sm:$0xff]
        %v1970 = vld [vmem:[%s451 + $0x38] sm:$0xff]
        %v1971 = vmul.f32 %v1963, %v513
        %v1972 = vmul.f32 %v1964, %v513
        %v1973 = vmul.f32 %v1965, %v513
        %v1974 = vmul.f32 %v1966, %v513
        %v1975 = vmul.f32 %v1967, %v513
        %v1976 = vmul.f32 %v1968, %v513
        %v1977 = vmul.f32 %v1969, %v513
        %v1978 = vmul.f32 %v1970, %v513
        %v1979 = vadd.f32 %v1971, %v527
        %v1980 = vadd.f32 %v1972, %v527
        %v1981 = vadd.f32 %v1973, %v527
        %v1982 = vadd.f32 %v1974, %v527
        %v1983 = vadd.f32 %v1975, %v527
        %v1984 = vadd.f32 %v1976, %v527
        %v1985 = vadd.f32 %v1977, %v527
        %v1986 = vadd.f32 %v1978, %v527
        %vm1987 = vcmp.ge.f32.partialorder %v1979, 0.0
        %vm1988 = vcmp.ge.f32.partialorder %v1980, 0.0
        %vm1989 = vcmp.ge.f32.partialorder %v1981, 0.0
        %vm1990 = vcmp.ge.f32.partialorder %v1982, 0.0
        %vm1991 = vcmp.ge.f32.partialorder %v1983, 0.0
        %vm1992 = vcmp.ge.f32.partialorder %v1984, 0.0
        %vm1993 = vcmp.ge.f32.partialorder %v1985, 0.0
        %vm1994 = vcmp.ge.f32.partialorder %v1986, 0.0
        %v1995 = vmul.f32 %v1979, 1e-05
        %v1996 = vmul.f32 %v1980, 1e-05
        %v1997 = vmul.f32 %v1981, 1e-05
        %v1998 = vmul.f32 %v1982, 1e-05
        %v1999 = vmul.f32 %v1983, 1e-05
        %v2000 = vmul.f32 %v1984, 1e-05
        %v2001 = vmul.f32 %v1985, 1e-05
        %v2002 = vmul.f32 %v1986, 1e-05
        %v2003 = vsel %vm1987, %v1979, %v1995
        %v2004 = vsel %vm1988, %v1980, %v1996
        %v2005 = vsel %vm1989, %v1981, %v1997
        %v2006 = vsel %vm1990, %v1982, %v1998
        %v2007 = vsel %vm1991, %v1983, %v1999
        %v2008 = vsel %vm1992, %v1984, %v2000
        %v2009 = vsel %vm1993, %v1985, %v2001
        %v2010 = vsel %vm1994, %v1986, %v2002
        %v2011 = vpack.c.bf16 %v2003, %v2003
        %v2012 = vpack.c.bf16 %v2004, %v2004
        %v2013 = vpack.c.bf16 %v2005, %v2005
        %v2014 = vpack.c.bf16 %v2006, %v2006
        %v2015 = vpack.c.bf16 %v2007, %v2007
        %v2016 = vpack.c.bf16 %v2008, %v2008
        %v2017 = vpack.c.bf16 %v2009, %v2009
        %v2018 = vpack.c.bf16 %v2010, %v2010
        %v2027 = vunpack.c.l.b16 %v2011
        %v2028 = vunpack.c.l.b16 %v2012
        %v2029 = vunpack.c.l.b16 %v2013
        %v2030 = vunpack.c.l.b16 %v2014
        %v2031 = vunpack.c.l.b16 %v2015
        %v2032 = vunpack.c.l.b16 %v2016
        %v2033 = vunpack.c.l.b16 %v2017
        %v2034 = vunpack.c.l.b16 %v2018
        %v2035 = vpack.c.b16 %v2027, %v2027
        %v2036 = vpack.c.b16 %v2028, %v2028
        %v2037 = vpack.c.b16 %v2029, %v2029
        %v2038 = vpack.c.b16 %v2030, %v2030
        %v2039 = vpack.c.b16 %v2031, %v2031
        %v2040 = vpack.c.b16 %v2032, %v2032
        %v2041 = vpack.c.b16 %v2033, %v2033
        %v2042 = vpack.c.b16 %v2034, %v2034
        %v2044 = vshrl.u32 %v2035, 16
        %v2046 = vrot.slane %v2044, 7
        %v2047 = vshll.u32 %v2035, 16
        %v2049 = vor.u32 %v2046, %v2047
        %v2050 = vrot.slane %v2046, 4
        %v2052 = vshrl.u32 %v2036, 16
        %v2054 = vrot.slane %v2052, 7
        %v2055 = vshll.u32 %v2036, 16
        %v2057 = vor.u32 %v2054, %v2055
        %v2058 = vrot.slane %v2054, 4
        %v2060 = vshrl.u32 %v2037, 16
        %v2062 = vrot.slane %v2060, 7
        %v2063 = vshll.u32 %v2037, 16
        %v2065 = vor.u32 %v2062, %v2063
        %v2066 = vrot.slane %v2062, 4
        %v2068 = vshrl.u32 %v2038, 16
        %v2070 = vrot.slane %v2068, 7
        %v2071 = vshll.u32 %v2038, 16
        %v2073 = vor.u32 %v2070, %v2071
        %v2074 = vrot.slane %v2070, 4
        %v2076 = vshrl.u32 %v2039, 16
        %v2078 = vrot.slane %v2076, 7
        %v2079 = vshll.u32 %v2039, 16
        %v2081 = vor.u32 %v2078, %v2079
        %v2082 = vrot.slane %v2078, 4
        %v2084 = vshrl.u32 %v2040, 16
        %v2086 = vrot.slane %v2084, 7
        %v2087 = vshll.u32 %v2040, 16
        %v2089 = vor.u32 %v2086, %v2087
        %v2090 = vrot.slane %v2086, 4
        %v2092 = vshrl.u32 %v2041, 16
        %v2094 = vrot.slane %v2092, 7
        %v2095 = vshll.u32 %v2041, 16
        %v2097 = vor.u32 %v2094, %v2095
        %v2098 = vrot.slane %v2094, 4
        %v2100 = vshrl.u32 %v2042, 16
        %v2102 = vrot.slane %v2100, 7
        %v2103 = vshll.u32 %v2042, 16
        %v2105 = vor.u32 %v2102, %v2103
        %v2106 = vrot.slane %v2102, 4
        %v2123 = vld [vmem:[%s685] sm:$0xf]
        %v2124 = vsel %vm688, %v2049, %v2123
        %2125 = vst [vmem:[%s685] sm:$0xf] %v2124
        %v2126 = vld [vmem:[%s685 + $0x4] sm:$0x1]
        %v2127 = vsel %vm694, %v2050, %v2126
        %2128 = vst [vmem:[%s685 + $0x4] sm:$0x1] %v2127
        %v2129 = vld [vmem:[%s685 + $0x8] sm:$0xf]
        %v2130 = vsel %vm688, %v2057, %v2129
        %2131 = vst [vmem:[%s685 + $0x8] sm:$0xf] %v2130
        %v2132 = vld [vmem:[%s685 + $0xc] sm:$0x1]
        %v2133 = vsel %vm694, %v2058, %v2132
        %2134 = vst [vmem:[%s685 + $0xc] sm:$0x1] %v2133
        %v2135 = vld [vmem:[%s685 + $0x10] sm:$0xf]
        %v2136 = vsel %vm688, %v2065, %v2135
        %2137 = vst [vmem:[%s685 + $0x10] sm:$0xf] %v2136
        %v2138 = vld [vmem:[%s685 + $0x14] sm:$0x1]
        %v2139 = vsel %vm694, %v2066, %v2138
        %2140 = vst [vmem:[%s685 + $0x14] sm:$0x1] %v2139
        %v2141 = vld [vmem:[%s685 + $0x18] sm:$0xf]
        %v2142 = vsel %vm688, %v2073, %v2141
        %2143 = vst [vmem:[%s685 + $0x18] sm:$0xf] %v2142
        %v2144 = vld [vmem:[%s685 + $0x1c] sm:$0x1]
        %v2145 = vsel %vm694, %v2074, %v2144
        %2146 = vst [vmem:[%s685 + $0x1c] sm:$0x1] %v2145
        %v2147 = vld [vmem:[%s685 + $0x20] sm:$0xf]
        %v2148 = vsel %vm688, %v2081, %v2147
        %2149 = vst [vmem:[%s685 + $0x20] sm:$0xf] %v2148
        %v2150 = vld [vmem:[%s685 + $0x24] sm:$0x1]
        %v2151 = vsel %vm694, %v2082, %v2150
        %2152 = vst [vmem:[%s685 + $0x24] sm:$0x1] %v2151
        %v2153 = vld [vmem:[%s685 + $0x28] sm:$0xf]
        %v2154 = vsel %vm688, %v2089, %v2153
        %2155 = vst [vmem:[%s685 + $0x28] sm:$0xf] %v2154
        %v2156 = vld [vmem:[%s685 + $0x2c] sm:$0x1]
        %v2157 = vsel %vm694, %v2090, %v2156
        %2158 = vst [vmem:[%s685 + $0x2c] sm:$0x1] %v2157
        %v2159 = vld [vmem:[%s685 + $0x30] sm:$0xf]
        %v2160 = vsel %vm688, %v2097, %v2159
        %2161 = vst [vmem:[%s685 + $0x30] sm:$0xf] %v2160
        %v2162 = vld [vmem:[%s685 + $0x34] sm:$0x1]
        %v2163 = vsel %vm694, %v2098, %v2162
        %2164 = vst [vmem:[%s685 + $0x34] sm:$0x1] %v2163
        %v2165 = vld [vmem:[%s685 + $0x38] sm:$0xf]
        %v2166 = vsel %vm688, %v2105, %v2165
        %2167 = vst [vmem:[%s685 + $0x38] sm:$0xf] %v2166
        %v2168 = vld [vmem:[%s685 + $0x3c] sm:$0x1]
        %v2169 = vsel %vm694, %v2106, %v2168
        %2170 = vst [vmem:[%s685 + $0x3c] sm:$0x1] %v2169
        %v2171 = vld [vmem:[#allocation2] sm:$0xf]
        %v2172 = vld [vmem:[#allocation2 + $0x8] sm:$0xf]
        %v2173 = vld [vmem:[#allocation2 + $0x10] sm:$0xf]
        %v2174 = vld [vmem:[#allocation2 + $0x18] sm:$0xf]
        %v2175 = vld [vmem:[#allocation2 + $0x20] sm:$0xf]
        %v2176 = vld [vmem:[#allocation2 + $0x28] sm:$0xf]
        %v2177 = vld [vmem:[#allocation2 + $0x30] sm:$0xf]
        %v2178 = vld [vmem:[#allocation2 + $0x38] sm:$0xf]
        %v2179 = vld [vmem:[#allocation2 + $0x4] sm:$0x1]
        %v2180 = vld [vmem:[#allocation2 + $0xc] sm:$0x1]
        %v2181 = vld [vmem:[#allocation2 + $0x14] sm:$0x1]
        %v2182 = vld [vmem:[#allocation2 + $0x1c] sm:$0x1]
        %v2183 = vld [vmem:[#allocation2 + $0x24] sm:$0x1]
        %v2184 = vld [vmem:[#allocation2 + $0x2c] sm:$0x1]
        %v2185 = vld [vmem:[#allocation2 + $0x34] sm:$0x1]
        %v2186 = vld [vmem:[#allocation2 + $0x3c] sm:$0x1]
        %v2187 = vld [vmem:[#allocation2] sm:$0xe]
        %v2188 = vld [vmem:[#allocation2 + $0x8] sm:$0xe]
        %v2189 = vld [vmem:[#allocation2 + $0x10] sm:$0xe]
        %v2190 = vld [vmem:[#allocation2 + $0x18] sm:$0xe]
        %v2191 = vld [vmem:[#allocation2 + $0x20] sm:$0xe]
        %v2192 = vld [vmem:[#allocation2 + $0x28] sm:$0xe]
        %v2193 = vld [vmem:[#allocation2 + $0x30] sm:$0xe]
        %v2194 = vld [vmem:[#allocation2 + $0x38] sm:$0xe]
        %v2211 = vunpack.c.l.b16 %v2171
        %v2212 = vunpack.c.l.b16 %v2179
        %v2213 = vunpack.c.l.b16 %v2172
        %v2214 = vunpack.c.l.b16 %v2180
        %v2215 = vunpack.c.l.b16 %v2173
        %v2216 = vunpack.c.l.b16 %v2181
        %v2217 = vunpack.c.l.b16 %v2174
        %v2218 = vunpack.c.l.b16 %v2182
        %v2219 = vunpack.c.l.b16 %v2175
        %v2220 = vunpack.c.l.b16 %v2183
        %v2221 = vunpack.c.l.b16 %v2176
        %v2222 = vunpack.c.l.b16 %v2184
        %v2223 = vunpack.c.l.b16 %v2177
        %v2224 = vunpack.c.l.b16 %v2185
        %v2225 = vunpack.c.l.b16 %v2178
        %v2226 = vunpack.c.l.b16 %v2186
        %v2227 = vpack.c.b16 %v2212, %v2211
        %v2228 = vpack.c.b16 %v2214, %v2213
        %v2229 = vpack.c.b16 %v2216, %v2215
        %v2230 = vpack.c.b16 %v2218, %v2217
        %v2231 = vpack.c.b16 %v2220, %v2219
        %v2232 = vpack.c.b16 %v2222, %v2221
        %v2233 = vpack.c.b16 %v2224, %v2223
        %v2234 = vpack.c.b16 %v2226, %v2225
        %v2236 = vshrl.u32 %v2227, 16
        %v2238 = vshll.u32 %v2227, 16
        %v2240 = vrot.slane %v2238, 1
        %v2241 = vor.u32 %v2236, %v2240
        %v2243 = vshrl.u32 %v2228, 16
        %v2245 = vshll.u32 %v2228, 16
        %v2247 = vrot.slane %v2245, 1
        %v2248 = vor.u32 %v2243, %v2247
        %v2250 = vshrl.u32 %v2229, 16
        %v2252 = vshll.u32 %v2229, 16
        %v2254 = vrot.slane %v2252, 1
        %v2255 = vor.u32 %v2250, %v2254
        %v2257 = vshrl.u32 %v2230, 16
        %v2259 = vshll.u32 %v2230, 16
        %v2261 = vrot.slane %v2259, 1
        %v2262 = vor.u32 %v2257, %v2261
        %v2264 = vshrl.u32 %v2231, 16
        %v2266 = vshll.u32 %v2231, 16
        %v2268 = vrot.slane %v2266, 1
        %v2269 = vor.u32 %v2264, %v2268
        %v2271 = vshrl.u32 %v2232, 16
        %v2273 = vshll.u32 %v2232, 16
        %v2275 = vrot.slane %v2273, 1
        %v2276 = vor.u32 %v2271, %v2275
        %v2278 = vshrl.u32 %v2233, 16
        %v2280 = vshll.u32 %v2233, 16
        %v2282 = vrot.slane %v2280, 1
        %v2283 = vor.u32 %v2278, %v2282
        %v2285 = vshrl.u32 %v2234, 16
        %v2287 = vshll.u32 %v2234, 16
        %v2289 = vrot.slane %v2287, 1
        %v2290 = vor.u32 %v2285, %v2289
        %2291 = vrot.lane.b32.xlu0 %v2241, 64
        %v2292 = vpop.permute.xlu0 %2291
        %2293 = vrot.lane.b32.xlu0 %v2248, 64
        %v2294 = vpop.permute.xlu0 %2293
        %2295 = vrot.lane.b32.xlu0 %v2255, 64
        %v2296 = vpop.permute.xlu0 %2295
        %2297 = vrot.lane.b32.xlu0 %v2262, 64
        %v2298 = vpop.permute.xlu0 %2297
        %2299 = vrot.lane.b32.xlu0 %v2269, 64
        %v2300 = vpop.permute.xlu0 %2299
        %2301 = vrot.lane.b32.xlu0 %v2276, 64
        %v2302 = vpop.permute.xlu0 %2301
        %2303 = vrot.lane.b32.xlu0 %v2283, 64
        %v2304 = vpop.permute.xlu0 %2303
        %2305 = vrot.lane.b32.xlu0 %v2290, 64
        %v2306 = vpop.permute.xlu0 %2305
        %v2315 = vunpack.c.l.b16 %v2187
        %v2316 = vunpack.c.l.b16 %v2188
        %v2317 = vunpack.c.l.b16 %v2189
        %v2318 = vunpack.c.l.b16 %v2190
        %v2319 = vunpack.c.l.b16 %v2191
        %v2320 = vunpack.c.l.b16 %v2192
        %v2321 = vunpack.c.l.b16 %v2193
        %v2322 = vunpack.c.l.b16 %v2194
        %v2323 = vpack.c.b16 %v2212, %v2315
        %v2324 = vpack.c.b16 %v2214, %v2316
        %v2325 = vpack.c.b16 %v2216, %v2317
        %v2326 = vpack.c.b16 %v2218, %v2318
        %v2327 = vpack.c.b16 %v2220, %v2319
        %v2328 = vpack.c.b16 %v2222, %v2320
        %v2329 = vpack.c.b16 %v2224, %v2321
        %v2330 = vpack.c.b16 %v2226, %v2322
        %v2331 = vrot.slane %v2323, 1
        %v2332 = vrot.slane %v2324, 1
        %v2333 = vrot.slane %v2325, 1
        %v2334 = vrot.slane %v2326, 1
        %v2335 = vrot.slane %v2327, 1
        %v2336 = vrot.slane %v2328, 1
        %v2337 = vrot.slane %v2329, 1
        %v2338 = vrot.slane %v2330, 1
        %v2341 = vsel %vm908, %v2171, %v2292
        %v2344 = vsel %vm908, %v2172, %v2294
        %v2347 = vsel %vm908, %v2173, %v2296
        %v2350 = vsel %vm908, %v2174, %v2298
        %v2353 = vsel %vm908, %v2175, %v2300
        %v2356 = vsel %vm908, %v2176, %v2302
        %v2359 = vsel %vm908, %v2177, %v2304
        %v2362 = vsel %vm908, %v2178, %v2306
        %v2371 = vunpack.c.l.b16 %v2341
        %v2372 = vunpack.c.l.b16 %v2331
        %v2373 = vunpack.c.l.b16 %v2344
        %v2374 = vunpack.c.l.b16 %v2332
        %v2375 = vunpack.c.l.b16 %v2347
        %v2376 = vunpack.c.l.b16 %v2333
        %v2377 = vunpack.c.l.b16 %v2350
        %v2378 = vunpack.c.l.b16 %v2334
        %v2379 = vunpack.c.l.b16 %v2353
        %v2380 = vunpack.c.l.b16 %v2335
        %v2381 = vunpack.c.l.b16 %v2356
        %v2382 = vunpack.c.l.b16 %v2336
        %v2383 = vunpack.c.l.b16 %v2359
        %v2384 = vunpack.c.l.b16 %v2337
        %v2385 = vunpack.c.l.b16 %v2362
        %v2386 = vunpack.c.l.b16 %v2338
        %s2387 = scalar_lea.vmem %s5, 288
        %v2388 = vld [vmem:[%s2387] sm:$0xf]
        %v2389 = vld [vmem:[%s2387 + $0x4] sm:$0xf]
        %v2390 = vld [vmem:[%s2387 + $0x8] sm:$0xf]
        %v2391 = vld [vmem:[%s2387 + $0xc] sm:$0xf]
        %v2392 = vld [vmem:[%s2387 + $0x10] sm:$0xf]
        %v2393 = vld [vmem:[%s2387 + $0x14] sm:$0xf]
        %v2394 = vld [vmem:[%s2387 + $0x18] sm:$0xf]
        %v2395 = vld [vmem:[%s2387 + $0x1c] sm:$0xf]
        %v2396 = vld [vmem:[%s2387 + $0x20] sm:$0xf]
        %v2397 = vld [vmem:[%s2387 + $0x24] sm:$0xf]
        %v2398 = vld [vmem:[%s2387 + $0x28] sm:$0xf]
        %v2399 = vld [vmem:[%s2387 + $0x2c] sm:$0xf]
        %v2400 = vld [vmem:[%s2387 + $0x30] sm:$0xf]
        %v2401 = vld [vmem:[%s2387 + $0x34] sm:$0xf]
        %v2402 = vld [vmem:[%s2387 + $0x38] sm:$0xf]
        %v2403 = vld [vmem:[%s2387 + $0x3c] sm:$0xf]
        %v2404 = vld [vmem:[%s2387 + $0x40] sm:$0xf]
        %v2405 = vld [vmem:[%s2387 + $0x44] sm:$0xf]
        %v2406 = vld [vmem:[%s2387 + $0x48] sm:$0xf]
        %v2407 = vld [vmem:[%s2387 + $0x4c] sm:$0xf]
        %v2408 = vld [vmem:[%s2387 + $0x50] sm:$0xf]
        %v2409 = vld [vmem:[%s2387 + $0x54] sm:$0xf]
        %v2410 = vld [vmem:[%s2387 + $0x58] sm:$0xf]
        %v2411 = vld [vmem:[%s2387 + $0x5c] sm:$0xf]
        %v2412 = vld [vmem:[%s685] sm:$0xf]
        %v2413 = vld [vmem:[%s685 + $0x8] sm:$0xf]
        %v2414 = vld [vmem:[%s685 + $0x10] sm:$0xf]
        %v2415 = vld [vmem:[%s685 + $0x18] sm:$0xf]
        %v2416 = vld [vmem:[%s685 + $0x20] sm:$0xf]
        %v2417 = vld [vmem:[%s685 + $0x28] sm:$0xf]
        %v2418 = vld [vmem:[%s685 + $0x30] sm:$0xf]
        %v2419 = vld [vmem:[%s685 + $0x38] sm:$0xf]
        %v2420 = vld [vmem:[%s685 + $0x4] sm:$0x1]
        %v2421 = vld [vmem:[%s685 + $0xc] sm:$0x1]
        %v2422 = vld [vmem:[%s685 + $0x14] sm:$0x1]
        %v2423 = vld [vmem:[%s685 + $0x1c] sm:$0x1]
        %v2424 = vld [vmem:[%s685 + $0x24] sm:$0x1]
        %v2425 = vld [vmem:[%s685 + $0x2c] sm:$0x1]
        %v2426 = vld [vmem:[%s685 + $0x34] sm:$0x1]
        %v2427 = vld [vmem:[%s685 + $0x3c] sm:$0x1]
        %v2428 = vld [vmem:[%s685] sm:$0xe]
        %v2429 = vld [vmem:[%s685 + $0x8] sm:$0xe]
        %v2430 = vld [vmem:[%s685 + $0x10] sm:$0xe]
        %v2431 = vld [vmem:[%s685 + $0x18] sm:$0xe]
        %v2432 = vld [vmem:[%s685 + $0x20] sm:$0xe]
        %v2433 = vld [vmem:[%s685 + $0x28] sm:$0xe]
        %v2434 = vld [vmem:[%s685 + $0x30] sm:$0xe]
        %v2435 = vld [vmem:[%s685 + $0x38] sm:$0xe]
        %v2452 = vunpack.c.l.b16 %v2412
        %v2453 = vunpack.c.l.b16 %v2420
        %v2454 = vunpack.c.l.b16 %v2413
        %v2455 = vunpack.c.l.b16 %v2421
        %v2456 = vunpack.c.l.b16 %v2414
        %v2457 = vunpack.c.l.b16 %v2422
        %v2458 = vunpack.c.l.b16 %v2415
        %v2459 = vunpack.c.l.b16 %v2423
        %v2460 = vunpack.c.l.b16 %v2416
        %v2461 = vunpack.c.l.b16 %v2424
        %v2462 = vunpack.c.l.b16 %v2417
        %v2463 = vunpack.c.l.b16 %v2425
        %v2464 = vunpack.c.l.b16 %v2418
        %v2465 = vunpack.c.l.b16 %v2426
        %v2466 = vunpack.c.l.b16 %v2419
        %v2467 = vunpack.c.l.b16 %v2427
        %v2468 = vpack.c.b16 %v2453, %v2452
        %v2469 = vpack.c.b16 %v2455, %v2454
        %v2470 = vpack.c.b16 %v2457, %v2456
        %v2471 = vpack.c.b16 %v2459, %v2458
        %v2472 = vpack.c.b16 %v2461, %v2460
        %v2473 = vpack.c.b16 %v2463, %v2462
        %v2474 = vpack.c.b16 %v2465, %v2464
        %v2475 = vpack.c.b16 %v2467, %v2466
        %v2477 = vshrl.u32 %v2468, 16
        %v2479 = vshll.u32 %v2468, 16
        %v2481 = vrot.slane %v2479, 1
        %v2482 = vor.u32 %v2477, %v2481
        %v2484 = vshrl.u32 %v2469, 16
        %v2486 = vshll.u32 %v2469, 16
        %v2488 = vrot.slane %v2486, 1
        %v2489 = vor.u32 %v2484, %v2488
        %v2491 = vshrl.u32 %v2470, 16
        %v2493 = vshll.u32 %v2470, 16
        %v2495 = vrot.slane %v2493, 1
        %v2496 = vor.u32 %v2491, %v2495
        %v2498 = vshrl.u32 %v2471, 16
        %v2500 = vshll.u32 %v2471, 16
        %v2502 = vrot.slane %v2500, 1
        %v2503 = vor.u32 %v2498, %v2502
        %v2505 = vshrl.u32 %v2472, 16
        %v2507 = vshll.u32 %v2472, 16
        %v2509 = vrot.slane %v2507, 1
        %v2510 = vor.u32 %v2505, %v2509
        %v2512 = vshrl.u32 %v2473, 16
        %v2514 = vshll.u32 %v2473, 16
        %v2516 = vrot.slane %v2514, 1
        %v2517 = vor.u32 %v2512, %v2516
        %v2519 = vshrl.u32 %v2474, 16
        %v2521 = vshll.u32 %v2474, 16
        %v2523 = vrot.slane %v2521, 1
        %v2524 = vor.u32 %v2519, %v2523
        %v2526 = vshrl.u32 %v2475, 16
        %v2528 = vshll.u32 %v2475, 16
        %v2530 = vrot.slane %v2528, 1
        %v2531 = vor.u32 %v2526, %v2530
        %2532 = vrot.lane.b32.xlu0 %v2482, 64
        %v2533 = vpop.permute.xlu0 %2532
        %2534 = vrot.lane.b32.xlu0 %v2489, 64
        %v2535 = vpop.permute.xlu0 %2534
        %2536 = vrot.lane.b32.xlu0 %v2496, 64
        %v2537 = vpop.permute.xlu0 %2536
        %2538 = vrot.lane.b32.xlu0 %v2503, 64
        %v2539 = vpop.permute.xlu0 %2538
        %2540 = vrot.lane.b32.xlu0 %v2510, 64
        %v2541 = vpop.permute.xlu0 %2540
        %2542 = vrot.lane.b32.xlu0 %v2517, 64
        %v2543 = vpop.permute.xlu0 %2542
        %2544 = vrot.lane.b32.xlu0 %v2524, 64
        %v2545 = vpop.permute.xlu0 %2544
        %2546 = vrot.lane.b32.xlu0 %v2531, 64
        %v2547 = vpop.permute.xlu0 %2546
        %v2556 = vunpack.c.l.b16 %v2428
        %v2557 = vunpack.c.l.b16 %v2429
        %v2558 = vunpack.c.l.b16 %v2430
        %v2559 = vunpack.c.l.b16 %v2431
        %v2560 = vunpack.c.l.b16 %v2432
        %v2561 = vunpack.c.l.b16 %v2433
        %v2562 = vunpack.c.l.b16 %v2434
        %v2563 = vunpack.c.l.b16 %v2435
        %v2564 = vpack.c.b16 %v2453, %v2556
        %v2565 = vpack.c.b16 %v2455, %v2557
        %v2566 = vpack.c.b16 %v2457, %v2558
        %v2567 = vpack.c.b16 %v2459, %v2559
        %v2568 = vpack.c.b16 %v2461, %v2560
        %v2569 = vpack.c.b16 %v2463, %v2561
        %v2570 = vpack.c.b16 %v2465, %v2562
        %v2571 = vpack.c.b16 %v2467, %v2563
        %v2572 = vrot.slane %v2564, 1
        %v2573 = vrot.slane %v2565, 1
        %v2574 = vrot.slane %v2566, 1
        %v2575 = vrot.slane %v2567, 1
        %v2576 = vrot.slane %v2568, 1
        %v2577 = vrot.slane %v2569, 1
        %v2578 = vrot.slane %v2570, 1
        %v2579 = vrot.slane %v2571, 1
        %v2582 = vsel %vm908, %v2412, %v2533
        %v2585 = vsel %vm908, %v2413, %v2535
        %v2588 = vsel %vm908, %v2414, %v2537
        %v2591 = vsel %vm908, %v2415, %v2539
        %v2594 = vsel %vm908, %v2416, %v2541
        %v2597 = vsel %vm908, %v2417, %v2543
        %v2600 = vsel %vm908, %v2418, %v2545
        %v2603 = vsel %vm908, %v2419, %v2547
        %v2612 = vunpack.c.l.b16 %v2582
        %v2613 = vunpack.c.l.b16 %v2572
        %v2614 = vunpack.c.l.b16 %v2585
        %v2615 = vunpack.c.l.b16 %v2573
        %v2616 = vunpack.c.l.b16 %v2588
        %v2617 = vunpack.c.l.b16 %v2574
        %v2618 = vunpack.c.l.b16 %v2591
        %v2619 = vunpack.c.l.b16 %v2575
        %v2620 = vunpack.c.l.b16 %v2594
        %v2621 = vunpack.c.l.b16 %v2576
        %v2622 = vunpack.c.l.b16 %v2597
        %v2623 = vunpack.c.l.b16 %v2577
        %v2624 = vunpack.c.l.b16 %v2600
        %v2625 = vunpack.c.l.b16 %v2578
        %v2626 = vunpack.c.l.b16 %v2603
        %v2627 = vunpack.c.l.b16 %v2579
        %s2628 = scalar_lea.vmem %s5, 384
        %v2629 = vld [vmem:[%s2628] sm:$0xf]
        %v2630 = vld [vmem:[%s2628 + $0x4] sm:$0xf]
        %v2631 = vld [vmem:[%s2628 + $0x8] sm:$0xf]
        %v2632 = vld [vmem:[%s2628 + $0xc] sm:$0xf]
        %v2633 = vld [vmem:[%s2628 + $0x10] sm:$0xf]
        %v2634 = vld [vmem:[%s2628 + $0x14] sm:$0xf]
        %v2635 = vld [vmem:[%s2628 + $0x18] sm:$0xf]
        %v2636 = vld [vmem:[%s2628 + $0x1c] sm:$0xf]
        %v2637 = vld [vmem:[%s2628 + $0x20] sm:$0xf]
        %v2638 = vld [vmem:[%s2628 + $0x24] sm:$0xf]
        %v2639 = vld [vmem:[%s2628 + $0x28] sm:$0xf]
        %v2640 = vld [vmem:[%s2628 + $0x2c] sm:$0xf]
        %v2641 = vld [vmem:[%s2628 + $0x30] sm:$0xf]
        %v2642 = vld [vmem:[%s2628 + $0x34] sm:$0xf]
        %v2643 = vld [vmem:[%s2628 + $0x38] sm:$0xf]
        %v2644 = vld [vmem:[%s2628 + $0x3c] sm:$0xf]
        %v2645 = vld [vmem:[%s2628 + $0x40] sm:$0xf]
        %v2646 = vld [vmem:[%s2628 + $0x44] sm:$0xf]
        %v2647 = vld [vmem:[%s2628 + $0x48] sm:$0xf]
        %v2648 = vld [vmem:[%s2628 + $0x4c] sm:$0xf]
        %v2649 = vld [vmem:[%s2628 + $0x50] sm:$0xf]
        %v2650 = vld [vmem:[%s2628 + $0x54] sm:$0xf]
        %v2651 = vld [vmem:[%s2628 + $0x58] sm:$0xf]
        %v2652 = vld [vmem:[%s2628 + $0x5c] sm:$0xf]
        %v2653 = vpack.c.b16 %v2614, %v2612
        %v2654 = vpack.c.b16 %v2615, %v2613
        %v2655 = vpack.c.b16 %v2618, %v2616
        %v2656 = vpack.c.b16 %v2619, %v2617
        %v2657 = vpack.c.b16 %v2622, %v2620
        %v2658 = vpack.c.b16 %v2623, %v2621
        %v2659 = vpack.c.b16 %v2626, %v2624
        %v2660 = vpack.c.b16 %v2627, %v2625
        %v2689 = vunpack.c.l.b16 %v2629
        %v2690 = vunpack.c.l.b16 %v2630
        %v2691 = vunpack.c.l.b16 %v2631
        %v2692 = vunpack.c.l.b16 %v2632
        %v2693 = vunpack.c.l.b16 %v2633
        %v2694 = vunpack.c.l.b16 %v2634
        %v2695 = vunpack.c.l.b16 %v2635
        %v2696 = vunpack.c.l.b16 %v2636
        %v2697 = vunpack.c.l.b16 %v2637
        %v2698 = vunpack.c.l.b16 %v2638
        %v2699 = vunpack.c.l.b16 %v2639
        %v2700 = vunpack.c.l.b16 %v2640
        %v2701 = vunpack.c.l.b16 %v2641
        %v2702 = vunpack.c.l.b16 %v2642
        %v2703 = vunpack.c.l.b16 %v2643
        %v2704 = vunpack.c.l.b16 %v2644
        %v2705 = vunpack.c.l.b16 %v2645
        %v2706 = vunpack.c.l.b16 %v2646
        %v2707 = vunpack.c.l.b16 %v2647
        %v2708 = vunpack.c.l.b16 %v2648
        %v2709 = vunpack.c.l.b16 %v2649
        %v2710 = vunpack.c.l.b16 %v2650
        %v2711 = vunpack.c.l.b16 %v2651
        %v2712 = vunpack.c.l.b16 %v2652
        %v2713 = vpack.c.b16 %v2690, %v2689
        %v2714 = vpack.c.b16 %v2692, %v2691
        %v2715 = vpack.c.b16 %v2694, %v2693
        %v2716 = vpack.c.b16 %v2696, %v2695
        %v2717 = vpack.c.b16 %v2698, %v2697
        %v2718 = vpack.c.b16 %v2700, %v2699
        %v2719 = vpack.c.b16 %v2702, %v2701
        %v2720 = vpack.c.b16 %v2704, %v2703
        %v2721 = vpack.c.b16 %v2706, %v2705
        %v2722 = vpack.c.b16 %v2708, %v2707
        %v2723 = vpack.c.b16 %v2710, %v2709
        %v2724 = vpack.c.b16 %v2712, %v2711
        %v2738 = vsel %vm908, %v2654, 0
        %v2741 = vsel %vm908, %v2656, 0
        %v2744 = vsel %vm908, %v2658, 0
        %v2747 = vsel %vm908, %v2660, 0
        %2749 = vmatprep.subr.bf16.mxu0 0
        %2750 = vmatpush1.bf16.msra.mxu0 %v2720
        %2751 = vmatprep.subr.bf16.mxu0 0
        %2752 = vmatpush1.bf16.msra.mxu0 %v2719
        %2753 = vmatprep.subr.bf16.mxu0 0
        %2754 = vmatpush1.bf16.msra.mxu0 %v2718
        %2755 = vmatprep.subr.bf16.mxu0 0
        %2756 = vmatpush1.bf16.msra.mxu0 %v2717
        %2757 = vmatprep.subr.bf16.mxu0 0
        %2758 = vmatpush1.bf16.msra.mxu0 %v2716
        %2759 = vmatprep.subr.bf16.mxu0 0
        %2760 = vmatpush1.bf16.msra.mxu0 %v2715
        %2761 = vmatprep.subr.bf16.mxu0 0
        %2762 = vmatpush1.bf16.msra.mxu0 %v2714
        %2763 = vmatprep.subr.bf16.mxu0 0
        %2764 = vmatpush1.bf16.msra.mxu0 %v2713
        %2765 = vmatprep.subr.bf16.mxu0 0
        %2766 = vmatpush2.bf16.msra.mxu0 0
        %2767 = vmatprep.subr.bf16.mxu0 0
        %2768 = vmatpush2.bf16.msra.mxu0 0
        %2769 = vmatprep.subr.bf16.mxu0 0
        %2770 = vmatpush2.bf16.msra.mxu0 0
        %2771 = vmatprep.subr.bf16.mxu0 0
        %2772 = vmatpush2.bf16.msra.mxu0 0
        %2773 = vmatprep.subr.bf16.mxu0 0
        %2774 = vmatpush2.bf16.msra.mxu0 %v2724
        %2775 = vmatprep.subr.bf16.mxu0 0
        %2776 = vmatpush2.bf16.msra.mxu0 %v2723
        %2777 = vmatprep.subr.bf16.mxu0 0
        %2778 = vmatpush2.bf16.msra.mxu0 %v2722
        %2779 = vmatprep.subr.bf16.mxu0 0
        %2780 = vmatpush2.bf16.msra.mxu0 %v2721
        %2781 = vmatprep.mubr.bf16.mxu0 %v2738
        %2782 = vmatmul.mubr.bf16.gmra.mxu0 %v2653
        %v2783 = vpop.f32.mrf.mxu0
        %v2784 = vadd.f32 0.0, %v2783
        %v2785 = vpop.f32.mrf.mxu0
        %v2786 = vpop.f32.mrf.mxu0
        %v2787 = vadd.f32 0.0, %v2786
        %v2788 = vpop.f32.mrf.mxu0
        %2789 = vmatprep.mubr.bf16.mxu0 %v2741
        %2790 = vmatmul.mubr.bf16.gmra.mxu0 %v2655
        %v2791 = vpop.f32.mrf.mxu0
        %v2792 = vadd.f32 0.0, %v2791
        %v2793 = vpop.f32.mrf.mxu0
        %v2794 = vpop.f32.mrf.mxu0
        %v2795 = vadd.f32 0.0, %v2794
        %v2796 = vpop.f32.mrf.mxu0
        %2797 = vmatprep.mubr.bf16.mxu0 %v2744
        %2798 = vmatmul.mubr.bf16.gmra.mxu0 %v2657
        %v2799 = vpop.f32.mrf.mxu0
        %v2800 = vadd.f32 0.0, %v2799
        %v2801 = vpop.f32.mrf.mxu0
        %v2802 = vpop.f32.mrf.mxu0
        %v2803 = vadd.f32 0.0, %v2802
        %v2804 = vpop.f32.mrf.mxu0
        %2805 = vmatprep.mubr.bf16.mxu0 %v2747
        %2806 = vmatmul.mubr.bf16.gmra.mxu0 %v2659
        %v2807 = vpop.f32.mrf.mxu0
        %v2808 = vadd.f32 0.0, %v2807
        %v2809 = vpop.f32.mrf.mxu0
        %v2810 = vpop.f32.mrf.mxu0
        %v2811 = vadd.f32 0.0, %v2810
        %v2812 = vpop.f32.mrf.mxu0
        %2813 = vdwg.mxu0
        %v2814 = vpack.c.b16 %v2373, %v2371
        %v2815 = vpack.c.b16 %v2374, %v2372
        %v2816 = vpack.c.b16 %v2377, %v2375
        %v2817 = vpack.c.b16 %v2378, %v2376
        %v2818 = vpack.c.b16 %v2381, %v2379
        %v2819 = vpack.c.b16 %v2382, %v2380
        %v2820 = vpack.c.b16 %v2385, %v2383
        %v2821 = vpack.c.b16 %v2386, %v2384
        %v2850 = vunpack.c.l.b16 %v2388
        %v2851 = vunpack.c.l.b16 %v2389
        %v2852 = vunpack.c.l.b16 %v2390
        %v2853 = vunpack.c.l.b16 %v2391
        %v2854 = vunpack.c.l.b16 %v2392
        %v2855 = vunpack.c.l.b16 %v2393
        %v2856 = vunpack.c.l.b16 %v2394
        %v2857 = vunpack.c.l.b16 %v2395
        %v2858 = vunpack.c.l.b16 %v2396
        %v2859 = vunpack.c.l.b16 %v2397
        %v2860 = vunpack.c.l.b16 %v2398
        %v2861 = vunpack.c.l.b16 %v2399
        %v2862 = vunpack.c.l.b16 %v2400
        %v2863 = vunpack.c.l.b16 %v2401
        %v2864 = vunpack.c.l.b16 %v2402
        %v2865 = vunpack.c.l.b16 %v2403
        %v2866 = vunpack.c.l.b16 %v2404
        %v2867 = vunpack.c.l.b16 %v2405
        %v2868 = vunpack.c.l.b16 %v2406
        %v2869 = vunpack.c.l.b16 %v2407
        %v2870 = vunpack.c.l.b16 %v2408
        %v2871 = vunpack.c.l.b16 %v2409
        %v2872 = vunpack.c.l.b16 %v2410
        %v2873 = vunpack.c.l.b16 %v2411
        %v2874 = vpack.c.b16 %v2851, %v2850
        %v2875 = vpack.c.b16 %v2853, %v2852
        %v2876 = vpack.c.b16 %v2855, %v2854
        %v2877 = vpack.c.b16 %v2857, %v2856
        %v2878 = vpack.c.b16 %v2859, %v2858
        %v2879 = vpack.c.b16 %v2861, %v2860
        %v2880 = vpack.c.b16 %v2863, %v2862
        %v2881 = vpack.c.b16 %v2865, %v2864
        %v2882 = vpack.c.b16 %v2867, %v2866
        %v2883 = vpack.c.b16 %v2869, %v2868
        %v2884 = vpack.c.b16 %v2871, %v2870
        %v2885 = vpack.c.b16 %v2873, %v2872
        %v2899 = vsel %vm908, %v2815, 0
        %v2902 = vsel %vm908, %v2817, 0
        %v2905 = vsel %vm908, %v2819, 0
        %v2908 = vsel %vm908, %v2821, 0
        %2910 = vmatprep.subr.bf16.mxu0 0
        %2911 = vmatpush1.bf16.msra.mxu0 %v2881
        %2912 = vmatprep.subr.bf16.mxu0 0
        %2913 = vmatpush1.bf16.msra.mxu0 %v2880
        %2914 = vmatprep.subr.bf16.mxu0 0
        %2915 = vmatpush1.bf16.msra.mxu0 %v2879
        %2916 = vmatprep.subr.bf16.mxu0 0
        %2917 = vmatpush1.bf16.msra.mxu0 %v2878
        %2918 = vmatprep.subr.bf16.mxu0 0
        %2919 = vmatpush1.bf16.msra.mxu0 %v2877
        %2920 = vmatprep.subr.bf16.mxu0 0
        %2921 = vmatpush1.bf16.msra.mxu0 %v2876
        %2922 = vmatprep.subr.bf16.mxu0 0
        %2923 = vmatpush1.bf16.msra.mxu0 %v2875
        %2924 = vmatprep.subr.bf16.mxu0 0
        %2925 = vmatpush1.bf16.msra.mxu0 %v2874
        %2926 = vmatprep.subr.bf16.mxu0 0
        %2927 = vmatpush2.bf16.msra.mxu0 0
        %2928 = vmatprep.subr.bf16.mxu0 0
        %2929 = vmatpush2.bf16.msra.mxu0 0
        %2930 = vmatprep.subr.bf16.mxu0 0
        %2931 = vmatpush2.bf16.msra.mxu0 0
        %2932 = vmatprep.subr.bf16.mxu0 0
        %2933 = vmatpush2.bf16.msra.mxu0 0
        %2934 = vmatprep.subr.bf16.mxu0 0
        %2935 = vmatpush2.bf16.msra.mxu0 %v2885
        %2936 = vmatprep.subr.bf16.mxu0 0
        %2937 = vmatpush2.bf16.msra.mxu0 %v2884
        %2938 = vmatprep.subr.bf16.mxu0 0
        %2939 = vmatpush2.bf16.msra.mxu0 %v2883
        %2940 = vmatprep.subr.bf16.mxu0 0
        %2941 = vmatpush2.bf16.msra.mxu0 %v2882
        %2942 = vmatprep.mubr.bf16.mxu0 %v2899
        %2943 = vmatmul.mubr.bf16.gmra.mxu0 %v2814
        %v2944 = vpop.f32.mrf.mxu0
        %v2945 = vadd.f32 %v2784, %v2944
        %v2946 = vpop.f32.mrf.mxu0
        %v2947 = vpop.f32.mrf.mxu0
        %v2948 = vadd.f32 %v2787, %v2947
        %v2949 = vpop.f32.mrf.mxu0
        %2950 = vmatprep.mubr.bf16.mxu0 %v2902
        %2951 = vmatmul.mubr.bf16.gmra.mxu0 %v2816
        %v2952 = vpop.f32.mrf.mxu0
        %v2953 = vadd.f32 %v2792, %v2952
        %v2954 = vpop.f32.mrf.mxu0
        %v2955 = vpop.f32.mrf.mxu0
        %v2956 = vadd.f32 %v2795, %v2955
        %v2957 = vpop.f32.mrf.mxu0
        %2958 = vmatprep.mubr.bf16.mxu0 %v2905
        %2959 = vmatmul.mubr.bf16.gmra.mxu0 %v2818
        %v2960 = vpop.f32.mrf.mxu0
        %v2961 = vadd.f32 %v2800, %v2960
        %v2962 = vpop.f32.mrf.mxu0
        %v2963 = vpop.f32.mrf.mxu0
        %v2964 = vadd.f32 %v2803, %v2963
        %v2965 = vpop.f32.mrf.mxu0
        %2966 = vmatprep.mubr.bf16.mxu0 %v2908
        %2967 = vmatmul.mubr.bf16.gmra.mxu0 %v2820
        %v2968 = vpop.f32.mrf.mxu0
        %v2969 = vadd.f32 %v2808, %v2968
        %v2970 = vpop.f32.mrf.mxu0
        %v2971 = vpop.f32.mrf.mxu0
        %v2972 = vadd.f32 %v2811, %v2971
        %v2973 = vpop.f32.mrf.mxu0
        %2974 = vdwg.mxu0
        %v2975 = vld [vmem:[%s1544] sm:$0xf]
        %v2976 = vld [vmem:[%s1544 + $0x8] sm:$0xf]
        %v2977 = vld [vmem:[%s1544 + $0x10] sm:$0xf]
        %v2978 = vld [vmem:[%s1544 + $0x18] sm:$0xf]
        %v2979 = vld [vmem:[%s1544 + $0x20] sm:$0xf]
        %v2980 = vld [vmem:[%s1544 + $0x28] sm:$0xf]
        %v2981 = vld [vmem:[%s1544 + $0x30] sm:$0xf]
        %v2982 = vld [vmem:[%s1544 + $0x38] sm:$0xf]
        %v2983 = vld [vmem:[%s1544 + $0x4] sm:$0x1]
        %v2984 = vld [vmem:[%s1544 + $0xc] sm:$0x1]
        %v2985 = vld [vmem:[%s1544 + $0x14] sm:$0x1]
        %v2986 = vld [vmem:[%s1544 + $0x1c] sm:$0x1]
        %v2987 = vld [vmem:[%s1544 + $0x24] sm:$0x1]
        %v2988 = vld [vmem:[%s1544 + $0x2c] sm:$0x1]
        %v2989 = vld [vmem:[%s1544 + $0x34] sm:$0x1]
        %v2990 = vld [vmem:[%s1544 + $0x3c] sm:$0x1]
        %v2991 = vld [vmem:[%s1544] sm:$0xe]
        %v2992 = vld [vmem:[%s1544 + $0x8] sm:$0xe]
        %v2993 = vld [vmem:[%s1544 + $0x10] sm:$0xe]
        %v2994 = vld [vmem:[%s1544 + $0x18] sm:$0xe]
        %v2995 = vld [vmem:[%s1544 + $0x20] sm:$0xe]
        %v2996 = vld [vmem:[%s1544 + $0x28] sm:$0xe]
        %v2997 = vld [vmem:[%s1544 + $0x30] sm:$0xe]
        %v2998 = vld [vmem:[%s1544 + $0x38] sm:$0xe]
        %v3015 = vunpack.c.l.b16 %v2975
        %v3016 = vunpack.c.l.b16 %v2983
        %v3017 = vunpack.c.l.b16 %v2976
        %v3018 = vunpack.c.l.b16 %v2984
        %v3019 = vunpack.c.l.b16 %v2977
        %v3020 = vunpack.c.l.b16 %v2985
        %v3021 = vunpack.c.l.b16 %v2978
        %v3022 = vunpack.c.l.b16 %v2986
        %v3023 = vunpack.c.l.b16 %v2979
        %v3024 = vunpack.c.l.b16 %v2987
        %v3025 = vunpack.c.l.b16 %v2980
        %v3026 = vunpack.c.l.b16 %v2988
        %v3027 = vunpack.c.l.b16 %v2981
        %v3028 = vunpack.c.l.b16 %v2989
        %v3029 = vunpack.c.l.b16 %v2982
        %v3030 = vunpack.c.l.b16 %v2990
        %v3031 = vpack.c.b16 %v3016, %v3015
        %v3032 = vpack.c.b16 %v3018, %v3017
        %v3033 = vpack.c.b16 %v3020, %v3019
        %v3034 = vpack.c.b16 %v3022, %v3021
        %v3035 = vpack.c.b16 %v3024, %v3023
        %v3036 = vpack.c.b16 %v3026, %v3025
        %v3037 = vpack.c.b16 %v3028, %v3027
        %v3038 = vpack.c.b16 %v3030, %v3029
        %v3040 = vshrl.u32 %v3031, 16
        %v3042 = vshll.u32 %v3031, 16
        %v3044 = vrot.slane %v3042, 1
        %v3045 = vor.u32 %v3040, %v3044
        %v3047 = vshrl.u32 %v3032, 16
        %v3049 = vshll.u32 %v3032, 16
        %v3051 = vrot.slane %v3049, 1
        %v3052 = vor.u32 %v3047, %v3051
        %v3054 = vshrl.u32 %v3033, 16
        %v3056 = vshll.u32 %v3033, 16
        %v3058 = vrot.slane %v3056, 1
        %v3059 = vor.u32 %v3054, %v3058
        %v3061 = vshrl.u32 %v3034, 16
        %v3063 = vshll.u32 %v3034, 16
        %v3065 = vrot.slane %v3063, 1
        %v3066 = vor.u32 %v3061, %v3065
        %v3068 = vshrl.u32 %v3035, 16
        %v3070 = vshll.u32 %v3035, 16
        %v3072 = vrot.slane %v3070, 1
        %v3073 = vor.u32 %v3068, %v3072
        %v3075 = vshrl.u32 %v3036, 16
        %v3077 = vshll.u32 %v3036, 16
        %v3079 = vrot.slane %v3077, 1
        %v3080 = vor.u32 %v3075, %v3079
        %v3082 = vshrl.u32 %v3037, 16
        %v3084 = vshll.u32 %v3037, 16
        %v3086 = vrot.slane %v3084, 1
        %v3087 = vor.u32 %v3082, %v3086
        %v3089 = vshrl.u32 %v3038, 16
        %v3091 = vshll.u32 %v3038, 16
        %v3093 = vrot.slane %v3091, 1
        %v3094 = vor.u32 %v3089, %v3093
        %3095 = vrot.lane.b32.xlu0 %v3045, 64
        %v3096 = vpop.permute.xlu0 %3095
        %3097 = vrot.lane.b32.xlu0 %v3052, 64
        %v3098 = vpop.permute.xlu0 %3097
        %3099 = vrot.lane.b32.xlu0 %v3059, 64
        %v3100 = vpop.permute.xlu0 %3099
        %3101 = vrot.lane.b32.xlu0 %v3066, 64
        %v3102 = vpop.permute.xlu0 %3101
        %3103 = vrot.lane.b32.xlu0 %v3073, 64
        %v3104 = vpop.permute.xlu0 %3103
        %3105 = vrot.lane.b32.xlu0 %v3080, 64
        %v3106 = vpop.permute.xlu0 %3105
        %3107 = vrot.lane.b32.xlu0 %v3087, 64
        %v3108 = vpop.permute.xlu0 %3107
        %3109 = vrot.lane.b32.xlu0 %v3094, 64
        %v3110 = vpop.permute.xlu0 %3109
        %v3119 = vunpack.c.l.b16 %v2991
        %v3120 = vunpack.c.l.b16 %v2992
        %v3121 = vunpack.c.l.b16 %v2993
        %v3122 = vunpack.c.l.b16 %v2994
        %v3123 = vunpack.c.l.b16 %v2995
        %v3124 = vunpack.c.l.b16 %v2996
        %v3125 = vunpack.c.l.b16 %v2997
        %v3126 = vunpack.c.l.b16 %v2998
        %v3127 = vpack.c.b16 %v3016, %v3119
        %v3128 = vpack.c.b16 %v3018, %v3120
        %v3129 = vpack.c.b16 %v3020, %v3121
        %v3130 = vpack.c.b16 %v3022, %v3122
        %v3131 = vpack.c.b16 %v3024, %v3123
        %v3132 = vpack.c.b16 %v3026, %v3124
        %v3133 = vpack.c.b16 %v3028, %v3125
        %v3134 = vpack.c.b16 %v3030, %v3126
        %v3135 = vrot.slane %v3127, 1
        %v3136 = vrot.slane %v3128, 1
        %v3137 = vrot.slane %v3129, 1
        %v3138 = vrot.slane %v3130, 1
        %v3139 = vrot.slane %v3131, 1
        %v3140 = vrot.slane %v3132, 1
        %v3141 = vrot.slane %v3133, 1
        %v3142 = vrot.slane %v3134, 1
        %v3145 = vsel %vm908, %v2975, %v3096
        %v3148 = vsel %vm908, %v2976, %v3098
        %v3151 = vsel %vm908, %v2977, %v3100
        %v3154 = vsel %vm908, %v2978, %v3102
        %v3157 = vsel %vm908, %v2979, %v3104
        %v3160 = vsel %vm908, %v2980, %v3106
        %v3163 = vsel %vm908, %v2981, %v3108
        %v3166 = vsel %vm908, %v2982, %v3110
        %v3175 = vunpack.c.l.b16 %v3145
        %v3176 = vunpack.c.l.b16 %v3135
        %v3177 = vunpack.c.l.b16 %v3148
        %v3178 = vunpack.c.l.b16 %v3136
        %v3179 = vunpack.c.l.b16 %v3151
        %v3180 = vunpack.c.l.b16 %v3137
        %v3181 = vunpack.c.l.b16 %v3154
        %v3182 = vunpack.c.l.b16 %v3138
        %v3183 = vunpack.c.l.b16 %v3157
        %v3184 = vunpack.c.l.b16 %v3139
        %v3185 = vunpack.c.l.b16 %v3160
        %v3186 = vunpack.c.l.b16 %v3140
        %v3187 = vunpack.c.l.b16 %v3163
        %v3188 = vunpack.c.l.b16 %v3141
        %v3189 = vunpack.c.l.b16 %v3166
        %v3190 = vunpack.c.l.b16 %v3142
        %s3191 = scalar_lea.vmem %s5, 480
        %v3192 = vld [vmem:[%s3191] sm:$0xf]
        %v3193 = vld [vmem:[%s3191 + $0x4] sm:$0xf]
        %v3194 = vld [vmem:[%s3191 + $0x8] sm:$0xf]
        %v3195 = vld [vmem:[%s3191 + $0xc] sm:$0xf]
        %v3196 = vld [vmem:[%s3191 + $0x10] sm:$0xf]
        %v3197 = vld [vmem:[%s3191 + $0x14] sm:$0xf]
        %v3198 = vld [vmem:[%s3191 + $0x18] sm:$0xf]
        %v3199 = vld [vmem:[%s3191 + $0x1c] sm:$0xf]
        %v3200 = vld [vmem:[%s3191 + $0x20] sm:$0xf]
        %v3201 = vld [vmem:[%s3191 + $0x24] sm:$0xf]
        %v3202 = vld [vmem:[%s3191 + $0x28] sm:$0xf]
        %v3203 = vld [vmem:[%s3191 + $0x2c] sm:$0xf]
        %v3204 = vld [vmem:[%s3191 + $0x30] sm:$0xf]
        %v3205 = vld [vmem:[%s3191 + $0x34] sm:$0xf]
        %v3206 = vld [vmem:[%s3191 + $0x38] sm:$0xf]
        %v3207 = vld [vmem:[%s3191 + $0x3c] sm:$0xf]
        %v3208 = vld [vmem:[%s3191 + $0x40] sm:$0xf]
        %v3209 = vld [vmem:[%s3191 + $0x44] sm:$0xf]
        %v3210 = vld [vmem:[%s3191 + $0x48] sm:$0xf]
        %v3211 = vld [vmem:[%s3191 + $0x4c] sm:$0xf]
        %v3212 = vld [vmem:[%s3191 + $0x50] sm:$0xf]
        %v3213 = vld [vmem:[%s3191 + $0x54] sm:$0xf]
        %v3214 = vld [vmem:[%s3191 + $0x58] sm:$0xf]
        %v3215 = vld [vmem:[%s3191 + $0x5c] sm:$0xf]
        %v3216 = vpack.c.b16 %v3177, %v3175
        %v3217 = vpack.c.b16 %v3178, %v3176
        %v3218 = vpack.c.b16 %v3181, %v3179
        %v3219 = vpack.c.b16 %v3182, %v3180
        %v3220 = vpack.c.b16 %v3185, %v3183
        %v3221 = vpack.c.b16 %v3186, %v3184
        %v3222 = vpack.c.b16 %v3189, %v3187
        %v3223 = vpack.c.b16 %v3190, %v3188
        %v3252 = vunpack.c.l.b16 %v3192
        %v3253 = vunpack.c.l.b16 %v3193
        %v3254 = vunpack.c.l.b16 %v3194
        %v3255 = vunpack.c.l.b16 %v3195
        %v3256 = vunpack.c.l.b16 %v3196
        %v3257 = vunpack.c.l.b16 %v3197
        %v3258 = vunpack.c.l.b16 %v3198
        %v3259 = vunpack.c.l.b16 %v3199
        %v3260 = vunpack.c.l.b16 %v3200
        %v3261 = vunpack.c.l.b16 %v3201
        %v3262 = vunpack.c.l.b16 %v3202
        %v3263 = vunpack.c.l.b16 %v3203
        %v3264 = vunpack.c.l.b16 %v3204
        %v3265 = vunpack.c.l.b16 %v3205
        %v3266 = vunpack.c.l.b16 %v3206
        %v3267 = vunpack.c.l.b16 %v3207
        %v3268 = vunpack.c.l.b16 %v3208
        %v3269 = vunpack.c.l.b16 %v3209
        %v3270 = vunpack.c.l.b16 %v3210
        %v3271 = vunpack.c.l.b16 %v3211
        %v3272 = vunpack.c.l.b16 %v3212
        %v3273 = vunpack.c.l.b16 %v3213
        %v3274 = vunpack.c.l.b16 %v3214
        %v3275 = vunpack.c.l.b16 %v3215
        %v3276 = vpack.c.b16 %v3253, %v3252
        %v3277 = vpack.c.b16 %v3255, %v3254
        %v3278 = vpack.c.b16 %v3257, %v3256
        %v3279 = vpack.c.b16 %v3259, %v3258
        %v3280 = vpack.c.b16 %v3261, %v3260
        %v3281 = vpack.c.b16 %v3263, %v3262
        %v3282 = vpack.c.b16 %v3265, %v3264
        %v3283 = vpack.c.b16 %v3267, %v3266
        %v3284 = vpack.c.b16 %v3269, %v3268
        %v3285 = vpack.c.b16 %v3271, %v3270
        %v3286 = vpack.c.b16 %v3273, %v3272
        %v3287 = vpack.c.b16 %v3275, %v3274
        %v3301 = vsel %vm908, %v3217, 0
        %v3304 = vsel %vm908, %v3219, 0
        %v3307 = vsel %vm908, %v3221, 0
        %v3310 = vsel %vm908, %v3223, 0
        %3312 = vmatprep.subr.bf16.mxu0 0
        %3313 = vmatpush1.bf16.msra.mxu0 %v3283
        %3314 = vmatprep.subr.bf16.mxu0 0
        %3315 = vmatpush1.bf16.msra.mxu0 %v3282
        %3316 = vmatprep.subr.bf16.mxu0 0
        %3317 = vmatpush1.bf16.msra.mxu0 %v3281
        %3318 = vmatprep.subr.bf16.mxu0 0
        %3319 = vmatpush1.bf16.msra.mxu0 %v3280
        %3320 = vmatprep.subr.bf16.mxu0 0
        %3321 = vmatpush1.bf16.msra.mxu0 %v3279
        %3322 = vmatprep.subr.bf16.mxu0 0
        %3323 = vmatpush1.bf16.msra.mxu0 %v3278
        %3324 = vmatprep.subr.bf16.mxu0 0
        %3325 = vmatpush1.bf16.msra.mxu0 %v3277
        %3326 = vmatprep.subr.bf16.mxu0 0
        %3327 = vmatpush1.bf16.msra.mxu0 %v3276
        %3328 = vmatprep.subr.bf16.mxu0 0
        %3329 = vmatpush2.bf16.msra.mxu0 0
        %3330 = vmatprep.subr.bf16.mxu0 0
        %3331 = vmatpush2.bf16.msra.mxu0 0
        %3332 = vmatprep.subr.bf16.mxu0 0
        %3333 = vmatpush2.bf16.msra.mxu0 0
        %3334 = vmatprep.subr.bf16.mxu0 0
        %3335 = vmatpush2.bf16.msra.mxu0 0
        %3336 = vmatprep.subr.bf16.mxu0 0
        %3337 = vmatpush2.bf16.msra.mxu0 %v3287
        %3338 = vmatprep.subr.bf16.mxu0 0
        %3339 = vmatpush2.bf16.msra.mxu0 %v3286
        %3340 = vmatprep.subr.bf16.mxu0 0
        %3341 = vmatpush2.bf16.msra.mxu0 %v3285
        %3342 = vmatprep.subr.bf16.mxu0 0
        %3343 = vmatpush2.bf16.msra.mxu0 %v3284
        %3344 = vmatprep.mubr.bf16.mxu0 %v3301
        %3345 = vmatmul.mubr.bf16.gmra.mxu0 %v3216
        %v3346 = vpop.f32.mrf.mxu0
        %v3347 = vadd.f32 0.0, %v3346
        %v3348 = vpop.f32.mrf.mxu0
        %v3349 = vpop.f32.mrf.mxu0
        %v3350 = vadd.f32 0.0, %v3349
        %v3351 = vpop.f32.mrf.mxu0
        %3352 = vmatprep.mubr.bf16.mxu0 %v3304
        %3353 = vmatmul.mubr.bf16.gmra.mxu0 %v3218
        %v3354 = vpop.f32.mrf.mxu0
        %v3355 = vadd.f32 0.0, %v3354
        %v3356 = vpop.f32.mrf.mxu0
        %v3357 = vpop.f32.mrf.mxu0
        %v3358 = vadd.f32 0.0, %v3357
        %v3359 = vpop.f32.mrf.mxu0
        %3360 = vmatprep.mubr.bf16.mxu0 %v3307
        %3361 = vmatmul.mubr.bf16.gmra.mxu0 %v3220
        %v3362 = vpop.f32.mrf.mxu0
        %v3363 = vadd.f32 0.0, %v3362
        %v3364 = vpop.f32.mrf.mxu0
        %v3365 = vpop.f32.mrf.mxu0
        %v3366 = vadd.f32 0.0, %v3365
        %v3367 = vpop.f32.mrf.mxu0
        %3368 = vmatprep.mubr.bf16.mxu0 %v3310
        %3369 = vmatmul.mubr.bf16.gmra.mxu0 %v3222
        %v3370 = vpop.f32.mrf.mxu0
        %v3371 = vadd.f32 0.0, %v3370
        %v3372 = vpop.f32.mrf.mxu0
        %v3373 = vpop.f32.mrf.mxu0
        %v3374 = vadd.f32 0.0, %v3373
        %v3375 = vpop.f32.mrf.mxu0
        %3376 = vdwg.mxu0
        %v3377 = vadd.f32 %v2945, %v3347
        %v3378 = vadd.f32 %v2948, %v3350
        %v3379 = vadd.f32 %v2953, %v3355
        %v3380 = vadd.f32 %v2956, %v3358
        %v3381 = vadd.f32 %v2961, %v3363
        %v3382 = vadd.f32 %v2964, %v3366
        %v3383 = vadd.f32 %v2969, %v3371
        %v3384 = vadd.f32 %v2972, %v3374
        %v3385 = vld [vmem:[#allocation3] sm:$0xff]
        %v3386 = vld [vmem:[#allocation3 + $0x8] sm:$0xff]
        %v3387 = vld [vmem:[#allocation3 + $0x10] sm:$0xff]
        %v3388 = vld [vmem:[#allocation3 + $0x18] sm:$0xff]
        %v3389 = vld [vmem:[#allocation3 + $0x20] sm:$0xff]
        %v3390 = vld [vmem:[#allocation3 + $0x28] sm:$0xff]
        %v3391 = vld [vmem:[#allocation3 + $0x30] sm:$0xff]
        %v3392 = vld [vmem:[#allocation3 + $0x38] sm:$0xff]
        %v3393 = vadd.f32 %v3385, %v3377
        %v3394 = vadd.f32 %v3386, %v3378
        %v3395 = vadd.f32 %v3387, %v3379
        %v3396 = vadd.f32 %v3388, %v3380
        %v3397 = vadd.f32 %v3389, %v3381
        %v3398 = vadd.f32 %v3390, %v3382
        %v3399 = vadd.f32 %v3391, %v3383
        %v3400 = vadd.f32 %v3392, %v3384
        %3401 = vst.msk [vmem:[#allocation3] sm:$0xff] %vm908, %v3393
        %3402 = vst.msk [vmem:[#allocation3 + $0x8] sm:$0xff] %vm908, %v3394
        %3403 = vst.msk [vmem:[#allocation3 + $0x10] sm:$0xff] %vm908, %v3395
        %3404 = vst.msk [vmem:[#allocation3 + $0x18] sm:$0xff] %vm908, %v3396
        %3405 = vst.msk [vmem:[#allocation3 + $0x20] sm:$0xff] %vm908, %v3397
        %3406 = vst.msk [vmem:[#allocation3 + $0x28] sm:$0xff] %vm908, %v3398
        %3407 = vst.msk [vmem:[#allocation3 + $0x30] sm:$0xff] %vm908, %v3399
        %3408 = vst.msk [vmem:[#allocation3 + $0x38] sm:$0xff] %vm908, %v3400
        %v3409 = vld [vmem:[%s463] sm:$0xff]
        %v3410 = vld [vmem:[%s463 + $0x8] sm:$0xff]
        %v3411 = vld [vmem:[%s463 + $0x10] sm:$0xff]
        %v3412 = vld [vmem:[%s463 + $0x18] sm:$0xff]
        %v3413 = vld [vmem:[%s463 + $0x20] sm:$0xff]
        %v3414 = vld [vmem:[%s463 + $0x28] sm:$0xff]
        %v3415 = vld [vmem:[%s463 + $0x30] sm:$0xff]
        %v3416 = vld [vmem:[%s463 + $0x38] sm:$0xff]
        %v3417 = vmul.f32 %v3409, %v513
        %v3418 = vmul.f32 %v3410, %v513
        %v3419 = vmul.f32 %v3411, %v513
        %v3420 = vmul.f32 %v3412, %v513
        %v3421 = vmul.f32 %v3413, %v513
        %v3422 = vmul.f32 %v3414, %v513
        %v3423 = vmul.f32 %v3415, %v513
        %v3424 = vmul.f32 %v3416, %v513
        %v3425 = vadd.f32 %v3417, %v527
        %v3426 = vadd.f32 %v3418, %v527
        %v3427 = vadd.f32 %v3419, %v527
        %v3428 = vadd.f32 %v3420, %v527
        %v3429 = vadd.f32 %v3421, %v527
        %v3430 = vadd.f32 %v3422, %v527
        %v3431 = vadd.f32 %v3423, %v527
        %v3432 = vadd.f32 %v3424, %v527
        %vm3433 = vcmp.ge.f32.partialorder %v3425, 0.0
        %vm3434 = vcmp.ge.f32.partialorder %v3426, 0.0
        %vm3435 = vcmp.ge.f32.partialorder %v3427, 0.0
        %vm3436 = vcmp.ge.f32.partialorder %v3428, 0.0
        %vm3437 = vcmp.ge.f32.partialorder %v3429, 0.0
        %vm3438 = vcmp.ge.f32.partialorder %v3430, 0.0
        %vm3439 = vcmp.ge.f32.partialorder %v3431, 0.0
        %vm3440 = vcmp.ge.f32.partialorder %v3432, 0.0
        %v3441 = vmul.f32 %v3425, 1e-05
        %v3442 = vmul.f32 %v3426, 1e-05
        %v3443 = vmul.f32 %v3427, 1e-05
        %v3444 = vmul.f32 %v3428, 1e-05
        %v3445 = vmul.f32 %v3429, 1e-05
        %v3446 = vmul.f32 %v3430, 1e-05
        %v3447 = vmul.f32 %v3431, 1e-05
        %v3448 = vmul.f32 %v3432, 1e-05
        %v3449 = vsel %vm3433, %v3425, %v3441
        %v3450 = vsel %vm3434, %v3426, %v3442
        %v3451 = vsel %vm3435, %v3427, %v3443
        %v3452 = vsel %vm3436, %v3428, %v3444
        %v3453 = vsel %vm3437, %v3429, %v3445
        %v3454 = vsel %vm3438, %v3430, %v3446
        %v3455 = vsel %vm3439, %v3431, %v3447
        %v3456 = vsel %vm3440, %v3432, %v3448
        %p3457 = scmp.lt.s32.totalorder %s27, 7
        %s3458 = scalar_select %p3457, 1, 0
        %v3459 = vstv %s3458
        %vm3460 = vcmp.eq.s32.totalorder %v3459, 1
        %v3461 = vsel %vm3460, %v3449, 0.0
        %v3462 = vsel %vm3460, %v3450, 0.0
        %v3463 = vsel %vm3460, %v3451, 0.0
        %v3464 = vsel %vm3460, %v3452, 0.0
        %v3465 = vsel %vm3460, %v3453, 0.0
        %v3466 = vsel %vm3460, %v3454, 0.0
        %v3467 = vsel %vm3460, %v3455, 0.0
        %v3468 = vsel %vm3460, %v3456, 0.0
        %v3469 = vpack.c.bf16 %v3461, %v3461
        %v3470 = vpack.c.bf16 %v3462, %v3462
        %v3471 = vpack.c.bf16 %v3463, %v3463
        %v3472 = vpack.c.bf16 %v3464, %v3464
        %v3473 = vpack.c.bf16 %v3465, %v3465
        %v3474 = vpack.c.bf16 %v3466, %v3466
        %v3475 = vpack.c.bf16 %v3467, %v3467
        %v3476 = vpack.c.bf16 %v3468, %v3468
        %v3485 = vunpack.c.l.b16 %v3469
        %v3486 = vunpack.c.l.b16 %v3470
        %v3487 = vunpack.c.l.b16 %v3471
        %v3488 = vunpack.c.l.b16 %v3472
        %v3489 = vunpack.c.l.b16 %v3473
        %v3490 = vunpack.c.l.b16 %v3474
        %v3491 = vunpack.c.l.b16 %v3475
        %v3492 = vunpack.c.l.b16 %v3476
        %v3493 = vpack.c.b16 %v3485, %v3485
        %v3494 = vpack.c.b16 %v3486, %v3486
        %v3495 = vpack.c.b16 %v3487, %v3487
        %v3496 = vpack.c.b16 %v3488, %v3488
        %v3497 = vpack.c.b16 %v3489, %v3489
        %v3498 = vpack.c.b16 %v3490, %v3490
        %v3499 = vpack.c.b16 %v3491, %v3491
        %v3500 = vpack.c.b16 %v3492, %v3492
        %v3502 = vshrl.u32 %v3493, 16
        %v3504 = vrot.slane %v3502, 7
        %v3505 = vshll.u32 %v3493, 16
        %v3507 = vor.u32 %v3504, %v3505
        %v3508 = vrot.slane %v3504, 4
        %v3510 = vshrl.u32 %v3494, 16
        %v3512 = vrot.slane %v3510, 7
        %v3513 = vshll.u32 %v3494, 16
        %v3515 = vor.u32 %v3512, %v3513
        %v3516 = vrot.slane %v3512, 4
        %v3518 = vshrl.u32 %v3495, 16
        %v3520 = vrot.slane %v3518, 7
        %v3521 = vshll.u32 %v3495, 16
        %v3523 = vor.u32 %v3520, %v3521
        %v3524 = vrot.slane %v3520, 4
        %v3526 = vshrl.u32 %v3496, 16
        %v3528 = vrot.slane %v3526, 7
        %v3529 = vshll.u32 %v3496, 16
        %v3531 = vor.u32 %v3528, %v3529
        %v3532 = vrot.slane %v3528, 4
        %v3534 = vshrl.u32 %v3497, 16
        %v3536 = vrot.slane %v3534, 7
        %v3537 = vshll.u32 %v3497, 16
        %v3539 = vor.u32 %v3536, %v3537
        %v3540 = vrot.slane %v3536, 4
        %v3542 = vshrl.u32 %v3498, 16
        %v3544 = vrot.slane %v3542, 7
        %v3545 = vshll.u32 %v3498, 16
        %v3547 = vor.u32 %v3544, %v3545
        %v3548 = vrot.slane %v3544, 4
        %v3550 = vshrl.u32 %v3499, 16
        %v3552 = vrot.slane %v3550, 7
        %v3553 = vshll.u32 %v3499, 16
        %v3555 = vor.u32 %v3552, %v3553
        %v3556 = vrot.slane %v3552, 4
        %v3558 = vshrl.u32 %v3500, 16
        %v3560 = vrot.slane %v3558, 7
        %v3561 = vshll.u32 %v3500, 16
        %v3563 = vor.u32 %v3560, %v3561
        %v3564 = vrot.slane %v3560, 4
        %v3581 = vld [vmem:[%s685] sm:$0xf]
        %v3582 = vsel %vm688, %v3507, %v3581
        %3583 = vst [vmem:[%s685] sm:$0xf] %v3582
        %v3584 = vld [vmem:[%s685 + $0x4] sm:$0x1]
        %v3585 = vsel %vm694, %v3508, %v3584
        %3586 = vst [vmem:[%s685 + $0x4] sm:$0x1] %v3585
        %v3587 = vld [vmem:[%s685 + $0x8] sm:$0xf]
        %v3588 = vsel %vm688, %v3515, %v3587
        %3589 = vst [vmem:[%s685 + $0x8] sm:$0xf] %v3588
        %v3590 = vld [vmem:[%s685 + $0xc] sm:$0x1]
        %v3591 = vsel %vm694, %v3516, %v3590
        %3592 = vst [vmem:[%s685 + $0xc] sm:$0x1] %v3591
        %v3593 = vld [vmem:[%s685 + $0x10] sm:$0xf]
        %v3594 = vsel %vm688, %v3523, %v3593
        %3595 = vst [vmem:[%s685 + $0x10] sm:$0xf] %v3594
        %v3596 = vld [vmem:[%s685 + $0x14] sm:$0x1]
        %v3597 = vsel %vm694, %v3524, %v3596
        %3598 = vst [vmem:[%s685 + $0x14] sm:$0x1] %v3597
        %v3599 = vld [vmem:[%s685 + $0x18] sm:$0xf]
        %v3600 = vsel %vm688, %v3531, %v3599
        %3601 = vst [vmem:[%s685 + $0x18] sm:$0xf] %v3600
        %v3602 = vld [vmem:[%s685 + $0x1c] sm:$0x1]
        %v3603 = vsel %vm694, %v3532, %v3602
        %3604 = vst [vmem:[%s685 + $0x1c] sm:$0x1] %v3603
        %v3605 = vld [vmem:[%s685 + $0x20] sm:$0xf]
        %v3606 = vsel %vm688, %v3539, %v3605
        %3607 = vst [vmem:[%s685 + $0x20] sm:$0xf] %v3606
        %v3608 = vld [vmem:[%s685 + $0x24] sm:$0x1]
        %v3609 = vsel %vm694, %v3540, %v3608
        %3610 = vst [vmem:[%s685 + $0x24] sm:$0x1] %v3609
        %v3611 = vld [vmem:[%s685 + $0x28] sm:$0xf]
        %v3612 = vsel %vm688, %v3547, %v3611
        %3613 = vst [vmem:[%s685 + $0x28] sm:$0xf] %v3612
        %v3614 = vld [vmem:[%s685 + $0x2c] sm:$0x1]
        %v3615 = vsel %vm694, %v3548, %v3614
        %3616 = vst [vmem:[%s685 + $0x2c] sm:$0x1] %v3615
        %v3617 = vld [vmem:[%s685 + $0x30] sm:$0xf]
        %v3618 = vsel %vm688, %v3555, %v3617
        %3619 = vst [vmem:[%s685 + $0x30] sm:$0xf] %v3618
        %v3620 = vld [vmem:[%s685 + $0x34] sm:$0x1]
        %v3621 = vsel %vm694, %v3556, %v3620
        %3622 = vst [vmem:[%s685 + $0x34] sm:$0x1] %v3621
        %v3623 = vld [vmem:[%s685 + $0x38] sm:$0xf]
        %v3624 = vsel %vm688, %v3563, %v3623
        %3625 = vst [vmem:[%s685 + $0x38] sm:$0xf] %v3624
        %v3626 = vld [vmem:[%s685 + $0x3c] sm:$0x1]
        %v3627 = vsel %vm694, %v3564, %v3626
        %3628 = vst [vmem:[%s685 + $0x3c] sm:$0x1] %v3627
        %v3629 = vld [vmem:[#allocation2] sm:$0xf]
        %v3630 = vld [vmem:[#allocation2 + $0x8] sm:$0xf]
        %v3631 = vld [vmem:[#allocation2 + $0x10] sm:$0xf]
        %v3632 = vld [vmem:[#allocation2 + $0x18] sm:$0xf]
        %v3633 = vld [vmem:[#allocation2 + $0x20] sm:$0xf]
        %v3634 = vld [vmem:[#allocation2 + $0x28] sm:$0xf]
        %v3635 = vld [vmem:[#allocation2 + $0x30] sm:$0xf]
        %v3636 = vld [vmem:[#allocation2 + $0x38] sm:$0xf]
        %v3637 = vld [vmem:[#allocation2 + $0x4] sm:$0x1]
        %v3638 = vld [vmem:[#allocation2 + $0xc] sm:$0x1]
        %v3639 = vld [vmem:[#allocation2 + $0x14] sm:$0x1]
        %v3640 = vld [vmem:[#allocation2 + $0x1c] sm:$0x1]
        %v3641 = vld [vmem:[#allocation2 + $0x24] sm:$0x1]
        %v3642 = vld [vmem:[#allocation2 + $0x2c] sm:$0x1]
        %v3643 = vld [vmem:[#allocation2 + $0x34] sm:$0x1]
        %v3644 = vld [vmem:[#allocation2 + $0x3c] sm:$0x1]
        %v3645 = vld [vmem:[#allocation2] sm:$0xe]
        %v3646 = vld [vmem:[#allocation2 + $0x8] sm:$0xe]
        %v3647 = vld [vmem:[#allocation2 + $0x10] sm:$0xe]
        %v3648 = vld [vmem:[#allocation2 + $0x18] sm:$0xe]
        %v3649 = vld [vmem:[#allocation2 + $0x20] sm:$0xe]
        %v3650 = vld [vmem:[#allocation2 + $0x28] sm:$0xe]
        %v3651 = vld [vmem:[#allocation2 + $0x30] sm:$0xe]
        %v3652 = vld [vmem:[#allocation2 + $0x38] sm:$0xe]
        %v3669 = vunpack.c.l.b16 %v3629
        %v3670 = vunpack.c.l.b16 %v3637
        %v3671 = vunpack.c.l.b16 %v3630
        %v3672 = vunpack.c.l.b16 %v3638
        %v3673 = vunpack.c.l.b16 %v3631
        %v3674 = vunpack.c.l.b16 %v3639
        %v3675 = vunpack.c.l.b16 %v3632
        %v3676 = vunpack.c.l.b16 %v3640
        %v3677 = vunpack.c.l.b16 %v3633
        %v3678 = vunpack.c.l.b16 %v3641
        %v3679 = vunpack.c.l.b16 %v3634
        %v3680 = vunpack.c.l.b16 %v3642
        %v3681 = vunpack.c.l.b16 %v3635
        %v3682 = vunpack.c.l.b16 %v3643
        %v3683 = vunpack.c.l.b16 %v3636
        %v3684 = vunpack.c.l.b16 %v3644
        %v3685 = vpack.c.b16 %v3670, %v3669
        %v3686 = vpack.c.b16 %v3672, %v3671
        %v3687 = vpack.c.b16 %v3674, %v3673
        %v3688 = vpack.c.b16 %v3676, %v3675
        %v3689 = vpack.c.b16 %v3678, %v3677
        %v3690 = vpack.c.b16 %v3680, %v3679
        %v3691 = vpack.c.b16 %v3682, %v3681
        %v3692 = vpack.c.b16 %v3684, %v3683
        %v3694 = vshrl.u32 %v3685, 16
        %v3696 = vshll.u32 %v3685, 16
        %v3698 = vrot.slane %v3696, 1
        %v3699 = vor.u32 %v3694, %v3698
        %v3701 = vshrl.u32 %v3686, 16
        %v3703 = vshll.u32 %v3686, 16
        %v3705 = vrot.slane %v3703, 1
        %v3706 = vor.u32 %v3701, %v3705
        %v3708 = vshrl.u32 %v3687, 16
        %v3710 = vshll.u32 %v3687, 16
        %v3712 = vrot.slane %v3710, 1
        %v3713 = vor.u32 %v3708, %v3712
        %v3715 = vshrl.u32 %v3688, 16
        %v3717 = vshll.u32 %v3688, 16
        %v3719 = vrot.slane %v3717, 1
        %v3720 = vor.u32 %v3715, %v3719
        %v3722 = vshrl.u32 %v3689, 16
        %v3724 = vshll.u32 %v3689, 16
        %v3726 = vrot.slane %v3724, 1
        %v3727 = vor.u32 %v3722, %v3726
        %v3729 = vshrl.u32 %v3690, 16
        %v3731 = vshll.u32 %v3690, 16
        %v3733 = vrot.slane %v3731, 1
        %v3734 = vor.u32 %v3729, %v3733
        %v3736 = vshrl.u32 %v3691, 16
        %v3738 = vshll.u32 %v3691, 16
        %v3740 = vrot.slane %v3738, 1
        %v3741 = vor.u32 %v3736, %v3740
        %v3743 = vshrl.u32 %v3692, 16
        %v3745 = vshll.u32 %v3692, 16
        %v3747 = vrot.slane %v3745, 1
        %v3748 = vor.u32 %v3743, %v3747
        %3749 = vrot.lane.b32.xlu0 %v3699, 64
        %v3750 = vpop.permute.xlu0 %3749
        %3751 = vrot.lane.b32.xlu0 %v3706, 64
        %v3752 = vpop.permute.xlu0 %3751
        %3753 = vrot.lane.b32.xlu0 %v3713, 64
        %v3754 = vpop.permute.xlu0 %3753
        %3755 = vrot.lane.b32.xlu0 %v3720, 64
        %v3756 = vpop.permute.xlu0 %3755
        %3757 = vrot.lane.b32.xlu0 %v3727, 64
        %v3758 = vpop.permute.xlu0 %3757
        %3759 = vrot.lane.b32.xlu0 %v3734, 64
        %v3760 = vpop.permute.xlu0 %3759
        %3761 = vrot.lane.b32.xlu0 %v3741, 64
        %v3762 = vpop.permute.xlu0 %3761
        %3763 = vrot.lane.b32.xlu0 %v3748, 64
        %v3764 = vpop.permute.xlu0 %3763
        %v3773 = vunpack.c.l.b16 %v3645
        %v3774 = vunpack.c.l.b16 %v3646
        %v3775 = vunpack.c.l.b16 %v3647
        %v3776 = vunpack.c.l.b16 %v3648
        %v3777 = vunpack.c.l.b16 %v3649
        %v3778 = vunpack.c.l.b16 %v3650
        %v3779 = vunpack.c.l.b16 %v3651
        %v3780 = vunpack.c.l.b16 %v3652
        %v3781 = vpack.c.b16 %v3670, %v3773
        %v3782 = vpack.c.b16 %v3672, %v3774
        %v3783 = vpack.c.b16 %v3674, %v3775
        %v3784 = vpack.c.b16 %v3676, %v3776
        %v3785 = vpack.c.b16 %v3678, %v3777
        %v3786 = vpack.c.b16 %v3680, %v3778
        %v3787 = vpack.c.b16 %v3682, %v3779
        %v3788 = vpack.c.b16 %v3684, %v3780
        %v3789 = vrot.slane %v3781, 1
        %v3790 = vrot.slane %v3782, 1
        %v3791 = vrot.slane %v3783, 1
        %v3792 = vrot.slane %v3784, 1
        %v3793 = vrot.slane %v3785, 1
        %v3794 = vrot.slane %v3786, 1
        %v3795 = vrot.slane %v3787, 1
        %v3796 = vrot.slane %v3788, 1
        %v3799 = vsel %vm908, %v3629, %v3750
        %v3802 = vsel %vm908, %v3630, %v3752
        %v3805 = vsel %vm908, %v3631, %v3754
        %v3808 = vsel %vm908, %v3632, %v3756
        %v3811 = vsel %vm908, %v3633, %v3758
        %v3814 = vsel %vm908, %v3634, %v3760
        %v3817 = vsel %vm908, %v3635, %v3762
        %v3820 = vsel %vm908, %v3636, %v3764
        %v3829 = vunpack.c.l.b16 %v3799
        %v3830 = vunpack.c.l.b16 %v3789
        %v3831 = vunpack.c.l.b16 %v3802
        %v3832 = vunpack.c.l.b16 %v3790
        %v3833 = vunpack.c.l.b16 %v3805
        %v3834 = vunpack.c.l.b16 %v3791
        %v3835 = vunpack.c.l.b16 %v3808
        %v3836 = vunpack.c.l.b16 %v3792
        %v3837 = vunpack.c.l.b16 %v3811
        %v3838 = vunpack.c.l.b16 %v3793
        %v3839 = vunpack.c.l.b16 %v3814
        %v3840 = vunpack.c.l.b16 %v3794
        %v3841 = vunpack.c.l.b16 %v3817
        %v3842 = vunpack.c.l.b16 %v3795
        %v3843 = vunpack.c.l.b16 %v3820
        %v3844 = vunpack.c.l.b16 %v3796
        %s3845 = scalar_lea.vmem %s5, 576
        %v3846 = vld [vmem:[%s3845] sm:$0xf]
        %v3847 = vld [vmem:[%s3845 + $0x4] sm:$0xf]
        %v3848 = vld [vmem:[%s3845 + $0x8] sm:$0xf]
        %v3849 = vld [vmem:[%s3845 + $0xc] sm:$0xf]
        %v3850 = vld [vmem:[%s3845 + $0x10] sm:$0xf]
        %v3851 = vld [vmem:[%s3845 + $0x14] sm:$0xf]
        %v3852 = vld [vmem:[%s3845 + $0x18] sm:$0xf]
        %v3853 = vld [vmem:[%s3845 + $0x1c] sm:$0xf]
        %v3854 = vld [vmem:[%s3845 + $0x20] sm:$0xf]
        %v3855 = vld [vmem:[%s3845 + $0x24] sm:$0xf]
        %v3856 = vld [vmem:[%s3845 + $0x28] sm:$0xf]
        %v3857 = vld [vmem:[%s3845 + $0x2c] sm:$0xf]
        %v3858 = vld [vmem:[%s3845 + $0x30] sm:$0xf]
        %v3859 = vld [vmem:[%s3845 + $0x34] sm:$0xf]
        %v3860 = vld [vmem:[%s3845 + $0x38] sm:$0xf]
        %v3861 = vld [vmem:[%s3845 + $0x3c] sm:$0xf]
        %v3862 = vld [vmem:[%s3845 + $0x40] sm:$0xf]
        %v3863 = vld [vmem:[%s3845 + $0x44] sm:$0xf]
        %v3864 = vld [vmem:[%s3845 + $0x48] sm:$0xf]
        %v3865 = vld [vmem:[%s3845 + $0x4c] sm:$0xf]
        %v3866 = vld [vmem:[%s3845 + $0x50] sm:$0xf]
        %v3867 = vld [vmem:[%s3845 + $0x54] sm:$0xf]
        %v3868 = vld [vmem:[%s3845 + $0x58] sm:$0xf]
        %v3869 = vld [vmem:[%s3845 + $0x5c] sm:$0xf]
        %v3870 = vld [vmem:[%s685] sm:$0xf]
        %v3871 = vld [vmem:[%s685 + $0x8] sm:$0xf]
        %v3872 = vld [vmem:[%s685 + $0x10] sm:$0xf]
        %v3873 = vld [vmem:[%s685 + $0x18] sm:$0xf]
        %v3874 = vld [vmem:[%s685 + $0x20] sm:$0xf]
        %v3875 = vld [vmem:[%s685 + $0x28] sm:$0xf]
        %v3876 = vld [vmem:[%s685 + $0x30] sm:$0xf]
        %v3877 = vld [vmem:[%s685 + $0x38] sm:$0xf]
        %v3878 = vld [vmem:[%s685 + $0x4] sm:$0x1]
        %v3879 = vld [vmem:[%s685 + $0xc] sm:$0x1]
        %v3880 = vld [vmem:[%s685 + $0x14] sm:$0x1]
        %v3881 = vld [vmem:[%s685 + $0x1c] sm:$0x1]
        %v3882 = vld [vmem:[%s685 + $0x24] sm:$0x1]
        %v3883 = vld [vmem:[%s685 + $0x2c] sm:$0x1]
        %v3884 = vld [vmem:[%s685 + $0x34] sm:$0x1]
        %v3885 = vld [vmem:[%s685 + $0x3c] sm:$0x1]
        %v3886 = vld [vmem:[%s685] sm:$0xe]
        %v3887 = vld [vmem:[%s685 + $0x8] sm:$0xe]
        %v3888 = vld [vmem:[%s685 + $0x10] sm:$0xe]
        %v3889 = vld [vmem:[%s685 + $0x18] sm:$0xe]
        %v3890 = vld [vmem:[%s685 + $0x20] sm:$0xe]
        %v3891 = vld [vmem:[%s685 + $0x28] sm:$0xe]
        %v3892 = vld [vmem:[%s685 + $0x30] sm:$0xe]
        %v3893 = vld [vmem:[%s685 + $0x38] sm:$0xe]
        %v3910 = vunpack.c.l.b16 %v3870
        %v3911 = vunpack.c.l.b16 %v3878
        %v3912 = vunpack.c.l.b16 %v3871
        %v3913 = vunpack.c.l.b16 %v3879
        %v3914 = vunpack.c.l.b16 %v3872
        %v3915 = vunpack.c.l.b16 %v3880
        %v3916 = vunpack.c.l.b16 %v3873
        %v3917 = vunpack.c.l.b16 %v3881
        %v3918 = vunpack.c.l.b16 %v3874
        %v3919 = vunpack.c.l.b16 %v3882
        %v3920 = vunpack.c.l.b16 %v3875
        %v3921 = vunpack.c.l.b16 %v3883
        %v3922 = vunpack.c.l.b16 %v3876
        %v3923 = vunpack.c.l.b16 %v3884
        %v3924 = vunpack.c.l.b16 %v3877
        %v3925 = vunpack.c.l.b16 %v3885
        %v3926 = vpack.c.b16 %v3911, %v3910
        %v3927 = vpack.c.b16 %v3913, %v3912
        %v3928 = vpack.c.b16 %v3915, %v3914
        %v3929 = vpack.c.b16 %v3917, %v3916
        %v3930 = vpack.c.b16 %v3919, %v3918
        %v3931 = vpack.c.b16 %v3921, %v3920
        %v3932 = vpack.c.b16 %v3923, %v3922
        %v3933 = vpack.c.b16 %v3925, %v3924
        %v3935 = vshrl.u32 %v3926, 16
        %v3937 = vshll.u32 %v3926, 16
        %v3939 = vrot.slane %v3937, 1
        %v3940 = vor.u32 %v3935, %v3939
        %v3942 = vshrl.u32 %v3927, 16
        %v3944 = vshll.u32 %v3927, 16
        %v3946 = vrot.slane %v3944, 1
        %v3947 = vor.u32 %v3942, %v3946
        %v3949 = vshrl.u32 %v3928, 16
        %v3951 = vshll.u32 %v3928, 16
        %v3953 = vrot.slane %v3951, 1
        %v3954 = vor.u32 %v3949, %v3953
        %v3956 = vshrl.u32 %v3929, 16
        %v3958 = vshll.u32 %v3929, 16
        %v3960 = vrot.slane %v3958, 1
        %v3961 = vor.u32 %v3956, %v3960
        %v3963 = vshrl.u32 %v3930, 16
        %v3965 = vshll.u32 %v3930, 16
        %v3967 = vrot.slane %v3965, 1
        %v3968 = vor.u32 %v3963, %v3967
        %v3970 = vshrl.u32 %v3931, 16
        %v3972 = vshll.u32 %v3931, 16
        %v3974 = vrot.slane %v3972, 1
        %v3975 = vor.u32 %v3970, %v3974
        %v3977 = vshrl.u32 %v3932, 16
        %v3979 = vshll.u32 %v3932, 16
        %v3981 = vrot.slane %v3979, 1
        %v3982 = vor.u32 %v3977, %v3981
        %v3984 = vshrl.u32 %v3933, 16
        %v3986 = vshll.u32 %v3933, 16
        %v3988 = vrot.slane %v3986, 1
        %v3989 = vor.u32 %v3984, %v3988
        %3990 = vrot.lane.b32.xlu0 %v3940, 64
        %v3991 = vpop.permute.xlu0 %3990
        %3992 = vrot.lane.b32.xlu0 %v3947, 64
        %v3993 = vpop.permute.xlu0 %3992
        %3994 = vrot.lane.b32.xlu0 %v3954, 64
        %v3995 = vpop.permute.xlu0 %3994
        %3996 = vrot.lane.b32.xlu0 %v3961, 64
        %v3997 = vpop.permute.xlu0 %3996
        %3998 = vrot.lane.b32.xlu0 %v3968, 64
        %v3999 = vpop.permute.xlu0 %3998
        %4000 = vrot.lane.b32.xlu0 %v3975, 64
        %v4001 = vpop.permute.xlu0 %4000
        %4002 = vrot.lane.b32.xlu0 %v3982, 64
        %v4003 = vpop.permute.xlu0 %4002
        %4004 = vrot.lane.b32.xlu0 %v3989, 64
        %v4005 = vpop.permute.xlu0 %4004
        %v4014 = vunpack.c.l.b16 %v3886
        %v4015 = vunpack.c.l.b16 %v3887
        %v4016 = vunpack.c.l.b16 %v3888
        %v4017 = vunpack.c.l.b16 %v3889
        %v4018 = vunpack.c.l.b16 %v3890
        %v4019 = vunpack.c.l.b16 %v3891
        %v4020 = vunpack.c.l.b16 %v3892
        %v4021 = vunpack.c.l.b16 %v3893
        %v4022 = vpack.c.b16 %v3911, %v4014
        %v4023 = vpack.c.b16 %v3913, %v4015
        %v4024 = vpack.c.b16 %v3915, %v4016
        %v4025 = vpack.c.b16 %v3917, %v4017
        %v4026 = vpack.c.b16 %v3919, %v4018
        %v4027 = vpack.c.b16 %v3921, %v4019
        %v4028 = vpack.c.b16 %v3923, %v4020
        %v4029 = vpack.c.b16 %v3925, %v4021
        %v4030 = vrot.slane %v4022, 1
        %v4031 = vrot.slane %v4023, 1
        %v4032 = vrot.slane %v4024, 1
        %v4033 = vrot.slane %v4025, 1
        %v4034 = vrot.slane %v4026, 1
        %v4035 = vrot.slane %v4027, 1
        %v4036 = vrot.slane %v4028, 1
        %v4037 = vrot.slane %v4029, 1
        %v4040 = vsel %vm908, %v3870, %v3991
        %v4043 = vsel %vm908, %v3871, %v3993
        %v4046 = vsel %vm908, %v3872, %v3995
        %v4049 = vsel %vm908, %v3873, %v3997
        %v4052 = vsel %vm908, %v3874, %v3999
        %v4055 = vsel %vm908, %v3875, %v4001
        %v4058 = vsel %vm908, %v3876, %v4003
        %v4061 = vsel %vm908, %v3877, %v4005
        %v4070 = vunpack.c.l.b16 %v4040
        %v4071 = vunpack.c.l.b16 %v4030
        %v4072 = vunpack.c.l.b16 %v4043
        %v4073 = vunpack.c.l.b16 %v4031
        %v4074 = vunpack.c.l.b16 %v4046
        %v4075 = vunpack.c.l.b16 %v4032
        %v4076 = vunpack.c.l.b16 %v4049
        %v4077 = vunpack.c.l.b16 %v4033
        %v4078 = vunpack.c.l.b16 %v4052
        %v4079 = vunpack.c.l.b16 %v4034
        %v4080 = vunpack.c.l.b16 %v4055
        %v4081 = vunpack.c.l.b16 %v4035
        %v4082 = vunpack.c.l.b16 %v4058
        %v4083 = vunpack.c.l.b16 %v4036
        %v4084 = vunpack.c.l.b16 %v4061
        %v4085 = vunpack.c.l.b16 %v4037
        %s4086 = scalar_lea.vmem %s5, 672
        %v4087 = vld [vmem:[%s4086] sm:$0xf]
        %v4088 = vld [vmem:[%s4086 + $0x4] sm:$0xf]
        %v4089 = vld [vmem:[%s4086 + $0x8] sm:$0xf]
        %v4090 = vld [vmem:[%s4086 + $0xc] sm:$0xf]
        %v4091 = vld [vmem:[%s4086 + $0x10] sm:$0xf]
        %v4092 = vld [vmem:[%s4086 + $0x14] sm:$0xf]
        %v4093 = vld [vmem:[%s4086 + $0x18] sm:$0xf]
        %v4094 = vld [vmem:[%s4086 + $0x1c] sm:$0xf]
        %v4095 = vld [vmem:[%s4086 + $0x20] sm:$0xf]
        %v4096 = vld [vmem:[%s4086 + $0x24] sm:$0xf]
        %v4097 = vld [vmem:[%s4086 + $0x28] sm:$0xf]
        %v4098 = vld [vmem:[%s4086 + $0x2c] sm:$0xf]
        %v4099 = vld [vmem:[%s4086 + $0x30] sm:$0xf]
        %v4100 = vld [vmem:[%s4086 + $0x34] sm:$0xf]
        %v4101 = vld [vmem:[%s4086 + $0x38] sm:$0xf]
        %v4102 = vld [vmem:[%s4086 + $0x3c] sm:$0xf]
        %v4103 = vld [vmem:[%s4086 + $0x40] sm:$0xf]
        %v4104 = vld [vmem:[%s4086 + $0x44] sm:$0xf]
        %v4105 = vld [vmem:[%s4086 + $0x48] sm:$0xf]
        %v4106 = vld [vmem:[%s4086 + $0x4c] sm:$0xf]
        %v4107 = vld [vmem:[%s4086 + $0x50] sm:$0xf]
        %v4108 = vld [vmem:[%s4086 + $0x54] sm:$0xf]
        %v4109 = vld [vmem:[%s4086 + $0x58] sm:$0xf]
        %v4110 = vld [vmem:[%s4086 + $0x5c] sm:$0xf]
        %v4111 = vpack.c.b16 %v4072, %v4070
        %v4112 = vpack.c.b16 %v4073, %v4071
        %v4113 = vpack.c.b16 %v4076, %v4074
        %v4114 = vpack.c.b16 %v4077, %v4075
        %v4115 = vpack.c.b16 %v4080, %v4078
        %v4116 = vpack.c.b16 %v4081, %v4079
        %v4117 = vpack.c.b16 %v4084, %v4082
        %v4118 = vpack.c.b16 %v4085, %v4083
        %v4147 = vunpack.c.l.b16 %v4087
        %v4148 = vunpack.c.l.b16 %v4088
        %v4149 = vunpack.c.l.b16 %v4089
        %v4150 = vunpack.c.l.b16 %v4090
        %v4151 = vunpack.c.l.b16 %v4091
        %v4152 = vunpack.c.l.b16 %v4092
        %v4153 = vunpack.c.l.b16 %v4093
        %v4154 = vunpack.c.l.b16 %v4094
        %v4155 = vunpack.c.l.b16 %v4095
        %v4156 = vunpack.c.l.b16 %v4096
        %v4157 = vunpack.c.l.b16 %v4097
        %v4158 = vunpack.c.l.b16 %v4098
        %v4159 = vunpack.c.l.b16 %v4099
        %v4160 = vunpack.c.l.b16 %v4100
        %v4161 = vunpack.c.l.b16 %v4101
        %v4162 = vunpack.c.l.b16 %v4102
        %v4163 = vunpack.c.l.b16 %v4103
        %v4164 = vunpack.c.l.b16 %v4104
        %v4165 = vunpack.c.l.b16 %v4105
        %v4166 = vunpack.c.l.b16 %v4106
        %v4167 = vunpack.c.l.b16 %v4107
        %v4168 = vunpack.c.l.b16 %v4108
        %v4169 = vunpack.c.l.b16 %v4109
        %v4170 = vunpack.c.l.b16 %v4110
        %v4171 = vpack.c.b16 %v4148, %v4147
        %v4172 = vpack.c.b16 %v4150, %v4149
        %v4173 = vpack.c.b16 %v4152, %v4151
        %v4174 = vpack.c.b16 %v4154, %v4153
        %v4175 = vpack.c.b16 %v4156, %v4155
        %v4176 = vpack.c.b16 %v4158, %v4157
        %v4177 = vpack.c.b16 %v4160, %v4159
        %v4178 = vpack.c.b16 %v4162, %v4161
        %v4179 = vpack.c.b16 %v4164, %v4163
        %v4180 = vpack.c.b16 %v4166, %v4165
        %v4181 = vpack.c.b16 %v4168, %v4167
        %v4182 = vpack.c.b16 %v4170, %v4169
        %v4196 = vsel %vm908, %v4112, 0
        %v4199 = vsel %vm908, %v4114, 0
        %v4202 = vsel %vm908, %v4116, 0
        %v4205 = vsel %vm908, %v4118, 0
        %4207 = vmatprep.subr.bf16.mxu0 0
        %4208 = vmatpush1.bf16.msra.mxu0 %v4178
        %4209 = vmatprep.subr.bf16.mxu0 0
        %4210 = vmatpush1.bf16.msra.mxu0 %v4177
        %4211 = vmatprep.subr.bf16.mxu0 0
        %4212 = vmatpush1.bf16.msra.mxu0 %v4176
        %4213 = vmatprep.subr.bf16.mxu0 0
        %4214 = vmatpush1.bf16.msra.mxu0 %v4175
        %4215 = vmatprep.subr.bf16.mxu0 0
        %4216 = vmatpush1.bf16.msra.mxu0 %v4174
        %4217 = vmatprep.subr.bf16.mxu0 0
        %4218 = vmatpush1.bf16.msra.mxu0 %v4173
        %4219 = vmatprep.subr.bf16.mxu0 0
        %4220 = vmatpush1.bf16.msra.mxu0 %v4172
        %4221 = vmatprep.subr.bf16.mxu0 0
        %4222 = vmatpush1.bf16.msra.mxu0 %v4171
        %4223 = vmatprep.subr.bf16.mxu0 0
        %4224 = vmatpush2.bf16.msra.mxu0 0
        %4225 = vmatprep.subr.bf16.mxu0 0
        %4226 = vmatpush2.bf16.msra.mxu0 0
        %4227 = vmatprep.subr.bf16.mxu0 0
        %4228 = vmatpush2.bf16.msra.mxu0 0
        %4229 = vmatprep.subr.bf16.mxu0 0
        %4230 = vmatpush2.bf16.msra.mxu0 0
        %4231 = vmatprep.subr.bf16.mxu0 0
        %4232 = vmatpush2.bf16.msra.mxu0 %v4182
        %4233 = vmatprep.subr.bf16.mxu0 0
        %4234 = vmatpush2.bf16.msra.mxu0 %v4181
        %4235 = vmatprep.subr.bf16.mxu0 0
        %4236 = vmatpush2.bf16.msra.mxu0 %v4180
        %4237 = vmatprep.subr.bf16.mxu0 0
        %4238 = vmatpush2.bf16.msra.mxu0 %v4179
        %4239 = vmatprep.mubr.bf16.mxu0 %v4196
        %4240 = vmatmul.mubr.bf16.gmra.mxu0 %v4111
        %v4241 = vpop.f32.mrf.mxu0
        %v4242 = vadd.f32 0.0, %v4241
        %v4243 = vpop.f32.mrf.mxu0
        %v4244 = vpop.f32.mrf.mxu0
        %v4245 = vadd.f32 0.0, %v4244
        %v4246 = vpop.f32.mrf.mxu0
        %4247 = vmatprep.mubr.bf16.mxu0 %v4199
        %4248 = vmatmul.mubr.bf16.gmra.mxu0 %v4113
        %v4249 = vpop.f32.mrf.mxu0
        %v4250 = vadd.f32 0.0, %v4249
        %v4251 = vpop.f32.mrf.mxu0
        %v4252 = vpop.f32.mrf.mxu0
        %v4253 = vadd.f32 0.0, %v4252
        %v4254 = vpop.f32.mrf.mxu0
        %4255 = vmatprep.mubr.bf16.mxu0 %v4202
        %4256 = vmatmul.mubr.bf16.gmra.mxu0 %v4115
        %v4257 = vpop.f32.mrf.mxu0
        %v4258 = vadd.f32 0.0, %v4257
        %v4259 = vpop.f32.mrf.mxu0
        %v4260 = vpop.f32.mrf.mxu0
        %v4261 = vadd.f32 0.0, %v4260
        %v4262 = vpop.f32.mrf.mxu0
        %4263 = vmatprep.mubr.bf16.mxu0 %v4205
        %4264 = vmatmul.mubr.bf16.gmra.mxu0 %v4117
        %v4265 = vpop.f32.mrf.mxu0
        %v4266 = vadd.f32 0.0, %v4265
        %v4267 = vpop.f32.mrf.mxu0
        %v4268 = vpop.f32.mrf.mxu0
        %v4269 = vadd.f32 0.0, %v4268
        %v4270 = vpop.f32.mrf.mxu0
        %4271 = vdwg.mxu0
        %v4272 = vpack.c.b16 %v3831, %v3829
        %v4273 = vpack.c.b16 %v3832, %v3830
        %v4274 = vpack.c.b16 %v3835, %v3833
        %v4275 = vpack.c.b16 %v3836, %v3834
        %v4276 = vpack.c.b16 %v3839, %v3837
        %v4277 = vpack.c.b16 %v3840, %v3838
        %v4278 = vpack.c.b16 %v3843, %v3841
        %v4279 = vpack.c.b16 %v3844, %v3842
        %v4308 = vunpack.c.l.b16 %v3846
        %v4309 = vunpack.c.l.b16 %v3847
        %v4310 = vunpack.c.l.b16 %v3848
        %v4311 = vunpack.c.l.b16 %v3849
        %v4312 = vunpack.c.l.b16 %v3850
        %v4313 = vunpack.c.l.b16 %v3851
        %v4314 = vunpack.c.l.b16 %v3852
        %v4315 = vunpack.c.l.b16 %v3853
        %v4316 = vunpack.c.l.b16 %v3854
        %v4317 = vunpack.c.l.b16 %v3855
        %v4318 = vunpack.c.l.b16 %v3856
        %v4319 = vunpack.c.l.b16 %v3857
        %v4320 = vunpack.c.l.b16 %v3858
        %v4321 = vunpack.c.l.b16 %v3859
        %v4322 = vunpack.c.l.b16 %v3860
        %v4323 = vunpack.c.l.b16 %v3861
        %v4324 = vunpack.c.l.b16 %v3862
        %v4325 = vunpack.c.l.b16 %v3863
        %v4326 = vunpack.c.l.b16 %v3864
        %v4327 = vunpack.c.l.b16 %v3865
        %v4328 = vunpack.c.l.b16 %v3866
        %v4329 = vunpack.c.l.b16 %v3867
        %v4330 = vunpack.c.l.b16 %v3868
        %v4331 = vunpack.c.l.b16 %v3869
        %v4332 = vpack.c.b16 %v4309, %v4308
        %v4333 = vpack.c.b16 %v4311, %v4310
        %v4334 = vpack.c.b16 %v4313, %v4312
        %v4335 = vpack.c.b16 %v4315, %v4314
        %v4336 = vpack.c.b16 %v4317, %v4316
        %v4337 = vpack.c.b16 %v4319, %v4318
        %v4338 = vpack.c.b16 %v4321, %v4320
        %v4339 = vpack.c.b16 %v4323, %v4322
        %v4340 = vpack.c.b16 %v4325, %v4324
        %v4341 = vpack.c.b16 %v4327, %v4326
        %v4342 = vpack.c.b16 %v4329, %v4328
        %v4343 = vpack.c.b16 %v4331, %v4330
        %v4357 = vsel %vm908, %v4273, 0
        %v4360 = vsel %vm908, %v4275, 0
        %v4363 = vsel %vm908, %v4277, 0
        %v4366 = vsel %vm908, %v4279, 0
        %4368 = vmatprep.subr.bf16.mxu0 0
        %4369 = vmatpush1.bf16.msra.mxu0 %v4339
        %4370 = vmatprep.subr.bf16.mxu0 0
        %4371 = vmatpush1.bf16.msra.mxu0 %v4338
        %4372 = vmatprep.subr.bf16.mxu0 0
        %4373 = vmatpush1.bf16.msra.mxu0 %v4337
        %4374 = vmatprep.subr.bf16.mxu0 0
        %4375 = vmatpush1.bf16.msra.mxu0 %v4336
        %4376 = vmatprep.subr.bf16.mxu0 0
        %4377 = vmatpush1.bf16.msra.mxu0 %v4335
        %4378 = vmatprep.subr.bf16.mxu0 0
        %4379 = vmatpush1.bf16.msra.mxu0 %v4334
        %4380 = vmatprep.subr.bf16.mxu0 0
        %4381 = vmatpush1.bf16.msra.mxu0 %v4333
        %4382 = vmatprep.subr.bf16.mxu0 0
        %4383 = vmatpush1.bf16.msra.mxu0 %v4332
        %4384 = vmatprep.subr.bf16.mxu0 0
        %4385 = vmatpush2.bf16.msra.mxu0 0
        %4386 = vmatprep.subr.bf16.mxu0 0
        %4387 = vmatpush2.bf16.msra.mxu0 0
        %4388 = vmatprep.subr.bf16.mxu0 0
        %4389 = vmatpush2.bf16.msra.mxu0 0
        %4390 = vmatprep.subr.bf16.mxu0 0
        %4391 = vmatpush2.bf16.msra.mxu0 0
        %4392 = vmatprep.subr.bf16.mxu0 0
        %4393 = vmatpush2.bf16.msra.mxu0 %v4343
        %4394 = vmatprep.subr.bf16.mxu0 0
        %4395 = vmatpush2.bf16.msra.mxu0 %v4342
        %4396 = vmatprep.subr.bf16.mxu0 0
        %4397 = vmatpush2.bf16.msra.mxu0 %v4341
        %4398 = vmatprep.subr.bf16.mxu0 0
        %4399 = vmatpush2.bf16.msra.mxu0 %v4340
        %4400 = vmatprep.mubr.bf16.mxu0 %v4357
        %4401 = vmatmul.mubr.bf16.gmra.mxu0 %v4272
        %v4402 = vpop.f32.mrf.mxu0
        %v4403 = vadd.f32 %v4242, %v4402
        %v4404 = vpop.f32.mrf.mxu0
        %v4405 = vpop.f32.mrf.mxu0
        %v4406 = vadd.f32 %v4245, %v4405
        %v4407 = vpop.f32.mrf.mxu0
        %4408 = vmatprep.mubr.bf16.mxu0 %v4360
        %4409 = vmatmul.mubr.bf16.gmra.mxu0 %v4274
        %v4410 = vpop.f32.mrf.mxu0
        %v4411 = vadd.f32 %v4250, %v4410
        %v4412 = vpop.f32.mrf.mxu0
        %v4413 = vpop.f32.mrf.mxu0
        %v4414 = vadd.f32 %v4253, %v4413
        %v4415 = vpop.f32.mrf.mxu0
        %4416 = vmatprep.mubr.bf16.mxu0 %v4363
        %4417 = vmatmul.mubr.bf16.gmra.mxu0 %v4276
        %v4418 = vpop.f32.mrf.mxu0
        %v4419 = vadd.f32 %v4258, %v4418
        %v4420 = vpop.f32.mrf.mxu0
        %v4421 = vpop.f32.mrf.mxu0
        %v4422 = vadd.f32 %v4261, %v4421
        %v4423 = vpop.f32.mrf.mxu0
        %4424 = vmatprep.mubr.bf16.mxu0 %v4366
        %4425 = vmatmul.mubr.bf16.gmra.mxu0 %v4278
        %v4426 = vpop.f32.mrf.mxu0
        %v4427 = vadd.f32 %v4266, %v4426
        %v4428 = vpop.f32.mrf.mxu0
        %v4429 = vpop.f32.mrf.mxu0
        %v4430 = vadd.f32 %v4269, %v4429
        %v4431 = vpop.f32.mrf.mxu0
        %4432 = vdwg.mxu0
        %v4433 = vld [vmem:[%s1544] sm:$0xf]
        %v4434 = vld [vmem:[%s1544 + $0x8] sm:$0xf]
        %v4435 = vld [vmem:[%s1544 + $0x10] sm:$0xf]
        %v4436 = vld [vmem:[%s1544 + $0x18] sm:$0xf]
        %v4437 = vld [vmem:[%s1544 + $0x20] sm:$0xf]
        %v4438 = vld [vmem:[%s1544 + $0x28] sm:$0xf]
        %v4439 = vld [vmem:[%s1544 + $0x30] sm:$0xf]
        %v4440 = vld [vmem:[%s1544 + $0x38] sm:$0xf]
        %v4441 = vld [vmem:[%s1544 + $0x4] sm:$0x1]
        %v4442 = vld [vmem:[%s1544 + $0xc] sm:$0x1]
        %v4443 = vld [vmem:[%s1544 + $0x14] sm:$0x1]
        %v4444 = vld [vmem:[%s1544 + $0x1c] sm:$0x1]
        %v4445 = vld [vmem:[%s1544 + $0x24] sm:$0x1]
        %v4446 = vld [vmem:[%s1544 + $0x2c] sm:$0x1]
        %v4447 = vld [vmem:[%s1544 + $0x34] sm:$0x1]
        %v4448 = vld [vmem:[%s1544 + $0x3c] sm:$0x1]
        %v4449 = vld [vmem:[%s1544] sm:$0xe]
        %v4450 = vld [vmem:[%s1544 + $0x8] sm:$0xe]
        %v4451 = vld [vmem:[%s1544 + $0x10] sm:$0xe]
        %v4452 = vld [vmem:[%s1544 + $0x18] sm:$0xe]
        %v4453 = vld [vmem:[%s1544 + $0x20] sm:$0xe]
        %v4454 = vld [vmem:[%s1544 + $0x28] sm:$0xe]
        %v4455 = vld [vmem:[%s1544 + $0x30] sm:$0xe]
        %v4456 = vld [vmem:[%s1544 + $0x38] sm:$0xe]
        %v4473 = vunpack.c.l.b16 %v4433
        %v4474 = vunpack.c.l.b16 %v4441
        %v4475 = vunpack.c.l.b16 %v4434
        %v4476 = vunpack.c.l.b16 %v4442
        %v4477 = vunpack.c.l.b16 %v4435
        %v4478 = vunpack.c.l.b16 %v4443
        %v4479 = vunpack.c.l.b16 %v4436
        %v4480 = vunpack.c.l.b16 %v4444
        %v4481 = vunpack.c.l.b16 %v4437
        %v4482 = vunpack.c.l.b16 %v4445
        %v4483 = vunpack.c.l.b16 %v4438
        %v4484 = vunpack.c.l.b16 %v4446
        %v4485 = vunpack.c.l.b16 %v4439
        %v4486 = vunpack.c.l.b16 %v4447
        %v4487 = vunpack.c.l.b16 %v4440
        %v4488 = vunpack.c.l.b16 %v4448
        %v4489 = vpack.c.b16 %v4474, %v4473
        %v4490 = vpack.c.b16 %v4476, %v4475
        %v4491 = vpack.c.b16 %v4478, %v4477
        %v4492 = vpack.c.b16 %v4480, %v4479
        %v4493 = vpack.c.b16 %v4482, %v4481
        %v4494 = vpack.c.b16 %v4484, %v4483
        %v4495 = vpack.c.b16 %v4486, %v4485
        %v4496 = vpack.c.b16 %v4488, %v4487
        %v4498 = vshrl.u32 %v4489, 16
        %v4500 = vshll.u32 %v4489, 16
        %v4502 = vrot.slane %v4500, 1
        %v4503 = vor.u32 %v4498, %v4502
        %v4505 = vshrl.u32 %v4490, 16
        %v4507 = vshll.u32 %v4490, 16
        %v4509 = vrot.slane %v4507, 1
        %v4510 = vor.u32 %v4505, %v4509
        %v4512 = vshrl.u32 %v4491, 16
        %v4514 = vshll.u32 %v4491, 16
        %v4516 = vrot.slane %v4514, 1
        %v4517 = vor.u32 %v4512, %v4516
        %v4519 = vshrl.u32 %v4492, 16
        %v4521 = vshll.u32 %v4492, 16
        %v4523 = vrot.slane %v4521, 1
        %v4524 = vor.u32 %v4519, %v4523
        %v4526 = vshrl.u32 %v4493, 16
        %v4528 = vshll.u32 %v4493, 16
        %v4530 = vrot.slane %v4528, 1
        %v4531 = vor.u32 %v4526, %v4530
        %v4533 = vshrl.u32 %v4494, 16
        %v4535 = vshll.u32 %v4494, 16
        %v4537 = vrot.slane %v4535, 1
        %v4538 = vor.u32 %v4533, %v4537
        %v4540 = vshrl.u32 %v4495, 16
        %v4542 = vshll.u32 %v4495, 16
        %v4544 = vrot.slane %v4542, 1
        %v4545 = vor.u32 %v4540, %v4544
        %v4547 = vshrl.u32 %v4496, 16
        %v4549 = vshll.u32 %v4496, 16
        %v4551 = vrot.slane %v4549, 1
        %v4552 = vor.u32 %v4547, %v4551
        %4553 = vrot.lane.b32.xlu0 %v4503, 64
        %v4554 = vpop.permute.xlu0 %4553
        %4555 = vrot.lane.b32.xlu0 %v4510, 64
        %v4556 = vpop.permute.xlu0 %4555
        %4557 = vrot.lane.b32.xlu0 %v4517, 64
        %v4558 = vpop.permute.xlu0 %4557
        %4559 = vrot.lane.b32.xlu0 %v4524, 64
        %v4560 = vpop.permute.xlu0 %4559
        %4561 = vrot.lane.b32.xlu0 %v4531, 64
        %v4562 = vpop.permute.xlu0 %4561
        %4563 = vrot.lane.b32.xlu0 %v4538, 64
        %v4564 = vpop.permute.xlu0 %4563
        %4565 = vrot.lane.b32.xlu0 %v4545, 64
        %v4566 = vpop.permute.xlu0 %4565
        %4567 = vrot.lane.b32.xlu0 %v4552, 64
        %v4568 = vpop.permute.xlu0 %4567
        %v4577 = vunpack.c.l.b16 %v4449
        %v4578 = vunpack.c.l.b16 %v4450
        %v4579 = vunpack.c.l.b16 %v4451
        %v4580 = vunpack.c.l.b16 %v4452
        %v4581 = vunpack.c.l.b16 %v4453
        %v4582 = vunpack.c.l.b16 %v4454
        %v4583 = vunpack.c.l.b16 %v4455
        %v4584 = vunpack.c.l.b16 %v4456
        %v4585 = vpack.c.b16 %v4474, %v4577
        %v4586 = vpack.c.b16 %v4476, %v4578
        %v4587 = vpack.c.b16 %v4478, %v4579
        %v4588 = vpack.c.b16 %v4480, %v4580
        %v4589 = vpack.c.b16 %v4482, %v4581
        %v4590 = vpack.c.b16 %v4484, %v4582
        %v4591 = vpack.c.b16 %v4486, %v4583
        %v4592 = vpack.c.b16 %v4488, %v4584
        %v4593 = vrot.slane %v4585, 1
        %v4594 = vrot.slane %v4586, 1
        %v4595 = vrot.slane %v4587, 1
        %v4596 = vrot.slane %v4588, 1
        %v4597 = vrot.slane %v4589, 1
        %v4598 = vrot.slane %v4590, 1
        %v4599 = vrot.slane %v4591, 1
        %v4600 = vrot.slane %v4592, 1
        %v4603 = vsel %vm908, %v4433, %v4554
        %v4606 = vsel %vm908, %v4434, %v4556
        %v4609 = vsel %vm908, %v4435, %v4558
        %v4612 = vsel %vm908, %v4436, %v4560
        %v4615 = vsel %vm908, %v4437, %v4562
        %v4618 = vsel %vm908, %v4438, %v4564
        %v4621 = vsel %vm908, %v4439, %v4566
        %v4624 = vsel %vm908, %v4440, %v4568
        %v4633 = vunpack.c.l.b16 %v4603
        %v4634 = vunpack.c.l.b16 %v4593
        %v4635 = vunpack.c.l.b16 %v4606
        %v4636 = vunpack.c.l.b16 %v4594
        %v4637 = vunpack.c.l.b16 %v4609
        %v4638 = vunpack.c.l.b16 %v4595
        %v4639 = vunpack.c.l.b16 %v4612
        %v4640 = vunpack.c.l.b16 %v4596
        %v4641 = vunpack.c.l.b16 %v4615
        %v4642 = vunpack.c.l.b16 %v4597
        %v4643 = vunpack.c.l.b16 %v4618
        %v4644 = vunpack.c.l.b16 %v4598
        %v4645 = vunpack.c.l.b16 %v4621
        %v4646 = vunpack.c.l.b16 %v4599
        %v4647 = vunpack.c.l.b16 %v4624
        %v4648 = vunpack.c.l.b16 %v4600
        %s4649 = scalar_lea.vmem %s5, 768
        %v4650 = vld [vmem:[%s4649] sm:$0xf]
        %v4651 = vld [vmem:[%s4649 + $0x4] sm:$0xf]
        %v4652 = vld [vmem:[%s4649 + $0x8] sm:$0xf]
        %v4653 = vld [vmem:[%s4649 + $0xc] sm:$0xf]
        %v4654 = vld [vmem:[%s4649 + $0x10] sm:$0xf]
        %v4655 = vld [vmem:[%s4649 + $0x14] sm:$0xf]
        %v4656 = vld [vmem:[%s4649 + $0x18] sm:$0xf]
        %v4657 = vld [vmem:[%s4649 + $0x1c] sm:$0xf]
        %v4658 = vld [vmem:[%s4649 + $0x20] sm:$0xf]
        %v4659 = vld [vmem:[%s4649 + $0x24] sm:$0xf]
        %v4660 = vld [vmem:[%s4649 + $0x28] sm:$0xf]
        %v4661 = vld [vmem:[%s4649 + $0x2c] sm:$0xf]
        %v4662 = vld [vmem:[%s4649 + $0x30] sm:$0xf]
        %v4663 = vld [vmem:[%s4649 + $0x34] sm:$0xf]
        %v4664 = vld [vmem:[%s4649 + $0x38] sm:$0xf]
        %v4665 = vld [vmem:[%s4649 + $0x3c] sm:$0xf]
        %v4666 = vld [vmem:[%s4649 + $0x40] sm:$0xf]
        %v4667 = vld [vmem:[%s4649 + $0x44] sm:$0xf]
        %v4668 = vld [vmem:[%s4649 + $0x48] sm:$0xf]
        %v4669 = vld [vmem:[%s4649 + $0x4c] sm:$0xf]
        %v4670 = vld [vmem:[%s4649 + $0x50] sm:$0xf]
        %v4671 = vld [vmem:[%s4649 + $0x54] sm:$0xf]
        %v4672 = vld [vmem:[%s4649 + $0x58] sm:$0xf]
        %v4673 = vld [vmem:[%s4649 + $0x5c] sm:$0xf]
        %v4674 = vpack.c.b16 %v4635, %v4633
        %v4675 = vpack.c.b16 %v4636, %v4634
        %v4676 = vpack.c.b16 %v4639, %v4637
        %v4677 = vpack.c.b16 %v4640, %v4638
        %v4678 = vpack.c.b16 %v4643, %v4641
        %v4679 = vpack.c.b16 %v4644, %v4642
        %v4680 = vpack.c.b16 %v4647, %v4645
        %v4681 = vpack.c.b16 %v4648, %v4646
        %v4710 = vunpack.c.l.b16 %v4650
        %v4711 = vunpack.c.l.b16 %v4651
        %v4712 = vunpack.c.l.b16 %v4652
        %v4713 = vunpack.c.l.b16 %v4653
        %v4714 = vunpack.c.l.b16 %v4654
        %v4715 = vunpack.c.l.b16 %v4655
        %v4716 = vunpack.c.l.b16 %v4656
        %v4717 = vunpack.c.l.b16 %v4657
        %v4718 = vunpack.c.l.b16 %v4658
        %v4719 = vunpack.c.l.b16 %v4659
        %v4720 = vunpack.c.l.b16 %v4660
        %v4721 = vunpack.c.l.b16 %v4661
        %v4722 = vunpack.c.l.b16 %v4662
        %v4723 = vunpack.c.l.b16 %v4663
        %v4724 = vunpack.c.l.b16 %v4664
        %v4725 = vunpack.c.l.b16 %v4665
        %v4726 = vunpack.c.l.b16 %v4666
        %v4727 = vunpack.c.l.b16 %v4667
        %v4728 = vunpack.c.l.b16 %v4668
        %v4729 = vunpack.c.l.b16 %v4669
        %v4730 = vunpack.c.l.b16 %v4670
        %v4731 = vunpack.c.l.b16 %v4671
        %v4732 = vunpack.c.l.b16 %v4672
        %v4733 = vunpack.c.l.b16 %v4673
        %v4734 = vpack.c.b16 %v4711, %v4710
        %v4735 = vpack.c.b16 %v4713, %v4712
        %v4736 = vpack.c.b16 %v4715, %v4714
        %v4737 = vpack.c.b16 %v4717, %v4716
        %v4738 = vpack.c.b16 %v4719, %v4718
        %v4739 = vpack.c.b16 %v4721, %v4720
        %v4740 = vpack.c.b16 %v4723, %v4722
        %v4741 = vpack.c.b16 %v4725, %v4724
        %v4742 = vpack.c.b16 %v4727, %v4726
        %v4743 = vpack.c.b16 %v4729, %v4728
        %v4744 = vpack.c.b16 %v4731, %v4730
        %v4745 = vpack.c.b16 %v4733, %v4732
        %v4759 = vsel %vm908, %v4675, 0
        %v4762 = vsel %vm908, %v4677, 0
        %v4765 = vsel %vm908, %v4679, 0
        %v4768 = vsel %vm908, %v4681, 0
        %4770 = vmatprep.subr.bf16.mxu0 0
        %4771 = vmatpush1.bf16.msra.mxu0 %v4741
        %4772 = vmatprep.subr.bf16.mxu0 0
        %4773 = vmatpush1.bf16.msra.mxu0 %v4740
        %4774 = vmatprep.subr.bf16.mxu0 0
        %4775 = vmatpush1.bf16.msra.mxu0 %v4739
        %4776 = vmatprep.subr.bf16.mxu0 0
        %4777 = vmatpush1.bf16.msra.mxu0 %v4738
        %4778 = vmatprep.subr.bf16.mxu0 0
        %4779 = vmatpush1.bf16.msra.mxu0 %v4737
        %4780 = vmatprep.subr.bf16.mxu0 0
        %4781 = vmatpush1.bf16.msra.mxu0 %v4736
        %4782 = vmatprep.subr.bf16.mxu0 0
        %4783 = vmatpush1.bf16.msra.mxu0 %v4735
        %4784 = vmatprep.subr.bf16.mxu0 0
        %4785 = vmatpush1.bf16.msra.mxu0 %v4734
        %4786 = vmatprep.subr.bf16.mxu0 0
        %4787 = vmatpush2.bf16.msra.mxu0 0
        %4788 = vmatprep.subr.bf16.mxu0 0
        %4789 = vmatpush2.bf16.msra.mxu0 0
        %4790 = vmatprep.subr.bf16.mxu0 0
        %4791 = vmatpush2.bf16.msra.mxu0 0
        %4792 = vmatprep.subr.bf16.mxu0 0
        %4793 = vmatpush2.bf16.msra.mxu0 0
        %4794 = vmatprep.subr.bf16.mxu0 0
        %4795 = vmatpush2.bf16.msra.mxu0 %v4745
        %4796 = vmatprep.subr.bf16.mxu0 0
        %4797 = vmatpush2.bf16.msra.mxu0 %v4744
        %4798 = vmatprep.subr.bf16.mxu0 0
        %4799 = vmatpush2.bf16.msra.mxu0 %v4743
        %4800 = vmatprep.subr.bf16.mxu0 0
        %4801 = vmatpush2.bf16.msra.mxu0 %v4742
        %4802 = vmatprep.mubr.bf16.mxu0 %v4759
        %4803 = vmatmul.mubr.bf16.gmra.mxu0 %v4674
        %v4804 = vpop.f32.mrf.mxu0
        %v4805 = vadd.f32 0.0, %v4804
        %v4806 = vpop.f32.mrf.mxu0
        %v4807 = vpop.f32.mrf.mxu0
        %v4808 = vadd.f32 0.0, %v4807
        %v4809 = vpop.f32.mrf.mxu0
        %4810 = vmatprep.mubr.bf16.mxu0 %v4762
        %4811 = vmatmul.mubr.bf16.gmra.mxu0 %v4676
        %v4812 = vpop.f32.mrf.mxu0
        %v4813 = vadd.f32 0.0, %v4812
        %v4814 = vpop.f32.mrf.mxu0
        %v4815 = vpop.f32.mrf.mxu0
        %v4816 = vadd.f32 0.0, %v4815
        %v4817 = vpop.f32.mrf.mxu0
        %4818 = vmatprep.mubr.bf16.mxu0 %v4765
        %4819 = vmatmul.mubr.bf16.gmra.mxu0 %v4678
        %v4820 = vpop.f32.mrf.mxu0
        %v4821 = vadd.f32 0.0, %v4820
        %v4822 = vpop.f32.mrf.mxu0
        %v4823 = vpop.f32.mrf.mxu0
        %v4824 = vadd.f32 0.0, %v4823
        %v4825 = vpop.f32.mrf.mxu0
        %4826 = vmatprep.mubr.bf16.mxu0 %v4768
        %4827 = vmatmul.mubr.bf16.gmra.mxu0 %v4680
        %v4828 = vpop.f32.mrf.mxu0
        %v4829 = vadd.f32 0.0, %v4828
        %v4830 = vpop.f32.mrf.mxu0
        %v4831 = vpop.f32.mrf.mxu0
        %v4832 = vadd.f32 0.0, %v4831
        %v4833 = vpop.f32.mrf.mxu0
        %4834 = vdwg.mxu0
        %v4835 = vadd.f32 %v4403, %v4805
        %v4836 = vadd.f32 %v4406, %v4808
        %v4837 = vadd.f32 %v4411, %v4813
        %v4838 = vadd.f32 %v4414, %v4816
        %v4839 = vadd.f32 %v4419, %v4821
        %v4840 = vadd.f32 %v4422, %v4824
        %v4841 = vadd.f32 %v4427, %v4829
        %v4842 = vadd.f32 %v4430, %v4832
        %v4843 = vld [vmem:[#allocation3] sm:$0xff]
        %v4844 = vld [vmem:[#allocation3 + $0x8] sm:$0xff]
        %v4845 = vld [vmem:[#allocation3 + $0x10] sm:$0xff]
        %v4846 = vld [vmem:[#allocation3 + $0x18] sm:$0xff]
        %v4847 = vld [vmem:[#allocation3 + $0x20] sm:$0xff]
        %v4848 = vld [vmem:[#allocation3 + $0x28] sm:$0xff]
        %v4849 = vld [vmem:[#allocation3 + $0x30] sm:$0xff]
        %v4850 = vld [vmem:[#allocation3 + $0x38] sm:$0xff]
        %v4851 = vadd.f32 %v4843, %v4835
        %v4852 = vadd.f32 %v4844, %v4836
        %v4853 = vadd.f32 %v4845, %v4837
        %v4854 = vadd.f32 %v4846, %v4838
        %v4855 = vadd.f32 %v4847, %v4839
        %v4856 = vadd.f32 %v4848, %v4840
        %v4857 = vadd.f32 %v4849, %v4841
        %v4858 = vadd.f32 %v4850, %v4842
        %4859 = vst.msk [vmem:[#allocation3] sm:$0xff] %vm908, %v4851
        %4860 = vst.msk [vmem:[#allocation3 + $0x8] sm:$0xff] %vm908, %v4852
        %4861 = vst.msk [vmem:[#allocation3 + $0x10] sm:$0xff] %vm908, %v4853
        %4862 = vst.msk [vmem:[#allocation3 + $0x18] sm:$0xff] %vm908, %v4854
        %4863 = vst.msk [vmem:[#allocation3 + $0x20] sm:$0xff] %vm908, %v4855
        %4864 = vst.msk [vmem:[#allocation3 + $0x28] sm:$0xff] %vm908, %v4856
        %4865 = vst.msk [vmem:[#allocation3 + $0x30] sm:$0xff] %vm908, %v4857
        %4866 = vst.msk [vmem:[#allocation3 + $0x38] sm:$0xff] %vm908, %v4858
        %v4867 = vld [vmem:[#allocation3] sm:$0xff]
        %v4868 = vld [vmem:[#allocation3 + $0x8] sm:$0xff]
        %v4869 = vld [vmem:[#allocation3 + $0x10] sm:$0xff]
        %v4870 = vld [vmem:[#allocation3 + $0x18] sm:$0xff]
        %v4871 = vld [vmem:[#allocation3 + $0x20] sm:$0xff]
        %v4872 = vld [vmem:[#allocation3 + $0x28] sm:$0xff]
        %v4873 = vld [vmem:[#allocation3 + $0x30] sm:$0xff]
        %v4874 = vld [vmem:[#allocation3 + $0x38] sm:$0xff]
        %v4875 = vld [vmem:[%s6] sm:$0x1]
        %v4877 = vlaneseq
        %v4878 = vshrl.u32 %v4877, 7
        %v4879 = vsub.s32 0, %v4878
        %v4880 = vrot.slane %v4875, %v4879
        %v4882 = vadd.f32 %v4867, %v4880
        %v4883 = vadd.f32 %v4868, %v4880
        %v4884 = vadd.f32 %v4869, %v4880
        %v4885 = vadd.f32 %v4870, %v4880
        %v4886 = vadd.f32 %v4871, %v4880
        %v4887 = vadd.f32 %v4872, %v4880
        %v4888 = vadd.f32 %v4873, %v4880
        %v4889 = vadd.f32 %v4874, %v4880
        %v4890 = vld [vmem:[%s475] sm:$0xff]
        %v4891 = vld [vmem:[%s475 + $0x8] sm:$0xff]
        %v4892 = vld [vmem:[%s475 + $0x10] sm:$0xff]
        %v4893 = vld [vmem:[%s475 + $0x18] sm:$0xff]
        %v4894 = vld [vmem:[%s475 + $0x20] sm:$0xff]
        %v4895 = vld [vmem:[%s475 + $0x28] sm:$0xff]
        %v4896 = vld [vmem:[%s475 + $0x30] sm:$0xff]
        %v4897 = vld [vmem:[%s475 + $0x38] sm:$0xff]
        %v4898 = vadd.f32 %v4882, %v4890
        %v4899 = vadd.f32 %v4883, %v4891
        %v4900 = vadd.f32 %v4884, %v4892
        %v4901 = vadd.f32 %v4885, %v4893
        %v4902 = vadd.f32 %v4886, %v4894
        %v4903 = vadd.f32 %v4887, %v4895
        %v4904 = vadd.f32 %v4888, %v4896
        %v4905 = vadd.f32 %v4889, %v4897
        %4906 = vst.msk [vmem:[%s427] sm:$0xff] %vm908, %v4898
        %4907 = vst.msk [vmem:[%s427 + $0x8] sm:$0xff] %vm908, %v4899
        %4908 = vst.msk [vmem:[%s427 + $0x10] sm:$0xff] %vm908, %v4900
        %4909 = vst.msk [vmem:[%s427 + $0x18] sm:$0xff] %vm908, %v4901
        %4910 = vst.msk [vmem:[%s427 + $0x20] sm:$0xff] %vm908, %v4902
        %4911 = vst.msk [vmem:[%s427 + $0x28] sm:$0xff] %vm908, %v4903
        %4912 = vst.msk [vmem:[%s427 + $0x30] sm:$0xff] %vm908, %v4904
        %4913 = vst.msk [vmem:[%s427 + $0x38] sm:$0xff] %vm908, %v4905
        %s4914 = sand.u32 %s252, 1
        %s4915 = scalar_lea.sflag [#allocation5], %s4914
        %s4916 = sand.u32 %s252, 1
        %s4917 = smul.addr %s4916, 64
        %s4918 = scalar_lea.vmem [#allocation4], %s4917
        // Predicated region
        $region53: #{voxres_forward_ndhwc.3} parent=51 // pred_check
          %p4919 = pneg %p262
        $region54: #{voxres_forward_ndhwc.3} parent=51 // pred_check_branch
          %4921 = sbr.rel (%p4919) target = $region56
        $region55: #{voxres_forward_ndhwc.3} parent=51 // pred_region
          %s4923 = ssub.s32 1024, 1024
          %4924 = vsyncadd %s4915, %s4923
          %s4925 = smul.addr %s27, 8
          %s4926 = smul.addr %s26, 64
          %s4927 = sadd.s32 %s4925, %s4926
          %s4928 = smul.addr %s4927, 128
          %s4929 = scalar_lea.hbm %s8, %s4928
          %s4930 = sshll.u32 %s4918, 4
          %s4931 = int_to_ptr.vmem [resolvable:$true] %s4930
          %4936 = dma.vmem_to_hbm [thread:$0]  %s4931, 1024, %s4929, %s4915, 128, 128, 8
        $region56: #{voxres_forward_ndhwc.3} parent=51 // pred_fallthru
          _
      $region52: #{voxres_forward_ndhwc.3} parent=5 // pred_fallthru
        _
      %p4937 = scmp.le.s32.totalorder 2, %s17
      // Predicated region
      $region57: #{voxres_forward_ndhwc.3} parent=5 // pred_check
        %p4938 = pneg %p4937
      $region58: #{voxres_forward_ndhwc.3} parent=5 // pred_check_branch
        %4940 = sbr.rel (%p4938) target = $region60
      $region59: #{voxres_forward_ndhwc.3} parent=5 // pred_region
        %s4941 = ssub.s32 %s17, 2
        // Predicated region
        $region61: #{voxres_forward_ndhwc.3} parent=59 // pred_check
          %p4942 = pneg %p268
        $region62: #{voxres_forward_ndhwc.3} parent=59 // pred_check_branch
          %4944 = sbr.rel (%p4942) target = $region64
        $region63: #{voxres_forward_ndhwc.3} parent=59 // pred_region
          %s4945 = sand.u32 %s253, 1
          %s4946 = scalar_lea.sflag [#allocation5], %s4945
          %s4947 = sand.u32 %s253, 1
          %s4948 = smul.addr %s4947, 64
          %s4949 = scalar_lea.vmem [#allocation4], %s4948
          %4950 = dma.done %s4946, 1024
        $region64: #{voxres_forward_ndhwc.3} parent=59 // pred_fallthru
          _
      $region60: #{voxres_forward_ndhwc.3} parent=5 // pred_fallthru
        _
    $region6: #{voxres_forward_ndhwc.3} parent=1 // loop_footer
      %s21 = sadd.s32 1, %s17
    $region7: #{voxres_forward_ndhwc.3} parent=1 // loop_footer_branch
      %16 = sbr.rel target = $region3
    $region8: #{voxres_forward_ndhwc.3} parent=1 // loop_exit
      _
    %4951 = vsyncpa [#allocation5], 1
    %s4952 = scalar_lea.sflag [#allocation5], 1
    %4953 = vsyncpa %s4952, 1

// kernel: voxres_forward_ndhwc.2
$region0: #{voxres_forward_ndhwc.2}
  #allocation0 [shape = 'u32[]', space=smem, size = 0x4, offset = 0x4, fixed_abs, tag = 'smem constant byte address 0x4 - core index']
  #allocation1 [shape = 'u32[144,128]{1,0:T(1,128)}', space=vmem, size = 0x12000, scoped, tag = 'internal scratch']
  #allocation2 [shape = 'bf16[10,10,64]{2,1,0:T(8,128)(2,1)}', space=vmem, size = 0xa000, scoped, tag = 'scratch operand']
  #allocation3 [shape = 'f32[64,64]{1,0:T(8,128)}', space=vmem, size = 0x8000, scoped, tag = 'scratch operand']
  %s0 = inlined_call_operand.vmem [shape: f32[2,8,8,8,64], index: 0, kind: input, shape index: {}, may-alias: {0,1,2}]
  %s1 = inlined_call_operand.vmem [shape: f32[2,8,8,8,64], index: 1, kind: input, shape index: {}, may-alias: {0,1,2}]
  %s2 = inlined_call_operand.vmem [shape: f32[2,8,8,8,64], index: 2, kind: input, shape index: {}, may-alias: {0,1,2}]
  %s3 = inlined_call_operand.vmem [shape: f32[1,64], index: 3, kind: input, shape index: {}]
  %s4 = inlined_call_operand.vmem [shape: f32[1,64], index: 4, kind: input, shape index: {}]
  %s5 = inlined_call_operand.vmem [shape: bf16[9,192,64], index: 5, kind: input, shape index: {}]
  %s6 = inlined_call_operand.vmem [shape: f32[1,64], index: 6, kind: input, shape index: {}]
  %s7 = inlined_call_operand.vmem [shape: f32[2,8,8,8,64], index: 7, kind: output, shape index: {0}]
  %s8 = inlined_call_operand.vmem [shape: f32[2,8,1,64], index: 8, kind: output, shape index: {1}]
  %s9 = inlined_call_operand.vmem [shape: f32[2,8,1,64], index: 9, kind: output, shape index: {2}]
  %10 = xla_tuple %s7, %s8, %s9
  %s11 = sld [smem:[#allocation0]]
  $region77: #{voxres_forward_ndhwc.2} parent=0
    _
  %s13 = ssub.s32 1, %s11
  %s14 = scalar_select 0, %s13, %s11
  loop: start=0, step=1, limit=18
  $region2: #{voxres_forward_ndhwc.2} parent=0 // loop_pre_header
    _
  $region3: #{voxres_forward_ndhwc.2} parent=0 // loop_header
    %s16 = sphi 0, %s20
    %p17 = scmp.ge.s32.totalorder %s16, 18
    %s23 = sphi 0, %s35
    %s24 = sphi 0, %s31
    %s25 = sphi 0, %s23
    %s26 = sphi 0, %s24
    %s27 = sphi 0, %s25
    %s28 = sphi 0, %s26
    %s46 = sphi 0, %s48
    %s49 = sphi 0, %s46
    %s50 = sphi 0, %s49
    %s66 = sphi 0, %s50
    %s74 = sphi 0, %s76
    %s77 = sphi 0, %s74
    %s78 = sphi 0, %s77
    %s94 = sphi 0, %s78
    %s108 = sphi 0, %s110
    %s111 = sphi 0, %s108
    %s112 = sphi 0, %s111
    %s128 = sphi 0, %s112
    %s132 = sphi 0, %s132
    %s134 = sphi 0, %s132
    %s135 = sphi 0, %s134
    %s149 = sphi 0, %s135
    %s153 = sphi 0, %s153
    %s155 = sphi 0, %s153
    %s156 = sphi 0, %s155
    %s170 = sphi 0, %s156
    %s174 = sphi 0, %s174
    %s176 = sphi 0, %s174
    %s177 = sphi 0, %s176
    %s191 = sphi 0, %s177
    %s195 = sphi 0, %s195
    %s197 = sphi 0, %s195
    %s198 = sphi 0, %s197
    %s212 = sphi 0, %s198
    %s220 = sphi 0, %s222
    %s223 = sphi 0, %s220
    %s224 = sphi 0, %s223
    %s240 = sphi 0, %s224
    %s248 = sphi 0, %s250
    %s251 = sphi 0, %s248
    %s252 = sphi 0, %s251
    %s268 = sphi 0, %s252
    %s276 = sphi 0, %s278
    %s279 = sphi 0, %s276
    %s280 = sphi 0, %s279
    %s296 = sphi 0, %s280
  $region4: #{voxres_forward_ndhwc.2} parent=0 // loop_header_branch
    %19 = sbr.rel (%p17) target = $region8
  $region5: #{voxres_forward_ndhwc.2} parent=0 // loop_body
    %s21 = ssub.s32 %s16, 1
    %s22 = ssub.s32 %s16, 2
    %s29 = sadd.s32 1, %s24
    %p30 = scmp.ge.s32.totalorder %s29, 8
    %s31 = scalar_select %p30, 0, %s29
    %s32 = sadd.s32 1, %s23
    %s33 = scalar_select %p30, %s32, %s23
    %p34 = scmp.ge.s32.totalorder %s33, 2
    %s35 = scalar_select %p34, 0, %s33
    %s36 = ssub.s32 %s24, 1
    %p37 = scmp.gt.s32.totalorder %s36, 0
    %s38 = scalar_select %p37, %s36, 0
    %s39 = ssub.s32 %s31, 1
    %p40 = scmp.gt.s32.totalorder %s39, 0
    %s41 = scalar_select %p40, %s39, 0
    %s42 = ssub.s32 %s23, %s35
    %s43 = ssub.s32 %s38, %s41
    %s44 = sor.u32 %s42, %s43
    %p45 = scmp.eq.s32.totalorder %s44, 0
    %s47 = sadd.s32 %s46, 1
    %s48 = scalar_select %p45, %s46, %s47
    %p51 = pneg %p45
    %p52 = scmp.eq.s32.totalorder %s16, 15
    %p53 = por %p51, %p52
    %p54 = scmp.ne.s32.totalorder %s46, %s49
    %p55 = scmp.eq.s32.totalorder %s16, 0
    %p56 = por %p54, %p55
    %p57 = scmp.ne.s32.totalorder %s46, %s49
    %p58 = scmp.eq.s32.totalorder %s21, 15
    %p59 = por %p57, %p58
    %p60 = scmp.ne.s32.totalorder %s49, %s50
    %p61 = scmp.eq.s32.totalorder %s21, 0
    %p62 = por %p60, %p61
    %p63 = scmp.ne.s32.totalorder %s49, %s50
    %p64 = scmp.eq.s32.totalorder %s22, 15
    %p65 = por %p63, %p64
    %p67 = scmp.ne.s32.totalorder %s50, %s66
    %p68 = scmp.eq.s32.totalorder %s22, 0
    %p69 = por %p67, %p68
    %s70 = ssub.s32 %s23, %s35
    %s71 = ssub.s32 %s24, %s31
    %s72 = sor.u32 %s70, %s71
    %p73 = scmp.eq.s32.totalorder %s72, 0
    %s75 = sadd.s32 %s74, 1
    %s76 = scalar_select %p73, %s74, %s75
    %p79 = pneg %p73
    %p80 = scmp.eq.s32.totalorder %s16, 15
    %p81 = por %p79, %p80
    %p82 = scmp.ne.s32.totalorder %s74, %s77
    %p83 = scmp.eq.s32.totalorder %s16, 0
    %p84 = por %p82, %p83
    %p85 = scmp.ne.s32.totalorder %s74, %s77
    %p86 = scmp.eq.s32.totalorder %s21, 15
    %p87 = por %p85, %p86
    %p88 = scmp.ne.s32.totalorder %s77, %s78
    %p89 = scmp.eq.s32.totalorder %s21, 0
    %p90 = por %p88, %p89
    %p91 = scmp.ne.s32.totalorder %s77, %s78
    %p92 = scmp.eq.s32.totalorder %s22, 15
    %p93 = por %p91, %p92
    %p95 = scmp.ne.s32.totalorder %s78, %s94
    %p96 = scmp.eq.s32.totalorder %s22, 0
    %p97 = por %p95, %p96
    %s98 = sadd.s32 %s24, 1
    %p99 = scmp.lt.s32.totalorder %s98, 7
    %s100 = scalar_select %p99, %s98, 7
    %s101 = sadd.s32 %s31, 1
    %p102 = scmp.lt.s32.totalorder %s101, 7
    %s103 = scalar_select %p102, %s101, 7
    %s104 = ssub.s32 %s23, %s35
    %s105 = ssub.s32 %s100, %s103
    %s106 = sor.u32 %s104, %s105
    %p107 = scmp.eq.s32.totalorder %s106, 0
    %s109 = sadd.s32 %s108, 1
    %s110 = scalar_select %p107, %s108, %s109
    %p113 = pneg %p107
    %p114 = scmp.eq.s32.totalorder %s16, 15
    %p115 = por %p113, %p114
    %p116 = scmp.ne.s32.totalorder %s108, %s111
    %p117 = scmp.eq.s32.totalorder %s16, 0
    %p118 = por %p116, %p117
    %p119 = scmp.ne.s32.totalorder %s108, %s111
    %p120 = scmp.eq.s32.totalorder %s21, 15
    %p121 = por %p119, %p120
    %p122 = scmp.ne.s32.totalorder %s111, %s112
    %p123 = scmp.eq.s32.totalorder %s21, 0
    %p124 = por %p122, %p123
    %p125 = scmp.ne.s32.totalorder %s111, %s112
    %p126 = scmp.eq.s32.totalorder %s22, 15
    %p127 = por %p125, %p126
    %p129 = scmp.ne.s32.totalorder %s112, %s128
    %p130 = scmp.eq.s32.totalorder %s22, 0
    %p131 = por %p129, %p130
    %s133 = sadd.s32 %s132, 1
    %p136 = scmp.eq.s32.totalorder %s16, 15
    %p137 = scmp.ne.s32.totalorder %s132, %s134
    %p138 = scmp.eq.s32.totalorder %s16, 0
    %p139 = por %p137, %p138
    %p140 = scmp.ne.s32.totalorder %s132, %s134
    %p141 = scmp.eq.s32.totalorder %s21, 15
    %p142 = por %p140, %p141
    %p143 = scmp.ne.s32.totalorder %s134, %s135
    %p144 = scmp.eq.s32.totalorder %s21, 0
    %p145 = por %p143, %p144
    %p146 = scmp.ne.s32.totalorder %s134, %s135
    %p147 = scmp.eq.s32.totalorder %s22, 15
    %p148 = por %p146, %p147
    %p150 = scmp.ne.s32.totalorder %s135, %s149
    %p151 = scmp.eq.s32.totalorder %s22, 0
    %p152 = por %p150, %p151
    %s154 = sadd.s32 %s153, 1
    %p157 = scmp.eq.s32.totalorder %s16, 15
    %p158 = scmp.ne.s32.totalorder %s153, %s155
    %p159 = scmp.eq.s32.totalorder %s16, 0
    %p160 = por %p158, %p159
    %p161 = scmp.ne.s32.totalorder %s153, %s155
    %p162 = scmp.eq.s32.totalorder %s21, 15
    %p163 = por %p161, %p162
    %p164 = scmp.ne.s32.totalorder %s155, %s156
    %p165 = scmp.eq.s32.totalorder %s21, 0
    %p166 = por %p164, %p165
    %p167 = scmp.ne.s32.totalorder %s155, %s156
    %p168 = scmp.eq.s32.totalorder %s22, 15
    %p169 = por %p167, %p168
    %p171 = scmp.ne.s32.totalorder %s156, %s170
    %p172 = scmp.eq.s32.totalorder %s22, 0
    %p173 = por %p171, %p172
    %s175 = sadd.s32 %s174, 1
    %p178 = scmp.eq.s32.totalorder %s16, 15
    %p179 = scmp.ne.s32.totalorder %s174, %s176
    %p180 = scmp.eq.s32.totalorder %s16, 0
    %p181 = por %p179, %p180
    %p182 = scmp.ne.s32.totalorder %s174, %s176
    %p183 = scmp.eq.s32.totalorder %s21, 15
    %p184 = por %p182, %p183
    %p185 = scmp.ne.s32.totalorder %s176, %s177
    %p186 = scmp.eq.s32.totalorder %s21, 0
    %p187 = por %p185, %p186
    %p188 = scmp.ne.s32.totalorder %s176, %s177
    %p189 = scmp.eq.s32.totalorder %s22, 15
    %p190 = por %p188, %p189
    %p192 = scmp.ne.s32.totalorder %s177, %s191
    %p193 = scmp.eq.s32.totalorder %s22, 0
    %p194 = por %p192, %p193
    %s196 = sadd.s32 %s195, 1
    %p199 = scmp.eq.s32.totalorder %s16, 15
    %p200 = scmp.ne.s32.totalorder %s195, %s197
    %p201 = scmp.eq.s32.totalorder %s16, 0
    %p202 = por %p200, %p201
    %p203 = scmp.ne.s32.totalorder %s195, %s197
    %p204 = scmp.eq.s32.totalorder %s21, 15
    %p205 = por %p203, %p204
    %p206 = scmp.ne.s32.totalorder %s197, %s198
    %p207 = scmp.eq.s32.totalorder %s21, 0
    %p208 = por %p206, %p207
    %p209 = scmp.ne.s32.totalorder %s197, %s198
    %p210 = scmp.eq.s32.totalorder %s22, 15
    %p211 = por %p209, %p210
    %p213 = scmp.ne.s32.totalorder %s198, %s212
    %p214 = scmp.eq.s32.totalorder %s22, 0
    %p215 = por %p213, %p214
    %s216 = ssub.s32 %s23, %s35
    %s217 = ssub.s32 %s24, %s31
    %s218 = sor.u32 %s216, %s217
    %p219 = scmp.eq.s32.totalorder %s218, 0
    %s221 = sadd.s32 %s220, 1
    %s222 = scalar_select %p219, %s220, %s221
    %p225 = pneg %p219
    %p226 = scmp.eq.s32.totalorder %s16, 15
    %p227 = por %p225, %p226
    %p228 = scmp.ne.s32.totalorder %s220, %s223
    %p229 = scmp.eq.s32.totalorder %s16, 0
    %p230 = por %p228, %p229
    %p231 = scmp.ne.s32.totalorder %s220, %s223
    %p232 = scmp.eq.s32.totalorder %s21, 15
    %p233 = por %p231, %p232
    %p234 = scmp.ne.s32.totalorder %s223, %s224
    %p235 = scmp.eq.s32.totalorder %s21, 0
    %p236 = por %p234, %p235
    %p237 = scmp.ne.s32.totalorder %s223, %s224
    %p238 = scmp.eq.s32.totalorder %s22, 15
    %p239 = por %p237, %p238
    %p241 = scmp.ne.s32.totalorder %s224, %s240
    %p242 = scmp.eq.s32.totalorder %s22, 0
    %p243 = por %p241, %p242
    %s244 = ssub.s32 %s23, %s35
    %s245 = ssub.s32 %s24, %s31
    %s246 = sor.u32 %s244, %s245
    %p247 = scmp.eq.s32.totalorder %s246, 0
    %s249 = sadd.s32 %s248, 1
    %s250 = scalar_select %p247, %s248, %s249
    %p253 = pneg %p247
    %p254 = scmp.eq.s32.totalorder %s16, 15
    %p255 = por %p253, %p254
    %p256 = scmp.ne.s32.totalorder %s248, %s251
    %p257 = scmp.eq.s32.totalorder %s16, 0
    %p258 = por %p256, %p257
    %p259 = scmp.ne.s32.totalorder %s248, %s251
    %p260 = scmp.eq.s32.totalorder %s21, 15
    %p261 = por %p259, %p260
    %p262 = scmp.ne.s32.totalorder %s251, %s252
    %p263 = scmp.eq.s32.totalorder %s21, 0
    %p264 = por %p262, %p263
    %p265 = scmp.ne.s32.totalorder %s251, %s252
    %p266 = scmp.eq.s32.totalorder %s22, 15
    %p267 = por %p265, %p266
    %p269 = scmp.ne.s32.totalorder %s252, %s268
    %p270 = scmp.eq.s32.totalorder %s22, 0
    %p271 = por %p269, %p270
    %s272 = ssub.s32 %s23, %s35
    %s273 = ssub.s32 %s24, %s31
    %s274 = sor.u32 %s272, %s273
    %p275 = scmp.eq.s32.totalorder %s274, 0
    %s277 = sadd.s32 %s276, 1
    %s278 = scalar_select %p275, %s276, %s277
    %p281 = pneg %p275
    %p282 = scmp.eq.s32.totalorder %s16, 15
    %p283 = por %p281, %p282
    %p284 = scmp.ne.s32.totalorder %s276, %s279
    %p285 = scmp.eq.s32.totalorder %s16, 0
    %p286 = por %p284, %p285
    %p287 = scmp.ne.s32.totalorder %s276, %s279
    %p288 = scmp.eq.s32.totalorder %s21, 15
    %p289 = por %p287, %p288
    %p290 = scmp.ne.s32.totalorder %s279, %s280
    %p291 = scmp.eq.s32.totalorder %s21, 0
    %p292 = por %p290, %p291
    %p293 = scmp.ne.s32.totalorder %s279, %s280
    %p294 = scmp.eq.s32.totalorder %s22, 15
    %p295 = por %p293, %p294
    %p297 = scmp.ne.s32.totalorder %s280, %s296
    %p298 = scmp.eq.s32.totalorder %s22, 0
    %p299 = por %p297, %p298
    %p300 = scmp.le.s32.totalorder 1, %s16
    %p301 = scmp.lt.s32.totalorder %s16, 17
    %p302 = pnand %p300, %p301
    %p303 = pneg %p302
    // Predicated region
    $region9: #{voxres_forward_ndhwc.2} parent=5 // pred_check
      _
    $region10: #{voxres_forward_ndhwc.2} parent=5 // pred_check_branch
      %305 = sbr.rel (%p302) target = $region12
    $region11: #{voxres_forward_ndhwc.2} parent=5 // pred_region
      %s306 = ssub.s32 %s16, 1
      // Predicated region
      $region13: #{voxres_forward_ndhwc.2} parent=11 // pred_check
        %p307 = pneg %p145
      $region14: #{voxres_forward_ndhwc.2} parent=11 // pred_check_branch
        %309 = sbr.rel (%p307) target = $region16
      $region15: #{voxres_forward_ndhwc.2} parent=11 // pred_region
        _
      $region16: #{voxres_forward_ndhwc.2} parent=11 // pred_fallthru
        _
      // Predicated region
      $region17: #{voxres_forward_ndhwc.2} parent=11 // pred_check
        %p310 = pneg %p166
      $region18: #{voxres_forward_ndhwc.2} parent=11 // pred_check_branch
        %312 = sbr.rel (%p310) target = $region20
      $region19: #{voxres_forward_ndhwc.2} parent=11 // pred_region
        _
      $region20: #{voxres_forward_ndhwc.2} parent=11 // pred_fallthru
        _
      // Predicated region
      $region21: #{voxres_forward_ndhwc.2} parent=11 // pred_check
        %p313 = pneg %p187
      $region22: #{voxres_forward_ndhwc.2} parent=11 // pred_check_branch
        %315 = sbr.rel (%p313) target = $region24
      $region23: #{voxres_forward_ndhwc.2} parent=11 // pred_region
        _
      $region24: #{voxres_forward_ndhwc.2} parent=11 // pred_fallthru
        _
      // Predicated region
      $region25: #{voxres_forward_ndhwc.2} parent=11 // pred_check
        %p316 = pneg %p208
      $region26: #{voxres_forward_ndhwc.2} parent=11 // pred_check_branch
        %318 = sbr.rel (%p316) target = $region28
      $region27: #{voxres_forward_ndhwc.2} parent=11 // pred_region
        _
      $region28: #{voxres_forward_ndhwc.2} parent=11 // pred_fallthru
        _
    $region12: #{voxres_forward_ndhwc.2} parent=5 // pred_fallthru
      _
    %p319 = scmp.lt.s32.totalorder %s16, 16
    // Predicated region
    $region29: #{voxres_forward_ndhwc.2} parent=5 // pred_check
      %p320 = pneg %p319
    $region30: #{voxres_forward_ndhwc.2} parent=5 // pred_check_branch
      %322 = sbr.rel (%p320) target = $region32
    $region31: #{voxres_forward_ndhwc.2} parent=5 // pred_region
      // Predicated region
      $region33: #{voxres_forward_ndhwc.2} parent=31 // pred_check
        %p323 = pneg %p56
      $region34: #{voxres_forward_ndhwc.2} parent=31 // pred_check_branch
        %325 = sbr.rel (%p323) target = $region36
      $region35: #{voxres_forward_ndhwc.2} parent=31 // pred_region
        %s326 = ssub.s32 %s24, 1
        %p327 = scmp.gt.s32.totalorder %s326, 0
        %s328 = scalar_select %p327, %s326, 0
        %p329 = scmp.lt.s32.totalorder %s23, 1
        %s330 = scalar_select %p329, %s23, 1
        %p331 = scmp.lt.s32.totalorder %s328, 7
        %s332 = scalar_select %p331, %s328, 7
        %s333 = smul.addr %s332, 8
        %s334 = smul.addr %s330, 64
        %s335 = sadd.s32 %s333, %s334
        %s336 = smul.addr %s335, 8
        %s337 = scalar_lea.vmem %s0, %s336
        %s338 = ssub.s32 %s24, 1
        %p339 = scmp.gt.s32.totalorder %s338, 0
        %s340 = scalar_select %p339, %s338, 0
      $region36: #{voxres_forward_ndhwc.2} parent=31 // pred_fallthru
        _
      // Predicated region
      $region37: #{voxres_forward_ndhwc.2} parent=31 // pred_check
        %p341 = pneg %p84
      $region38: #{voxres_forward_ndhwc.2} parent=31 // pred_check_branch
        %343 = sbr.rel (%p341) target = $region40
      $region39: #{voxres_forward_ndhwc.2} parent=31 // pred_region
        %p344 = scmp.lt.s32.totalorder %s23, 1
        %s345 = scalar_select %p344, %s23, 1
        %p346 = scmp.lt.s32.totalorder %s24, 7
        %s347 = scalar_select %p346, %s24, 7
        %s348 = smul.addr %s347, 8
        %s349 = smul.addr %s345, 64
        %s350 = sadd.s32 %s348, %s349
        %s351 = smul.addr %s350, 8
        %s352 = scalar_lea.vmem %s1, %s351
      $region40: #{voxres_forward_ndhwc.2} parent=31 // pred_fallthru
        _
      // Predicated region
      $region41: #{voxres_forward_ndhwc.2} parent=31 // pred_check
        %p353 = pneg %p118
      $region42: #{voxres_forward_ndhwc.2} parent=31 // pred_check_branch
        %355 = sbr.rel (%p353) target = $region44
      $region43: #{voxres_forward_ndhwc.2} parent=31 // pred_region
        %s356 = sadd.s32 %s24, 1
        %p357 = scmp.lt.s32.totalorder %s356, 7
        %s358 = scalar_select %p357, %s356, 7
        %p359 = scmp.lt.s32.totalorder %s23, 1
        %s360 = scalar_select %p359, %s23, 1
        %p361 = scmp.lt.s32.totalorder %s358, 7
        %s362 = scalar_select %p361, %s358, 7
        %s363 = smul.addr %s362, 8
        %s364 = smul.addr %s360, 64
        %s365 = sadd.s32 %s363, %s364
        %s366 = smul.addr %s365, 8
        %s367 = scalar_lea.vmem %s2, %s366
        %s368 = sadd.s32 %s24, 1
        %p369 = scmp.lt.s32.totalorder %s368, 7
        %s370 = scalar_select %p369, %s368, 7
      $region44: #{voxres_forward_ndhwc.2} parent=31 // pred_fallthru
        _
    $region32: #{voxres_forward_ndhwc.2} parent=5 // pred_fallthru
      _
    %p371 = scmp.le.s32.totalorder 1, %s16
    %p372 = scmp.lt.s32.totalorder %s16, 17
    %p373 = pnand %p371, %p372
    %p374 = pneg %p373
    // Predicated region
    $region45: #{voxres_forward_ndhwc.2} parent=5 // pred_check
      _
    $region46: #{voxres_forward_ndhwc.2} parent=5 // pred_check_branch
      %376 = sbr.rel (%p373) target = $region48
    $region47: #{voxres_forward_ndhwc.2} parent=5 // pred_region
      %s377 = ssub.s32 %s16, 1
      %s378 = ssub.s32 %s26, 1
      %p379 = scmp.gt.s32.totalorder %s378, 0
      %s380 = scalar_select %p379, %s378, 0
      %p381 = scmp.lt.s32.totalorder %s25, 1
      %s382 = scalar_select %p381, %s25, 1
      %p383 = scmp.lt.s32.totalorder %s380, 7
      %s384 = scalar_select %p383, %s380, 7
      %s385 = smul.addr %s384, 8
      %s386 = smul.addr %s382, 64
      %s387 = sadd.s32 %s385, %s386
      %s388 = smul.addr %s387, 8
      %s389 = scalar_lea.vmem %s0, %s388
      %p390 = pneg %p62
      %p391 = pneg %p59
      %p392 = scmp.lt.s32.totalorder %s25, 1
      %s393 = scalar_select %p392, %s25, 1
      %p394 = scmp.lt.s32.totalorder %s26, 7
      %s395 = scalar_select %p394, %s26, 7
      %s396 = smul.addr %s395, 8
      %s397 = smul.addr %s393, 64
      %s398 = sadd.s32 %s396, %s397
      %s399 = smul.addr %s398, 8
      %s400 = scalar_lea.vmem %s1, %s399
      %p401 = pneg %p90
      %p402 = pneg %p87
      %s403 = sadd.s32 %s26, 1
      %p404 = scmp.lt.s32.totalorder %s403, 7
      %s405 = scalar_select %p404, %s403, 7
      %p406 = scmp.lt.s32.totalorder %s25, 1
      %s407 = scalar_select %p406, %s25, 1
      %p408 = scmp.lt.s32.totalorder %s405, 7
      %s409 = scalar_select %p408, %s405, 7
      %s410 = smul.addr %s409, 8
      %s411 = smul.addr %s407, 64
      %s412 = sadd.s32 %s410, %s411
      %s413 = smul.addr %s412, 8
      %s414 = scalar_lea.vmem %s2, %s413
      %p415 = pneg %p124
      %p416 = pneg %p121
      %p417 = pneg %p145
      %p418 = pneg %p142
      %p419 = pneg %p166
      %p420 = pneg %p163
      %p421 = pneg %p187
      %p422 = pneg %p184
      %p423 = pneg %p208
      %p424 = pneg %p205
      %p425 = pneg %p236
      %p426 = pneg %p233
      %p427 = scmp.lt.s32.totalorder %s25, 1
      %s428 = scalar_select %p427, %s25, 1
      %p429 = scmp.lt.s32.totalorder %s26, 7
      %s430 = scalar_select %p429, %s26, 7
      %s431 = smul.addr %s430, 8
      %s432 = smul.addr %s428, 64
      %s433 = sadd.s32 %s431, %s432
      %s434 = smul.addr %s433, 8
      %s435 = scalar_lea.vmem %s7, %s434
      %p436 = pneg %p264
      %p437 = pneg %p261
      %p438 = scmp.lt.s32.totalorder %s25, 1
      %s439 = scalar_select %p438, %s25, 1
      %p440 = scmp.lt.s32.totalorder %s26, 7
      %s441 = scalar_select %p440, %s26, 7
      %s442 = smul.addr %s439, 8
      %s443 = sadd.s32 %s441, %s442
      %s444 = scalar_lea.vmem %s8, %s443
      %p445 = pneg %p292
      %p446 = pneg %p289
      %p447 = scmp.lt.s32.totalorder %s25, 1
      %s448 = scalar_select %p447, %s25, 1
      %p449 = scmp.lt.s32.totalorder %s26, 7
      %s450 = scalar_select %p449, %s26, 7
      %s451 = smul.addr %s448, 8
      %s452 = sadd.s32 %s450, %s451
      %s453 = scalar_lea.vmem %s9, %s452
      %s454 = ssub.s32 %s26, 1
      %p455 = scmp.gt.s32.totalorder %s454, 0
      %s456 = scalar_select %p455, %s454, 0
      %p457 = scmp.lt.s32.totalorder %s25, 1
      %s458 = scalar_select %p457, %s25, 1
      %p459 = scmp.lt.s32.totalorder %s456, 7
      %s460 = scalar_select %p459, %s456, 7
      %s461 = smul.addr %s460, 8
      %s462 = smul.addr %s458, 64
      %s463 = sadd.s32 %s461, %s462
      %s464 = smul.addr %s463, 8
      %s465 = scalar_lea.vmem %s0, %s464
      %s466 = ssub.s32 %s26, 1
      %p467 = scmp.gt.s32.totalorder %s466, 0
      %s468 = scalar_select %p467, %s466, 0
      %p469 = scmp.lt.s32.totalorder %s25, 1
      %s470 = scalar_select %p469, %s25, 1
      %p471 = scmp.lt.s32.totalorder %s26, 7
      %s472 = scalar_select %p471, %s26, 7
      %s473 = smul.addr %s472, 8
      %s474 = smul.addr %s470, 64
      %s475 = sadd.s32 %s473, %s474
      %s476 = smul.addr %s475, 8
      %s477 = scalar_lea.vmem %s1, %s476
      %s478 = sadd.s32 %s26, 1
      %p479 = scmp.lt.s32.totalorder %s478, 7
      %s480 = scalar_select %p479, %s478, 7
      %p481 = scmp.lt.s32.totalorder %s25, 1
      %s482 = scalar_select %p481, %s25, 1
      %p483 = scmp.lt.s32.totalorder %s480, 7
      %s484 = scalar_select %p483, %s480, 7
      %s485 = smul.addr %s484, 8
      %s486 = smul.addr %s482, 64
      %s487 = sadd.s32 %s485, %s486
      %s488 = smul.addr %s487, 8
      %s489 = scalar_lea.vmem %s2, %s488
      %s490 = sadd.s32 %s26, 1
      %p491 = scmp.lt.s32.totalorder %s490, 7
      %s492 = scalar_select %p491, %s490, 7
      %p493 = scmp.lt.s32.totalorder %s25, 1
      %s494 = scalar_select %p493, %s25, 1
      %p495 = scmp.lt.s32.totalorder %s26, 7
      %s496 = scalar_select %p495, %s26, 7
      %s497 = smul.addr %s496, 8
      %s498 = smul.addr %s494, 64
      %s499 = sadd.s32 %s497, %s498
      %s500 = smul.addr %s499, 8
      %s501 = scalar_lea.vmem %s7, %s500
      %p502 = scmp.lt.s32.totalorder %s25, 1
      %s503 = scalar_select %p502, %s25, 1
      %p504 = scmp.lt.s32.totalorder %s26, 7
      %s505 = scalar_select %p504, %s26, 7
      %s506 = smul.addr %s503, 8
      %s507 = sadd.s32 %s505, %s506
      %s508 = scalar_lea.vmem %s8, %s507
      %p509 = scmp.lt.s32.totalorder %s25, 1
      %s510 = scalar_select %p509, %s25, 1
      %p511 = scmp.lt.s32.totalorder %s26, 7
      %s512 = scalar_select %p511, %s26, 7
      %s513 = smul.addr %s510, 8
      %s514 = sadd.s32 %s512, %s513
      %s515 = scalar_lea.vmem %s9, %s514
      %vm517 = vcmask 519168
      %518 = vst.msk [vmem:[#allocation2] sm:$0xf] %vm517, 0
      %vm519 = vcmask 516096
      %520 = vst.msk [vmem:[#allocation2 + $0x4] sm:$0x1] %vm519, 0
      %521 = vst.msk [vmem:[#allocation2 + $0x8] sm:$0xf] %vm517, 0
      %522 = vst.msk [vmem:[#allocation2 + $0xc] sm:$0x1] %vm519, 0
      %523 = vst.msk [vmem:[#allocation2 + $0x10] sm:$0xf] %vm517, 0
      %524 = vst.msk [vmem:[#allocation2 + $0x14] sm:$0x1] %vm519, 0
      %525 = vst.msk [vmem:[#allocation2 + $0x18] sm:$0xf] %vm517, 0
      %526 = vst.msk [vmem:[#allocation2 + $0x1c] sm:$0x1] %vm519, 0
      %527 = vst.msk [vmem:[#allocation2 + $0x20] sm:$0xf] %vm517, 0
      %528 = vst.msk [vmem:[#allocation2 + $0x24] sm:$0x1] %vm519, 0
      %529 = vst.msk [vmem:[#allocation2 + $0x28] sm:$0xf] %vm517, 0
      %530 = vst.msk [vmem:[#allocation2 + $0x2c] sm:$0x1] %vm519, 0
      %531 = vst.msk [vmem:[#allocation2 + $0x30] sm:$0xf] %vm517, 0
      %532 = vst.msk [vmem:[#allocation2 + $0x34] sm:$0x1] %vm519, 0
      %533 = vst.msk [vmem:[#allocation2 + $0x38] sm:$0xf] %vm517, 0
      %534 = vst.msk [vmem:[#allocation2 + $0x3c] sm:$0x1] %vm519, 0
      %535 = vst.msk [vmem:[#allocation2 + $0x40] sm:$0xf] %vm517, 0
      %536 = vst.msk [vmem:[#allocation2 + $0x44] sm:$0x1] %vm519, 0
      %537 = vst.msk [vmem:[#allocation2 + $0x48] sm:$0xf] %vm517, 0
      %538 = vst.msk [vmem:[#allocation2 + $0x4c] sm:$0x1] %vm519, 0
      %v539 = vld [vmem:[%s3] sm:$0x1]
      %v540 = vld [vmem:[%s4] sm:$0x1]
      %v541 = vld [vmem:[%s465] sm:$0xff]
      %v542 = vld [vmem:[%s465 + $0x8] sm:$0xff]
      %v543 = vld [vmem:[%s465 + $0x10] sm:$0xff]
      %v544 = vld [vmem:[%s465 + $0x18] sm:$0xff]
      %v545 = vld [vmem:[%s465 + $0x20] sm:$0xff]
      %v546 = vld [vmem:[%s465 + $0x28] sm:$0xff]
      %v547 = vld [vmem:[%s465 + $0x30] sm:$0xff]
      %v548 = vld [vmem:[%s465 + $0x38] sm:$0xff]
      %v550 = vlaneseq
      %v551 = vshrl.u32 %v550, 7
      %v552 = vsub.s32 0, %v551
      %v553 = vrot.slane %v539, %v552
      %v555 = vmul.f32 %v541, %v553
      %v556 = vmul.f32 %v542, %v553
      %v557 = vmul.f32 %v543, %v553
      %v558 = vmul.f32 %v544, %v553
      %v559 = vmul.f32 %v545, %v553
      %v560 = vmul.f32 %v546, %v553
      %v561 = vmul.f32 %v547, %v553
      %v562 = vmul.f32 %v548, %v553
      %v564 = vlaneseq
      %v565 = vshrl.u32 %v564, 7
      %v566 = vsub.s32 0, %v565
      %v567 = vrot.slane %v540, %v566
      %v569 = vadd.f32 %v555, %v567
      %v570 = vadd.f32 %v556, %v567
      %v571 = vadd.f32 %v557, %v567
      %v572 = vadd.f32 %v558, %v567
      %v573 = vadd.f32 %v559, %v567
      %v574 = vadd.f32 %v560, %v567
      %v575 = vadd.f32 %v561, %v567
      %v576 = vadd.f32 %v562, %v567
      %vm577 = vcmp.ge.f32.partialorder %v569, 0.0
      %vm578 = vcmp.ge.f32.partialorder %v570, 0.0
      %vm579 = vcmp.ge.f32.partialorder %v571, 0.0
      %vm580 = vcmp.ge.f32.partialorder %v572, 0.0
      %vm581 = vcmp.ge.f32.partialorder %v573, 0.0
      %vm582 = vcmp.ge.f32.partialorder %v574, 0.0
      %vm583 = vcmp.ge.f32.partialorder %v575, 0.0
      %vm584 = vcmp.ge.f32.partialorder %v576, 0.0
      %v585 = vmul.f32 %v569, 1e-05
      %v586 = vmul.f32 %v570, 1e-05
      %v587 = vmul.f32 %v571, 1e-05
      %v588 = vmul.f32 %v572, 1e-05
      %v589 = vmul.f32 %v573, 1e-05
      %v590 = vmul.f32 %v574, 1e-05
      %v591 = vmul.f32 %v575, 1e-05
      %v592 = vmul.f32 %v576, 1e-05
      %v593 = vsel %vm577, %v569, %v585
      %v594 = vsel %vm578, %v570, %v586
      %v595 = vsel %vm579, %v571, %v587
      %v596 = vsel %vm580, %v572, %v588
      %v597 = vsel %vm581, %v573, %v589
      %v598 = vsel %vm582, %v574, %v590
      %v599 = vsel %vm583, %v575, %v591
      %v600 = vsel %vm584, %v576, %v592
      %p601 = scmp.gt.s32.totalorder %s26, 0
      %s602 = scalar_select %p601, 1, 0
      %v603 = vstv %s602
      %vm604 = vcmp.eq.s32.totalorder %v603, 1
      %v605 = vsel %vm604, %v593, 0.0
      %v606 = vsel %vm604, %v594, 0.0
      %v607 = vsel %vm604, %v595, 0.0
      %v608 = vsel %vm604, %v596, 0.0
      %v609 = vsel %vm604, %v597, 0.0
      %v610 = vsel %vm604, %v598, 0.0
      %v611 = vsel %vm604, %v599, 0.0
      %v612 = vsel %vm604, %v600, 0.0
      %v613 = vpack.c.bf16 %v605, %v605
      %v614 = vpack.c.bf16 %v606, %v606
      %v615 = vpack.c.bf16 %v607, %v607
      %v616 = vpack.c.bf16 %v608, %v608
      %v617 = vpack.c.bf16 %v609, %v609
      %v618 = vpack.c.bf16 %v610, %v610
      %v619 = vpack.c.bf16 %v611, %v611
      %v620 = vpack.c.bf16 %v612, %v612
      %v629 = vunpack.c.l.b16 %v613
      %v630 = vunpack.c.l.b16 %v614
      %v631 = vunpack.c.l.b16 %v615
      %v632 = vunpack.c.l.b16 %v616
      %v633 = vunpack.c.l.b16 %v617
      %v634 = vunpack.c.l.b16 %v618
      %v635 = vunpack.c.l.b16 %v619
      %v636 = vunpack.c.l.b16 %v620
      %v637 = vpack.c.b16 %v629, %v629
      %v638 = vpack.c.b16 %v630, %v630
      %v639 = vpack.c.b16 %v631, %v631
      %v640 = vpack.c.b16 %v632, %v632
      %v641 = vpack.c.b16 %v633, %v633
      %v642 = vpack.c.b16 %v634, %v634
      %v643 = vpack.c.b16 %v635, %v635
      %v644 = vpack.c.b16 %v636, %v636
      %v646 = vshrl.u32 %v637, 16
      %v648 = vrot.slane %v646, 7
      %v649 = vshll.u32 %v637, 16
      %v651 = vor.u32 %v648, %v649
      %v652 = vrot.slane %v648, 4
      %v654 = vshrl.u32 %v638, 16
      %v656 = vrot.slane %v654, 7
      %v657 = vshll.u32 %v638, 16
      %v659 = vor.u32 %v656, %v657
      %v660 = vrot.slane %v656, 4
      %v662 = vshrl.u32 %v639, 16
      %v664 = vrot.slane %v662, 7
      %v665 = vshll.u32 %v639, 16
      %v667 = vor.u32 %v664, %v665
      %v668 = vrot.slane %v664, 4
      %v670 = vshrl.u32 %v640, 16
      %v672 = vrot.slane %v670, 7
      %v673 = vshll.u32 %v640, 16
      %v675 = vor.u32 %v672, %v673
      %v676 = vrot.slane %v672, 4
      %v678 = vshrl.u32 %v641, 16
      %v680 = vrot.slane %v678, 7
      %v681 = vshll.u32 %v641, 16
      %v683 = vor.u32 %v680, %v681
      %v684 = vrot.slane %v680, 4
      %v686 = vshrl.u32 %v642, 16
      %v688 = vrot.slane %v686, 7
      %v689 = vshll.u32 %v642, 16
      %v691 = vor.u32 %v688, %v689
      %v692 = vrot.slane %v688, 4
      %v694 = vshrl.u32 %v643, 16
      %v696 = vrot.slane %v694, 7
      %v697 = vshll.u32 %v643, 16
      %v699 = vor.u32 %v696, %v697
      %v700 = vrot.slane %v696, 4
      %v702 = vshrl.u32 %v644, 16
      %v704 = vrot.slane %v702, 7
      %v705 = vshll.u32 %v644, 16
      %v707 = vor.u32 %v704, %v705
      %v708 = vrot.slane %v704, 4
      %s725 = scalar_lea.vmem [#allocation2], 8
      %vm726 = vcmask 519168
      %vm727 = vsmask.f32 7938
      %vm728 = vmand %vm726, %vm727
      %v729 = vld [vmem:[%s725] sm:$0xf]
      %v730 = vsel %vm728, %v651, %v729
      %731 = vst [vmem:[%s725] sm:$0xf] %v730
      %vm732 = vcmask 516096
      %vm733 = vsmask.f32 256
      %vm734 = vmand %vm732, %vm733
      %v735 = vld [vmem:[%s725 + $0x4] sm:$0x1]
      %v736 = vsel %vm734, %v652, %v735
      %737 = vst [vmem:[%s725 + $0x4] sm:$0x1] %v736
      %v738 = vld [vmem:[%s725 + $0x8] sm:$0xf]
      %v739 = vsel %vm728, %v659, %v738
      %740 = vst [vmem:[%s725 + $0x8] sm:$0xf] %v739
      %v741 = vld [vmem:[%s725 + $0xc] sm:$0x1]
      %v742 = vsel %vm734, %v660, %v741
      %743 = vst [vmem:[%s725 + $0xc] sm:$0x1] %v742
      %v744 = vld [vmem:[%s725 + $0x10] sm:$0xf]
      %v745 = vsel %vm728, %v667, %v744
      %746 = vst [vmem:[%s725 + $0x10] sm:$0xf] %v745
      %v747 = vld [vmem:[%s725 + $0x14] sm:$0x1]
      %v748 = vsel %vm734, %v668, %v747
      %749 = vst [vmem:[%s725 + $0x14] sm:$0x1] %v748
      %v750 = vld [vmem:[%s725 + $0x18] sm:$0xf]
      %v751 = vsel %vm728, %v675, %v750
      %752 = vst [vmem:[%s725 + $0x18] sm:$0xf] %v751
      %v753 = vld [vmem:[%s725 + $0x1c] sm:$0x1]
      %v754 = vsel %vm734, %v676, %v753
      %755 = vst [vmem:[%s725 + $0x1c] sm:$0x1] %v754
      %v756 = vld [vmem:[%s725 + $0x20] sm:$0xf]
      %v757 = vsel %vm728, %v683, %v756
      %758 = vst [vmem:[%s725 + $0x20] sm:$0xf] %v757
      %v759 = vld [vmem:[%s725 + $0x24] sm:$0x1]
      %v760 = vsel %vm734, %v684, %v759
      %761 = vst [vmem:[%s725 + $0x24] sm:$0x1] %v760
      %v762 = vld [vmem:[%s725 + $0x28] sm:$0xf]
      %v763 = vsel %vm728, %v691, %v762
      %764 = vst [vmem:[%s725 + $0x28] sm:$0xf] %v763
      %v765 = vld [vmem:[%s725 + $0x2c] sm:$0x1]
      %v766 = vsel %vm734, %v692, %v765
      %767 = vst [vmem:[%s725 + $0x2c] sm:$0x1] %v766
      %v768 = vld [vmem:[%s725 + $0x30] sm:$0xf]
      %v769 = vsel %vm728, %v699, %v768
      %770 = vst [vmem:[%s725 + $0x30] sm:$0xf] %v769
      %v771 = vld [vmem:[%s725 + $0x34] sm:$0x1]
      %v772 = vsel %vm734, %v700, %v771
      %773 = vst [vmem:[%s725 + $0x34] sm:$0x1] %v772
      %v774 = vld [vmem:[%s725 + $0x38] sm:$0xf]
      %v775 = vsel %vm728, %v707, %v774
      %776 = vst [vmem:[%s725 + $0x38] sm:$0xf] %v775
      %v777 = vld [vmem:[%s725 + $0x3c] sm:$0x1]
      %v778 = vsel %vm734, %v708, %v777
      %779 = vst [vmem:[%s725 + $0x3c] sm:$0x1] %v778
      %v780 = vld [vmem:[#allocation2] sm:$0xf]
      %v781 = vld [vmem:[#allocation2 + $0x8] sm:$0xf]
      %v782 = vld [vmem:[#allocation2 + $0x10] sm:$0xf]
      %v783 = vld [vmem:[#allocation2 + $0x18] sm:$0xf]
      %v784 = vld [vmem:[#allocation2 + $0x20] sm:$0xf]
      %v785 = vld [vmem:[#allocation2 + $0x28] sm:$0xf]
      %v786 = vld [vmem:[#allocation2 + $0x30] sm:$0xf]
      %v787 = vld [vmem:[#allocation2 + $0x38] sm:$0xf]
      %v788 = vld [vmem:[#allocation2 + $0x4] sm:$0x1]
      %v789 = vld [vmem:[#allocation2 + $0xc] sm:$0x1]
      %v790 = vld [vmem:[#allocation2 + $0x14] sm:$0x1]
      %v791 = vld [vmem:[#allocation2 + $0x1c] sm:$0x1]
      %v792 = vld [vmem:[#allocation2 + $0x24] sm:$0x1]
      %v793 = vld [vmem:[#allocation2 + $0x2c] sm:$0x1]
      %v794 = vld [vmem:[#allocation2 + $0x34] sm:$0x1]
      %v795 = vld [vmem:[#allocation2 + $0x3c] sm:$0x1]
      %v796 = vld [vmem:[#allocation2] sm:$0xe]
      %v797 = vld [vmem:[#allocation2 + $0x8] sm:$0xe]
      %v798 = vld [vmem:[#allocation2 + $0x10] sm:$0xe]
      %v799 = vld [vmem:[#allocation2 + $0x18] sm:$0xe]
      %v800 = vld [vmem:[#allocation2 + $0x20] sm:$0xe]
      %v801 = vld [vmem:[#allocation2 + $0x28] sm:$0xe]
      %v802 = vld [vmem:[#allocation2 + $0x30] sm:$0xe]
      %v803 = vld [vmem:[#allocation2 + $0x38] sm:$0xe]
      %v820 = vunpack.c.l.b16 %v780
      %v821 = vunpack.c.l.b16 %v788
      %v822 = vunpack.c.l.b16 %v781
      %v823 = vunpack.c.l.b16 %v789
      %v824 = vunpack.c.l.b16 %v782
      %v825 = vunpack.c.l.b16 %v790
      %v826 = vunpack.c.l.b16 %v783
      %v827 = vunpack.c.l.b16 %v791
      %v828 = vunpack.c.l.b16 %v784
      %v829 = vunpack.c.l.b16 %v792
      %v830 = vunpack.c.l.b16 %v785
      %v831 = vunpack.c.l.b16 %v793
      %v832 = vunpack.c.l.b16 %v786
      %v833 = vunpack.c.l.b16 %v794
      %v834 = vunpack.c.l.b16 %v787
      %v835 = vunpack.c.l.b16 %v795
      %v836 = vpack.c.b16 %v821, %v820
      %v837 = vpack.c.b16 %v823, %v822
      %v838 = vpack.c.b16 %v825, %v824
      %v839 = vpack.c.b16 %v827, %v826
      %v840 = vpack.c.b16 %v829, %v828
      %v841 = vpack.c.b16 %v831, %v830
      %v842 = vpack.c.b16 %v833, %v832
      %v843 = vpack.c.b16 %v835, %v834
      %v845 = vshrl.u32 %v836, 16
      %v847 = vshll.u32 %v836, 16
      %v849 = vrot.slane %v847, 1
      %v850 = vor.u32 %v845, %v849
      %v852 = vshrl.u32 %v837, 16
      %v854 = vshll.u32 %v837, 16
      %v856 = vrot.slane %v854, 1
      %v857 = vor.u32 %v852, %v856
      %v859 = vshrl.u32 %v838, 16
      %v861 = vshll.u32 %v838, 16
      %v863 = vrot.slane %v861, 1
      %v864 = vor.u32 %v859, %v863
      %v866 = vshrl.u32 %v839, 16
      %v868 = vshll.u32 %v839, 16
      %v870 = vrot.slane %v868, 1
      %v871 = vor.u32 %v866, %v870
      %v873 = vshrl.u32 %v840, 16
      %v875 = vshll.u32 %v840, 16
      %v877 = vrot.slane %v875, 1
      %v878 = vor.u32 %v873, %v877
      %v880 = vshrl.u32 %v841, 16
      %v882 = vshll.u32 %v841, 16
      %v884 = vrot.slane %v882, 1
      %v885 = vor.u32 %v880, %v884
      %v887 = vshrl.u32 %v842, 16
      %v889 = vshll.u32 %v842, 16
      %v891 = vrot.slane %v889, 1
      %v892 = vor.u32 %v887, %v891
      %v894 = vshrl.u32 %v843, 16
      %v896 = vshll.u32 %v843, 16
      %v898 = vrot.slane %v896, 1
      %v899 = vor.u32 %v894, %v898
      %900 = vrot.lane.b32.xlu0 %v850, 64
      %v901 = vpop.permute.xlu0 %900
      %902 = vrot.lane.b32.xlu0 %v857, 64
      %v903 = vpop.permute.xlu0 %902
      %904 = vrot.lane.b32.xlu0 %v864, 64
      %v905 = vpop.permute.xlu0 %904
      %906 = vrot.lane.b32.xlu0 %v871, 64
      %v907 = vpop.permute.xlu0 %906
      %908 = vrot.lane.b32.xlu0 %v878, 64
      %v909 = vpop.permute.xlu0 %908
      %910 = vrot.lane.b32.xlu0 %v885, 64
      %v911 = vpop.permute.xlu0 %910
      %912 = vrot.lane.b32.xlu0 %v892, 64
      %v913 = vpop.permute.xlu0 %912
      %914 = vrot.lane.b32.xlu0 %v899, 64
      %v915 = vpop.permute.xlu0 %914
      %v924 = vunpack.c.l.b16 %v796
      %v925 = vunpack.c.l.b16 %v797
      %v926 = vunpack.c.l.b16 %v798
      %v927 = vunpack.c.l.b16 %v799
      %v928 = vunpack.c.l.b16 %v800
      %v929 = vunpack.c.l.b16 %v801
      %v930 = vunpack.c.l.b16 %v802
      %v931 = vunpack.c.l.b16 %v803
      %v932 = vpack.c.b16 %v821, %v924
      %v933 = vpack.c.b16 %v823, %v925
      %v934 = vpack.c.b16 %v825, %v926
      %v935 = vpack.c.b16 %v827, %v927
      %v936 = vpack.c.b16 %v829, %v928
      %v937 = vpack.c.b16 %v831, %v929
      %v938 = vpack.c.b16 %v833, %v930
      %v939 = vpack.c.b16 %v835, %v931
      %v940 = vrot.slane %v932, 1
      %v941 = vrot.slane %v933, 1
      %v942 = vrot.slane %v934, 1
      %v943 = vrot.slane %v935, 1
      %v944 = vrot.slane %v936, 1
      %v945 = vrot.slane %v937, 1
      %v946 = vrot.slane %v938, 1
      %v947 = vrot.slane %v939, 1
      %vm948 = vcmask 523264
      %v951 = vsel %vm948, %v780, %v901
      %v954 = vsel %vm948, %v781, %v903
      %v957 = vsel %vm948, %v782, %v905
      %v960 = vsel %vm948, %v783, %v907
      %v963 = vsel %vm948, %v784, %v909
      %v966 = vsel %vm948, %v785, %v911
      %v969 = vsel %vm948, %v786, %v913
      %v972 = vsel %vm948, %v787, %v915
      %v981 = vunpack.c.l.b16 %v951
      %v982 = vunpack.c.l.b16 %v940
      %v983 = vunpack.c.l.b16 %v954
      %v984 = vunpack.c.l.b16 %v941
      %v985 = vunpack.c.l.b16 %v957
      %v986 = vunpack.c.l.b16 %v942
      %v987 = vunpack.c.l.b16 %v960
      %v988 = vunpack.c.l.b16 %v943
      %v989 = vunpack.c.l.b16 %v963
      %v990 = vunpack.c.l.b16 %v944
      %v991 = vunpack.c.l.b16 %v966
      %v992 = vunpack.c.l.b16 %v945
      %v993 = vunpack.c.l.b16 %v969
      %v994 = vunpack.c.l.b16 %v946
      %v995 = vunpack.c.l.b16 %v972
      %v996 = vunpack.c.l.b16 %v947
      %v997 = vld [vmem:[%s5] sm:$0xf]
      %v998 = vld [vmem:[%s5 + $0x4] sm:$0xf]
      %v999 = vld [vmem:[%s5 + $0x8] sm:$0xf]
      %v1000 = vld [vmem:[%s5 + $0xc] sm:$0xf]
      %v1001 = vld [vmem:[%s5 + $0x10] sm:$0xf]
      %v1002 = vld [vmem:[%s5 + $0x14] sm:$0xf]
      %v1003 = vld [vmem:[%s5 + $0x18] sm:$0xf]
      %v1004 = vld [vmem:[%s5 + $0x1c] sm:$0xf]
      %v1005 = vld [vmem:[%s5 + $0x20] sm:$0xf]
      %v1006 = vld [vmem:[%s5 + $0x24] sm:$0xf]
      %v1007 = vld [vmem:[%s5 + $0x28] sm:$0xf]
      %v1008 = vld [vmem:[%s5 + $0x2c] sm:$0xf]
      %v1009 = vld [vmem:[%s5 + $0x30] sm:$0xf]
      %v1010 = vld [vmem:[%s5 + $0x34] sm:$0xf]
      %v1011 = vld [vmem:[%s5 + $0x38] sm:$0xf]
      %v1012 = vld [vmem:[%s5 + $0x3c] sm:$0xf]
      %v1013 = vld [vmem:[%s5 + $0x40] sm:$0xf]
      %v1014 = vld [vmem:[%s5 + $0x44] sm:$0xf]
      %v1015 = vld [vmem:[%s5 + $0x48] sm:$0xf]
      %v1016 = vld [vmem:[%s5 + $0x4c] sm:$0xf]
      %v1017 = vld [vmem:[%s5 + $0x50] sm:$0xf]
      %v1018 = vld [vmem:[%s5 + $0x54] sm:$0xf]
      %v1019 = vld [vmem:[%s5 + $0x58] sm:$0xf]
      %v1020 = vld [vmem:[%s5 + $0x5c] sm:$0xf]
      %v1021 = vld [vmem:[%s725] sm:$0xf]
      %v1022 = vld [vmem:[%s725 + $0x8] sm:$0xf]
      %v1023 = vld [vmem:[%s725 + $0x10] sm:$0xf]
      %v1024 = vld [vmem:[%s725 + $0x18] sm:$0xf]
      %v1025 = vld [vmem:[%s725 + $0x20] sm:$0xf]
      %v1026 = vld [vmem:[%s725 + $0x28] sm:$0xf]
      %v1027 = vld [vmem:[%s725 + $0x30] sm:$0xf]
      %v1028 = vld [vmem:[%s725 + $0x38] sm:$0xf]
      %v1029 = vld [vmem:[%s725 + $0x4] sm:$0x1]
      %v1030 = vld [vmem:[%s725 + $0xc] sm:$0x1]
      %v1031 = vld [vmem:[%s725 + $0x14] sm:$0x1]
      %v1032 = vld [vmem:[%s725 + $0x1c] sm:$0x1]
      %v1033 = vld [vmem:[%s725 + $0x24] sm:$0x1]
      %v1034 = vld [vmem:[%s725 + $0x2c] sm:$0x1]
      %v1035 = vld [vmem:[%s725 + $0x34] sm:$0x1]
      %v1036 = vld [vmem:[%s725 + $0x3c] sm:$0x1]
      %v1037 = vld [vmem:[%s725] sm:$0xe]
      %v1038 = vld [vmem:[%s725 + $0x8] sm:$0xe]
      %v1039 = vld [vmem:[%s725 + $0x10] sm:$0xe]
      %v1040 = vld [vmem:[%s725 + $0x18] sm:$0xe]
      %v1041 = vld [vmem:[%s725 + $0x20] sm:$0xe]
      %v1042 = vld [vmem:[%s725 + $0x28] sm:$0xe]
      %v1043 = vld [vmem:[%s725 + $0x30] sm:$0xe]
      %v1044 = vld [vmem:[%s725 + $0x38] sm:$0xe]
      %v1061 = vunpack.c.l.b16 %v1021
      %v1062 = vunpack.c.l.b16 %v1029
      %v1063 = vunpack.c.l.b16 %v1022
      %v1064 = vunpack.c.l.b16 %v1030
      %v1065 = vunpack.c.l.b16 %v1023
      %v1066 = vunpack.c.l.b16 %v1031
      %v1067 = vunpack.c.l.b16 %v1024
      %v1068 = vunpack.c.l.b16 %v1032
      %v1069 = vunpack.c.l.b16 %v1025
      %v1070 = vunpack.c.l.b16 %v1033
      %v1071 = vunpack.c.l.b16 %v1026
      %v1072 = vunpack.c.l.b16 %v1034
      %v1073 = vunpack.c.l.b16 %v1027
      %v1074 = vunpack.c.l.b16 %v1035
      %v1075 = vunpack.c.l.b16 %v1028
      %v1076 = vunpack.c.l.b16 %v1036
      %v1077 = vpack.c.b16 %v1062, %v1061
      %v1078 = vpack.c.b16 %v1064, %v1063
      %v1079 = vpack.c.b16 %v1066, %v1065
      %v1080 = vpack.c.b16 %v1068, %v1067
      %v1081 = vpack.c.b16 %v1070, %v1069
      %v1082 = vpack.c.b16 %v1072, %v1071
      %v1083 = vpack.c.b16 %v1074, %v1073
      %v1084 = vpack.c.b16 %v1076, %v1075
      %v1086 = vshrl.u32 %v1077, 16
      %v1088 = vshll.u32 %v1077, 16
      %v1090 = vrot.slane %v1088, 1
      %v1091 = vor.u32 %v1086, %v1090
      %v1093 = vshrl.u32 %v1078, 16
      %v1095 = vshll.u32 %v1078, 16
      %v1097 = vrot.slane %v1095, 1
      %v1098 = vor.u32 %v1093, %v1097
      %v1100 = vshrl.u32 %v1079, 16
      %v1102 = vshll.u32 %v1079, 16
      %v1104 = vrot.slane %v1102, 1
      %v1105 = vor.u32 %v1100, %v1104
      %v1107 = vshrl.u32 %v1080, 16
      %v1109 = vshll.u32 %v1080, 16
      %v1111 = vrot.slane %v1109, 1
      %v1112 = vor.u32 %v1107, %v1111
      %v1114 = vshrl.u32 %v1081, 16
      %v1116 = vshll.u32 %v1081, 16
      %v1118 = vrot.slane %v1116, 1
      %v1119 = vor.u32 %v1114, %v1118
      %v1121 = vshrl.u32 %v1082, 16
      %v1123 = vshll.u32 %v1082, 16
      %v1125 = vrot.slane %v1123, 1
      %v1126 = vor.u32 %v1121, %v1125
      %v1128 = vshrl.u32 %v1083, 16
      %v1130 = vshll.u32 %v1083, 16
      %v1132 = vrot.slane %v1130, 1
      %v1133 = vor.u32 %v1128, %v1132
      %v1135 = vshrl.u32 %v1084, 16
      %v1137 = vshll.u32 %v1084, 16
      %v1139 = vrot.slane %v1137, 1
      %v1140 = vor.u32 %v1135, %v1139
      %1141 = vrot.lane.b32.xlu0 %v1091, 64
      %v1142 = vpop.permute.xlu0 %1141
      %1143 = vrot.lane.b32.xlu0 %v1098, 64
      %v1144 = vpop.permute.xlu0 %1143
      %1145 = vrot.lane.b32.xlu0 %v1105, 64
      %v1146 = vpop.permute.xlu0 %1145
      %1147 = vrot.lane.b32.xlu0 %v1112, 64
      %v1148 = vpop.permute.xlu0 %1147
      %1149 = vrot.lane.b32.xlu0 %v1119, 64
      %v1150 = vpop.permute.xlu0 %1149
      %1151 = vrot.lane.b32.xlu0 %v1126, 64
      %v1152 = vpop.permute.xlu0 %1151
      %1153 = vrot.lane.b32.xlu0 %v1133, 64
      %v1154 = vpop.permute.xlu0 %1153
      %1155 = vrot.lane.b32.xlu0 %v1140, 64
      %v1156 = vpop.permute.xlu0 %1155
      %v1165 = vunpack.c.l.b16 %v1037
      %v1166 = vunpack.c.l.b16 %v1038
      %v1167 = vunpack.c.l.b16 %v1039
      %v1168 = vunpack.c.l.b16 %v1040
      %v1169 = vunpack.c.l.b16 %v1041
      %v1170 = vunpack.c.l.b16 %v1042
      %v1171 = vunpack.c.l.b16 %v1043
      %v1172 = vunpack.c.l.b16 %v1044
      %v1173 = vpack.c.b16 %v1062, %v1165
      %v1174 = vpack.c.b16 %v1064, %v1166
      %v1175 = vpack.c.b16 %v1066, %v1167
      %v1176 = vpack.c.b16 %v1068, %v1168
      %v1177 = vpack.c.b16 %v1070, %v1169
      %v1178 = vpack.c.b16 %v1072, %v1170
      %v1179 = vpack.c.b16 %v1074, %v1171
      %v1180 = vpack.c.b16 %v1076, %v1172
      %v1181 = vrot.slane %v1173, 1
      %v1182 = vrot.slane %v1174, 1
      %v1183 = vrot.slane %v1175, 1
      %v1184 = vrot.slane %v1176, 1
      %v1185 = vrot.slane %v1177, 1
      %v1186 = vrot.slane %v1178, 1
      %v1187 = vrot.slane %v1179, 1
      %v1188 = vrot.slane %v1180, 1
      %v1191 = vsel %vm948, %v1021, %v1142
      %v1194 = vsel %vm948, %v1022, %v1144
      %v1197 = vsel %vm948, %v1023, %v1146
      %v1200 = vsel %vm948, %v1024, %v1148
      %v1203 = vsel %vm948, %v1025, %v1150
      %v1206 = vsel %vm948, %v1026, %v1152
      %v1209 = vsel %vm948, %v1027, %v1154
      %v1212 = vsel %vm948, %v1028, %v1156
      %v1221 = vunpack.c.l.b16 %v1191
      %v1222 = vunpack.c.l.b16 %v1181
      %v1223 = vunpack.c.l.b16 %v1194
      %v1224 = vunpack.c.l.b16 %v1182
      %v1225 = vunpack.c.l.b16 %v1197
      %v1226 = vunpack.c.l.b16 %v1183
      %v1227 = vunpack.c.l.b16 %v1200
      %v1228 = vunpack.c.l.b16 %v1184
      %v1229 = vunpack.c.l.b16 %v1203
      %v1230 = vunpack.c.l.b16 %v1185
      %v1231 = vunpack.c.l.b16 %v1206
      %v1232 = vunpack.c.l.b16 %v1186
      %v1233 = vunpack.c.l.b16 %v1209
      %v1234 = vunpack.c.l.b16 %v1187
      %v1235 = vunpack.c.l.b16 %v1212
      %v1236 = vunpack.c.l.b16 %v1188
      %s1237 = scalar_lea.vmem %s5, 96
      %v1238 = vld [vmem:[%s1237] sm:$0xf]
      %v1239 = vld [vmem:[%s1237 + $0x4] sm:$0xf]
      %v1240 = vld [vmem:[%s1237 + $0x8] sm:$0xf]
      %v1241 = vld [vmem:[%s1237 + $0xc] sm:$0xf]
      %v1242 = vld [vmem:[%s1237 + $0x10] sm:$0xf]
      %v1243 = vld [vmem:[%s1237 + $0x14] sm:$0xf]
      %v1244 = vld [vmem:[%s1237 + $0x18] sm:$0xf]
      %v1245 = vld [vmem:[%s1237 + $0x1c] sm:$0xf]
      %v1246 = vld [vmem:[%s1237 + $0x20] sm:$0xf]
      %v1247 = vld [vmem:[%s1237 + $0x24] sm:$0xf]
      %v1248 = vld [vmem:[%s1237 + $0x28] sm:$0xf]
      %v1249 = vld [vmem:[%s1237 + $0x2c] sm:$0xf]
      %v1250 = vld [vmem:[%s1237 + $0x30] sm:$0xf]
      %v1251 = vld [vmem:[%s1237 + $0x34] sm:$0xf]
      %v1252 = vld [vmem:[%s1237 + $0x38] sm:$0xf]
      %v1253 = vld [vmem:[%s1237 + $0x3c] sm:$0xf]
      %v1254 = vld [vmem:[%s1237 + $0x40] sm:$0xf]
      %v1255 = vld [vmem:[%s1237 + $0x44] sm:$0xf]
      %v1256 = vld [vmem:[%s1237 + $0x48] sm:$0xf]
      %v1257 = vld [vmem:[%s1237 + $0x4c] sm:$0xf]
      %v1258 = vld [vmem:[%s1237 + $0x50] sm:$0xf]
      %v1259 = vld [vmem:[%s1237 + $0x54] sm:$0xf]
      %v1260 = vld [vmem:[%s1237 + $0x58] sm:$0xf]
      %v1261 = vld [vmem:[%s1237 + $0x5c] sm:$0xf]
      %v1262 = vpack.c.b16 %v1223, %v1221
      %v1263 = vpack.c.b16 %v1224, %v1222
      %v1264 = vpack.c.b16 %v1227, %v1225
      %v1265 = vpack.c.b16 %v1228, %v1226
      %v1266 = vpack.c.b16 %v1231, %v1229
      %v1267 = vpack.c.b16 %v1232, %v1230
      %v1268 = vpack.c.b16 %v1235, %v1233
      %v1269 = vpack.c.b16 %v1236, %v1234
      %v1298 = vunpack.c.l.b16 %v1238
      %v1299 = vunpack.c.l.b16 %v1239
      %v1300 = vunpack.c.l.b16 %v1240
      %v1301 = vunpack.c.l.b16 %v1241
      %v1302 = vunpack.c.l.b16 %v1242
      %v1303 = vunpack.c.l.b16 %v1243
      %v1304 = vunpack.c.l.b16 %v1244
      %v1305 = vunpack.c.l.b16 %v1245
      %v1306 = vunpack.c.l.b16 %v1246
      %v1307 = vunpack.c.l.b16 %v1247
      %v1308 = vunpack.c.l.b16 %v1248
      %v1309 = vunpack.c.l.b16 %v1249
      %v1310 = vunpack.c.l.b16 %v1250
      %v1311 = vunpack.c.l.b16 %v1251
      %v1312 = vunpack.c.l.b16 %v1252
      %v1313 = vunpack.c.l.b16 %v1253
      %v1314 = vunpack.c.l.b16 %v1254
      %v1315 = vunpack.c.l.b16 %v1255
      %v1316 = vunpack.c.l.b16 %v1256
      %v1317 = vunpack.c.l.b16 %v1257
      %v1318 = vunpack.c.l.b16 %v1258
      %v1319 = vunpack.c.l.b16 %v1259
      %v1320 = vunpack.c.l.b16 %v1260
      %v1321 = vunpack.c.l.b16 %v1261
      %v1322 = vpack.c.b16 %v1299, %v1298
      %v1323 = vpack.c.b16 %v1301, %v1300
      %v1324 = vpack.c.b16 %v1303, %v1302
      %v1325 = vpack.c.b16 %v1305, %v1304
      %v1326 = vpack.c.b16 %v1307, %v1306
      %v1327 = vpack.c.b16 %v1309, %v1308
      %v1328 = vpack.c.b16 %v1311, %v1310
      %v1329 = vpack.c.b16 %v1313, %v1312
      %v1330 = vpack.c.b16 %v1315, %v1314
      %v1331 = vpack.c.b16 %v1317, %v1316
      %v1332 = vpack.c.b16 %v1319, %v1318
      %v1333 = vpack.c.b16 %v1321, %v1320
      %v1347 = vsel %vm948, %v1263, 0
      %v1350 = vsel %vm948, %v1265, 0
      %v1353 = vsel %vm948, %v1267, 0
      %v1356 = vsel %vm948, %v1269, 0
      %1358 = vmatprep.subr.bf16.mxu0 0
      %1359 = vmatpush1.bf16.msra.mxu0 %v1329
      %1360 = vmatprep.subr.bf16.mxu0 0
      %1361 = vmatpush1.bf16.msra.mxu0 %v1328
      %1362 = vmatprep.subr.bf16.mxu0 0
      %1363 = vmatpush1.bf16.msra.mxu0 %v1327
      %1364 = vmatprep.subr.bf16.mxu0 0
      %1365 = vmatpush1.bf16.msra.mxu0 %v1326
      %1366 = vmatprep.subr.bf16.mxu0 0
      %1367 = vmatpush1.bf16.msra.mxu0 %v1325
      %1368 = vmatprep.subr.bf16.mxu0 0
      %1369 = vmatpush1.bf16.msra.mxu0 %v1324
      %1370 = vmatprep.subr.bf16.mxu0 0
      %1371 = vmatpush1.bf16.msra.mxu0 %v1323
      %1372 = vmatprep.subr.bf16.mxu0 0
      %1373 = vmatpush1.bf16.msra.mxu0 %v1322
      %1374 = vmatprep.subr.bf16.mxu0 0
      %1375 = vmatpush2.bf16.msra.mxu0 0
      %1376 = vmatprep.subr.bf16.mxu0 0
      %1377 = vmatpush2.bf16.msra.mxu0 0
      %1378 = vmatprep.subr.bf16.mxu0 0
      %1379 = vmatpush2.bf16.msra.mxu0 0
      %1380 = vmatprep.subr.bf16.mxu0 0
      %1381 = vmatpush2.bf16.msra.mxu0 0
      %1382 = vmatprep.subr.bf16.mxu0 0
      %1383 = vmatpush2.bf16.msra.mxu0 %v1333
      %1384 = vmatprep.subr.bf16.mxu0 0
      %1385 = vmatpush2.bf16.msra.mxu0 %v1332
      %1386 = vmatprep.subr.bf16.mxu0 0
      %1387 = vmatpush2.bf16.msra.mxu0 %v1331
      %1388 = vmatprep.subr.bf16.mxu0 0
      %1389 = vmatpush2.bf16.msra.mxu0 %v1330
      %1390 = vmatprep.mubr.bf16.mxu0 %v1347
      %1391 = vmatmul.mubr.bf16.gmra.mxu0 %v1262
      %v1392 = vpop.f32.mrf.mxu0
      %v1393 = vadd.f32 0.0, %v1392
      %v1394 = vpop.f32.mrf.mxu0
      %v1395 = vpop.f32.mrf.mxu0
      %v1396 = vadd.f32 0.0, %v1395
      %v1397 = vpop.f32.mrf.mxu0
      %1398 = vmatprep.mubr.bf16.mxu0 %v1350
      %1399 = vmatmul.mubr.bf16.gmra.mxu0 %v1264
      %v1400 = vpop.f32.mrf.mxu0
      %v1401 = vadd.f32 0.0, %v1400
      %v1402 = vpop.f32.mrf.mxu0
      %v1403 = vpop.f32.mrf.mxu0
      %v1404 = vadd.f32 0.0, %v1403
      %v1405 = vpop.f32.mrf.mxu0
      %1406 = vmatprep.mubr.bf16.mxu0 %v1353
      %1407 = vmatmul.mubr.bf16.gmra.mxu0 %v1266
      %v1408 = vpop.f32.mrf.mxu0
      %v1409 = vadd.f32 0.0, %v1408
      %v1410 = vpop.f32.mrf.mxu0
      %v1411 = vpop.f32.mrf.mxu0
      %v1412 = vadd.f32 0.0, %v1411
      %v1413 = vpop.f32.mrf.mxu0
      %1414 = vmatprep.mubr.bf16.mxu0 %v1356
      %1415 = vmatmul.mubr.bf16.gmra.mxu0 %v1268
      %v1416 = vpop.f32.mrf.mxu0
      %v1417 = vadd.f32 0.0, %v1416
      %v1418 = vpop.f32.mrf.mxu0
      %v1419 = vpop.f32.mrf.mxu0
      %v1420 = vadd.f32 0.0, %v1419
      %v1421 = vpop.f32.mrf.mxu0
      %1422 = vdwg.mxu0
      %v1423 = vpack.c.b16 %v983, %v981
      %v1424 = vpack.c.b16 %v984, %v982
      %v1425 = vpack.c.b16 %v987, %v985
      %v1426 = vpack.c.b16 %v988, %v986
      %v1427 = vpack.c.b16 %v991, %v989
      %v1428 = vpack.c.b16 %v992, %v990
      %v1429 = vpack.c.b16 %v995, %v993
      %v1430 = vpack.c.b16 %v996, %v994
      %v1459 = vunpack.c.l.b16 %v997
      %v1460 = vunpack.c.l.b16 %v998
      %v1461 = vunpack.c.l.b16 %v999
      %v1462 = vunpack.c.l.b16 %v1000
      %v1463 = vunpack.c.l.b16 %v1001
      %v1464 = vunpack.c.l.b16 %v1002
      %v1465 = vunpack.c.l.b16 %v1003
      %v1466 = vunpack.c.l.b16 %v1004
      %v1467 = vunpack.c.l.b16 %v1005
      %v1468 = vunpack.c.l.b16 %v1006
      %v1469 = vunpack.c.l.b16 %v1007
      %v1470 = vunpack.c.l.b16 %v1008
      %v1471 = vunpack.c.l.b16 %v1009
      %v1472 = vunpack.c.l.b16 %v1010
      %v1473 = vunpack.c.l.b16 %v1011
      %v1474 = vunpack.c.l.b16 %v1012
      %v1475 = vunpack.c.l.b16 %v1013
      %v1476 = vunpack.c.l.b16 %v1014
      %v1477 = vunpack.c.l.b16 %v1015
      %v1478 = vunpack.c.l.b16 %v1016
      %v1479 = vunpack.c.l.b16 %v1017
      %v1480 = vunpack.c.l.b16 %v1018
      %v1481 = vunpack.c.l.b16 %v1019
      %v1482 = vunpack.c.l.b16 %v1020
      %v1483 = vpack.c.b16 %v1460, %v1459
      %v1484 = vpack.c.b16 %v1462, %v1461
      %v1485 = vpack.c.b16 %v1464, %v1463
      %v1486 = vpack.c.b16 %v1466, %v1465
      %v1487 = vpack.c.b16 %v1468, %v1467
      %v1488 = vpack.c.b16 %v1470, %v1469
      %v1489 = vpack.c.b16 %v1472, %v1471
      %v1490 = vpack.c.b16 %v1474, %v1473
      %v1491 = vpack.c.b16 %v1476, %v1475
      %v1492 = vpack.c.b16 %v1478, %v1477
      %v1493 = vpack.c.b16 %v1480, %v1479
      %v1494 = vpack.c.b16 %v1482, %v1481
      %v1508 = vsel %vm948, %v1424, 0
      %v1511 = vsel %vm948, %v1426, 0
      %v1514 = vsel %vm948, %v1428, 0
      %v1517 = vsel %vm948, %v1430, 0
      %1519 = vmatprep.subr.bf16.mxu0 0
      %1520 = vmatpush1.bf16.msra.mxu0 %v1490
      %1521 = vmatprep.subr.bf16.mxu0 0
      %1522 = vmatpush1.bf16.msra.mxu0 %v1489
      %1523 = vmatprep.subr.bf16.mxu0 0
      %1524 = vmatpush1.bf16.msra.mxu0 %v1488
      %1525 = vmatprep.subr.bf16.mxu0 0
      %1526 = vmatpush1.bf16.msra.mxu0 %v1487
      %1527 = vmatprep.subr.bf16.mxu0 0
      %1528 = vmatpush1.bf16.msra.mxu0 %v1486
      %1529 = vmatprep.subr.bf16.mxu0 0
      %1530 = vmatpush1.bf16.msra.mxu0 %v1485
      %1531 = vmatprep.subr.bf16.mxu0 0
      %1532 = vmatpush1.bf16.msra.mxu0 %v1484
      %1533 = vmatprep.subr.bf16.mxu0 0
      %1534 = vmatpush1.bf16.msra.mxu0 %v1483
      %1535 = vmatprep.subr.bf16.mxu0 0
      %1536 = vmatpush2.bf16.msra.mxu0 0
      %1537 = vmatprep.subr.bf16.mxu0 0
      %1538 = vmatpush2.bf16.msra.mxu0 0
      %1539 = vmatprep.subr.bf16.mxu0 0
      %1540 = vmatpush2.bf16.msra.mxu0 0
      %1541 = vmatprep.subr.bf16.mxu0 0
      %1542 = vmatpush2.bf16.msra.mxu0 0
      %1543 = vmatprep.subr.bf16.mxu0 0
      %1544 = vmatpush2.bf16.msra.mxu0 %v1494
      %1545 = vmatprep.subr.bf16.mxu0 0
      %1546 = vmatpush2.bf16.msra.mxu0 %v1493
      %1547 = vmatprep.subr.bf16.mxu0 0
      %1548 = vmatpush2.bf16.msra.mxu0 %v1492
      %1549 = vmatprep.subr.bf16.mxu0 0
      %1550 = vmatpush2.bf16.msra.mxu0 %v1491
      %1551 = vmatprep.mubr.bf16.mxu0 %v1508
      %1552 = vmatmul.mubr.bf16.gmra.mxu0 %v1423
      %v1553 = vpop.f32.mrf.mxu0
      %v1554 = vadd.f32 %v1393, %v1553
      %v1555 = vpop.f32.mrf.mxu0
      %v1556 = vpop.f32.mrf.mxu0
      %v1557 = vadd.f32 %v1396, %v1556
      %v1558 = vpop.f32.mrf.mxu0
      %1559 = vmatprep.mubr.bf16.mxu0 %v1511
      %1560 = vmatmul.mubr.bf16.gmra.mxu0 %v1425
      %v1561 = vpop.f32.mrf.mxu0
      %v1562 = vadd.f32 %v1401, %v1561
      %v1563 = vpop.f32.mrf.mxu0
      %v1564 = vpop.f32.mrf.mxu0
      %v1565 = vadd.f32 %v1404, %v1564
      %v1566 = vpop.f32.mrf.mxu0
      %1567 = vmatprep.mubr.bf16.mxu0 %v1514
      %1568 = vmatmul.mubr.bf16.gmra.mxu0 %v1427
      %v1569 = vpop.f32.mrf.mxu0
      %v1570 = vadd.f32 %v1409, %v1569
      %v1571 = vpop.f32.mrf.mxu0
      %v1572 = vpop.f32.mrf.mxu0
      %v1573 = vadd.f32 %v1412, %v1572
      %v1574 = vpop.f32.mrf.mxu0
      %1575 = vmatprep.mubr.bf16.mxu0 %v1517
      %1576 = vmatmul.mubr.bf16.gmra.mxu0 %v1429
      %v1577 = vpop.f32.mrf.mxu0
      %v1578 = vadd.f32 %v1417, %v1577
      %v1579 = vpop.f32.mrf.mxu0
      %v1580 = vpop.f32.mrf.mxu0
      %v1581 = vadd.f32 %v1420, %v1580
      %v1582 = vpop.f32.mrf.mxu0
      %1583 = vdwg.mxu0
      %s1584 = scalar_lea.vmem [#allocation2], 16
      %v1585 = vld [vmem:[%s1584] sm:$0xf]
      %v1586 = vld [vmem:[%s1584 + $0x8] sm:$0xf]
      %v1587 = vld [vmem:[%s1584 + $0x10] sm:$0xf]
      %v1588 = vld [vmem:[%s1584 + $0x18] sm:$0xf]
      %v1589 = vld [vmem:[%s1584 + $0x20] sm:$0xf]
      %v1590 = vld [vmem:[%s1584 + $0x28] sm:$0xf]
      %v1591 = vld [vmem:[%s1584 + $0x30] sm:$0xf]
      %v1592 = vld [vmem:[%s1584 + $0x38] sm:$0xf]
      %v1593 = vld [vmem:[%s1584 + $0x4] sm:$0x1]
      %v1594 = vld [vmem:[%s1584 + $0xc] sm:$0x1]
      %v1595 = vld [vmem:[%s1584 + $0x14] sm:$0x1]
      %v1596 = vld [vmem:[%s1584 + $0x1c] sm:$0x1]
      %v1597 = vld [vmem:[%s1584 + $0x24] sm:$0x1]
      %v1598 = vld [vmem:[%s1584 + $0x2c] sm:$0x1]
      %v1599 = vld [vmem:[%s1584 + $0x34] sm:$0x1]
      %v1600 = vld [vmem:[%s1584 + $0x3c] sm:$0x1]
      %v1601 = vld [vmem:[%s1584] sm:$0xe]
      %v1602 = vld [vmem:[%s1584 + $0x8] sm:$0xe]
      %v1603 = vld [vmem:[%s1584 + $0x10] sm:$0xe]
      %v1604 = vld [vmem:[%s1584 + $0x18] sm:$0xe]
      %v1605 = vld [vmem:[%s1584 + $0x20] sm:$0xe]
      %v1606 = vld [vmem:[%s1584 + $0x28] sm:$0xe]
      %v1607 = vld [vmem:[%s1584 + $0x30] sm:$0xe]
      %v1608 = vld [vmem:[%s1584 + $0x38] sm:$0xe]
      %v1625 = vunpack.c.l.b16 %v1585
      %v1626 = vunpack.c.l.b16 %v1593
      %v1627 = vunpack.c.l.b16 %v1586
      %v1628 = vunpack.c.l.b16 %v1594
      %v1629 = vunpack.c.l.b16 %v1587
      %v1630 = vunpack.c.l.b16 %v1595
      %v1631 = vunpack.c.l.b16 %v1588
      %v1632 = vunpack.c.l.b16 %v1596
      %v1633 = vunpack.c.l.b16 %v1589
      %v1634 = vunpack.c.l.b16 %v1597
      %v1635 = vunpack.c.l.b16 %v1590
      %v1636 = vunpack.c.l.b16 %v1598
      %v1637 = vunpack.c.l.b16 %v1591
      %v1638 = vunpack.c.l.b16 %v1599
      %v1639 = vunpack.c.l.b16 %v1592
      %v1640 = vunpack.c.l.b16 %v1600
      %v1641 = vpack.c.b16 %v1626, %v1625
      %v1642 = vpack.c.b16 %v1628, %v1627
      %v1643 = vpack.c.b16 %v1630, %v1629
      %v1644 = vpack.c.b16 %v1632, %v1631
      %v1645 = vpack.c.b16 %v1634, %v1633
      %v1646 = vpack.c.b16 %v1636, %v1635
      %v1647 = vpack.c.b16 %v1638, %v1637
      %v1648 = vpack.c.b16 %v1640, %v1639
      %v1650 = vshrl.u32 %v1641, 16
      %v1652 = vshll.u32 %v1641, 16
      %v1654 = vrot.slane %v1652, 1
      %v1655 = vor.u32 %v1650, %v1654
      %v1657 = vshrl.u32 %v1642, 16
      %v1659 = vshll.u32 %v1642, 16
      %v1661 = vrot.slane %v1659, 1
      %v1662 = vor.u32 %v1657, %v1661
      %v1664 = vshrl.u32 %v1643, 16
      %v1666 = vshll.u32 %v1643, 16
      %v1668 = vrot.slane %v1666, 1
      %v1669 = vor.u32 %v1664, %v1668
      %v1671 = vshrl.u32 %v1644, 16
      %v1673 = vshll.u32 %v1644, 16
      %v1675 = vrot.slane %v1673, 1
      %v1676 = vor.u32 %v1671, %v1675
      %v1678 = vshrl.u32 %v1645, 16
      %v1680 = vshll.u32 %v1645, 16
      %v1682 = vrot.slane %v1680, 1
      %v1683 = vor.u32 %v1678, %v1682
      %v1685 = vshrl.u32 %v1646, 16
      %v1687 = vshll.u32 %v1646, 16
      %v1689 = vrot.slane %v1687, 1
      %v1690 = vor.u32 %v1685, %v1689
      %v1692 = vshrl.u32 %v1647, 16
      %v1694 = vshll.u32 %v1647, 16
      %v1696 = vrot.slane %v1694, 1
      %v1697 = vor.u32 %v1692, %v1696
      %v1699 = vshrl.u32 %v1648, 16
      %v1701 = vshll.u32 %v1648, 16
      %v1703 = vrot.slane %v1701, 1
      %v1704 = vor.u32 %v1699, %v1703
      %1705 = vrot.lane.b32.xlu0 %v1655, 64
      %v1706 = vpop.permute.xlu0 %1705
      %1707 = vrot.lane.b32.xlu0 %v1662, 64
      %v1708 = vpop.permute.xlu0 %1707
      %1709 = vrot.lane.b32.xlu0 %v1669, 64
      %v1710 = vpop.permute.xlu0 %1709
      %1711 = vrot.lane.b32.xlu0 %v1676, 64
      %v1712 = vpop.permute.xlu0 %1711
      %1713 = vrot.lane.b32.xlu0 %v1683, 64
      %v1714 = vpop.permute.xlu0 %1713
      %1715 = vrot.lane.b32.xlu0 %v1690, 64
      %v1716 = vpop.permute.xlu0 %1715
      %1717 = vrot.lane.b32.xlu0 %v1697, 64
      %v1718 = vpop.permute.xlu0 %1717
      %1719 = vrot.lane.b32.xlu0 %v1704, 64
      %v1720 = vpop.permute.xlu0 %1719
      %v1729 = vunpack.c.l.b16 %v1601
      %v1730 = vunpack.c.l.b16 %v1602
      %v1731 = vunpack.c.l.b16 %v1603
      %v1732 = vunpack.c.l.b16 %v1604
      %v1733 = vunpack.c.l.b16 %v1605
      %v1734 = vunpack.c.l.b16 %v1606
      %v1735 = vunpack.c.l.b16 %v1607
      %v1736 = vunpack.c.l.b16 %v1608
      %v1737 = vpack.c.b16 %v1626, %v1729
      %v1738 = vpack.c.b16 %v1628, %v1730
      %v1739 = vpack.c.b16 %v1630, %v1731
      %v1740 = vpack.c.b16 %v1632, %v1732
      %v1741 = vpack.c.b16 %v1634, %v1733
      %v1742 = vpack.c.b16 %v1636, %v1734
      %v1743 = vpack.c.b16 %v1638, %v1735
      %v1744 = vpack.c.b16 %v1640, %v1736
      %v1745 = vrot.slane %v1737, 1
      %v1746 = vrot.slane %v1738, 1
      %v1747 = vrot.slane %v1739, 1
      %v1748 = vrot.slane %v1740, 1
      %v1749 = vrot.slane %v1741, 1
      %v1750 = vrot.slane %v1742, 1
      %v1751 = vrot.slane %v1743, 1
      %v1752 = vrot.slane %v1744, 1
      %v1755 = vsel %vm948, %v1585, %v1706
      %v1758 = vsel %vm948, %v1586, %v1708
      %v1761 = vsel %vm948, %v1587, %v1710
      %v1764 = vsel %vm948, %v1588, %v1712
      %v1767 = vsel %vm948, %v1589, %v1714
      %v1770 = vsel %vm948, %v1590, %v1716
      %v1773 = vsel %vm948, %v1591, %v1718
      %v1776 = vsel %vm948, %v1592, %v1720
      %v1785 = vunpack.c.l.b16 %v1755
      %v1786 = vunpack.c.l.b16 %v1745
      %v1787 = vunpack.c.l.b16 %v1758
      %v1788 = vunpack.c.l.b16 %v1746
      %v1789 = vunpack.c.l.b16 %v1761
      %v1790 = vunpack.c.l.b16 %v1747
      %v1791 = vunpack.c.l.b16 %v1764
      %v1792 = vunpack.c.l.b16 %v1748
      %v1793 = vunpack.c.l.b16 %v1767
      %v1794 = vunpack.c.l.b16 %v1749
      %v1795 = vunpack.c.l.b16 %v1770
      %v1796 = vunpack.c.l.b16 %v1750
      %v1797 = vunpack.c.l.b16 %v1773
      %v1798 = vunpack.c.l.b16 %v1751
      %v1799 = vunpack.c.l.b16 %v1776
      %v1800 = vunpack.c.l.b16 %v1752
      %s1801 = scalar_lea.vmem %s5, 192
      %v1802 = vld [vmem:[%s1801] sm:$0xf]
      %v1803 = vld [vmem:[%s1801 + $0x4] sm:$0xf]
      %v1804 = vld [vmem:[%s1801 + $0x8] sm:$0xf]
      %v1805 = vld [vmem:[%s1801 + $0xc] sm:$0xf]
      %v1806 = vld [vmem:[%s1801 + $0x10] sm:$0xf]
      %v1807 = vld [vmem:[%s1801 + $0x14] sm:$0xf]
      %v1808 = vld [vmem:[%s1801 + $0x18] sm:$0xf]
      %v1809 = vld [vmem:[%s1801 + $0x1c] sm:$0xf]
      %v1810 = vld [vmem:[%s1801 + $0x20] sm:$0xf]
      %v1811 = vld [vmem:[%s1801 + $0x24] sm:$0xf]
      %v1812 = vld [vmem:[%s1801 + $0x28] sm:$0xf]
      %v1813 = vld [vmem:[%s1801 + $0x2c] sm:$0xf]
      %v1814 = vld [vmem:[%s1801 + $0x30] sm:$0xf]
      %v1815 = vld [vmem:[%s1801 + $0x34] sm:$0xf]
      %v1816 = vld [vmem:[%s1801 + $0x38] sm:$0xf]
      %v1817 = vld [vmem:[%s1801 + $0x3c] sm:$0xf]
      %v1818 = vld [vmem:[%s1801 + $0x40] sm:$0xf]
      %v1819 = vld [vmem:[%s1801 + $0x44] sm:$0xf]
      %v1820 = vld [vmem:[%s1801 + $0x48] sm:$0xf]
      %v1821 = vld [vmem:[%s1801 + $0x4c] sm:$0xf]
      %v1822 = vld [vmem:[%s1801 + $0x50] sm:$0xf]
      %v1823 = vld [vmem:[%s1801 + $0x54] sm:$0xf]
      %v1824 = vld [vmem:[%s1801 + $0x58] sm:$0xf]
      %v1825 = vld [vmem:[%s1801 + $0x5c] sm:$0xf]
      %v1826 = vpack.c.b16 %v1787, %v1785
      %v1827 = vpack.c.b16 %v1788, %v1786
      %v1828 = vpack.c.b16 %v1791, %v1789
      %v1829 = vpack.c.b16 %v1792, %v1790
      %v1830 = vpack.c.b16 %v1795, %v1793
      %v1831 = vpack.c.b16 %v1796, %v1794
      %v1832 = vpack.c.b16 %v1799, %v1797
      %v1833 = vpack.c.b16 %v1800, %v1798
      %v1862 = vunpack.c.l.b16 %v1802
      %v1863 = vunpack.c.l.b16 %v1803
      %v1864 = vunpack.c.l.b16 %v1804
      %v1865 = vunpack.c.l.b16 %v1805
      %v1866 = vunpack.c.l.b16 %v1806
      %v1867 = vunpack.c.l.b16 %v1807
      %v1868 = vunpack.c.l.b16 %v1808
      %v1869 = vunpack.c.l.b16 %v1809
      %v1870 = vunpack.c.l.b16 %v1810
      %v1871 = vunpack.c.l.b16 %v1811
      %v1872 = vunpack.c.l.b16 %v1812
      %v1873 = vunpack.c.l.b16 %v1813
      %v1874 = vunpack.c.l.b16 %v1814
      %v1875 = vunpack.c.l.b16 %v1815
      %v1876 = vunpack.c.l.b16 %v1816
      %v1877 = vunpack.c.l.b16 %v1817
      %v1878 = vunpack.c.l.b16 %v1818
      %v1879 = vunpack.c.l.b16 %v1819
      %v1880 = vunpack.c.l.b16 %v1820
      %v1881 = vunpack.c.l.b16 %v1821
      %v1882 = vunpack.c.l.b16 %v1822
      %v1883 = vunpack.c.l.b16 %v1823
      %v1884 = vunpack.c.l.b16 %v1824
      %v1885 = vunpack.c.l.b16 %v1825
      %v1886 = vpack.c.b16 %v1863, %v1862
      %v1887 = vpack.c.b16 %v1865, %v1864
      %v1888 = vpack.c.b16 %v1867, %v1866
      %v1889 = vpack.c.b16 %v1869, %v1868
      %v1890 = vpack.c.b16 %v1871, %v1870
      %v1891 = vpack.c.b16 %v1873, %v1872
      %v1892 = vpack.c.b16 %v1875, %v1874
      %v1893 = vpack.c.b16 %v1877, %v1876
      %v1894 = vpack.c.b16 %v1879, %v1878
      %v1895 = vpack.c.b16 %v1881, %v1880
      %v1896 = vpack.c.b16 %v1883, %v1882
      %v1897 = vpack.c.b16 %v1885, %v1884
      %v1911 = vsel %vm948, %v1827, 0
      %v1914 = vsel %vm948, %v1829, 0
      %v1917 = vsel %vm948, %v1831, 0
      %v1920 = vsel %vm948, %v1833, 0
      %1922 = vmatprep.subr.bf16.mxu0 0
      %1923 = vmatpush1.bf16.msra.mxu0 %v1893
      %1924 = vmatprep.subr.bf16.mxu0 0
      %1925 = vmatpush1.bf16.msra.mxu0 %v1892
      %1926 = vmatprep.subr.bf16.mxu0 0
      %1927 = vmatpush1.bf16.msra.mxu0 %v1891
      %1928 = vmatprep.subr.bf16.mxu0 0
      %1929 = vmatpush1.bf16.msra.mxu0 %v1890
      %1930 = vmatprep.subr.bf16.mxu0 0
      %1931 = vmatpush1.bf16.msra.mxu0 %v1889
      %1932 = vmatprep.subr.bf16.mxu0 0
      %1933 = vmatpush1.bf16.msra.mxu0 %v1888
      %1934 = vmatprep.subr.bf16.mxu0 0
      %1935 = vmatpush1.bf16.msra.mxu0 %v1887
      %1936 = vmatprep.subr.bf16.mxu0 0
      %1937 = vmatpush1.bf16.msra.mxu0 %v1886
      %1938 = vmatprep.subr.bf16.mxu0 0
      %1939 = vmatpush2.bf16.msra.mxu0 0
      %1940 = vmatprep.subr.bf16.mxu0 0
      %1941 = vmatpush2.bf16.msra.mxu0 0
      %1942 = vmatprep.subr.bf16.mxu0 0
      %1943 = vmatpush2.bf16.msra.mxu0 0
      %1944 = vmatprep.subr.bf16.mxu0 0
      %1945 = vmatpush2.bf16.msra.mxu0 0
      %1946 = vmatprep.subr.bf16.mxu0 0
      %1947 = vmatpush2.bf16.msra.mxu0 %v1897
      %1948 = vmatprep.subr.bf16.mxu0 0
      %1949 = vmatpush2.bf16.msra.mxu0 %v1896
      %1950 = vmatprep.subr.bf16.mxu0 0
      %1951 = vmatpush2.bf16.msra.mxu0 %v1895
      %1952 = vmatprep.subr.bf16.mxu0 0
      %1953 = vmatpush2.bf16.msra.mxu0 %v1894
      %1954 = vmatprep.mubr.bf16.mxu0 %v1911
      %1955 = vmatmul.mubr.bf16.gmra.mxu0 %v1826
      %v1956 = vpop.f32.mrf.mxu0
      %v1957 = vadd.f32 0.0, %v1956
      %v1958 = vpop.f32.mrf.mxu0
      %v1959 = vpop.f32.mrf.mxu0
      %v1960 = vadd.f32 0.0, %v1959
      %v1961 = vpop.f32.mrf.mxu0
      %1962 = vmatprep.mubr.bf16.mxu0 %v1914
      %1963 = vmatmul.mubr.bf16.gmra.mxu0 %v1828
      %v1964 = vpop.f32.mrf.mxu0
      %v1965 = vadd.f32 0.0, %v1964
      %v1966 = vpop.f32.mrf.mxu0
      %v1967 = vpop.f32.mrf.mxu0
      %v1968 = vadd.f32 0.0, %v1967
      %v1969 = vpop.f32.mrf.mxu0
      %1970 = vmatprep.mubr.bf16.mxu0 %v1917
      %1971 = vmatmul.mubr.bf16.gmra.mxu0 %v1830
      %v1972 = vpop.f32.mrf.mxu0
      %v1973 = vadd.f32 0.0, %v1972
      %v1974 = vpop.f32.mrf.mxu0
      %v1975 = vpop.f32.mrf.mxu0
      %v1976 = vadd.f32 0.0, %v1975
      %v1977 = vpop.f32.mrf.mxu0
      %1978 = vmatprep.mubr.bf16.mxu0 %v1920
      %1979 = vmatmul.mubr.bf16.gmra.mxu0 %v1832
      %v1980 = vpop.f32.mrf.mxu0
      %v1981 = vadd.f32 0.0, %v1980
      %v1982 = vpop.f32.mrf.mxu0
      %v1983 = vpop.f32.mrf.mxu0
      %v1984 = vadd.f32 0.0, %v1983
      %v1985 = vpop.f32.mrf.mxu0
      %1986 = vdwg.mxu0
      %v1987 = vadd.f32 %v1554, %v1957
      %v1988 = vadd.f32 %v1557, %v1960
      %v1989 = vadd.f32 %v1562, %v1965
      %v1990 = vadd.f32 %v1565, %v1968
      %v1991 = vadd.f32 %v1570, %v1973
      %v1992 = vadd.f32 %v1573, %v1976
      %v1993 = vadd.f32 %v1578, %v1981
      %v1994 = vadd.f32 %v1581, %v1984
      %1995 = vst.msk [vmem:[#allocation3] sm:$0xff] %vm948, %v1987
      %1996 = vst.msk [vmem:[#allocation3 + $0x8] sm:$0xff] %vm948, %v1988
      %1997 = vst.msk [vmem:[#allocation3 + $0x10] sm:$0xff] %vm948, %v1989
      %1998 = vst.msk [vmem:[#allocation3 + $0x18] sm:$0xff] %vm948, %v1990
      %1999 = vst.msk [vmem:[#allocation3 + $0x20] sm:$0xff] %vm948, %v1991
      %2000 = vst.msk [vmem:[#allocation3 + $0x28] sm:$0xff] %vm948, %v1992
      %2001 = vst.msk [vmem:[#allocation3 + $0x30] sm:$0xff] %vm948, %v1993
      %2002 = vst.msk [vmem:[#allocation3 + $0x38] sm:$0xff] %vm948, %v1994
      %v2003 = vld [vmem:[%s477] sm:$0xff]
      %v2004 = vld [vmem:[%s477 + $0x8] sm:$0xff]
      %v2005 = vld [vmem:[%s477 + $0x10] sm:$0xff]
      %v2006 = vld [vmem:[%s477 + $0x18] sm:$0xff]
      %v2007 = vld [vmem:[%s477 + $0x20] sm:$0xff]
      %v2008 = vld [vmem:[%s477 + $0x28] sm:$0xff]
      %v2009 = vld [vmem:[%s477 + $0x30] sm:$0xff]
      %v2010 = vld [vmem:[%s477 + $0x38] sm:$0xff]
      %v2011 = vmul.f32 %v2003, %v553
      %v2012 = vmul.f32 %v2004, %v553
      %v2013 = vmul.f32 %v2005, %v553
      %v2014 = vmul.f32 %v2006, %v553
      %v2015 = vmul.f32 %v2007, %v553
      %v2016 = vmul.f32 %v2008, %v553
      %v2017 = vmul.f32 %v2009, %v553
      %v2018 = vmul.f32 %v2010, %v553
      %v2019 = vadd.f32 %v2011, %v567
      %v2020 = vadd.f32 %v2012, %v567
      %v2021 = vadd.f32 %v2013, %v567
      %v2022 = vadd.f32 %v2014, %v567
      %v2023 = vadd.f32 %v2015, %v567
      %v2024 = vadd.f32 %v2016, %v567
      %v2025 = vadd.f32 %v2017, %v567
      %v2026 = vadd.f32 %v2018, %v567
      %vm2027 = vcmp.ge.f32.partialorder %v2019, 0.0
      %vm2028 = vcmp.ge.f32.partialorder %v2020, 0.0
      %vm2029 = vcmp.ge.f32.partialorder %v2021, 0.0
      %vm2030 = vcmp.ge.f32.partialorder %v2022, 0.0
      %vm2031 = vcmp.ge.f32.partialorder %v2023, 0.0
      %vm2032 = vcmp.ge.f32.partialorder %v2024, 0.0
      %vm2033 = vcmp.ge.f32.partialorder %v2025, 0.0
      %vm2034 = vcmp.ge.f32.partialorder %v2026, 0.0
      %v2035 = vmul.f32 %v2019, 1e-05
      %v2036 = vmul.f32 %v2020, 1e-05
      %v2037 = vmul.f32 %v2021, 1e-05
      %v2038 = vmul.f32 %v2022, 1e-05
      %v2039 = vmul.f32 %v2023, 1e-05
      %v2040 = vmul.f32 %v2024, 1e-05
      %v2041 = vmul.f32 %v2025, 1e-05
      %v2042 = vmul.f32 %v2026, 1e-05
      %v2043 = vsel %vm2027, %v2019, %v2035
      %v2044 = vsel %vm2028, %v2020, %v2036
      %v2045 = vsel %vm2029, %v2021, %v2037
      %v2046 = vsel %vm2030, %v2022, %v2038
      %v2047 = vsel %vm2031, %v2023, %v2039
      %v2048 = vsel %vm2032, %v2024, %v2040
      %v2049 = vsel %vm2033, %v2025, %v2041
      %v2050 = vsel %vm2034, %v2026, %v2042
      %v2051 = vpack.c.bf16 %v2043, %v2043
      %v2052 = vpack.c.bf16 %v2044, %v2044
      %v2053 = vpack.c.bf16 %v2045, %v2045
      %v2054 = vpack.c.bf16 %v2046, %v2046
      %v2055 = vpack.c.bf16 %v2047, %v2047
      %v2056 = vpack.c.bf16 %v2048, %v2048
      %v2057 = vpack.c.bf16 %v2049, %v2049
      %v2058 = vpack.c.bf16 %v2050, %v2050
      %v2067 = vunpack.c.l.b16 %v2051
      %v2068 = vunpack.c.l.b16 %v2052
      %v2069 = vunpack.c.l.b16 %v2053
      %v2070 = vunpack.c.l.b16 %v2054
      %v2071 = vunpack.c.l.b16 %v2055
      %v2072 = vunpack.c.l.b16 %v2056
      %v2073 = vunpack.c.l.b16 %v2057
      %v2074 = vunpack.c.l.b16 %v2058
      %v2075 = vpack.c.b16 %v2067, %v2067
      %v2076 = vpack.c.b16 %v2068, %v2068
      %v2077 = vpack.c.b16 %v2069, %v2069
      %v2078 = vpack.c.b16 %v2070, %v2070
      %v2079 = vpack.c.b16 %v2071, %v2071
      %v2080 = vpack.c.b16 %v2072, %v2072
      %v2081 = vpack.c.b16 %v2073, %v2073
      %v2082 = vpack.c.b16 %v2074, %v2074
      %v2084 = vshrl.u32 %v2075, 16
      %v2086 = vrot.slane %v2084, 7
      %v2087 = vshll.u32 %v2075, 16
      %v2089 = vor.u32 %v2086, %v2087
      %v2090 = vrot.slane %v2086, 4
      %v2092 = vshrl.u32 %v2076, 16
      %v2094 = vrot.slane %v2092, 7
      %v2095 = vshll.u32 %v2076, 16
      %v2097 = vor.u32 %v2094, %v2095
      %v2098 = vrot.slane %v2094, 4
      %v2100 = vshrl.u32 %v2077, 16
      %v2102 = vrot.slane %v2100, 7
      %v2103 = vshll.u32 %v2077, 16
      %v2105 = vor.u32 %v2102, %v2103
      %v2106 = vrot.slane %v2102, 4
      %v2108 = vshrl.u32 %v2078, 16
      %v2110 = vrot.slane %v2108, 7
      %v2111 = vshll.u32 %v2078, 16
      %v2113 = vor.u32 %v2110, %v2111
      %v2114 = vrot.slane %v2110, 4
      %v2116 = vshrl.u32 %v2079, 16
      %v2118 = vrot.slane %v2116, 7
      %v2119 = vshll.u32 %v2079, 16
      %v2121 = vor.u32 %v2118, %v2119
      %v2122 = vrot.slane %v2118, 4
      %v2124 = vshrl.u32 %v2080, 16
      %v2126 = vrot.slane %v2124, 7
      %v2127 = vshll.u32 %v2080, 16
      %v2129 = vor.u32 %v2126, %v2127
      %v2130 = vrot.slane %v2126, 4
      %v2132 = vshrl.u32 %v2081, 16
      %v2134 = vrot.slane %v2132, 7
      %v2135 = vshll.u32 %v2081, 16
      %v2137 = vor.u32 %v2134, %v2135
      %v2138 = vrot.slane %v2134, 4
      %v2140 = vshrl.u32 %v2082, 16
      %v2142 = vrot.slane %v2140, 7
      %v2143 = vshll.u32 %v2082, 16
      %v2145 = vor.u32 %v2142, %v2143
      %v2146 = vrot.slane %v2142, 4
      %v2163 = vld [vmem:[%s725] sm:$0xf]
      %v2164 = vsel %vm728, %v2089, %v2163
      %2165 = vst [vmem:[%s725] sm:$0xf] %v2164
      %v2166 = vld [vmem:[%s725 + $0x4] sm:$0x1]
      %v2167 = vsel %vm734, %v2090, %v2166
      %2168 = vst [vmem:[%s725 + $0x4] sm:$0x1] %v2167
      %v2169 = vld [vmem:[%s725 + $0x8] sm:$0xf]
      %v2170 = vsel %vm728, %v2097, %v2169
      %2171 = vst [vmem:[%s725 + $0x8] sm:$0xf] %v2170
      %v2172 = vld [vmem:[%s725 + $0xc] sm:$0x1]
      %v2173 = vsel %vm734, %v2098, %v2172
      %2174 = vst [vmem:[%s725 + $0xc] sm:$0x1] %v2173
      %v2175 = vld [vmem:[%s725 + $0x10] sm:$0xf]
      %v2176 = vsel %vm728, %v2105, %v2175
      %2177 = vst [vmem:[%s725 + $0x10] sm:$0xf] %v2176
      %v2178 = vld [vmem:[%s725 + $0x14] sm:$0x1]
      %v2179 = vsel %vm734, %v2106, %v2178
      %2180 = vst [vmem:[%s725 + $0x14] sm:$0x1] %v2179
      %v2181 = vld [vmem:[%s725 + $0x18] sm:$0xf]
      %v2182 = vsel %vm728, %v2113, %v2181
      %2183 = vst [vmem:[%s725 + $0x18] sm:$0xf] %v2182
      %v2184 = vld [vmem:[%s725 + $0x1c] sm:$0x1]
      %v2185 = vsel %vm734, %v2114, %v2184
      %2186 = vst [vmem:[%s725 + $0x1c] sm:$0x1] %v2185
      %v2187 = vld [vmem:[%s725 + $0x20] sm:$0xf]
      %v2188 = vsel %vm728, %v2121, %v2187
      %2189 = vst [vmem:[%s725 + $0x20] sm:$0xf] %v2188
      %v2190 = vld [vmem:[%s725 + $0x24] sm:$0x1]
      %v2191 = vsel %vm734, %v2122, %v2190
      %2192 = vst [vmem:[%s725 + $0x24] sm:$0x1] %v2191
      %v2193 = vld [vmem:[%s725 + $0x28] sm:$0xf]
      %v2194 = vsel %vm728, %v2129, %v2193
      %2195 = vst [vmem:[%s725 + $0x28] sm:$0xf] %v2194
      %v2196 = vld [vmem:[%s725 + $0x2c] sm:$0x1]
      %v2197 = vsel %vm734, %v2130, %v2196
      %2198 = vst [vmem:[%s725 + $0x2c] sm:$0x1] %v2197
      %v2199 = vld [vmem:[%s725 + $0x30] sm:$0xf]
      %v2200 = vsel %vm728, %v2137, %v2199
      %2201 = vst [vmem:[%s725 + $0x30] sm:$0xf] %v2200
      %v2202 = vld [vmem:[%s725 + $0x34] sm:$0x1]
      %v2203 = vsel %vm734, %v2138, %v2202
      %2204 = vst [vmem:[%s725 + $0x34] sm:$0x1] %v2203
      %v2205 = vld [vmem:[%s725 + $0x38] sm:$0xf]
      %v2206 = vsel %vm728, %v2145, %v2205
      %2207 = vst [vmem:[%s725 + $0x38] sm:$0xf] %v2206
      %v2208 = vld [vmem:[%s725 + $0x3c] sm:$0x1]
      %v2209 = vsel %vm734, %v2146, %v2208
      %2210 = vst [vmem:[%s725 + $0x3c] sm:$0x1] %v2209
      %v2211 = vld [vmem:[#allocation2] sm:$0xf]
      %v2212 = vld [vmem:[#allocation2 + $0x8] sm:$0xf]
      %v2213 = vld [vmem:[#allocation2 + $0x10] sm:$0xf]
      %v2214 = vld [vmem:[#allocation2 + $0x18] sm:$0xf]
      %v2215 = vld [vmem:[#allocation2 + $0x20] sm:$0xf]
      %v2216 = vld [vmem:[#allocation2 + $0x28] sm:$0xf]
      %v2217 = vld [vmem:[#allocation2 + $0x30] sm:$0xf]
      %v2218 = vld [vmem:[#allocation2 + $0x38] sm:$0xf]
      %v2219 = vld [vmem:[#allocation2 + $0x4] sm:$0x1]
      %v2220 = vld [vmem:[#allocation2 + $0xc] sm:$0x1]
      %v2221 = vld [vmem:[#allocation2 + $0x14] sm:$0x1]
      %v2222 = vld [vmem:[#allocation2 + $0x1c] sm:$0x1]
      %v2223 = vld [vmem:[#allocation2 + $0x24] sm:$0x1]
      %v2224 = vld [vmem:[#allocation2 + $0x2c] sm:$0x1]
      %v2225 = vld [vmem:[#allocation2 + $0x34] sm:$0x1]
      %v2226 = vld [vmem:[#allocation2 + $0x3c] sm:$0x1]
      %v2227 = vld [vmem:[#allocation2] sm:$0xe]
      %v2228 = vld [vmem:[#allocation2 + $0x8] sm:$0xe]
      %v2229 = vld [vmem:[#allocation2 + $0x10] sm:$0xe]
      %v2230 = vld [vmem:[#allocation2 + $0x18] sm:$0xe]
      %v2231 = vld [vmem:[#allocation2 + $0x20] sm:$0xe]
      %v2232 = vld [vmem:[#allocation2 + $0x28] sm:$0xe]
      %v2233 = vld [vmem:[#allocation2 + $0x30] sm:$0xe]
      %v2234 = vld [vmem:[#allocation2 + $0x38] sm:$0xe]
      %v2251 = vunpack.c.l.b16 %v2211
      %v2252 = vunpack.c.l.b16 %v2219
      %v2253 = vunpack.c.l.b16 %v2212
      %v2254 = vunpack.c.l.b16 %v2220
      %v2255 = vunpack.c.l.b16 %v2213
      %v2256 = vunpack.c.l.b16 %v2221
      %v2257 = vunpack.c.l.b16 %v2214
      %v2258 = vunpack.c.l.b16 %v2222
      %v2259 = vunpack.c.l.b16 %v2215
      %v2260 = vunpack.c.l.b16 %v2223
      %v2261 = vunpack.c.l.b16 %v2216
      %v2262 = vunpack.c.l.b16 %v2224
      %v2263 = vunpack.c.l.b16 %v2217
      %v2264 = vunpack.c.l.b16 %v2225
      %v2265 = vunpack.c.l.b16 %v2218
      %v2266 = vunpack.c.l.b16 %v2226
      %v2267 = vpack.c.b16 %v2252, %v2251
      %v2268 = vpack.c.b16 %v2254, %v2253
      %v2269 = vpack.c.b16 %v2256, %v2255
      %v2270 = vpack.c.b16 %v2258, %v2257
      %v2271 = vpack.c.b16 %v2260, %v2259
      %v2272 = vpack.c.b16 %v2262, %v2261
      %v2273 = vpack.c.b16 %v2264, %v2263
      %v2274 = vpack.c.b16 %v2266, %v2265
      %v2276 = vshrl.u32 %v2267, 16
      %v2278 = vshll.u32 %v2267, 16
      %v2280 = vrot.slane %v2278, 1
      %v2281 = vor.u32 %v2276, %v2280
      %v2283 = vshrl.u32 %v2268, 16
      %v2285 = vshll.u32 %v2268, 16
      %v2287 = vrot.slane %v2285, 1
      %v2288 = vor.u32 %v2283, %v2287
      %v2290 = vshrl.u32 %v2269, 16
      %v2292 = vshll.u32 %v2269, 16
      %v2294 = vrot.slane %v2292, 1
      %v2295 = vor.u32 %v2290, %v2294
      %v2297 = vshrl.u32 %v2270, 16
      %v2299 = vshll.u32 %v2270, 16
      %v2301 = vrot.slane %v2299, 1
      %v2302 = vor.u32 %v2297, %v2301
      %v2304 = vshrl.u32 %v2271, 16
      %v2306 = vshll.u32 %v2271, 16
      %v2308 = vrot.slane %v2306, 1
      %v2309 = vor.u32 %v2304, %v2308
      %v2311 = vshrl.u32 %v2272, 16
      %v2313 = vshll.u32 %v2272, 16
      %v2315 = vrot.slane %v2313, 1
      %v2316 = vor.u32 %v2311, %v2315
      %v2318 = vshrl.u32 %v2273, 16
      %v2320 = vshll.u32 %v2273, 16
      %v2322 = vrot.slane %v2320, 1
      %v2323 = vor.u32 %v2318, %v2322
      %v2325 = vshrl.u32 %v2274, 16
      %v2327 = vshll.u32 %v2274, 16
      %v2329 = vrot.slane %v2327, 1
      %v2330 = vor.u32 %v2325, %v2329
      %2331 = vrot.lane.b32.xlu0 %v2281, 64
      %v2332 = vpop.permute.xlu0 %2331
      %2333 = vrot.lane.b32.xlu0 %v2288, 64
      %v2334 = vpop.permute.xlu0 %2333
      %2335 = vrot.lane.b32.xlu0 %v2295, 64
      %v2336 = vpop.permute.xlu0 %2335
      %2337 = vrot.lane.b32.xlu0 %v2302, 64
      %v2338 = vpop.permute.xlu0 %2337
      %2339 = vrot.lane.b32.xlu0 %v2309, 64
      %v2340 = vpop.permute.xlu0 %2339
      %2341 = vrot.lane.b32.xlu0 %v2316, 64
      %v2342 = vpop.permute.xlu0 %2341
      %2343 = vrot.lane.b32.xlu0 %v2323, 64
      %v2344 = vpop.permute.xlu0 %2343
      %2345 = vrot.lane.b32.xlu0 %v2330, 64
      %v2346 = vpop.permute.xlu0 %2345
      %v2355 = vunpack.c.l.b16 %v2227
      %v2356 = vunpack.c.l.b16 %v2228
      %v2357 = vunpack.c.l.b16 %v2229
      %v2358 = vunpack.c.l.b16 %v2230
      %v2359 = vunpack.c.l.b16 %v2231
      %v2360 = vunpack.c.l.b16 %v2232
      %v2361 = vunpack.c.l.b16 %v2233
      %v2362 = vunpack.c.l.b16 %v2234
      %v2363 = vpack.c.b16 %v2252, %v2355
      %v2364 = vpack.c.b16 %v2254, %v2356
      %v2365 = vpack.c.b16 %v2256, %v2357
      %v2366 = vpack.c.b16 %v2258, %v2358
      %v2367 = vpack.c.b16 %v2260, %v2359
      %v2368 = vpack.c.b16 %v2262, %v2360
      %v2369 = vpack.c.b16 %v2264, %v2361
      %v2370 = vpack.c.b16 %v2266, %v2362
      %v2371 = vrot.slane %v2363, 1
      %v2372 = vrot.slane %v2364, 1
      %v2373 = vrot.slane %v2365, 1
      %v2374 = vrot.slane %v2366, 1
      %v2375 = vrot.slane %v2367, 1
      %v2376 = vrot.slane %v2368, 1
      %v2377 = vrot.slane %v2369, 1
      %v2378 = vrot.slane %v2370, 1
      %v2381 = vsel %vm948, %v2211, %v2332
      %v2384 = vsel %vm948, %v2212, %v2334
      %v2387 = vsel %vm948, %v2213, %v2336
      %v2390 = vsel %vm948, %v2214, %v2338
      %v2393 = vsel %vm948, %v2215, %v2340
      %v2396 = vsel %vm948, %v2216, %v2342
      %v2399 = vsel %vm948, %v2217, %v2344
      %v2402 = vsel %vm948, %v2218, %v2346
      %v2411 = vunpack.c.l.b16 %v2381
      %v2412 = vunpack.c.l.b16 %v2371
      %v2413 = vunpack.c.l.b16 %v2384
      %v2414 = vunpack.c.l.b16 %v2372
      %v2415 = vunpack.c.l.b16 %v2387
      %v2416 = vunpack.c.l.b16 %v2373
      %v2417 = vunpack.c.l.b16 %v2390
      %v2418 = vunpack.c.l.b16 %v2374
      %v2419 = vunpack.c.l.b16 %v2393
      %v2420 = vunpack.c.l.b16 %v2375
      %v2421 = vunpack.c.l.b16 %v2396
      %v2422 = vunpack.c.l.b16 %v2376
      %v2423 = vunpack.c.l.b16 %v2399
      %v2424 = vunpack.c.l.b16 %v2377
      %v2425 = vunpack.c.l.b16 %v2402
      %v2426 = vunpack.c.l.b16 %v2378
      %s2427 = scalar_lea.vmem %s5, 288
      %v2428 = vld [vmem:[%s2427] sm:$0xf]
      %v2429 = vld [vmem:[%s2427 + $0x4] sm:$0xf]
      %v2430 = vld [vmem:[%s2427 + $0x8] sm:$0xf]
      %v2431 = vld [vmem:[%s2427 + $0xc] sm:$0xf]
      %v2432 = vld [vmem:[%s2427 + $0x10] sm:$0xf]
      %v2433 = vld [vmem:[%s2427 + $0x14] sm:$0xf]
      %v2434 = vld [vmem:[%s2427 + $0x18] sm:$0xf]
      %v2435 = vld [vmem:[%s2427 + $0x1c] sm:$0xf]
      %v2436 = vld [vmem:[%s2427 + $0x20] sm:$0xf]
      %v2437 = vld [vmem:[%s2427 + $0x24] sm:$0xf]
      %v2438 = vld [vmem:[%s2427 + $0x28] sm:$0xf]
      %v2439 = vld [vmem:[%s2427 + $0x2c] sm:$0xf]
      %v2440 = vld [vmem:[%s2427 + $0x30] sm:$0xf]
      %v2441 = vld [vmem:[%s2427 + $0x34] sm:$0xf]
      %v2442 = vld [vmem:[%s2427 + $0x38] sm:$0xf]
      %v2443 = vld [vmem:[%s2427 + $0x3c] sm:$0xf]
      %v2444 = vld [vmem:[%s2427 + $0x40] sm:$0xf]
      %v2445 = vld [vmem:[%s2427 + $0x44] sm:$0xf]
      %v2446 = vld [vmem:[%s2427 + $0x48] sm:$0xf]
      %v2447 = vld [vmem:[%s2427 + $0x4c] sm:$0xf]
      %v2448 = vld [vmem:[%s2427 + $0x50] sm:$0xf]
      %v2449 = vld [vmem:[%s2427 + $0x54] sm:$0xf]
      %v2450 = vld [vmem:[%s2427 + $0x58] sm:$0xf]
      %v2451 = vld [vmem:[%s2427 + $0x5c] sm:$0xf]
      %v2452 = vld [vmem:[%s725] sm:$0xf]
      %v2453 = vld [vmem:[%s725 + $0x8] sm:$0xf]
      %v2454 = vld [vmem:[%s725 + $0x10] sm:$0xf]
      %v2455 = vld [vmem:[%s725 + $0x18] sm:$0xf]
      %v2456 = vld [vmem:[%s725 + $0x20] sm:$0xf]
      %v2457 = vld [vmem:[%s725 + $0x28] sm:$0xf]
      %v2458 = vld [vmem:[%s725 + $0x30] sm:$0xf]
      %v2459 = vld [vmem:[%s725 + $0x38] sm:$0xf]
      %v2460 = vld [vmem:[%s725 + $0x4] sm:$0x1]
      %v2461 = vld [vmem:[%s725 + $0xc] sm:$0x1]
      %v2462 = vld [vmem:[%s725 + $0x14] sm:$0x1]
      %v2463 = vld [vmem:[%s725 + $0x1c] sm:$0x1]
      %v2464 = vld [vmem:[%s725 + $0x24] sm:$0x1]
      %v2465 = vld [vmem:[%s725 + $0x2c] sm:$0x1]
      %v2466 = vld [vmem:[%s725 + $0x34] sm:$0x1]
      %v2467 = vld [vmem:[%s725 + $0x3c] sm:$0x1]
      %v2468 = vld [vmem:[%s725] sm:$0xe]
      %v2469 = vld [vmem:[%s725 + $0x8] sm:$0xe]
      %v2470 = vld [vmem:[%s725 + $0x10] sm:$0xe]
      %v2471 = vld [vmem:[%s725 + $0x18] sm:$0xe]
      %v2472 = vld [vmem:[%s725 + $0x20] sm:$0xe]
      %v2473 = vld [vmem:[%s725 + $0x28] sm:$0xe]
      %v2474 = vld [vmem:[%s725 + $0x30] sm:$0xe]
      %v2475 = vld [vmem:[%s725 + $0x38] sm:$0xe]
      %v2492 = vunpack.c.l.b16 %v2452
      %v2493 = vunpack.c.l.b16 %v2460
      %v2494 = vunpack.c.l.b16 %v2453
      %v2495 = vunpack.c.l.b16 %v2461
      %v2496 = vunpack.c.l.b16 %v2454
      %v2497 = vunpack.c.l.b16 %v2462
      %v2498 = vunpack.c.l.b16 %v2455
      %v2499 = vunpack.c.l.b16 %v2463
      %v2500 = vunpack.c.l.b16 %v2456
      %v2501 = vunpack.c.l.b16 %v2464
      %v2502 = vunpack.c.l.b16 %v2457
      %v2503 = vunpack.c.l.b16 %v2465
      %v2504 = vunpack.c.l.b16 %v2458
      %v2505 = vunpack.c.l.b16 %v2466
      %v2506 = vunpack.c.l.b16 %v2459
      %v2507 = vunpack.c.l.b16 %v2467
      %v2508 = vpack.c.b16 %v2493, %v2492
      %v2509 = vpack.c.b16 %v2495, %v2494
      %v2510 = vpack.c.b16 %v2497, %v2496
      %v2511 = vpack.c.b16 %v2499, %v2498
      %v2512 = vpack.c.b16 %v2501, %v2500
      %v2513 = vpack.c.b16 %v2503, %v2502
      %v2514 = vpack.c.b16 %v2505, %v2504
      %v2515 = vpack.c.b16 %v2507, %v2506
      %v2517 = vshrl.u32 %v2508, 16
      %v2519 = vshll.u32 %v2508, 16
      %v2521 = vrot.slane %v2519, 1
      %v2522 = vor.u32 %v2517, %v2521
      %v2524 = vshrl.u32 %v2509, 16
      %v2526 = vshll.u32 %v2509, 16
      %v2528 = vrot.slane %v2526, 1
      %v2529 = vor.u32 %v2524, %v2528
      %v2531 = vshrl.u32 %v2510, 16
      %v2533 = vshll.u32 %v2510, 16
      %v2535 = vrot.slane %v2533, 1
      %v2536 = vor.u32 %v2531, %v2535
      %v2538 = vshrl.u32 %v2511, 16
      %v2540 = vshll.u32 %v2511, 16
      %v2542 = vrot.slane %v2540, 1
      %v2543 = vor.u32 %v2538, %v2542
      %v2545 = vshrl.u32 %v2512, 16
      %v2547 = vshll.u32 %v2512, 16
      %v2549 = vrot.slane %v2547, 1
      %v2550 = vor.u32 %v2545, %v2549
      %v2552 = vshrl.u32 %v2513, 16
      %v2554 = vshll.u32 %v2513, 16
      %v2556 = vrot.slane %v2554, 1
      %v2557 = vor.u32 %v2552, %v2556
      %v2559 = vshrl.u32 %v2514, 16
      %v2561 = vshll.u32 %v2514, 16
      %v2563 = vrot.slane %v2561, 1
      %v2564 = vor.u32 %v2559, %v2563
      %v2566 = vshrl.u32 %v2515, 16
      %v2568 = vshll.u32 %v2515, 16
      %v2570 = vrot.slane %v2568, 1
      %v2571 = vor.u32 %v2566, %v2570
      %2572 = vrot.lane.b32.xlu0 %v2522, 64
      %v2573 = vpop.permute.xlu0 %2572
      %2574 = vrot.lane.b32.xlu0 %v2529, 64
      %v2575 = vpop.permute.xlu0 %2574
      %2576 = vrot.lane.b32.xlu0 %v2536, 64
      %v2577 = vpop.permute.xlu0 %2576
      %2578 = vrot.lane.b32.xlu0 %v2543, 64
      %v2579 = vpop.permute.xlu0 %2578
      %2580 = vrot.lane.b32.xlu0 %v2550, 64
      %v2581 = vpop.permute.xlu0 %2580
      %2582 = vrot.lane.b32.xlu0 %v2557, 64
      %v2583 = vpop.permute.xlu0 %2582
      %2584 = vrot.lane.b32.xlu0 %v2564, 64
      %v2585 = vpop.permute.xlu0 %2584
      %2586 = vrot.lane.b32.xlu0 %v2571, 64
      %v2587 = vpop.permute.xlu0 %2586
      %v2596 = vunpack.c.l.b16 %v2468
      %v2597 = vunpack.c.l.b16 %v2469
      %v2598 = vunpack.c.l.b16 %v2470
      %v2599 = vunpack.c.l.b16 %v2471
      %v2600 = vunpack.c.l.b16 %v2472
      %v2601 = vunpack.c.l.b16 %v2473
      %v2602 = vunpack.c.l.b16 %v2474
      %v2603 = vunpack.c.l.b16 %v2475
      %v2604 = vpack.c.b16 %v2493, %v2596
      %v2605 = vpack.c.b16 %v2495, %v2597
      %v2606 = vpack.c.b16 %v2497, %v2598
      %v2607 = vpack.c.b16 %v2499, %v2599
      %v2608 = vpack.c.b16 %v2501, %v2600
      %v2609 = vpack.c.b16 %v2503, %v2601
      %v2610 = vpack.c.b16 %v2505, %v2602
      %v2611 = vpack.c.b16 %v2507, %v2603
      %v2612 = vrot.slane %v2604, 1
      %v2613 = vrot.slane %v2605, 1
      %v2614 = vrot.slane %v2606, 1
      %v2615 = vrot.slane %v2607, 1
      %v2616 = vrot.slane %v2608, 1
      %v2617 = vrot.slane %v2609, 1
      %v2618 = vrot.slane %v2610, 1
      %v2619 = vrot.slane %v2611, 1
      %v2622 = vsel %vm948, %v2452, %v2573
      %v2625 = vsel %vm948, %v2453, %v2575
      %v2628 = vsel %vm948, %v2454, %v2577
      %v2631 = vsel %vm948, %v2455, %v2579
      %v2634 = vsel %vm948, %v2456, %v2581
      %v2637 = vsel %vm948, %v2457, %v2583
      %v2640 = vsel %vm948, %v2458, %v2585
      %v2643 = vsel %vm948, %v2459, %v2587
      %v2652 = vunpack.c.l.b16 %v2622
      %v2653 = vunpack.c.l.b16 %v2612
      %v2654 = vunpack.c.l.b16 %v2625
      %v2655 = vunpack.c.l.b16 %v2613
      %v2656 = vunpack.c.l.b16 %v2628
      %v2657 = vunpack.c.l.b16 %v2614
      %v2658 = vunpack.c.l.b16 %v2631
      %v2659 = vunpack.c.l.b16 %v2615
      %v2660 = vunpack.c.l.b16 %v2634
      %v2661 = vunpack.c.l.b16 %v2616
      %v2662 = vunpack.c.l.b16 %v2637
      %v2663 = vunpack.c.l.b16 %v2617
      %v2664 = vunpack.c.l.b16 %v2640
      %v2665 = vunpack.c.l.b16 %v2618
      %v2666 = vunpack.c.l.b16 %v2643
      %v2667 = vunpack.c.l.b16 %v2619
      %s2668 = scalar_lea.vmem %s5, 384
      %v2669 = vld [vmem:[%s2668] sm:$0xf]
      %v2670 = vld [vmem:[%s2668 + $0x4] sm:$0xf]
      %v2671 = vld [vmem:[%s2668 + $0x8] sm:$0xf]
      %v2672 = vld [vmem:[%s2668 + $0xc] sm:$0xf]
      %v2673 = vld [vmem:[%s2668 + $0x10] sm:$0xf]
      %v2674 = vld [vmem:[%s2668 + $0x14] sm:$0xf]
      %v2675 = vld [vmem:[%s2668 + $0x18] sm:$0xf]
      %v2676 = vld [vmem:[%s2668 + $0x1c] sm:$0xf]
      %v2677 = vld [vmem:[%s2668 + $0x20] sm:$0xf]
      %v2678 = vld [vmem:[%s2668 + $0x24] sm:$0xf]
      %v2679 = vld [vmem:[%s2668 + $0x28] sm:$0xf]
      %v2680 = vld [vmem:[%s2668 + $0x2c] sm:$0xf]
      %v2681 = vld [vmem:[%s2668 + $0x30] sm:$0xf]
      %v2682 = vld [vmem:[%s2668 + $0x34] sm:$0xf]
      %v2683 = vld [vmem:[%s2668 + $0x38] sm:$0xf]
      %v2684 = vld [vmem:[%s2668 + $0x3c] sm:$0xf]
      %v2685 = vld [vmem:[%s2668 + $0x40] sm:$0xf]
      %v2686 = vld [vmem:[%s2668 + $0x44] sm:$0xf]
      %v2687 = vld [vmem:[%s2668 + $0x48] sm:$0xf]
      %v2688 = vld [vmem:[%s2668 + $0x4c] sm:$0xf]
      %v2689 = vld [vmem:[%s2668 + $0x50] sm:$0xf]
      %v2690 = vld [vmem:[%s2668 + $0x54] sm:$0xf]
      %v2691 = vld [vmem:[%s2668 + $0x58] sm:$0xf]
      %v2692 = vld [vmem:[%s2668 + $0x5c] sm:$0xf]
      %v2693 = vpack.c.b16 %v2654, %v2652
      %v2694 = vpack.c.b16 %v2655, %v2653
      %v2695 = vpack.c.b16 %v2658, %v2656
      %v2696 = vpack.c.b16 %v2659, %v2657
      %v2697 = vpack.c.b16 %v2662, %v2660
      %v2698 = vpack.c.b16 %v2663, %v2661
      %v2699 = vpack.c.b16 %v2666, %v2664
      %v2700 = vpack.c.b16 %v2667, %v2665
      %v2729 = vunpack.c.l.b16 %v2669
      %v2730 = vunpack.c.l.b16 %v2670
      %v2731 = vunpack.c.l.b16 %v2671
      %v2732 = vunpack.c.l.b16 %v2672
      %v2733 = vunpack.c.l.b16 %v2673
      %v2734 = vunpack.c.l.b16 %v2674
      %v2735 = vunpack.c.l.b16 %v2675
      %v2736 = vunpack.c.l.b16 %v2676
      %v2737 = vunpack.c.l.b16 %v2677
      %v2738 = vunpack.c.l.b16 %v2678
      %v2739 = vunpack.c.l.b16 %v2679
      %v2740 = vunpack.c.l.b16 %v2680
      %v2741 = vunpack.c.l.b16 %v2681
      %v2742 = vunpack.c.l.b16 %v2682
      %v2743 = vunpack.c.l.b16 %v2683
      %v2744 = vunpack.c.l.b16 %v2684
      %v2745 = vunpack.c.l.b16 %v2685
      %v2746 = vunpack.c.l.b16 %v2686
      %v2747 = vunpack.c.l.b16 %v2687
      %v2748 = vunpack.c.l.b16 %v2688
      %v2749 = vunpack.c.l.b16 %v2689
      %v2750 = vunpack.c.l.b16 %v2690
      %v2751 = vunpack.c.l.b16 %v2691
      %v2752 = vunpack.c.l.b16 %v2692
      %v2753 = vpack.c.b16 %v2730, %v2729
      %v2754 = vpack.c.b16 %v2732, %v2731
      %v2755 = vpack.c.b16 %v2734, %v2733
      %v2756 = vpack.c.b16 %v2736, %v2735
      %v2757 = vpack.c.b16 %v2738, %v2737
      %v2758 = vpack.c.b16 %v2740, %v2739
      %v2759 = vpack.c.b16 %v2742, %v2741
      %v2760 = vpack.c.b16 %v2744, %v2743
      %v2761 = vpack.c.b16 %v2746, %v2745
      %v2762 = vpack.c.b16 %v2748, %v2747
      %v2763 = vpack.c.b16 %v2750, %v2749
      %v2764 = vpack.c.b16 %v2752, %v2751
      %v2778 = vsel %vm948, %v2694, 0
      %v2781 = vsel %vm948, %v2696, 0
      %v2784 = vsel %vm948, %v2698, 0
      %v2787 = vsel %vm948, %v2700, 0
      %2789 = vmatprep.subr.bf16.mxu0 0
      %2790 = vmatpush1.bf16.msra.mxu0 %v2760
      %2791 = vmatprep.subr.bf16.mxu0 0
      %2792 = vmatpush1.bf16.msra.mxu0 %v2759
      %2793 = vmatprep.subr.bf16.mxu0 0
      %2794 = vmatpush1.bf16.msra.mxu0 %v2758
      %2795 = vmatprep.subr.bf16.mxu0 0
      %2796 = vmatpush1.bf16.msra.mxu0 %v2757
      %2797 = vmatprep.subr.bf16.mxu0 0
      %2798 = vmatpush1.bf16.msra.mxu0 %v2756
      %2799 = vmatprep.subr.bf16.mxu0 0
      %2800 = vmatpush1.bf16.msra.mxu0 %v2755
      %2801 = vmatprep.subr.bf16.mxu0 0
      %2802 = vmatpush1.bf16.msra.mxu0 %v2754
      %2803 = vmatprep.subr.bf16.mxu0 0
      %2804 = vmatpush1.bf16.msra.mxu0 %v2753
      %2805 = vmatprep.subr.bf16.mxu0 0
      %2806 = vmatpush2.bf16.msra.mxu0 0
      %2807 = vmatprep.subr.bf16.mxu0 0
      %2808 = vmatpush2.bf16.msra.mxu0 0
      %2809 = vmatprep.subr.bf16.mxu0 0
      %2810 = vmatpush2.bf16.msra.mxu0 0
      %2811 = vmatprep.subr.bf16.mxu0 0
      %2812 = vmatpush2.bf16.msra.mxu0 0
      %2813 = vmatprep.subr.bf16.mxu0 0
      %2814 = vmatpush2.bf16.msra.mxu0 %v2764
      %2815 = vmatprep.subr.bf16.mxu0 0
      %2816 = vmatpush2.bf16.msra.mxu0 %v2763
      %2817 = vmatprep.subr.bf16.mxu0 0
      %2818 = vmatpush2.bf16.msra.mxu0 %v2762
      %2819 = vmatprep.subr.bf16.mxu0 0
      %2820 = vmatpush2.bf16.msra.mxu0 %v2761
      %2821 = vmatprep.mubr.bf16.mxu0 %v2778
      %2822 = vmatmul.mubr.bf16.gmra.mxu0 %v2693
      %v2823 = vpop.f32.mrf.mxu0
      %v2824 = vadd.f32 0.0, %v2823
      %v2825 = vpop.f32.mrf.mxu0
      %v2826 = vpop.f32.mrf.mxu0
      %v2827 = vadd.f32 0.0, %v2826
      %v2828 = vpop.f32.mrf.mxu0
      %2829 = vmatprep.mubr.bf16.mxu0 %v2781
      %2830 = vmatmul.mubr.bf16.gmra.mxu0 %v2695
      %v2831 = vpop.f32.mrf.mxu0
      %v2832 = vadd.f32 0.0, %v2831
      %v2833 = vpop.f32.mrf.mxu0
      %v2834 = vpop.f32.mrf.mxu0
      %v2835 = vadd.f32 0.0, %v2834
      %v2836 = vpop.f32.mrf.mxu0
      %2837 = vmatprep.mubr.bf16.mxu0 %v2784
      %2838 = vmatmul.mubr.bf16.gmra.mxu0 %v2697
      %v2839 = vpop.f32.mrf.mxu0
      %v2840 = vadd.f32 0.0, %v2839
      %v2841 = vpop.f32.mrf.mxu0
      %v2842 = vpop.f32.mrf.mxu0
      %v2843 = vadd.f32 0.0, %v2842
      %v2844 = vpop.f32.mrf.mxu0
      %2845 = vmatprep.mubr.bf16.mxu0 %v2787
      %2846 = vmatmul.mubr.bf16.gmra.mxu0 %v2699
      %v2847 = vpop.f32.mrf.mxu0
      %v2848 = vadd.f32 0.0, %v2847
      %v2849 = vpop.f32.mrf.mxu0
      %v2850 = vpop.f32.mrf.mxu0
      %v2851 = vadd.f32 0.0, %v2850
      %v2852 = vpop.f32.mrf.mxu0
      %2853 = vdwg.mxu0
      %v2854 = vpack.c.b16 %v2413, %v2411
      %v2855 = vpack.c.b16 %v2414, %v2412
      %v2856 = vpack.c.b16 %v2417, %v2415
      %v2857 = vpack.c.b16 %v2418, %v2416
      %v2858 = vpack.c.b16 %v2421, %v2419
      %v2859 = vpack.c.b16 %v2422, %v2420
      %v2860 = vpack.c.b16 %v2425, %v2423
      %v2861 = vpack.c.b16 %v2426, %v2424
      %v2890 = vunpack.c.l.b16 %v2428
      %v2891 = vunpack.c.l.b16 %v2429
      %v2892 = vunpack.c.l.b16 %v2430
      %v2893 = vunpack.c.l.b16 %v2431
      %v2894 = vunpack.c.l.b16 %v2432
      %v2895 = vunpack.c.l.b16 %v2433
      %v2896 = vunpack.c.l.b16 %v2434
      %v2897 = vunpack.c.l.b16 %v2435
      %v2898 = vunpack.c.l.b16 %v2436
      %v2899 = vunpack.c.l.b16 %v2437
      %v2900 = vunpack.c.l.b16 %v2438
      %v2901 = vunpack.c.l.b16 %v2439
      %v2902 = vunpack.c.l.b16 %v2440
      %v2903 = vunpack.c.l.b16 %v2441
      %v2904 = vunpack.c.l.b16 %v2442
      %v2905 = vunpack.c.l.b16 %v2443
      %v2906 = vunpack.c.l.b16 %v2444
      %v2907 = vunpack.c.l.b16 %v2445
      %v2908 = vunpack.c.l.b16 %v2446
      %v2909 = vunpack.c.l.b16 %v2447
      %v2910 = vunpack.c.l.b16 %v2448
      %v2911 = vunpack.c.l.b16 %v2449
      %v2912 = vunpack.c.l.b16 %v2450
      %v2913 = vunpack.c.l.b16 %v2451
      %v2914 = vpack.c.b16 %v2891, %v2890
      %v2915 = vpack.c.b16 %v2893, %v2892
      %v2916 = vpack.c.b16 %v2895, %v2894
      %v2917 = vpack.c.b16 %v2897, %v2896
      %v2918 = vpack.c.b16 %v2899, %v2898
      %v2919 = vpack.c.b16 %v2901, %v2900
      %v2920 = vpack.c.b16 %v2903, %v2902
      %v2921 = vpack.c.b16 %v2905, %v2904
      %v2922 = vpack.c.b16 %v2907, %v2906
      %v2923 = vpack.c.b16 %v2909, %v2908
      %v2924 = vpack.c.b16 %v2911, %v2910
      %v2925 = vpack.c.b16 %v2913, %v2912
      %v2939 = vsel %vm948, %v2855, 0
      %v2942 = vsel %vm948, %v2857, 0
      %v2945 = vsel %vm948, %v2859, 0
      %v2948 = vsel %vm948, %v2861, 0
      %2950 = vmatprep.subr.bf16.mxu0 0
      %2951 = vmatpush1.bf16.msra.mxu0 %v2921
      %2952 = vmatprep.subr.bf16.mxu0 0
      %2953 = vmatpush1.bf16.msra.mxu0 %v2920
      %2954 = vmatprep.subr.bf16.mxu0 0
      %2955 = vmatpush1.bf16.msra.mxu0 %v2919
      %2956 = vmatprep.subr.bf16.mxu0 0
      %2957 = vmatpush1.bf16.msra.mxu0 %v2918
      %2958 = vmatprep.subr.bf16.mxu0 0
      %2959 = vmatpush1.bf16.msra.mxu0 %v2917
      %2960 = vmatprep.subr.bf16.mxu0 0
      %2961 = vmatpush1.bf16.msra.mxu0 %v2916
      %2962 = vmatprep.subr.bf16.mxu0 0
      %2963 = vmatpush1.bf16.msra.mxu0 %v2915
      %2964 = vmatprep.subr.bf16.mxu0 0
      %2965 = vmatpush1.bf16.msra.mxu0 %v2914
      %2966 = vmatprep.subr.bf16.mxu0 0
      %2967 = vmatpush2.bf16.msra.mxu0 0
      %2968 = vmatprep.subr.bf16.mxu0 0
      %2969 = vmatpush2.bf16.msra.mxu0 0
      %2970 = vmatprep.subr.bf16.mxu0 0
      %2971 = vmatpush2.bf16.msra.mxu0 0
      %2972 = vmatprep.subr.bf16.mxu0 0
      %2973 = vmatpush2.bf16.msra.mxu0 0
      %2974 = vmatprep.subr.bf16.mxu0 0
      %2975 = vmatpush2.bf16.msra.mxu0 %v2925
      %2976 = vmatprep.subr.bf16.mxu0 0
      %2977 = vmatpush2.bf16.msra.mxu0 %v2924
      %2978 = vmatprep.subr.bf16.mxu0 0
      %2979 = vmatpush2.bf16.msra.mxu0 %v2923
      %2980 = vmatprep.subr.bf16.mxu0 0
      %2981 = vmatpush2.bf16.msra.mxu0 %v2922
      %2982 = vmatprep.mubr.bf16.mxu0 %v2939
      %2983 = vmatmul.mubr.bf16.gmra.mxu0 %v2854
      %v2984 = vpop.f32.mrf.mxu0
      %v2985 = vadd.f32 %v2824, %v2984
      %v2986 = vpop.f32.mrf.mxu0
      %v2987 = vpop.f32.mrf.mxu0
      %v2988 = vadd.f32 %v2827, %v2987
      %v2989 = vpop.f32.mrf.mxu0
      %2990 = vmatprep.mubr.bf16.mxu0 %v2942
      %2991 = vmatmul.mubr.bf16.gmra.mxu0 %v2856
      %v2992 = vpop.f32.mrf.mxu0
      %v2993 = vadd.f32 %v2832, %v2992
      %v2994 = vpop.f32.mrf.mxu0
      %v2995 = vpop.f32.mrf.mxu0
      %v2996 = vadd.f32 %v2835, %v2995
      %v2997 = vpop.f32.mrf.mxu0
      %2998 = vmatprep.mubr.bf16.mxu0 %v2945
      %2999 = vmatmul.mubr.bf16.gmra.mxu0 %v2858
      %v3000 = vpop.f32.mrf.mxu0
      %v3001 = vadd.f32 %v2840, %v3000
      %v3002 = vpop.f32.mrf.mxu0
      %v3003 = vpop.f32.mrf.mxu0
      %v3004 = vadd.f32 %v2843, %v3003
      %v3005 = vpop.f32.mrf.mxu0
      %3006 = vmatprep.mubr.bf16.mxu0 %v2948
      %3007 = vmatmul.mubr.bf16.gmra.mxu0 %v2860
      %v3008 = vpop.f32.mrf.mxu0
      %v3009 = vadd.f32 %v2848, %v3008
      %v3010 = vpop.f32.mrf.mxu0
      %v3011 = vpop.f32.mrf.mxu0
      %v3012 = vadd.f32 %v2851, %v3011
      %v3013 = vpop.f32.mrf.mxu0
      %3014 = vdwg.mxu0
      %v3015 = vld [vmem:[%s1584] sm:$0xf]
      %v3016 = vld [vmem:[%s1584 + $0x8] sm:$0xf]
      %v3017 = vld [vmem:[%s1584 + $0x10] sm:$0xf]
      %v3018 = vld [vmem:[%s1584 + $0x18] sm:$0xf]
      %v3019 = vld [vmem:[%s1584 + $0x20] sm:$0xf]
      %v3020 = vld [vmem:[%s1584 + $0x28] sm:$0xf]
      %v3021 = vld [vmem:[%s1584 + $0x30] sm:$0xf]
      %v3022 = vld [vmem:[%s1584 + $0x38] sm:$0xf]
      %v3023 = vld [vmem:[%s1584 + $0x4] sm:$0x1]
      %v3024 = vld [vmem:[%s1584 + $0xc] sm:$0x1]
      %v3025 = vld [vmem:[%s1584 + $0x14] sm:$0x1]
      %v3026 = vld [vmem:[%s1584 + $0x1c] sm:$0x1]
      %v3027 = vld [vmem:[%s1584 + $0x24] sm:$0x1]
      %v3028 = vld [vmem:[%s1584 + $0x2c] sm:$0x1]
      %v3029 = vld [vmem:[%s1584 + $0x34] sm:$0x1]
      %v3030 = vld [vmem:[%s1584 + $0x3c] sm:$0x1]
      %v3031 = vld [vmem:[%s1584] sm:$0xe]
      %v3032 = vld [vmem:[%s1584 + $0x8] sm:$0xe]
      %v3033 = vld [vmem:[%s1584 + $0x10] sm:$0xe]
      %v3034 = vld [vmem:[%s1584 + $0x18] sm:$0xe]
      %v3035 = vld [vmem:[%s1584 + $0x20] sm:$0xe]
      %v3036 = vld [vmem:[%s1584 + $0x28] sm:$0xe]
      %v3037 = vld [vmem:[%s1584 + $0x30] sm:$0xe]
      %v3038 = vld [vmem:[%s1584 + $0x38] sm:$0xe]
      %v3055 = vunpack.c.l.b16 %v3015
      %v3056 = vunpack.c.l.b16 %v3023
      %v3057 = vunpack.c.l.b16 %v3016
      %v3058 = vunpack.c.l.b16 %v3024
      %v3059 = vunpack.c.l.b16 %v3017
      %v3060 = vunpack.c.l.b16 %v3025
      %v3061 = vunpack.c.l.b16 %v3018
      %v3062 = vunpack.c.l.b16 %v3026
      %v3063 = vunpack.c.l.b16 %v3019
      %v3064 = vunpack.c.l.b16 %v3027
      %v3065 = vunpack.c.l.b16 %v3020
      %v3066 = vunpack.c.l.b16 %v3028
      %v3067 = vunpack.c.l.b16 %v3021
      %v3068 = vunpack.c.l.b16 %v3029
      %v3069 = vunpack.c.l.b16 %v3022
      %v3070 = vunpack.c.l.b16 %v3030
      %v3071 = vpack.c.b16 %v3056, %v3055
      %v3072 = vpack.c.b16 %v3058, %v3057
      %v3073 = vpack.c.b16 %v3060, %v3059
      %v3074 = vpack.c.b16 %v3062, %v3061
      %v3075 = vpack.c.b16 %v3064, %v3063
      %v3076 = vpack.c.b16 %v3066, %v3065
      %v3077 = vpack.c.b16 %v3068, %v3067
      %v3078 = vpack.c.b16 %v3070, %v3069
      %v3080 = vshrl.u32 %v3071, 16
      %v3082 = vshll.u32 %v3071, 16
      %v3084 = vrot.slane %v3082, 1
      %v3085 = vor.u32 %v3080, %v3084
      %v3087 = vshrl.u32 %v3072, 16
      %v3089 = vshll.u32 %v3072, 16
      %v3091 = vrot.slane %v3089, 1
      %v3092 = vor.u32 %v3087, %v3091
      %v3094 = vshrl.u32 %v3073, 16
      %v3096 = vshll.u32 %v3073, 16
      %v3098 = vrot.slane %v3096, 1
      %v3099 = vor.u32 %v3094, %v3098
      %v3101 = vshrl.u32 %v3074, 16
      %v3103 = vshll.u32 %v3074, 16
      %v3105 = vrot.slane %v3103, 1
      %v3106 = vor.u32 %v3101, %v3105
      %v3108 = vshrl.u32 %v3075, 16
      %v3110 = vshll.u32 %v3075, 16
      %v3112 = vrot.slane %v3110, 1
      %v3113 = vor.u32 %v3108, %v3112
      %v3115 = vshrl.u32 %v3076, 16
      %v3117 = vshll.u32 %v3076, 16
      %v3119 = vrot.slane %v3117, 1
      %v3120 = vor.u32 %v3115, %v3119
      %v3122 = vshrl.u32 %v3077, 16
      %v3124 = vshll.u32 %v3077, 16
      %v3126 = vrot.slane %v3124, 1
      %v3127 = vor.u32 %v3122, %v3126
      %v3129 = vshrl.u32 %v3078, 16
      %v3131 = vshll.u32 %v3078, 16
      %v3133 = vrot.slane %v3131, 1
      %v3134 = vor.u32 %v3129, %v3133
      %3135 = vrot.lane.b32.xlu0 %v3085, 64
      %v3136 = vpop.permute.xlu0 %3135
      %3137 = vrot.lane.b32.xlu0 %v3092, 64
      %v3138 = vpop.permute.xlu0 %3137
      %3139 = vrot.lane.b32.xlu0 %v3099, 64
      %v3140 = vpop.permute.xlu0 %3139
      %3141 = vrot.lane.b32.xlu0 %v3106, 64
      %v3142 = vpop.permute.xlu0 %3141
      %3143 = vrot.lane.b32.xlu0 %v3113, 64
      %v3144 = vpop.permute.xlu0 %3143
      %3145 = vrot.lane.b32.xlu0 %v3120, 64
      %v3146 = vpop.permute.xlu0 %3145
      %3147 = vrot.lane.b32.xlu0 %v3127, 64
      %v3148 = vpop.permute.xlu0 %3147
      %3149 = vrot.lane.b32.xlu0 %v3134, 64
      %v3150 = vpop.permute.xlu0 %3149
      %v3159 = vunpack.c.l.b16 %v3031
      %v3160 = vunpack.c.l.b16 %v3032
      %v3161 = vunpack.c.l.b16 %v3033
      %v3162 = vunpack.c.l.b16 %v3034
      %v3163 = vunpack.c.l.b16 %v3035
      %v3164 = vunpack.c.l.b16 %v3036
      %v3165 = vunpack.c.l.b16 %v3037
      %v3166 = vunpack.c.l.b16 %v3038
      %v3167 = vpack.c.b16 %v3056, %v3159
      %v3168 = vpack.c.b16 %v3058, %v3160
      %v3169 = vpack.c.b16 %v3060, %v3161
      %v3170 = vpack.c.b16 %v3062, %v3162
      %v3171 = vpack.c.b16 %v3064, %v3163
      %v3172 = vpack.c.b16 %v3066, %v3164
      %v3173 = vpack.c.b16 %v3068, %v3165
      %v3174 = vpack.c.b16 %v3070, %v3166
      %v3175 = vrot.slane %v3167, 1
      %v3176 = vrot.slane %v3168, 1
      %v3177 = vrot.slane %v3169, 1
      %v3178 = vrot.slane %v3170, 1
      %v3179 = vrot.slane %v3171, 1
      %v3180 = vrot.slane %v3172, 1
      %v3181 = vrot.slane %v3173, 1
      %v3182 = vrot.slane %v3174, 1
      %v3185 = vsel %vm948, %v3015, %v3136
      %v3188 = vsel %vm948, %v3016, %v3138
      %v3191 = vsel %vm948, %v3017, %v3140
      %v3194 = vsel %vm948, %v3018, %v3142
      %v3197 = vsel %vm948, %v3019, %v3144
      %v3200 = vsel %vm948, %v3020, %v3146
      %v3203 = vsel %vm948, %v3021, %v3148
      %v3206 = vsel %vm948, %v3022, %v3150
      %v3215 = vunpack.c.l.b16 %v3185
      %v3216 = vunpack.c.l.b16 %v3175
      %v3217 = vunpack.c.l.b16 %v3188
      %v3218 = vunpack.c.l.b16 %v3176
      %v3219 = vunpack.c.l.b16 %v3191
      %v3220 = vunpack.c.l.b16 %v3177
      %v3221 = vunpack.c.l.b16 %v3194
      %v3222 = vunpack.c.l.b16 %v3178
      %v3223 = vunpack.c.l.b16 %v3197
      %v3224 = vunpack.c.l.b16 %v3179
      %v3225 = vunpack.c.l.b16 %v3200
      %v3226 = vunpack.c.l.b16 %v3180
      %v3227 = vunpack.c.l.b16 %v3203
      %v3228 = vunpack.c.l.b16 %v3181
      %v3229 = vunpack.c.l.b16 %v3206
      %v3230 = vunpack.c.l.b16 %v3182
      %s3231 = scalar_lea.vmem %s5, 480
      %v3232 = vld [vmem:[%s3231] sm:$0xf]
      %v3233 = vld [vmem:[%s3231 + $0x4] sm:$0xf]
      %v3234 = vld [vmem:[%s3231 + $0x8] sm:$0xf]
      %v3235 = vld [vmem:[%s3231 + $0xc] sm:$0xf]
      %v3236 = vld [vmem:[%s3231 + $0x10] sm:$0xf]
      %v3237 = vld [vmem:[%s3231 + $0x14] sm:$0xf]
      %v3238 = vld [vmem:[%s3231 + $0x18] sm:$0xf]
      %v3239 = vld [vmem:[%s3231 + $0x1c] sm:$0xf]
      %v3240 = vld [vmem:[%s3231 + $0x20] sm:$0xf]
      %v3241 = vld [vmem:[%s3231 + $0x24] sm:$0xf]
      %v3242 = vld [vmem:[%s3231 + $0x28] sm:$0xf]
      %v3243 = vld [vmem:[%s3231 + $0x2c] sm:$0xf]
      %v3244 = vld [vmem:[%s3231 + $0x30] sm:$0xf]
      %v3245 = vld [vmem:[%s3231 + $0x34] sm:$0xf]
      %v3246 = vld [vmem:[%s3231 + $0x38] sm:$0xf]
      %v3247 = vld [vmem:[%s3231 + $0x3c] sm:$0xf]
      %v3248 = vld [vmem:[%s3231 + $0x40] sm:$0xf]
      %v3249 = vld [vmem:[%s3231 + $0x44] sm:$0xf]
      %v3250 = vld [vmem:[%s3231 + $0x48] sm:$0xf]
      %v3251 = vld [vmem:[%s3231 + $0x4c] sm:$0xf]
      %v3252 = vld [vmem:[%s3231 + $0x50] sm:$0xf]
      %v3253 = vld [vmem:[%s3231 + $0x54] sm:$0xf]
      %v3254 = vld [vmem:[%s3231 + $0x58] sm:$0xf]
      %v3255 = vld [vmem:[%s3231 + $0x5c] sm:$0xf]
      %v3256 = vpack.c.b16 %v3217, %v3215
      %v3257 = vpack.c.b16 %v3218, %v3216
      %v3258 = vpack.c.b16 %v3221, %v3219
      %v3259 = vpack.c.b16 %v3222, %v3220
      %v3260 = vpack.c.b16 %v3225, %v3223
      %v3261 = vpack.c.b16 %v3226, %v3224
      %v3262 = vpack.c.b16 %v3229, %v3227
      %v3263 = vpack.c.b16 %v3230, %v3228
      %v3292 = vunpack.c.l.b16 %v3232
      %v3293 = vunpack.c.l.b16 %v3233
      %v3294 = vunpack.c.l.b16 %v3234
      %v3295 = vunpack.c.l.b16 %v3235
      %v3296 = vunpack.c.l.b16 %v3236
      %v3297 = vunpack.c.l.b16 %v3237
      %v3298 = vunpack.c.l.b16 %v3238
      %v3299 = vunpack.c.l.b16 %v3239
      %v3300 = vunpack.c.l.b16 %v3240
      %v3301 = vunpack.c.l.b16 %v3241
      %v3302 = vunpack.c.l.b16 %v3242
      %v3303 = vunpack.c.l.b16 %v3243
      %v3304 = vunpack.c.l.b16 %v3244
      %v3305 = vunpack.c.l.b16 %v3245
      %v3306 = vunpack.c.l.b16 %v3246
      %v3307 = vunpack.c.l.b16 %v3247
      %v3308 = vunpack.c.l.b16 %v3248
      %v3309 = vunpack.c.l.b16 %v3249
      %v3310 = vunpack.c.l.b16 %v3250
      %v3311 = vunpack.c.l.b16 %v3251
      %v3312 = vunpack.c.l.b16 %v3252
      %v3313 = vunpack.c.l.b16 %v3253
      %v3314 = vunpack.c.l.b16 %v3254
      %v3315 = vunpack.c.l.b16 %v3255
      %v3316 = vpack.c.b16 %v3293, %v3292
      %v3317 = vpack.c.b16 %v3295, %v3294
      %v3318 = vpack.c.b16 %v3297, %v3296
      %v3319 = vpack.c.b16 %v3299, %v3298
      %v3320 = vpack.c.b16 %v3301, %v3300
      %v3321 = vpack.c.b16 %v3303, %v3302
      %v3322 = vpack.c.b16 %v3305, %v3304
      %v3323 = vpack.c.b16 %v3307, %v3306
      %v3324 = vpack.c.b16 %v3309, %v3308
      %v3325 = vpack.c.b16 %v3311, %v3310
      %v3326 = vpack.c.b16 %v3313, %v3312
      %v3327 = vpack.c.b16 %v3315, %v3314
      %v3341 = vsel %vm948, %v3257, 0
      %v3344 = vsel %vm948, %v3259, 0
      %v3347 = vsel %vm948, %v3261, 0
      %v3350 = vsel %vm948, %v3263, 0
      %3352 = vmatprep.subr.bf16.mxu0 0
      %3353 = vmatpush1.bf16.msra.mxu0 %v3323
      %3354 = vmatprep.subr.bf16.mxu0 0
      %3355 = vmatpush1.bf16.msra.mxu0 %v3322
      %3356 = vmatprep.subr.bf16.mxu0 0
      %3357 = vmatpush1.bf16.msra.mxu0 %v3321
      %3358 = vmatprep.subr.bf16.mxu0 0
      %3359 = vmatpush1.bf16.msra.mxu0 %v3320
      %3360 = vmatprep.subr.bf16.mxu0 0
      %3361 = vmatpush1.bf16.msra.mxu0 %v3319
      %3362 = vmatprep.subr.bf16.mxu0 0
      %3363 = vmatpush1.bf16.msra.mxu0 %v3318
      %3364 = vmatprep.subr.bf16.mxu0 0
      %3365 = vmatpush1.bf16.msra.mxu0 %v3317
      %3366 = vmatprep.subr.bf16.mxu0 0
      %3367 = vmatpush1.bf16.msra.mxu0 %v3316
      %3368 = vmatprep.subr.bf16.mxu0 0
      %3369 = vmatpush2.bf16.msra.mxu0 0
      %3370 = vmatprep.subr.bf16.mxu0 0
      %3371 = vmatpush2.bf16.msra.mxu0 0
      %3372 = vmatprep.subr.bf16.mxu0 0
      %3373 = vmatpush2.bf16.msra.mxu0 0
      %3374 = vmatprep.subr.bf16.mxu0 0
      %3375 = vmatpush2.bf16.msra.mxu0 0
      %3376 = vmatprep.subr.bf16.mxu0 0
      %3377 = vmatpush2.bf16.msra.mxu0 %v3327
      %3378 = vmatprep.subr.bf16.mxu0 0
      %3379 = vmatpush2.bf16.msra.mxu0 %v3326
      %3380 = vmatprep.subr.bf16.mxu0 0
      %3381 = vmatpush2.bf16.msra.mxu0 %v3325
      %3382 = vmatprep.subr.bf16.mxu0 0
      %3383 = vmatpush2.bf16.msra.mxu0 %v3324
      %3384 = vmatprep.mubr.bf16.mxu0 %v3341
      %3385 = vmatmul.mubr.bf16.gmra.mxu0 %v3256
      %v3386 = vpop.f32.mrf.mxu0
      %v3387 = vadd.f32 0.0, %v3386
      %v3388 = vpop.f32.mrf.mxu0
      %v3389 = vpop.f32.mrf.mxu0
      %v3390 = vadd.f32 0.0, %v3389
      %v3391 = vpop.f32.mrf.mxu0
      %3392 = vmatprep.mubr.bf16.mxu0 %v3344
      %3393 = vmatmul.mubr.bf16.gmra.mxu0 %v3258
      %v3394 = vpop.f32.mrf.mxu0
      %v3395 = vadd.f32 0.0, %v3394
      %v3396 = vpop.f32.mrf.mxu0
      %v3397 = vpop.f32.mrf.mxu0
      %v3398 = vadd.f32 0.0, %v3397
      %v3399 = vpop.f32.mrf.mxu0
      %3400 = vmatprep.mubr.bf16.mxu0 %v3347
      %3401 = vmatmul.mubr.bf16.gmra.mxu0 %v3260
      %v3402 = vpop.f32.mrf.mxu0
      %v3403 = vadd.f32 0.0, %v3402
      %v3404 = vpop.f32.mrf.mxu0
      %v3405 = vpop.f32.mrf.mxu0
      %v3406 = vadd.f32 0.0, %v3405
      %v3407 = vpop.f32.mrf.mxu0
      %3408 = vmatprep.mubr.bf16.mxu0 %v3350
      %3409 = vmatmul.mubr.bf16.gmra.mxu0 %v3262
      %v3410 = vpop.f32.mrf.mxu0
      %v3411 = vadd.f32 0.0, %v3410
      %v3412 = vpop.f32.mrf.mxu0
      %v3413 = vpop.f32.mrf.mxu0
      %v3414 = vadd.f32 0.0, %v3413
      %v3415 = vpop.f32.mrf.mxu0
      %3416 = vdwg.mxu0
      %v3417 = vadd.f32 %v2985, %v3387
      %v3418 = vadd.f32 %v2988, %v3390
      %v3419 = vadd.f32 %v2993, %v3395
      %v3420 = vadd.f32 %v2996, %v3398
      %v3421 = vadd.f32 %v3001, %v3403
      %v3422 = vadd.f32 %v3004, %v3406
      %v3423 = vadd.f32 %v3009, %v3411
      %v3424 = vadd.f32 %v3012, %v3414
      %v3425 = vld [vmem:[#allocation3] sm:$0xff]
      %v3426 = vld [vmem:[#allocation3 + $0x8] sm:$0xff]
      %v3427 = vld [vmem:[#allocation3 + $0x10] sm:$0xff]
      %v3428 = vld [vmem:[#allocation3 + $0x18] sm:$0xff]
      %v3429 = vld [vmem:[#allocation3 + $0x20] sm:$0xff]
      %v3430 = vld [vmem:[#allocation3 + $0x28] sm:$0xff]
      %v3431 = vld [vmem:[#allocation3 + $0x30] sm:$0xff]
      %v3432 = vld [vmem:[#allocation3 + $0x38] sm:$0xff]
      %v3433 = vadd.f32 %v3425, %v3417
      %v3434 = vadd.f32 %v3426, %v3418
      %v3435 = vadd.f32 %v3427, %v3419
      %v3436 = vadd.f32 %v3428, %v3420
      %v3437 = vadd.f32 %v3429, %v3421
      %v3438 = vadd.f32 %v3430, %v3422
      %v3439 = vadd.f32 %v3431, %v3423
      %v3440 = vadd.f32 %v3432, %v3424
      %3441 = vst.msk [vmem:[#allocation3] sm:$0xff] %vm948, %v3433
      %3442 = vst.msk [vmem:[#allocation3 + $0x8] sm:$0xff] %vm948, %v3434
      %3443 = vst.msk [vmem:[#allocation3 + $0x10] sm:$0xff] %vm948, %v3435
      %3444 = vst.msk [vmem:[#allocation3 + $0x18] sm:$0xff] %vm948, %v3436
      %3445 = vst.msk [vmem:[#allocation3 + $0x20] sm:$0xff] %vm948, %v3437
      %3446 = vst.msk [vmem:[#allocation3 + $0x28] sm:$0xff] %vm948, %v3438
      %3447 = vst.msk [vmem:[#allocation3 + $0x30] sm:$0xff] %vm948, %v3439
      %3448 = vst.msk [vmem:[#allocation3 + $0x38] sm:$0xff] %vm948, %v3440
      %v3449 = vld [vmem:[%s489] sm:$0xff]
      %v3450 = vld [vmem:[%s489 + $0x8] sm:$0xff]
      %v3451 = vld [vmem:[%s489 + $0x10] sm:$0xff]
      %v3452 = vld [vmem:[%s489 + $0x18] sm:$0xff]
      %v3453 = vld [vmem:[%s489 + $0x20] sm:$0xff]
      %v3454 = vld [vmem:[%s489 + $0x28] sm:$0xff]
      %v3455 = vld [vmem:[%s489 + $0x30] sm:$0xff]
      %v3456 = vld [vmem:[%s489 + $0x38] sm:$0xff]
      %v3457 = vmul.f32 %v3449, %v553
      %v3458 = vmul.f32 %v3450, %v553
      %v3459 = vmul.f32 %v3451, %v553
      %v3460 = vmul.f32 %v3452, %v553
      %v3461 = vmul.f32 %v3453, %v553
      %v3462 = vmul.f32 %v3454, %v553
      %v3463 = vmul.f32 %v3455, %v553
      %v3464 = vmul.f32 %v3456, %v553
      %v3465 = vadd.f32 %v3457, %v567
      %v3466 = vadd.f32 %v3458, %v567
      %v3467 = vadd.f32 %v3459, %v567
      %v3468 = vadd.f32 %v3460, %v567
      %v3469 = vadd.f32 %v3461, %v567
      %v3470 = vadd.f32 %v3462, %v567
      %v3471 = vadd.f32 %v3463, %v567
      %v3472 = vadd.f32 %v3464, %v567
      %vm3473 = vcmp.ge.f32.partialorder %v3465, 0.0
      %vm3474 = vcmp.ge.f32.partialorder %v3466, 0.0
      %vm3475 = vcmp.ge.f32.partialorder %v3467, 0.0
      %vm3476 = vcmp.ge.f32.partialorder %v3468, 0.0
      %vm3477 = vcmp.ge.f32.partialorder %v3469, 0.0
      %vm3478 = vcmp.ge.f32.partialorder %v3470, 0.0
      %vm3479 = vcmp.ge.f32.partialorder %v3471, 0.0
      %vm3480 = vcmp.ge.f32.partialorder %v3472, 0.0
      %v3481 = vmul.f32 %v3465, 1e-05
      %v3482 = vmul.f32 %v3466, 1e-05
      %v3483 = vmul.f32 %v3467, 1e-05
      %v3484 = vmul.f32 %v3468, 1e-05
      %v3485 = vmul.f32 %v3469, 1e-05
      %v3486 = vmul.f32 %v3470, 1e-05
      %v3487 = vmul.f32 %v3471, 1e-05
      %v3488 = vmul.f32 %v3472, 1e-05
      %v3489 = vsel %vm3473, %v3465, %v3481
      %v3490 = vsel %vm3474, %v3466, %v3482
      %v3491 = vsel %vm3475, %v3467, %v3483
      %v3492 = vsel %vm3476, %v3468, %v3484
      %v3493 = vsel %vm3477, %v3469, %v3485
      %v3494 = vsel %vm3478, %v3470, %v3486
      %v3495 = vsel %vm3479, %v3471, %v3487
      %v3496 = vsel %vm3480, %v3472, %v3488
      %p3497 = scmp.lt.s32.totalorder %s26, 7
      %s3498 = scalar_select %p3497, 1, 0
      %v3499 = vstv %s3498
      %vm3500 = vcmp.eq.s32.totalorder %v3499, 1
      %v3501 = vsel %vm3500, %v3489, 0.0
      %v3502 = vsel %vm3500, %v3490, 0.0
      %v3503 = vsel %vm3500, %v3491, 0.0
      %v3504 = vsel %vm3500, %v3492, 0.0
      %v3505 = vsel %vm3500, %v3493, 0.0
      %v3506 = vsel %vm3500, %v3494, 0.0
      %v3507 = vsel %vm3500, %v3495, 0.0
      %v3508 = vsel %vm3500, %v3496, 0.0
      %v3509 = vpack.c.bf16 %v3501, %v3501
      %v3510 = vpack.c.bf16 %v3502, %v3502
      %v3511 = vpack.c.bf16 %v3503, %v3503
      %v3512 = vpack.c.bf16 %v3504, %v3504
      %v3513 = vpack.c.bf16 %v3505, %v3505
      %v3514 = vpack.c.bf16 %v3506, %v3506
      %v3515 = vpack.c.bf16 %v3507, %v3507
      %v3516 = vpack.c.bf16 %v3508, %v3508
      %v3525 = vunpack.c.l.b16 %v3509
      %v3526 = vunpack.c.l.b16 %v3510
      %v3527 = vunpack.c.l.b16 %v3511
      %v3528 = vunpack.c.l.b16 %v3512
      %v3529 = vunpack.c.l.b16 %v3513
      %v3530 = vunpack.c.l.b16 %v3514
      %v3531 = vunpack.c.l.b16 %v3515
      %v3532 = vunpack.c.l.b16 %v3516
      %v3533 = vpack.c.b16 %v3525, %v3525
      %v3534 = vpack.c.b16 %v3526, %v3526
      %v3535 = vpack.c.b16 %v3527, %v3527
      %v3536 = vpack.c.b16 %v3528, %v3528
      %v3537 = vpack.c.b16 %v3529, %v3529
      %v3538 = vpack.c.b16 %v3530, %v3530
      %v3539 = vpack.c.b16 %v3531, %v3531
      %v3540 = vpack.c.b16 %v3532, %v3532
      %v3542 = vshrl.u32 %v3533, 16
      %v3544 = vrot.slane %v3542, 7
      %v3545 = vshll.u32 %v3533, 16
      %v3547 = vor.u32 %v3544, %v3545
      %v3548 = vrot.slane %v3544, 4
      %v3550 = vshrl.u32 %v3534, 16
      %v3552 = vrot.slane %v3550, 7
      %v3553 = vshll.u32 %v3534, 16
      %v3555 = vor.u32 %v3552, %v3553
      %v3556 = vrot.slane %v3552, 4
      %v3558 = vshrl.u32 %v3535, 16
      %v3560 = vrot.slane %v3558, 7
      %v3561 = vshll.u32 %v3535, 16
      %v3563 = vor.u32 %v3560, %v3561
      %v3564 = vrot.slane %v3560, 4
      %v3566 = vshrl.u32 %v3536, 16
      %v3568 = vrot.slane %v3566, 7
      %v3569 = vshll.u32 %v3536, 16
      %v3571 = vor.u32 %v3568, %v3569
      %v3572 = vrot.slane %v3568, 4
      %v3574 = vshrl.u32 %v3537, 16
      %v3576 = vrot.slane %v3574, 7
      %v3577 = vshll.u32 %v3537, 16
      %v3579 = vor.u32 %v3576, %v3577
      %v3580 = vrot.slane %v3576, 4
      %v3582 = vshrl.u32 %v3538, 16
      %v3584 = vrot.slane %v3582, 7
      %v3585 = vshll.u32 %v3538, 16
      %v3587 = vor.u32 %v3584, %v3585
      %v3588 = vrot.slane %v3584, 4
      %v3590 = vshrl.u32 %v3539, 16
      %v3592 = vrot.slane %v3590, 7
      %v3593 = vshll.u32 %v3539, 16
      %v3595 = vor.u32 %v3592, %v3593
      %v3596 = vrot.slane %v3592, 4
      %v3598 = vshrl.u32 %v3540, 16
      %v3600 = vrot.slane %v3598, 7
      %v3601 = vshll.u32 %v3540, 16
      %v3603 = vor.u32 %v3600, %v3601
      %v3604 = vrot.slane %v3600, 4
      %v3621 = vld [vmem:[%s725] sm:$0xf]
      %v3622 = vsel %vm728, %v3547, %v3621
      %3623 = vst [vmem:[%s725] sm:$0xf] %v3622
      %v3624 = vld [vmem:[%s725 + $0x4] sm:$0x1]
      %v3625 = vsel %vm734, %v3548, %v3624
      %3626 = vst [vmem:[%s725 + $0x4] sm:$0x1] %v3625
      %v3627 = vld [vmem:[%s725 + $0x8] sm:$0xf]
      %v3628 = vsel %vm728, %v3555, %v3627
      %3629 = vst [vmem:[%s725 + $0x8] sm:$0xf] %v3628
      %v3630 = vld [vmem:[%s725 + $0xc] sm:$0x1]
      %v3631 = vsel %vm734, %v3556, %v3630
      %3632 = vst [vmem:[%s725 + $0xc] sm:$0x1] %v3631
      %v3633 = vld [vmem:[%s725 + $0x10] sm:$0xf]
      %v3634 = vsel %vm728, %v3563, %v3633
      %3635 = vst [vmem:[%s725 + $0x10] sm:$0xf] %v3634
      %v3636 = vld [vmem:[%s725 + $0x14] sm:$0x1]
      %v3637 = vsel %vm734, %v3564, %v3636
      %3638 = vst [vmem:[%s725 + $0x14] sm:$0x1] %v3637
      %v3639 = vld [vmem:[%s725 + $0x18] sm:$0xf]
      %v3640 = vsel %vm728, %v3571, %v3639
      %3641 = vst [vmem:[%s725 + $0x18] sm:$0xf] %v3640
      %v3642 = vld [vmem:[%s725 + $0x1c] sm:$0x1]
      %v3643 = vsel %vm734, %v3572, %v3642
      %3644 = vst [vmem:[%s725 + $0x1c] sm:$0x1] %v3643
      %v3645 = vld [vmem:[%s725 + $0x20] sm:$0xf]
      %v3646 = vsel %vm728, %v3579, %v3645
      %3647 = vst [vmem:[%s725 + $0x20] sm:$0xf] %v3646
      %v3648 = vld [vmem:[%s725 + $0x24] sm:$0x1]
      %v3649 = vsel %vm734, %v3580, %v3648
      %3650 = vst [vmem:[%s725 + $0x24] sm:$0x1] %v3649
      %v3651 = vld [vmem:[%s725 + $0x28] sm:$0xf]
      %v3652 = vsel %vm728, %v3587, %v3651
      %3653 = vst [vmem:[%s725 + $0x28] sm:$0xf] %v3652
      %v3654 = vld [vmem:[%s725 + $0x2c] sm:$0x1]
      %v3655 = vsel %vm734, %v3588, %v3654
      %3656 = vst [vmem:[%s725 + $0x2c] sm:$0x1] %v3655
      %v3657 = vld [vmem:[%s725 + $0x30] sm:$0xf]
      %v3658 = vsel %vm728, %v3595, %v3657
      %3659 = vst [vmem:[%s725 + $0x30] sm:$0xf] %v3658
      %v3660 = vld [vmem:[%s725 + $0x34] sm:$0x1]
      %v3661 = vsel %vm734, %v3596, %v3660
      %3662 = vst [vmem:[%s725 + $0x34] sm:$0x1] %v3661
      %v3663 = vld [vmem:[%s725 + $0x38] sm:$0xf]
      %v3664 = vsel %vm728, %v3603, %v3663
      %3665 = vst [vmem:[%s725 + $0x38] sm:$0xf] %v3664
      %v3666 = vld [vmem:[%s725 + $0x3c] sm:$0x1]
      %v3667 = vsel %vm734, %v3604, %v3666
      %3668 = vst [vmem:[%s725 + $0x3c] sm:$0x1] %v3667
      %v3669 = vld [vmem:[#allocation2] sm:$0xf]
      %v3670 = vld [vmem:[#allocation2 + $0x8] sm:$0xf]
      %v3671 = vld [vmem:[#allocation2 + $0x10] sm:$0xf]
      %v3672 = vld [vmem:[#allocation2 + $0x18] sm:$0xf]
      %v3673 = vld [vmem:[#allocation2 + $0x20] sm:$0xf]
      %v3674 = vld [vmem:[#allocation2 + $0x28] sm:$0xf]
      %v3675 = vld [vmem:[#allocation2 + $0x30] sm:$0xf]
      %v3676 = vld [vmem:[#allocation2 + $0x38] sm:$0xf]
      %v3677 = vld [vmem:[#allocation2 + $0x4] sm:$0x1]
      %v3678 = vld [vmem:[#allocation2 + $0xc] sm:$0x1]
      %v3679 = vld [vmem:[#allocation2 + $0x14] sm:$0x1]
      %v3680 = vld [vmem:[#allocation2 + $0x1c] sm:$0x1]
      %v3681 = vld [vmem:[#allocation2 + $0x24] sm:$0x1]
      %v3682 = vld [vmem:[#allocation2 + $0x2c] sm:$0x1]
      %v3683 = vld [vmem:[#allocation2 + $0x34] sm:$0x1]
      %v3684 = vld [vmem:[#allocation2 + $0x3c] sm:$0x1]
      %v3685 = vld [vmem:[#allocation2] sm:$0xe]
      %v3686 = vld [vmem:[#allocation2 + $0x8] sm:$0xe]
      %v3687 = vld [vmem:[#allocation2 + $0x10] sm:$0xe]
      %v3688 = vld [vmem:[#allocation2 + $0x18] sm:$0xe]
      %v3689 = vld [vmem:[#allocation2 + $0x20] sm:$0xe]
      %v3690 = vld [vmem:[#allocation2 + $0x28] sm:$0xe]
      %v3691 = vld [vmem:[#allocation2 + $0x30] sm:$0xe]
      %v3692 = vld [vmem:[#allocation2 + $0x38] sm:$0xe]
      %v3709 = vunpack.c.l.b16 %v3669
      %v3710 = vunpack.c.l.b16 %v3677
      %v3711 = vunpack.c.l.b16 %v3670
      %v3712 = vunpack.c.l.b16 %v3678
      %v3713 = vunpack.c.l.b16 %v3671
      %v3714 = vunpack.c.l.b16 %v3679
      %v3715 = vunpack.c.l.b16 %v3672
      %v3716 = vunpack.c.l.b16 %v3680
      %v3717 = vunpack.c.l.b16 %v3673
      %v3718 = vunpack.c.l.b16 %v3681
      %v3719 = vunpack.c.l.b16 %v3674
      %v3720 = vunpack.c.l.b16 %v3682
      %v3721 = vunpack.c.l.b16 %v3675
      %v3722 = vunpack.c.l.b16 %v3683
      %v3723 = vunpack.c.l.b16 %v3676
      %v3724 = vunpack.c.l.b16 %v3684
      %v3725 = vpack.c.b16 %v3710, %v3709
      %v3726 = vpack.c.b16 %v3712, %v3711
      %v3727 = vpack.c.b16 %v3714, %v3713
      %v3728 = vpack.c.b16 %v3716, %v3715
      %v3729 = vpack.c.b16 %v3718, %v3717
      %v3730 = vpack.c.b16 %v3720, %v3719
      %v3731 = vpack.c.b16 %v3722, %v3721
      %v3732 = vpack.c.b16 %v3724, %v3723
      %v3734 = vshrl.u32 %v3725, 16
      %v3736 = vshll.u32 %v3725, 16
      %v3738 = vrot.slane %v3736, 1
      %v3739 = vor.u32 %v3734, %v3738
      %v3741 = vshrl.u32 %v3726, 16
      %v3743 = vshll.u32 %v3726, 16
      %v3745 = vrot.slane %v3743, 1
      %v3746 = vor.u32 %v3741, %v3745
      %v3748 = vshrl.u32 %v3727, 16
      %v3750 = vshll.u32 %v3727, 16
      %v3752 = vrot.slane %v3750, 1
      %v3753 = vor.u32 %v3748, %v3752
      %v3755 = vshrl.u32 %v3728, 16
      %v3757 = vshll.u32 %v3728, 16
      %v3759 = vrot.slane %v3757, 1
      %v3760 = vor.u32 %v3755, %v3759
      %v3762 = vshrl.u32 %v3729, 16
      %v3764 = vshll.u32 %v3729, 16
      %v3766 = vrot.slane %v3764, 1
      %v3767 = vor.u32 %v3762, %v3766
      %v3769 = vshrl.u32 %v3730, 16
      %v3771 = vshll.u32 %v3730, 16
      %v3773 = vrot.slane %v3771, 1
      %v3774 = vor.u32 %v3769, %v3773
      %v3776 = vshrl.u32 %v3731, 16
      %v3778 = vshll.u32 %v3731, 16
      %v3780 = vrot.slane %v3778, 1
      %v3781 = vor.u32 %v3776, %v3780
      %v3783 = vshrl.u32 %v3732, 16
      %v3785 = vshll.u32 %v3732, 16
      %v3787 = vrot.slane %v3785, 1
      %v3788 = vor.u32 %v3783, %v3787
      %3789 = vrot.lane.b32.xlu0 %v3739, 64
      %v3790 = vpop.permute.xlu0 %3789
      %3791 = vrot.lane.b32.xlu0 %v3746, 64
      %v3792 = vpop.permute.xlu0 %3791
      %3793 = vrot.lane.b32.xlu0 %v3753, 64
      %v3794 = vpop.permute.xlu0 %3793
      %3795 = vrot.lane.b32.xlu0 %v3760, 64
      %v3796 = vpop.permute.xlu0 %3795
      %3797 = vrot.lane.b32.xlu0 %v3767, 64
      %v3798 = vpop.permute.xlu0 %3797
      %3799 = vrot.lane.b32.xlu0 %v3774, 64
      %v3800 = vpop.permute.xlu0 %3799
      %3801 = vrot.lane.b32.xlu0 %v3781, 64
      %v3802 = vpop.permute.xlu0 %3801
      %3803 = vrot.lane.b32.xlu0 %v3788, 64
      %v3804 = vpop.permute.xlu0 %3803
      %v3813 = vunpack.c.l.b16 %v3685
      %v3814 = vunpack.c.l.b16 %v3686
      %v3815 = vunpack.c.l.b16 %v3687
      %v3816 = vunpack.c.l.b16 %v3688
      %v3817 = vunpack.c.l.b16 %v3689
      %v3818 = vunpack.c.l.b16 %v3690
      %v3819 = vunpack.c.l.b16 %v3691
      %v3820 = vunpack.c.l.b16 %v3692
      %v3821 = vpack.c.b16 %v3710, %v3813
      %v3822 = vpack.c.b16 %v3712, %v3814
      %v3823 = vpack.c.b16 %v3714, %v3815
      %v3824 = vpack.c.b16 %v3716, %v3816
      %v3825 = vpack.c.b16 %v3718, %v3817
      %v3826 = vpack.c.b16 %v3720, %v3818
      %v3827 = vpack.c.b16 %v3722, %v3819
      %v3828 = vpack.c.b16 %v3724, %v3820
      %v3829 = vrot.slane %v3821, 1
      %v3830 = vrot.slane %v3822, 1
      %v3831 = vrot.slane %v3823, 1
      %v3832 = vrot.slane %v3824, 1
      %v3833 = vrot.slane %v3825, 1
      %v3834 = vrot.slane %v3826, 1
      %v3835 = vrot.slane %v3827, 1
      %v3836 = vrot.slane %v3828, 1
      %v3839 = vsel %vm948, %v3669, %v3790
      %v3842 = vsel %vm948, %v3670, %v3792
      %v3845 = vsel %vm948, %v3671, %v3794
      %v3848 = vsel %vm948, %v3672, %v3796
      %v3851 = vsel %vm948, %v3673, %v3798
      %v3854 = vsel %vm948, %v3674, %v3800
      %v3857 = vsel %vm948, %v3675, %v3802
      %v3860 = vsel %vm948, %v3676, %v3804
      %v3869 = vunpack.c.l.b16 %v3839
      %v3870 = vunpack.c.l.b16 %v3829
      %v3871 = vunpack.c.l.b16 %v3842
      %v3872 = vunpack.c.l.b16 %v3830
      %v3873 = vunpack.c.l.b16 %v3845
      %v3874 = vunpack.c.l.b16 %v3831
      %v3875 = vunpack.c.l.b16 %v3848
      %v3876 = vunpack.c.l.b16 %v3832
      %v3877 = vunpack.c.l.b16 %v3851
      %v3878 = vunpack.c.l.b16 %v3833
      %v3879 = vunpack.c.l.b16 %v3854
      %v3880 = vunpack.c.l.b16 %v3834
      %v3881 = vunpack.c.l.b16 %v3857
      %v3882 = vunpack.c.l.b16 %v3835
      %v3883 = vunpack.c.l.b16 %v3860
      %v3884 = vunpack.c.l.b16 %v3836
      %s3885 = scalar_lea.vmem %s5, 576
      %v3886 = vld [vmem:[%s3885] sm:$0xf]
      %v3887 = vld [vmem:[%s3885 + $0x4] sm:$0xf]
      %v3888 = vld [vmem:[%s3885 + $0x8] sm:$0xf]
      %v3889 = vld [vmem:[%s3885 + $0xc] sm:$0xf]
      %v3890 = vld [vmem:[%s3885 + $0x10] sm:$0xf]
      %v3891 = vld [vmem:[%s3885 + $0x14] sm:$0xf]
      %v3892 = vld [vmem:[%s3885 + $0x18] sm:$0xf]
      %v3893 = vld [vmem:[%s3885 + $0x1c] sm:$0xf]
      %v3894 = vld [vmem:[%s3885 + $0x20] sm:$0xf]
      %v3895 = vld [vmem:[%s3885 + $0x24] sm:$0xf]
      %v3896 = vld [vmem:[%s3885 + $0x28] sm:$0xf]
      %v3897 = vld [vmem:[%s3885 + $0x2c] sm:$0xf]
      %v3898 = vld [vmem:[%s3885 + $0x30] sm:$0xf]
      %v3899 = vld [vmem:[%s3885 + $0x34] sm:$0xf]
      %v3900 = vld [vmem:[%s3885 + $0x38] sm:$0xf]
      %v3901 = vld [vmem:[%s3885 + $0x3c] sm:$0xf]
      %v3902 = vld [vmem:[%s3885 + $0x40] sm:$0xf]
      %v3903 = vld [vmem:[%s3885 + $0x44] sm:$0xf]
      %v3904 = vld [vmem:[%s3885 + $0x48] sm:$0xf]
      %v3905 = vld [vmem:[%s3885 + $0x4c] sm:$0xf]
      %v3906 = vld [vmem:[%s3885 + $0x50] sm:$0xf]
      %v3907 = vld [vmem:[%s3885 + $0x54] sm:$0xf]
      %v3908 = vld [vmem:[%s3885 + $0x58] sm:$0xf]
      %v3909 = vld [vmem:[%s3885 + $0x5c] sm:$0xf]
      %v3910 = vld [vmem:[%s725] sm:$0xf]
      %v3911 = vld [vmem:[%s725 + $0x8] sm:$0xf]
      %v3912 = vld [vmem:[%s725 + $0x10] sm:$0xf]
      %v3913 = vld [vmem:[%s725 + $0x18] sm:$0xf]
      %v3914 = vld [vmem:[%s725 + $0x20] sm:$0xf]
      %v3915 = vld [vmem:[%s725 + $0x28] sm:$0xf]
      %v3916 = vld [vmem:[%s725 + $0x30] sm:$0xf]
      %v3917 = vld [vmem:[%s725 + $0x38] sm:$0xf]
      %v3918 = vld [vmem:[%s725 + $0x4] sm:$0x1]
      %v3919 = vld [vmem:[%s725 + $0xc] sm:$0x1]
      %v3920 = vld [vmem:[%s725 + $0x14] sm:$0x1]
      %v3921 = vld [vmem:[%s725 + $0x1c] sm:$0x1]
      %v3922 = vld [vmem:[%s725 + $0x24] sm:$0x1]
      %v3923 = vld [vmem:[%s725 + $0x2c] sm:$0x1]
      %v3924 = vld [vmem:[%s725 + $0x34] sm:$0x1]
      %v3925 = vld [vmem:[%s725 + $0x3c] sm:$0x1]
      %v3926 = vld [vmem:[%s725] sm:$0xe]
      %v3927 = vld [vmem:[%s725 + $0x8] sm:$0xe]
      %v3928 = vld [vmem:[%s725 + $0x10] sm:$0xe]
      %v3929 = vld [vmem:[%s725 + $0x18] sm:$0xe]
      %v3930 = vld [vmem:[%s725 + $0x20] sm:$0xe]
      %v3931 = vld [vmem:[%s725 + $0x28] sm:$0xe]
      %v3932 = vld [vmem:[%s725 + $0x30] sm:$0xe]
      %v3933 = vld [vmem:[%s725 + $0x38] sm:$0xe]
      %v3950 = vunpack.c.l.b16 %v3910
      %v3951 = vunpack.c.l.b16 %v3918
      %v3952 = vunpack.c.l.b16 %v3911
      %v3953 = vunpack.c.l.b16 %v3919
      %v3954 = vunpack.c.l.b16 %v3912
      %v3955 = vunpack.c.l.b16 %v3920
      %v3956 = vunpack.c.l.b16 %v3913
      %v3957 = vunpack.c.l.b16 %v3921
      %v3958 = vunpack.c.l.b16 %v3914
      %v3959 = vunpack.c.l.b16 %v3922
      %v3960 = vunpack.c.l.b16 %v3915
      %v3961 = vunpack.c.l.b16 %v3923
      %v3962 = vunpack.c.l.b16 %v3916
      %v3963 = vunpack.c.l.b16 %v3924
      %v3964 = vunpack.c.l.b16 %v3917
      %v3965 = vunpack.c.l.b16 %v3925
      %v3966 = vpack.c.b16 %v3951, %v3950
      %v3967 = vpack.c.b16 %v3953, %v3952
      %v3968 = vpack.c.b16 %v3955, %v3954
      %v3969 = vpack.c.b16 %v3957, %v3956
      %v3970 = vpack.c.b16 %v3959, %v3958
      %v3971 = vpack.c.b16 %v3961, %v3960
      %v3972 = vpack.c.b16 %v3963, %v3962
      %v3973 = vpack.c.b16 %v3965, %v3964
      %v3975 = vshrl.u32 %v3966, 16
      %v3977 = vshll.u32 %v3966, 16
      %v3979 = vrot.slane %v3977, 1
      %v3980 = vor.u32 %v3975, %v3979
      %v3982 = vshrl.u32 %v3967, 16
      %v3984 = vshll.u32 %v3967, 16
      %v3986 = vrot.slane %v3984, 1
      %v3987 = vor.u32 %v3982, %v3986
      %v3989 = vshrl.u32 %v3968, 16
      %v3991 = vshll.u32 %v3968, 16
      %v3993 = vrot.slane %v3991, 1
      %v3994 = vor.u32 %v3989, %v3993
      %v3996 = vshrl.u32 %v3969, 16
      %v3998 = vshll.u32 %v3969, 16
      %v4000 = vrot.slane %v3998, 1
      %v4001 = vor.u32 %v3996, %v4000
      %v4003 = vshrl.u32 %v3970, 16
      %v4005 = vshll.u32 %v3970, 16
      %v4007 = vrot.slane %v4005, 1
      %v4008 = vor.u32 %v4003, %v4007
      %v4010 = vshrl.u32 %v3971, 16
      %v4012 = vshll.u32 %v3971, 16
      %v4014 = vrot.slane %v4012, 1
      %v4015 = vor.u32 %v4010, %v4014
      %v4017 = vshrl.u32 %v3972, 16
      %v4019 = vshll.u32 %v3972, 16
      %v4021 = vrot.slane %v4019, 1
      %v4022 = vor.u32 %v4017, %v4021
      %v4024 = vshrl.u32 %v3973, 16
      %v4026 = vshll.u32 %v3973, 16
      %v4028 = vrot.slane %v4026, 1
      %v4029 = vor.u32 %v4024, %v4028
      %4030 = vrot.lane.b32.xlu0 %v3980, 64
      %v4031 = vpop.permute.xlu0 %4030
      %4032 = vrot.lane.b32.xlu0 %v3987, 64
      %v4033 = vpop.permute.xlu0 %4032
      %4034 = vrot.lane.b32.xlu0 %v3994, 64
      %v4035 = vpop.permute.xlu0 %4034
      %4036 = vrot.lane.b32.xlu0 %v4001, 64
      %v4037 = vpop.permute.xlu0 %4036
      %4038 = vrot.lane.b32.xlu0 %v4008, 64
      %v4039 = vpop.permute.xlu0 %4038
      %4040 = vrot.lane.b32.xlu0 %v4015, 64
      %v4041 = vpop.permute.xlu0 %4040
      %4042 = vrot.lane.b32.xlu0 %v4022, 64
      %v4043 = vpop.permute.xlu0 %4042
      %4044 = vrot.lane.b32.xlu0 %v4029, 64
      %v4045 = vpop.permute.xlu0 %4044
      %v4054 = vunpack.c.l.b16 %v3926
      %v4055 = vunpack.c.l.b16 %v3927
      %v4056 = vunpack.c.l.b16 %v3928
      %v4057 = vunpack.c.l.b16 %v3929
      %v4058 = vunpack.c.l.b16 %v3930
      %v4059 = vunpack.c.l.b16 %v3931
      %v4060 = vunpack.c.l.b16 %v3932
      %v4061 = vunpack.c.l.b16 %v3933
      %v4062 = vpack.c.b16 %v3951, %v4054
      %v4063 = vpack.c.b16 %v3953, %v4055
      %v4064 = vpack.c.b16 %v3955, %v4056
      %v4065 = vpack.c.b16 %v3957, %v4057
      %v4066 = vpack.c.b16 %v3959, %v4058
      %v4067 = vpack.c.b16 %v3961, %v4059
      %v4068 = vpack.c.b16 %v3963, %v4060
      %v4069 = vpack.c.b16 %v3965, %v4061
      %v4070 = vrot.slane %v4062, 1
      %v4071 = vrot.slane %v4063, 1
      %v4072 = vrot.slane %v4064, 1
      %v4073 = vrot.slane %v4065, 1
      %v4074 = vrot.slane %v4066, 1
      %v4075 = vrot.slane %v4067, 1
      %v4076 = vrot.slane %v4068, 1
      %v4077 = vrot.slane %v4069, 1
      %v4080 = vsel %vm948, %v3910, %v4031
      %v4083 = vsel %vm948, %v3911, %v4033
      %v4086 = vsel %vm948, %v3912, %v4035
      %v4089 = vsel %vm948, %v3913, %v4037
      %v4092 = vsel %vm948, %v3914, %v4039
      %v4095 = vsel %vm948, %v3915, %v4041
      %v4098 = vsel %vm948, %v3916, %v4043
      %v4101 = vsel %vm948, %v3917, %v4045
      %v4110 = vunpack.c.l.b16 %v4080
      %v4111 = vunpack.c.l.b16 %v4070
      %v4112 = vunpack.c.l.b16 %v4083
      %v4113 = vunpack.c.l.b16 %v4071
      %v4114 = vunpack.c.l.b16 %v4086
      %v4115 = vunpack.c.l.b16 %v4072
      %v4116 = vunpack.c.l.b16 %v4089
      %v4117 = vunpack.c.l.b16 %v4073
      %v4118 = vunpack.c.l.b16 %v4092
      %v4119 = vunpack.c.l.b16 %v4074
      %v4120 = vunpack.c.l.b16 %v4095
      %v4121 = vunpack.c.l.b16 %v4075
      %v4122 = vunpack.c.l.b16 %v4098
      %v4123 = vunpack.c.l.b16 %v4076
      %v4124 = vunpack.c.l.b16 %v4101
      %v4125 = vunpack.c.l.b16 %v4077
      %s4126 = scalar_lea.vmem %s5, 672
      %v4127 = vld [vmem:[%s4126] sm:$0xf]
      %v4128 = vld [vmem:[%s4126 + $0x4] sm:$0xf]
      %v4129 = vld [vmem:[%s4126 + $0x8] sm:$0xf]
      %v4130 = vld [vmem:[%s4126 + $0xc] sm:$0xf]
      %v4131 = vld [vmem:[%s4126 + $0x10] sm:$0xf]
      %v4132 = vld [vmem:[%s4126 + $0x14] sm:$0xf]
      %v4133 = vld [vmem:[%s4126 + $0x18] sm:$0xf]
      %v4134 = vld [vmem:[%s4126 + $0x1c] sm:$0xf]
      %v4135 = vld [vmem:[%s4126 + $0x20] sm:$0xf]
      %v4136 = vld [vmem:[%s4126 + $0x24] sm:$0xf]
      %v4137 = vld [vmem:[%s4126 + $0x28] sm:$0xf]
      %v4138 = vld [vmem:[%s4126 + $0x2c] sm:$0xf]
      %v4139 = vld [vmem:[%s4126 + $0x30] sm:$0xf]
      %v4140 = vld [vmem:[%s4126 + $0x34] sm:$0xf]
      %v4141 = vld [vmem:[%s4126 + $0x38] sm:$0xf]
      %v4142 = vld [vmem:[%s4126 + $0x3c] sm:$0xf]
      %v4143 = vld [vmem:[%s4126 + $0x40] sm:$0xf]
      %v4144 = vld [vmem:[%s4126 + $0x44] sm:$0xf]
      %v4145 = vld [vmem:[%s4126 + $0x48] sm:$0xf]
      %v4146 = vld [vmem:[%s4126 + $0x4c] sm:$0xf]
      %v4147 = vld [vmem:[%s4126 + $0x50] sm:$0xf]
      %v4148 = vld [vmem:[%s4126 + $0x54] sm:$0xf]
      %v4149 = vld [vmem:[%s4126 + $0x58] sm:$0xf]
      %v4150 = vld [vmem:[%s4126 + $0x5c] sm:$0xf]
      %v4151 = vpack.c.b16 %v4112, %v4110
      %v4152 = vpack.c.b16 %v4113, %v4111
      %v4153 = vpack.c.b16 %v4116, %v4114
      %v4154 = vpack.c.b16 %v4117, %v4115
      %v4155 = vpack.c.b16 %v4120, %v4118
      %v4156 = vpack.c.b16 %v4121, %v4119
      %v4157 = vpack.c.b16 %v4124, %v4122
      %v4158 = vpack.c.b16 %v4125, %v4123
      %v4187 = vunpack.c.l.b16 %v4127
      %v4188 = vunpack.c.l.b16 %v4128
      %v4189 = vunpack.c.l.b16 %v4129
      %v4190 = vunpack.c.l.b16 %v4130
      %v4191 = vunpack.c.l.b16 %v4131
      %v4192 = vunpack.c.l.b16 %v4132
      %v4193 = vunpack.c.l.b16 %v4133
      %v4194 = vunpack.c.l.b16 %v4134
      %v4195 = vunpack.c.l.b16 %v4135
      %v4196 = vunpack.c.l.b16 %v4136
      %v4197 = vunpack.c.l.b16 %v4137
      %v4198 = vunpack.c.l.b16 %v4138
      %v4199 = vunpack.c.l.b16 %v4139
      %v4200 = vunpack.c.l.b16 %v4140
      %v4201 = vunpack.c.l.b16 %v4141
      %v4202 = vunpack.c.l.b16 %v4142
      %v4203 = vunpack.c.l.b16 %v4143
      %v4204 = vunpack.c.l.b16 %v4144
      %v4205 = vunpack.c.l.b16 %v4145
      %v4206 = vunpack.c.l.b16 %v4146
      %v4207 = vunpack.c.l.b16 %v4147
      %v4208 = vunpack.c.l.b16 %v4148
      %v4209 = vunpack.c.l.b16 %v4149
      %v4210 = vunpack.c.l.b16 %v4150
      %v4211 = vpack.c.b16 %v4188, %v4187
      %v4212 = vpack.c.b16 %v4190, %v4189
      %v4213 = vpack.c.b16 %v4192, %v4191
      %v4214 = vpack.c.b16 %v4194, %v4193
      %v4215 = vpack.c.b16 %v4196, %v4195
      %v4216 = vpack.c.b16 %v4198, %v4197
      %v4217 = vpack.c.b16 %v4200, %v4199
      %v4218 = vpack.c.b16 %v4202, %v4201
      %v4219 = vpack.c.b16 %v4204, %v4203
      %v4220 = vpack.c.b16 %v4206, %v4205
      %v4221 = vpack.c.b16 %v4208, %v4207
      %v4222 = vpack.c.b16 %v4210, %v4209
      %v4236 = vsel %vm948, %v4152, 0
      %v4239 = vsel %vm948, %v4154, 0
      %v4242 = vsel %vm948, %v4156, 0
      %v4245 = vsel %vm948, %v4158, 0
      %4247 = vmatprep.subr.bf16.mxu0 0
      %4248 = vmatpush1.bf16.msra.mxu0 %v4218
      %4249 = vmatprep.subr.bf16.mxu0 0
      %4250 = vmatpush1.bf16.msra.mxu0 %v4217
      %4251 = vmatprep.subr.bf16.mxu0 0
      %4252 = vmatpush1.bf16.msra.mxu0 %v4216
      %4253 = vmatprep.subr.bf16.mxu0 0
      %4254 = vmatpush1.bf16.msra.mxu0 %v4215
      %4255 = vmatprep.subr.bf16.mxu0 0
      %4256 = vmatpush1.bf16.msra.mxu0 %v4214
      %4257 = vmatprep.subr.bf16.mxu0 0
      %4258 = vmatpush1.bf16.msra.mxu0 %v4213
      %4259 = vmatprep.subr.bf16.mxu0 0
      %4260 = vmatpush1.bf16.msra.mxu0 %v4212
      %4261 = vmatprep.subr.bf16.mxu0 0
      %4262 = vmatpush1.bf16.msra.mxu0 %v4211
      %4263 = vmatprep.subr.bf16.mxu0 0
      %4264 = vmatpush2.bf16.msra.mxu0 0
      %4265 = vmatprep.subr.bf16.mxu0 0
      %4266 = vmatpush2.bf16.msra.mxu0 0
      %4267 = vmatprep.subr.bf16.mxu0 0
      %4268 = vmatpush2.bf16.msra.mxu0 0
      %4269 = vmatprep.subr.bf16.mxu0 0
      %4270 = vmatpush2.bf16.msra.mxu0 0
      %4271 = vmatprep.subr.bf16.mxu0 0
      %4272 = vmatpush2.bf16.msra.mxu0 %v4222
      %4273 = vmatprep.subr.bf16.mxu0 0
      %4274 = vmatpush2.bf16.msra.mxu0 %v4221
      %4275 = vmatprep.subr.bf16.mxu0 0
      %4276 = vmatpush2.bf16.msra.mxu0 %v4220
      %4277 = vmatprep.subr.bf16.mxu0 0
      %4278 = vmatpush2.bf16.msra.mxu0 %v4219
      %4279 = vmatprep.mubr.bf16.mxu0 %v4236
      %4280 = vmatmul.mubr.bf16.gmra.mxu0 %v4151
      %v4281 = vpop.f32.mrf.mxu0
      %v4282 = vadd.f32 0.0, %v4281
      %v4283 = vpop.f32.mrf.mxu0
      %v4284 = vpop.f32.mrf.mxu0
      %v4285 = vadd.f32 0.0, %v4284
      %v4286 = vpop.f32.mrf.mxu0
      %4287 = vmatprep.mubr.bf16.mxu0 %v4239
      %4288 = vmatmul.mubr.bf16.gmra.mxu0 %v4153
      %v4289 = vpop.f32.mrf.mxu0
      %v4290 = vadd.f32 0.0, %v4289
      %v4291 = vpop.f32.mrf.mxu0
      %v4292 = vpop.f32.mrf.mxu0
      %v4293 = vadd.f32 0.0, %v4292
      %v4294 = vpop.f32.mrf.mxu0
      %4295 = vmatprep.mubr.bf16.mxu0 %v4242
      %4296 = vmatmul.mubr.bf16.gmra.mxu0 %v4155
      %v4297 = vpop.f32.mrf.mxu0
      %v4298 = vadd.f32 0.0, %v4297
      %v4299 = vpop.f32.mrf.mxu0
      %v4300 = vpop.f32.mrf.mxu0
      %v4301 = vadd.f32 0.0, %v4300
      %v4302 = vpop.f32.mrf.mxu0
      %4303 = vmatprep.mubr.bf16.mxu0 %v4245
      %4304 = vmatmul.mubr.bf16.gmra.mxu0 %v4157
      %v4305 = vpop.f32.mrf.mxu0
      %v4306 = vadd.f32 0.0, %v4305
      %v4307 = vpop.f32.mrf.mxu0
      %v4308 = vpop.f32.mrf.mxu0
      %v4309 = vadd.f32 0.0, %v4308
      %v4310 = vpop.f32.mrf.mxu0
      %4311 = vdwg.mxu0
      %v4312 = vpack.c.b16 %v3871, %v3869
      %v4313 = vpack.c.b16 %v3872, %v3870
      %v4314 = vpack.c.b16 %v3875, %v3873
      %v4315 = vpack.c.b16 %v3876, %v3874
      %v4316 = vpack.c.b16 %v3879, %v3877
      %v4317 = vpack.c.b16 %v3880, %v3878
      %v4318 = vpack.c.b16 %v3883, %v3881
      %v4319 = vpack.c.b16 %v3884, %v3882
      %v4348 = vunpack.c.l.b16 %v3886
      %v4349 = vunpack.c.l.b16 %v3887
      %v4350 = vunpack.c.l.b16 %v3888
      %v4351 = vunpack.c.l.b16 %v3889
      %v4352 = vunpack.c.l.b16 %v3890
      %v4353 = vunpack.c.l.b16 %v3891
      %v4354 = vunpack.c.l.b16 %v3892
      %v4355 = vunpack.c.l.b16 %v3893
      %v4356 = vunpack.c.l.b16 %v3894
      %v4357 = vunpack.c.l.b16 %v3895
      %v4358 = vunpack.c.l.b16 %v3896
      %v4359 = vunpack.c.l.b16 %v3897
      %v4360 = vunpack.c.l.b16 %v3898
      %v4361 = vunpack.c.l.b16 %v3899
      %v4362 = vunpack.c.l.b16 %v3900
      %v4363 = vunpack.c.l.b16 %v3901
      %v4364 = vunpack.c.l.b16 %v3902
      %v4365 = vunpack.c.l.b16 %v3903
      %v4366 = vunpack.c.l.b16 %v3904
      %v4367 = vunpack.c.l.b16 %v3905
      %v4368 = vunpack.c.l.b16 %v3906
      %v4369 = vunpack.c.l.b16 %v3907
      %v4370 = vunpack.c.l.b16 %v3908
      %v4371 = vunpack.c.l.b16 %v3909
      %v4372 = vpack.c.b16 %v4349, %v4348
      %v4373 = vpack.c.b16 %v4351, %v4350
      %v4374 = vpack.c.b16 %v4353, %v4352
      %v4375 = vpack.c.b16 %v4355, %v4354
      %v4376 = vpack.c.b16 %v4357, %v4356
      %v4377 = vpack.c.b16 %v4359, %v4358
      %v4378 = vpack.c.b16 %v4361, %v4360
      %v4379 = vpack.c.b16 %v4363, %v4362
      %v4380 = vpack.c.b16 %v4365, %v4364
      %v4381 = vpack.c.b16 %v4367, %v4366
      %v4382 = vpack.c.b16 %v4369, %v4368
      %v4383 = vpack.c.b16 %v4371, %v4370
      %v4397 = vsel %vm948, %v4313, 0
      %v4400 = vsel %vm948, %v4315, 0
      %v4403 = vsel %vm948, %v4317, 0
      %v4406 = vsel %vm948, %v4319, 0
      %4408 = vmatprep.subr.bf16.mxu0 0
      %4409 = vmatpush1.bf16.msra.mxu0 %v4379
      %4410 = vmatprep.subr.bf16.mxu0 0
      %4411 = vmatpush1.bf16.msra.mxu0 %v4378
      %4412 = vmatprep.subr.bf16.mxu0 0
      %4413 = vmatpush1.bf16.msra.mxu0 %v4377
      %4414 = vmatprep.subr.bf16.mxu0 0
      %4415 = vmatpush1.bf16.msra.mxu0 %v4376
      %4416 = vmatprep.subr.bf16.mxu0 0
      %4417 = vmatpush1.bf16.msra.mxu0 %v4375
      %4418 = vmatprep.subr.bf16.mxu0 0
      %4419 = vmatpush1.bf16.msra.mxu0 %v4374
      %4420 = vmatprep.subr.bf16.mxu0 0
      %4421 = vmatpush1.bf16.msra.mxu0 %v4373
      %4422 = vmatprep.subr.bf16.mxu0 0
      %4423 = vmatpush1.bf16.msra.mxu0 %v4372
      %4424 = vmatprep.subr.bf16.mxu0 0
      %4425 = vmatpush2.bf16.msra.mxu0 0
      %4426 = vmatprep.subr.bf16.mxu0 0
      %4427 = vmatpush2.bf16.msra.mxu0 0
      %4428 = vmatprep.subr.bf16.mxu0 0
      %4429 = vmatpush2.bf16.msra.mxu0 0
      %4430 = vmatprep.subr.bf16.mxu0 0
      %4431 = vmatpush2.bf16.msra.mxu0 0
      %4432 = vmatprep.subr.bf16.mxu0 0
      %4433 = vmatpush2.bf16.msra.mxu0 %v4383
      %4434 = vmatprep.subr.bf16.mxu0 0
      %4435 = vmatpush2.bf16.msra.mxu0 %v4382
      %4436 = vmatprep.subr.bf16.mxu0 0
      %4437 = vmatpush2.bf16.msra.mxu0 %v4381
      %4438 = vmatprep.subr.bf16.mxu0 0
      %4439 = vmatpush2.bf16.msra.mxu0 %v4380
      %4440 = vmatprep.mubr.bf16.mxu0 %v4397
      %4441 = vmatmul.mubr.bf16.gmra.mxu0 %v4312
      %v4442 = vpop.f32.mrf.mxu0
      %v4443 = vadd.f32 %v4282, %v4442
      %v4444 = vpop.f32.mrf.mxu0
      %v4445 = vpop.f32.mrf.mxu0
      %v4446 = vadd.f32 %v4285, %v4445
      %v4447 = vpop.f32.mrf.mxu0
      %4448 = vmatprep.mubr.bf16.mxu0 %v4400
      %4449 = vmatmul.mubr.bf16.gmra.mxu0 %v4314
      %v4450 = vpop.f32.mrf.mxu0
      %v4451 = vadd.f32 %v4290, %v4450
      %v4452 = vpop.f32.mrf.mxu0
      %v4453 = vpop.f32.mrf.mxu0
      %v4454 = vadd.f32 %v4293, %v4453
      %v4455 = vpop.f32.mrf.mxu0
      %4456 = vmatprep.mubr.bf16.mxu0 %v4403
      %4457 = vmatmul.mubr.bf16.gmra.mxu0 %v4316
      %v4458 = vpop.f32.mrf.mxu0
      %v4459 = vadd.f32 %v4298, %v4458
      %v4460 = vpop.f32.mrf.mxu0
      %v4461 = vpop.f32.mrf.mxu0
      %v4462 = vadd.f32 %v4301, %v4461
      %v4463 = vpop.f32.mrf.mxu0
      %4464 = vmatprep.mubr.bf16.mxu0 %v4406
      %4465 = vmatmul.mubr.bf16.gmra.mxu0 %v4318
      %v4466 = vpop.f32.mrf.mxu0
      %v4467 = vadd.f32 %v4306, %v4466
      %v4468 = vpop.f32.mrf.mxu0
      %v4469 = vpop.f32.mrf.mxu0
      %v4470 = vadd.f32 %v4309, %v4469
      %v4471 = vpop.f32.mrf.mxu0
      %4472 = vdwg.mxu0
      %v4473 = vld [vmem:[%s1584] sm:$0xf]
      %v4474 = vld [vmem:[%s1584 + $0x8] sm:$0xf]
      %v4475 = vld [vmem:[%s1584 + $0x10] sm:$0xf]
      %v4476 = vld [vmem:[%s1584 + $0x18] sm:$0xf]
      %v4477 = vld [vmem:[%s1584 + $0x20] sm:$0xf]
      %v4478 = vld [vmem:[%s1584 + $0x28] sm:$0xf]
      %v4479 = vld [vmem:[%s1584 + $0x30] sm:$0xf]
      %v4480 = vld [vmem:[%s1584 + $0x38] sm:$0xf]
      %v4481 = vld [vmem:[%s1584 + $0x4] sm:$0x1]
      %v4482 = vld [vmem:[%s1584 + $0xc] sm:$0x1]
      %v4483 = vld [vmem:[%s1584 + $0x14] sm:$0x1]
      %v4484 = vld [vmem:[%s1584 + $0x1c] sm:$0x1]
      %v4485 = vld [vmem:[%s1584 + $0x24] sm:$0x1]
      %v4486 = vld [vmem:[%s1584 + $0x2c] sm:$0x1]
      %v4487 = vld [vmem:[%s1584 + $0x34] sm:$0x1]
      %v4488 = vld [vmem:[%s1584 + $0x3c] sm:$0x1]
      %v4489 = vld [vmem:[%s1584] sm:$0xe]
      %v4490 = vld [vmem:[%s1584 + $0x8] sm:$0xe]
      %v4491 = vld [vmem:[%s1584 + $0x10] sm:$0xe]
      %v4492 = vld [vmem:[%s1584 + $0x18] sm:$0xe]
      %v4493 = vld [vmem:[%s1584 + $0x20] sm:$0xe]
      %v4494 = vld [vmem:[%s1584 + $0x28] sm:$0xe]
      %v4495 = vld [vmem:[%s1584 + $0x30] sm:$0xe]
      %v4496 = vld [vmem:[%s1584 + $0x38] sm:$0xe]
      %v4513 = vunpack.c.l.b16 %v4473
      %v4514 = vunpack.c.l.b16 %v4481
      %v4515 = vunpack.c.l.b16 %v4474
      %v4516 = vunpack.c.l.b16 %v4482
      %v4517 = vunpack.c.l.b16 %v4475
      %v4518 = vunpack.c.l.b16 %v4483
      %v4519 = vunpack.c.l.b16 %v4476
      %v4520 = vunpack.c.l.b16 %v4484
      %v4521 = vunpack.c.l.b16 %v4477
      %v4522 = vunpack.c.l.b16 %v4485
      %v4523 = vunpack.c.l.b16 %v4478
      %v4524 = vunpack.c.l.b16 %v4486
      %v4525 = vunpack.c.l.b16 %v4479
      %v4526 = vunpack.c.l.b16 %v4487
      %v4527 = vunpack.c.l.b16 %v4480
      %v4528 = vunpack.c.l.b16 %v4488
      %v4529 = vpack.c.b16 %v4514, %v4513
      %v4530 = vpack.c.b16 %v4516, %v4515
      %v4531 = vpack.c.b16 %v4518, %v4517
      %v4532 = vpack.c.b16 %v4520, %v4519
      %v4533 = vpack.c.b16 %v4522, %v4521
      %v4534 = vpack.c.b16 %v4524, %v4523
      %v4535 = vpack.c.b16 %v4526, %v4525
      %v4536 = vpack.c.b16 %v4528, %v4527
      %v4538 = vshrl.u32 %v4529, 16
      %v4540 = vshll.u32 %v4529, 16
      %v4542 = vrot.slane %v4540, 1
      %v4543 = vor.u32 %v4538, %v4542
      %v4545 = vshrl.u32 %v4530, 16
      %v4547 = vshll.u32 %v4530, 16
      %v4549 = vrot.slane %v4547, 1
      %v4550 = vor.u32 %v4545, %v4549
      %v4552 = vshrl.u32 %v4531, 16
      %v4554 = vshll.u32 %v4531, 16
      %v4556 = vrot.slane %v4554, 1
      %v4557 = vor.u32 %v4552, %v4556
      %v4559 = vshrl.u32 %v4532, 16
      %v4561 = vshll.u32 %v4532, 16
      %v4563 = vrot.slane %v4561, 1
      %v4564 = vor.u32 %v4559, %v4563
      %v4566 = vshrl.u32 %v4533, 16
      %v4568 = vshll.u32 %v4533, 16
      %v4570 = vrot.slane %v4568, 1
      %v4571 = vor.u32 %v4566, %v4570
      %v4573 = vshrl.u32 %v4534, 16
      %v4575 = vshll.u32 %v4534, 16
      %v4577 = vrot.slane %v4575, 1
      %v4578 = vor.u32 %v4573, %v4577
      %v4580 = vshrl.u32 %v4535, 16
      %v4582 = vshll.u32 %v4535, 16
      %v4584 = vrot.slane %v4582, 1
      %v4585 = vor.u32 %v4580, %v4584
      %v4587 = vshrl.u32 %v4536, 16
      %v4589 = vshll.u32 %v4536, 16
      %v4591 = vrot.slane %v4589, 1
      %v4592 = vor.u32 %v4587, %v4591
      %4593 = vrot.lane.b32.xlu0 %v4543, 64
      %v4594 = vpop.permute.xlu0 %4593
      %4595 = vrot.lane.b32.xlu0 %v4550, 64
      %v4596 = vpop.permute.xlu0 %4595
      %4597 = vrot.lane.b32.xlu0 %v4557, 64
      %v4598 = vpop.permute.xlu0 %4597
      %4599 = vrot.lane.b32.xlu0 %v4564, 64
      %v4600 = vpop.permute.xlu0 %4599
      %4601 = vrot.lane.b32.xlu0 %v4571, 64
      %v4602 = vpop.permute.xlu0 %4601
      %4603 = vrot.lane.b32.xlu0 %v4578, 64
      %v4604 = vpop.permute.xlu0 %4603
      %4605 = vrot.lane.b32.xlu0 %v4585, 64
      %v4606 = vpop.permute.xlu0 %4605
      %4607 = vrot.lane.b32.xlu0 %v4592, 64
      %v4608 = vpop.permute.xlu0 %4607
      %v4617 = vunpack.c.l.b16 %v4489
      %v4618 = vunpack.c.l.b16 %v4490
      %v4619 = vunpack.c.l.b16 %v4491
      %v4620 = vunpack.c.l.b16 %v4492
      %v4621 = vunpack.c.l.b16 %v4493
      %v4622 = vunpack.c.l.b16 %v4494
      %v4623 = vunpack.c.l.b16 %v4495
      %v4624 = vunpack.c.l.b16 %v4496
      %v4625 = vpack.c.b16 %v4514, %v4617
      %v4626 = vpack.c.b16 %v4516, %v4618
      %v4627 = vpack.c.b16 %v4518, %v4619
      %v4628 = vpack.c.b16 %v4520, %v4620
      %v4629 = vpack.c.b16 %v4522, %v4621
      %v4630 = vpack.c.b16 %v4524, %v4622
      %v4631 = vpack.c.b16 %v4526, %v4623
      %v4632 = vpack.c.b16 %v4528, %v4624
      %v4633 = vrot.slane %v4625, 1
      %v4634 = vrot.slane %v4626, 1
      %v4635 = vrot.slane %v4627, 1
      %v4636 = vrot.slane %v4628, 1
      %v4637 = vrot.slane %v4629, 1
      %v4638 = vrot.slane %v4630, 1
      %v4639 = vrot.slane %v4631, 1
      %v4640 = vrot.slane %v4632, 1
      %v4643 = vsel %vm948, %v4473, %v4594
      %v4646 = vsel %vm948, %v4474, %v4596
      %v4649 = vsel %vm948, %v4475, %v4598
      %v4652 = vsel %vm948, %v4476, %v4600
      %v4655 = vsel %vm948, %v4477, %v4602
      %v4658 = vsel %vm948, %v4478, %v4604
      %v4661 = vsel %vm948, %v4479, %v4606
      %v4664 = vsel %vm948, %v4480, %v4608
      %v4673 = vunpack.c.l.b16 %v4643
      %v4674 = vunpack.c.l.b16 %v4633
      %v4675 = vunpack.c.l.b16 %v4646
      %v4676 = vunpack.c.l.b16 %v4634
      %v4677 = vunpack.c.l.b16 %v4649
      %v4678 = vunpack.c.l.b16 %v4635
      %v4679 = vunpack.c.l.b16 %v4652
      %v4680 = vunpack.c.l.b16 %v4636
      %v4681 = vunpack.c.l.b16 %v4655
      %v4682 = vunpack.c.l.b16 %v4637
      %v4683 = vunpack.c.l.b16 %v4658
      %v4684 = vunpack.c.l.b16 %v4638
      %v4685 = vunpack.c.l.b16 %v4661
      %v4686 = vunpack.c.l.b16 %v4639
      %v4687 = vunpack.c.l.b16 %v4664
      %v4688 = vunpack.c.l.b16 %v4640
      %s4689 = scalar_lea.vmem %s5, 768
      %v4690 = vld [vmem:[%s4689] sm:$0xf]
      %v4691 = vld [vmem:[%s4689 + $0x4] sm:$0xf]
      %v4692 = vld [vmem:[%s4689 + $0x8] sm:$0xf]
      %v4693 = vld [vmem:[%s4689 + $0xc] sm:$0xf]
      %v4694 = vld [vmem:[%s4689 + $0x10] sm:$0xf]
      %v4695 = vld [vmem:[%s4689 + $0x14] sm:$0xf]
      %v4696 = vld [vmem:[%s4689 + $0x18] sm:$0xf]
      %v4697 = vld [vmem:[%s4689 + $0x1c] sm:$0xf]
      %v4698 = vld [vmem:[%s4689 + $0x20] sm:$0xf]
      %v4699 = vld [vmem:[%s4689 + $0x24] sm:$0xf]
      %v4700 = vld [vmem:[%s4689 + $0x28] sm:$0xf]
      %v4701 = vld [vmem:[%s4689 + $0x2c] sm:$0xf]
      %v4702 = vld [vmem:[%s4689 + $0x30] sm:$0xf]
      %v4703 = vld [vmem:[%s4689 + $0x34] sm:$0xf]
      %v4704 = vld [vmem:[%s4689 + $0x38] sm:$0xf]
      %v4705 = vld [vmem:[%s4689 + $0x3c] sm:$0xf]
      %v4706 = vld [vmem:[%s4689 + $0x40] sm:$0xf]
      %v4707 = vld [vmem:[%s4689 + $0x44] sm:$0xf]
      %v4708 = vld [vmem:[%s4689 + $0x48] sm:$0xf]
      %v4709 = vld [vmem:[%s4689 + $0x4c] sm:$0xf]
      %v4710 = vld [vmem:[%s4689 + $0x50] sm:$0xf]
      %v4711 = vld [vmem:[%s4689 + $0x54] sm:$0xf]
      %v4712 = vld [vmem:[%s4689 + $0x58] sm:$0xf]
      %v4713 = vld [vmem:[%s4689 + $0x5c] sm:$0xf]
      %v4714 = vpack.c.b16 %v4675, %v4673
      %v4715 = vpack.c.b16 %v4676, %v4674
      %v4716 = vpack.c.b16 %v4679, %v4677
      %v4717 = vpack.c.b16 %v4680, %v4678
      %v4718 = vpack.c.b16 %v4683, %v4681
      %v4719 = vpack.c.b16 %v4684, %v4682
      %v4720 = vpack.c.b16 %v4687, %v4685
      %v4721 = vpack.c.b16 %v4688, %v4686
      %v4750 = vunpack.c.l.b16 %v4690
      %v4751 = vunpack.c.l.b16 %v4691
      %v4752 = vunpack.c.l.b16 %v4692
      %v4753 = vunpack.c.l.b16 %v4693
      %v4754 = vunpack.c.l.b16 %v4694
      %v4755 = vunpack.c.l.b16 %v4695
      %v4756 = vunpack.c.l.b16 %v4696
      %v4757 = vunpack.c.l.b16 %v4697
      %v4758 = vunpack.c.l.b16 %v4698
      %v4759 = vunpack.c.l.b16 %v4699
      %v4760 = vunpack.c.l.b16 %v4700
      %v4761 = vunpack.c.l.b16 %v4701
      %v4762 = vunpack.c.l.b16 %v4702
      %v4763 = vunpack.c.l.b16 %v4703
      %v4764 = vunpack.c.l.b16 %v4704
      %v4765 = vunpack.c.l.b16 %v4705
      %v4766 = vunpack.c.l.b16 %v4706
      %v4767 = vunpack.c.l.b16 %v4707
      %v4768 = vunpack.c.l.b16 %v4708
      %v4769 = vunpack.c.l.b16 %v4709
      %v4770 = vunpack.c.l.b16 %v4710
      %v4771 = vunpack.c.l.b16 %v4711
      %v4772 = vunpack.c.l.b16 %v4712
      %v4773 = vunpack.c.l.b16 %v4713
      %v4774 = vpack.c.b16 %v4751, %v4750
      %v4775 = vpack.c.b16 %v4753, %v4752
      %v4776 = vpack.c.b16 %v4755, %v4754
      %v4777 = vpack.c.b16 %v4757, %v4756
      %v4778 = vpack.c.b16 %v4759, %v4758
      %v4779 = vpack.c.b16 %v4761, %v4760
      %v4780 = vpack.c.b16 %v4763, %v4762
      %v4781 = vpack.c.b16 %v4765, %v4764
      %v4782 = vpack.c.b16 %v4767, %v4766
      %v4783 = vpack.c.b16 %v4769, %v4768
      %v4784 = vpack.c.b16 %v4771, %v4770
      %v4785 = vpack.c.b16 %v4773, %v4772
      %v4799 = vsel %vm948, %v4715, 0
      %v4802 = vsel %vm948, %v4717, 0
      %v4805 = vsel %vm948, %v4719, 0
      %v4808 = vsel %vm948, %v4721, 0
      %4810 = vmatprep.subr.bf16.mxu0 0
      %4811 = vmatpush1.bf16.msra.mxu0 %v4781
      %4812 = vmatprep.subr.bf16.mxu0 0
      %4813 = vmatpush1.bf16.msra.mxu0 %v4780
      %4814 = vmatprep.subr.bf16.mxu0 0
      %4815 = vmatpush1.bf16.msra.mxu0 %v4779
      %4816 = vmatprep.subr.bf16.mxu0 0
      %4817 = vmatpush1.bf16.msra.mxu0 %v4778
      %4818 = vmatprep.subr.bf16.mxu0 0
      %4819 = vmatpush1.bf16.msra.mxu0 %v4777
      %4820 = vmatprep.subr.bf16.mxu0 0
      %4821 = vmatpush1.bf16.msra.mxu0 %v4776
      %4822 = vmatprep.subr.bf16.mxu0 0
      %4823 = vmatpush1.bf16.msra.mxu0 %v4775
      %4824 = vmatprep.subr.bf16.mxu0 0
      %4825 = vmatpush1.bf16.msra.mxu0 %v4774
      %4826 = vmatprep.subr.bf16.mxu0 0
      %4827 = vmatpush2.bf16.msra.mxu0 0
      %4828 = vmatprep.subr.bf16.mxu0 0
      %4829 = vmatpush2.bf16.msra.mxu0 0
      %4830 = vmatprep.subr.bf16.mxu0 0
      %4831 = vmatpush2.bf16.msra.mxu0 0
      %4832 = vmatprep.subr.bf16.mxu0 0
      %4833 = vmatpush2.bf16.msra.mxu0 0
      %4834 = vmatprep.subr.bf16.mxu0 0
      %4835 = vmatpush2.bf16.msra.mxu0 %v4785
      %4836 = vmatprep.subr.bf16.mxu0 0
      %4837 = vmatpush2.bf16.msra.mxu0 %v4784
      %4838 = vmatprep.subr.bf16.mxu0 0
      %4839 = vmatpush2.bf16.msra.mxu0 %v4783
      %4840 = vmatprep.subr.bf16.mxu0 0
      %4841 = vmatpush2.bf16.msra.mxu0 %v4782
      %4842 = vmatprep.mubr.bf16.mxu0 %v4799
      %4843 = vmatmul.mubr.bf16.gmra.mxu0 %v4714
      %v4844 = vpop.f32.mrf.mxu0
      %v4845 = vadd.f32 0.0, %v4844
      %v4846 = vpop.f32.mrf.mxu0
      %v4847 = vpop.f32.mrf.mxu0
      %v4848 = vadd.f32 0.0, %v4847
      %v4849 = vpop.f32.mrf.mxu0
      %4850 = vmatprep.mubr.bf16.mxu0 %v4802
      %4851 = vmatmul.mubr.bf16.gmra.mxu0 %v4716
      %v4852 = vpop.f32.mrf.mxu0
      %v4853 = vadd.f32 0.0, %v4852
      %v4854 = vpop.f32.mrf.mxu0
      %v4855 = vpop.f32.mrf.mxu0
      %v4856 = vadd.f32 0.0, %v4855
      %v4857 = vpop.f32.mrf.mxu0
      %4858 = vmatprep.mubr.bf16.mxu0 %v4805
      %4859 = vmatmul.mubr.bf16.gmra.mxu0 %v4718
      %v4860 = vpop.f32.mrf.mxu0
      %v4861 = vadd.f32 0.0, %v4860
      %v4862 = vpop.f32.mrf.mxu0
      %v4863 = vpop.f32.mrf.mxu0
      %v4864 = vadd.f32 0.0, %v4863
      %v4865 = vpop.f32.mrf.mxu0
      %4866 = vmatprep.mubr.bf16.mxu0 %v4808
      %4867 = vmatmul.mubr.bf16.gmra.mxu0 %v4720
      %v4868 = vpop.f32.mrf.mxu0
      %v4869 = vadd.f32 0.0, %v4868
      %v4870 = vpop.f32.mrf.mxu0
      %v4871 = vpop.f32.mrf.mxu0
      %v4872 = vadd.f32 0.0, %v4871
      %v4873 = vpop.f32.mrf.mxu0
      %4874 = vdwg.mxu0
      %v4875 = vadd.f32 %v4443, %v4845
      %v4876 = vadd.f32 %v4446, %v4848
      %v4877 = vadd.f32 %v4451, %v4853
      %v4878 = vadd.f32 %v4454, %v4856
      %v4879 = vadd.f32 %v4459, %v4861
      %v4880 = vadd.f32 %v4462, %v4864
      %v4881 = vadd.f32 %v4467, %v4869
      %v4882 = vadd.f32 %v4470, %v4872
      %v4883 = vld [vmem:[#allocation3] sm:$0xff]
      %v4884 = vld [vmem:[#allocation3 + $0x8] sm:$0xff]
      %v4885 = vld [vmem:[#allocation3 + $0x10] sm:$0xff]
      %v4886 = vld [vmem:[#allocation3 + $0x18] sm:$0xff]
      %v4887 = vld [vmem:[#allocation3 + $0x20] sm:$0xff]
      %v4888 = vld [vmem:[#allocation3 + $0x28] sm:$0xff]
      %v4889 = vld [vmem:[#allocation3 + $0x30] sm:$0xff]
      %v4890 = vld [vmem:[#allocation3 + $0x38] sm:$0xff]
      %v4891 = vadd.f32 %v4883, %v4875
      %v4892 = vadd.f32 %v4884, %v4876
      %v4893 = vadd.f32 %v4885, %v4877
      %v4894 = vadd.f32 %v4886, %v4878
      %v4895 = vadd.f32 %v4887, %v4879
      %v4896 = vadd.f32 %v4888, %v4880
      %v4897 = vadd.f32 %v4889, %v4881
      %v4898 = vadd.f32 %v4890, %v4882
      %4899 = vst.msk [vmem:[#allocation3] sm:$0xff] %vm948, %v4891
      %4900 = vst.msk [vmem:[#allocation3 + $0x8] sm:$0xff] %vm948, %v4892
      %4901 = vst.msk [vmem:[#allocation3 + $0x10] sm:$0xff] %vm948, %v4893
      %4902 = vst.msk [vmem:[#allocation3 + $0x18] sm:$0xff] %vm948, %v4894
      %4903 = vst.msk [vmem:[#allocation3 + $0x20] sm:$0xff] %vm948, %v4895
      %4904 = vst.msk [vmem:[#allocation3 + $0x28] sm:$0xff] %vm948, %v4896
      %4905 = vst.msk [vmem:[#allocation3 + $0x30] sm:$0xff] %vm948, %v4897
      %4906 = vst.msk [vmem:[#allocation3 + $0x38] sm:$0xff] %vm948, %v4898
      %v4907 = vld [vmem:[#allocation3] sm:$0xff]
      %v4908 = vld [vmem:[#allocation3 + $0x8] sm:$0xff]
      %v4909 = vld [vmem:[#allocation3 + $0x10] sm:$0xff]
      %v4910 = vld [vmem:[#allocation3 + $0x18] sm:$0xff]
      %v4911 = vld [vmem:[#allocation3 + $0x20] sm:$0xff]
      %v4912 = vld [vmem:[#allocation3 + $0x28] sm:$0xff]
      %v4913 = vld [vmem:[#allocation3 + $0x30] sm:$0xff]
      %v4914 = vld [vmem:[#allocation3 + $0x38] sm:$0xff]
      %v4915 = vld [vmem:[%s6] sm:$0x1]
      %v4917 = vlaneseq
      %v4918 = vshrl.u32 %v4917, 7
      %v4919 = vsub.s32 0, %v4918
      %v4920 = vrot.slane %v4915, %v4919
      %v4922 = vadd.f32 %v4907, %v4920
      %v4923 = vadd.f32 %v4908, %v4920
      %v4924 = vadd.f32 %v4909, %v4920
      %v4925 = vadd.f32 %v4910, %v4920
      %v4926 = vadd.f32 %v4911, %v4920
      %v4927 = vadd.f32 %v4912, %v4920
      %v4928 = vadd.f32 %v4913, %v4920
      %v4929 = vadd.f32 %v4914, %v4920
      %v4930 = vsel %vm948, %v4922, 0.0
      %v4931 = vsel %vm948, %v4923, 0.0
      %v4932 = vadd.f32 %v4930, %v4931
      %v4933 = vsel %vm948, %v4924, 0.0
      %v4934 = vadd.f32 %v4932, %v4933
      %v4935 = vsel %vm948, %v4925, 0.0
      %v4936 = vadd.f32 %v4934, %v4935
      %v4937 = vsel %vm948, %v4926, 0.0
      %v4938 = vadd.f32 %v4936, %v4937
      %v4939 = vsel %vm948, %v4927, 0.0
      %v4940 = vadd.f32 %v4938, %v4939
      %v4941 = vsel %vm948, %v4928, 0.0
      %v4942 = vadd.f32 %v4940, %v4941
      %v4943 = vsel %vm948, %v4929, 0.0
      %v4944 = vadd.f32 %v4942, %v4943
      %v4945 = vrot.slane %v4944, 4
      %v4946 = vadd.f32 %v4944, %v4945
      %v4947 = vrot.slane %v4946, 2
      %v4948 = vadd.f32 %v4946, %v4947
      %v4949 = vrot.slane %v4948, 1
      %v4950 = vadd.f32 %v4948, %v4949
      %4951 = vst.msk [vmem:[%s508] sm:$0x1] %vm519, %v4950
      %v4952 = vmul.f32 %v4922, %v4922
      %v4953 = vmul.f32 %v4923, %v4923
      %v4954 = vmul.f32 %v4924, %v4924
      %v4955 = vmul.f32 %v4925, %v4925
      %v4956 = vmul.f32 %v4926, %v4926
      %v4957 = vmul.f32 %v4927, %v4927
      %v4958 = vmul.f32 %v4928, %v4928
      %v4959 = vmul.f32 %v4929, %v4929
      %v4960 = vsel %vm948, %v4952, 0.0
      %v4961 = vsel %vm948, %v4953, 0.0
      %v4962 = vadd.f32 %v4960, %v4961
      %v4963 = vsel %vm948, %v4954, 0.0
      %v4964 = vadd.f32 %v4962, %v4963
      %v4965 = vsel %vm948, %v4955, 0.0
      %v4966 = vadd.f32 %v4964, %v4965
      %v4967 = vsel %vm948, %v4956, 0.0
      %v4968 = vadd.f32 %v4966, %v4967
      %v4969 = vsel %vm948, %v4957, 0.0
      %v4970 = vadd.f32 %v4968, %v4969
      %v4971 = vsel %vm948, %v4958, 0.0
      %v4972 = vadd.f32 %v4970, %v4971
      %v4973 = vsel %vm948, %v4959, 0.0
      %v4974 = vadd.f32 %v4972, %v4973
      %v4975 = vrot.slane %v4974, 4
      %v4976 = vadd.f32 %v4974, %v4975
      %v4977 = vrot.slane %v4976, 2
      %v4978 = vadd.f32 %v4976, %v4977
      %v4979 = vrot.slane %v4978, 1
      %v4980 = vadd.f32 %v4978, %v4979
      %4981 = vst.msk [vmem:[%s515] sm:$0x1] %vm519, %v4980
      %4982 = vst.msk [vmem:[%s501] sm:$0xff] %vm948, %v4922
      %4983 = vst.msk [vmem:[%s501 + $0x8] sm:$0xff] %vm948, %v4923
      %4984 = vst.msk [vmem:[%s501 + $0x10] sm:$0xff] %vm948, %v4924
      %4985 = vst.msk [vmem:[%s501 + $0x18] sm:$0xff] %vm948, %v4925
      %4986 = vst.msk [vmem:[%s501 + $0x20] sm:$0xff] %vm948, %v4926
      %4987 = vst.msk [vmem:[%s501 + $0x28] sm:$0xff] %vm948, %v4927
      %4988 = vst.msk [vmem:[%s501 + $0x30] sm:$0xff] %vm948, %v4928
      %4989 = vst.msk [vmem:[%s501 + $0x38] sm:$0xff] %vm948, %v4929
      %p4990 = scmp.lt.s32.totalorder %s25, 1
      %s4991 = scalar_select %p4990, %s25, 1
      %p4992 = scmp.lt.s32.totalorder %s26, 7
      %s4993 = scalar_select %p4992, %s26, 7
      %s4994 = smul.addr %s4993, 8
      %s4995 = smul.addr %s4991, 64
      %s4996 = sadd.s32 %s4994, %s4995
      %s4997 = smul.addr %s4996, 8
      %s4998 = scalar_lea.vmem %s7, %s4997
      %p4999 = scmp.lt.s32.totalorder %s25, 1
      %s5000 = scalar_select %p4999, %s25, 1
      %p5001 = scmp.lt.s32.totalorder %s26, 7
      %s5002 = scalar_select %p5001, %s26, 7
      %s5003 = smul.addr %s5000, 8
      %s5004 = sadd.s32 %s5002, %s5003
      %s5005 = scalar_lea.vmem %s8, %s5004
      %p5006 = scmp.lt.s32.totalorder %s25, 1
      %s5007 = scalar_select %p5006, %s25, 1
      %p5008 = scmp.lt.s32.totalorder %s26, 7
      %s5009 = scalar_select %p5008, %s26, 7
      %s5010 = smul.addr %s5007, 8
      %s5011 = sadd.s32 %s5009, %s5010
      %s5012 = scalar_lea.vmem %s9, %s5011
      // Predicated region
      $region49: #{voxres_forward_ndhwc.2} parent=47 // pred_check
        %p5013 = pneg %p233
      $region50: #{voxres_forward_ndhwc.2} parent=47 // pred_check_branch
        %5015 = sbr.rel (%p5013) target = $region52
      $region51: #{voxres_forward_ndhwc.2} parent=47 // pred_region
        _
      $region52: #{voxres_forward_ndhwc.2} parent=47 // pred_fallthru
        _
      // Predicated region
      $region53: #{voxres_forward_ndhwc.2} parent=47 // pred_check
        %p5016 = pneg %p261
      $region54: #{voxres_forward_ndhwc.2} parent=47 // pred_check_branch
        %5018 = sbr.rel (%p5016) target = $region56
      $region55: #{voxres_forward_ndhwc.2} parent=47 // pred_region
        _
      $region56: #{voxres_forward_ndhwc.2} parent=47 // pred_fallthru
        _
      // Predicated region
      $region57: #{voxres_forward_ndhwc.2} parent=47 // pred_check
        %p5019 = pneg %p289
      $region58: #{voxres_forward_ndhwc.2} parent=47 // pred_check_branch
        %5021 = sbr.rel (%p5019) target = $region60
      $region59: #{voxres_forward_ndhwc.2} parent=47 // pred_region
        _
      $region60: #{voxres_forward_ndhwc.2} parent=47 // pred_fallthru
        _
    $region48: #{voxres_forward_ndhwc.2} parent=5 // pred_fallthru
      _
    %p5022 = scmp.le.s32.totalorder 2, %s16
    // Predicated region
    $region61: #{voxres_forward_ndhwc.2} parent=5 // pred_check
      %p5023 = pneg %p5022
    $region62: #{voxres_forward_ndhwc.2} parent=5 // pred_check_branch
      %5025 = sbr.rel (%p5023) target = $region64
    $region63: #{voxres_forward_ndhwc.2} parent=5 // pred_region
      %s5026 = ssub.s32 %s16, 2
      // Predicated region
      $region65: #{voxres_forward_ndhwc.2} parent=63 // pred_check
        %p5027 = pneg %p239
      $region66: #{voxres_forward_ndhwc.2} parent=63 // pred_check_branch
        %5029 = sbr.rel (%p5027) target = $region68
      $region67: #{voxres_forward_ndhwc.2} parent=63 // pred_region
        %p5030 = scmp.lt.s32.totalorder %s27, 1
        %s5031 = scalar_select %p5030, %s27, 1
        %p5032 = scmp.lt.s32.totalorder %s28, 7
        %s5033 = scalar_select %p5032, %s28, 7
        %s5034 = smul.addr %s5033, 8
        %s5035 = smul.addr %s5031, 64
        %s5036 = sadd.s32 %s5034, %s5035
        %s5037 = smul.addr %s5036, 8
        %s5038 = scalar_lea.vmem %s7, %s5037
      $region68: #{voxres_forward_ndhwc.2} parent=63 // pred_fallthru
        _
      // Predicated region
      $region69: #{voxres_forward_ndhwc.2} parent=63 // pred_check
        %p5039 = pneg %p267
      $region70: #{voxres_forward_ndhwc.2} parent=63 // pred_check_branch
        %5041 = sbr.rel (%p5039) target = $region72
      $region71: #{voxres_forward_ndhwc.2} parent=63 // pred_region
        %p5042 = scmp.lt.s32.totalorder %s27, 1
        %s5043 = scalar_select %p5042, %s27, 1
        %p5044 = scmp.lt.s32.totalorder %s28, 7
        %s5045 = scalar_select %p5044, %s28, 7
        %s5046 = smul.addr %s5043, 8
        %s5047 = sadd.s32 %s5045, %s5046
        %s5048 = scalar_lea.vmem %s8, %s5047
      $region72: #{voxres_forward_ndhwc.2} parent=63 // pred_fallthru
        _
      // Predicated region
      $region73: #{voxres_forward_ndhwc.2} parent=63 // pred_check
        %p5049 = pneg %p295
      $region74: #{voxres_forward_ndhwc.2} parent=63 // pred_check_branch
        %5051 = sbr.rel (%p5049) target = $region76
      $region75: #{voxres_forward_ndhwc.2} parent=63 // pred_region
        %p5052 = scmp.lt.s32.totalorder %s27, 1
        %s5053 = scalar_select %p5052, %s27, 1
        %p5054 = scmp.lt.s32.totalorder %s28, 7
        %s5055 = scalar_select %p5054, %s28, 7
        %s5056 = smul.addr %s5053, 8
        %s5057 = sadd.s32 %s5055, %s5056
        %s5058 = scalar_lea.vmem %s9, %s5057
      $region76: #{voxres_forward_ndhwc.2} parent=63 // pred_fallthru
        _
    $region64: #{voxres_forward_ndhwc.2} parent=5 // pred_fallthru
      _
  $region6: #{voxres_forward_ndhwc.2} parent=0 // loop_footer
    %s20 = sadd.s32 1, %s16
  $region7: #{voxres_forward_ndhwc.2} parent=0 // loop_footer_branch
    %15 = sbr.rel target = $region3
  $region8: #{voxres_forward_ndhwc.2} parent=0 // loop_exit
    _

</llo_original>
